<compile_context>
chip_gen: v7x
topology: tpu7x:2x2x1
jax: 0.10.0
libtpu: 0.0.40
codegen_flags: <defaults>
</compile_context>

<pallas_src>
import functools

import jax
import jax.numpy as jnp
from jax.experimental import pallas as pl
from jax.experimental.pallas import tpu as pltpu

EPS = 1e-6       # LayerNormConv2d eps
HIDDEN = 64      # ConvLSTM hidden size


def _v():
    return pl.BlockSpec(memory_space=pltpu.MemorySpace.VMEM)


# --------------------------------------------------------------------------
# Pallas kernels
# --------------------------------------------------------------------------
def _enc_stage_kernel(xf_ref, w_ref, b_ref, g_ref, bt_ref, out_ref, y_ref, *, H, W, C3):
    """Fused conv3x3 (same) + bias + ReLU + LayerNormConv2d + 2x2 max-pool.

    xf_ref : ((H+2)*W, 3*Cin) bf16  width-folded, height-padded, flattened input
    w_ref  : (9*Cin, Cout)    bf16  row index = ky*(3*Cin) + kx*Cin + c
    b/g/bt : (1, Cout) f32
    out_ref: (H//2 * W//2, Cout) bf16 (pooled)
    y_ref  : (H*W, Cout) f32 VMEM scratch (pre-pool LN output)
    """
    HW = H * W
    xf = xf_ref[...]
    w = w_ref[...]
    acc = jnp.dot(xf[0:HW, :], w[0:C3, :], preferred_element_type=jnp.float32)
    for ky in (1, 2):
        acc = acc + jnp.dot(xf[ky * W:ky * W + HW, :],
                            w[ky * C3:(ky + 1) * C3, :],
                            preferred_element_type=jnp.float32)
    y = jnp.maximum(acc + b_ref[...], 0.0)                       # bias + ReLU
    # LayerNormConv2d: per-channel mean / unbiased std over the HW pixels.
    mean = jnp.mean(y, axis=0, keepdims=True)
    d = y - mean
    var = jnp.sum(d * d, axis=0, keepdims=True) * (1.0 / (HW - 1))
    scale = g_ref[...] * pl.reciprocal(jnp.sqrt(var) + EPS, approx=True)
    y_ref[...] = d * scale + bt_ref[...]
    # Fused 2x2 / stride-2 max-pool on the LN output while it is still in VMEM:
    #   horizontal pairs via stride-2 reads, vertical pairs via row-block slices.
    hm = jnp.maximum(y_ref[pl.ds(0, HW // 2, 2), :],
                     y_ref[pl.ds(1, HW // 2, 2), :])             # (H * W//2, Cout)
    W2 = W // 2
    ev = jnp.concatenate([hm[(2 * m) * W2:(2 * m + 1) * W2, :] for m in range(H // 2)], axis=0)
    od = jnp.concatenate([hm[(2 * m + 1) * W2:(2 * m + 2) * W2, :] for m in range(H // 2)], axis=0)
    out_ref[...] = jnp.maximum(ev, od).astype(out_ref.dtype)


def _convlstm_kernel(xf_ref, w_ref, b_ref, h_ref, *, H, W, C3, hidden):
    """ConvLSTM cell with zero initial state (s is None path of forward()).

    xf_ref : ((H+2)*W, 3*Cin) bf16 folded cat(x, h)=x slab  (h == 0 contributes nothing)
    w_ref  : (9*Cin, 4*hidden) bf16
    b_ref  : (1, 4*hidden) f32
    h_ref  : (H*W, hidden) bf16 output hidden state
    """
    HW = H * W
    xf = xf_ref[...]
    w = w_ref[...]
    acc = jnp.dot(xf[0:HW, :], w[0:C3, :], preferred_element_type=jnp.float32)
    for ky in (1, 2):
        acc = acc + jnp.dot(xf[ky * W:ky * W + HW, :],
                            w[ky * C3:(ky + 1) * C3, :],
                            preferred_element_type=jnp.float32)
    gates = acc + b_ref[...]                         # (HW, 4*hidden), order (i, f, o, g)
    sig = jax.nn.sigmoid(gates[:, :3 * hidden])      # i, f, o with a single 3*hidden-lane op
    g = jnp.tanh(gates[:, 3 * hidden:])
    i = sig[:, :hidden]
    o = sig[:, 2 * hidden:3 * hidden]
    c_next = i * g                                   # c0 == 0  =>  f*c0 vanishes
    h_ref[...] = (o * jnp.tanh(c_next)).astype(h_ref.dtype)


def _deconv_phases(xf_ref, w_ref, b_ref, g_ref, bt_ref, H, W):
    """Polyphase ConvTranspose2d(3, s=2, p=1, op=1) + bias + ReLU + LayerNormConv2d.

    xf_ref : ((H+1)*W, 2*Cin) bf16  dx-folded, bottom/right padded, flattened input
    w_ref  : (6, 2*Cin, Cout) bf16  polyphase weight mats (see deconv_w_to_phase_mats)
    Returns the 4 normalized output phases (ee, eo, oe, oo), each (H*W, Cout) f32,
    with LN statistics taken jointly over all 4*H*W output pixels.
    """
    HW = H * W
    xf = xf_ref[...]
    s0 = xf[0:HW, :]          # taps from rows (m,   n) / (m,   n+1)
    s1 = xf[W:W + HW, :]      # taps from rows (m+1, n) / (m+1, n+1)

    def mm(s, k):
        return jnp.dot(s, w_ref[k], preferred_element_type=jnp.float32)

    b = b_ref[...]
    ee = jnp.maximum(mm(s0, 0) + b, 0.0)
    eo = jnp.maximum(mm(s0, 1) + b, 0.0)
    oe = jnp.maximum(mm(s0, 2) + mm(s1, 3) + b, 0.0)
    oo = jnp.maximum(mm(s0, 4) + mm(s1, 5) + b, 0.0)
    n_tot = 4 * HW
    mean = (jnp.sum(ee, axis=0, keepdims=True) + jnp.sum(eo, axis=0, keepdims=True) +
            jnp.sum(oe, axis=0, keepdims=True) + jnp.sum(oo, axis=0, keepdims=True)
            ) * (1.0 / n_tot)
    dee, deo, doe, doo = ee - mean, eo - mean, oe - mean, oo - mean
    var = (jnp.sum(dee * dee, axis=0, keepdims=True) + jnp.sum(deo * deo, axis=0, keepdims=True) +
           jnp.sum(doe * doe, axis=0, keepdims=True) + jnp.sum(doo * doo, axis=0, keepdims=True)
           ) * (1.0 / (n_tot - 1))
    scale = g_ref[...] * pl.reciprocal(jnp.sqrt(var) + EPS, approx=True)
    bt = bt_ref[...]
    return (dee * scale + bt, deo * scale + bt, doe * scale + bt, doo * scale + bt)


def _dec_stage_kernel(xf_ref, w_ref, b_ref, g_ref, bt_ref, out_ref, *, H, W):
    phases = _deconv_phases(xf_ref, w_ref, b_ref, g_ref, bt_ref, H, W)
    for k in range(4):
        out_ref[k] = phases[k].astype(out_ref.dtype)


def _dec_cls_kernel(xf_ref, w_ref, b_ref, g_ref, bt_ref, cw_ref, cb_ref, out_ref, *, H, W):
    # Final decoder stage fused with the 1x1 classifier (8 -> 1 channels).
    phases = _deconv_phases(xf_ref, w_ref, b_ref, g_ref, bt_ref, H, W)
    cw = cw_ref[...]                                            # (1, 8) f32
    scores = [jnp.sum(ph * cw, axis=-1, keepdims=True) + cb_ref[...] for ph in phases]
    out_ref[...] = jnp.concatenate(scores, axis=-1)             # (H*W, 4) phase columns


# --------------------------------------------------------------------------
# Plain-JAX glue: slab folding, phase interleave, weight layout conversion
# --------------------------------------------------------------------------
def fold3_same(x_hwc):
    """(H,W,C) -> ((H+2)*W, 3C) bf16: width-pad 1/1, fold the 3 kx shifts into channels,
    height-pad 1/1, flatten.  Row ky*W+p of the result is the (ky, kx=*) conv tap row."""
    H, W, C = x_hwc.shape
    xp = jnp.pad(x_hwc, ((0, 0), (1, 1), (0, 0)))
    cols = jnp.concatenate([xp[:, kx:kx + W, :] for kx in range(3)], axis=-1)
    cols = jnp.pad(cols, ((1, 1), (0, 0), (0, 0)))
    return cols.reshape((H + 2) * W, 3 * C).astype(jnp.bfloat16)


def fold2_deconv(x_hwc):
    """(H,W,C) -> ((H+1)*W, 2C) bf16: pad right/bottom by 1, fold the 2 dx shifts."""
    H, W, C = x_hwc.shape
    xp = jnp.pad(x_hwc, ((0, 0), (0, 1), (0, 0)))
    cols = jnp.concatenate([xp[:, dx:dx + W, :] for dx in range(2)], axis=-1)
    cols = jnp.pad(cols, ((0, 1), (0, 0), (0, 0)))
    return cols.reshape((H + 1) * W, 2 * C).astype(jnp.bfloat16)


def interleave_phases(phases, H, W, C):
    """(4, H*W, C) phase tensors (phase = 2*py + px) -> (2H, 2W, C)."""
    p = phases.reshape(2, 2, H, W, C)
    p = jnp.transpose(p, (2, 0, 3, 1, 4))
    return p.reshape(2 * H, 2 * W, C)


def conv_w_to_mat(w_oihw):
    """PyTorch Conv2d weight (Cout, Cin, 3, 3) -> (9*Cin, Cout), row = ky*3Cin + kx*Cin + c."""
    return jnp.transpose(w_oihw, (2, 3, 1, 0)).reshape(-1, w_oihw.shape[0])


def deconv_w_to_phase_mats(w_iohw):
    """ConvTranspose2d weight (Cin, Cout, 3, 3) -> (6, 2*Cin, Cout) polyphase mats.
    Output parity (py, px): ky = 1 (py=0) or 2-2*dy (py=1); same for kx/dx."""
    Cin, Cout = w_iohw.shape[0], w_iohw.shape[1]
    z = jnp.zeros((Cin, Cout), jnp.float32)

    def tap(ky, kx):
        return w_iohw[:, :, ky, kx]

    mats = [
        jnp.concatenate([tap(1, 1), z], axis=0),          # 0: (even,even), dy=0
        jnp.concatenate([tap(1, 2), tap(1, 0)], axis=0),  # 1: (even,odd ), dy=0
        jnp.concatenate([tap(2, 1), z], axis=0),          # 2: (odd ,even), dy=0
        jnp.concatenate([tap(0, 1), z], axis=0),          # 3: (odd ,even), dy=1
        jnp.concatenate([tap(2, 2), tap(2, 0)], axis=0),  # 4: (odd ,odd ), dy=0
        jnp.concatenate([tap(0, 2), tap(0, 0)], axis=0),  # 5: (odd ,odd ), dy=1
    ]
    return jnp.stack(mats, axis=0)


# --------------------------------------------------------------------------
# pallas_call wrappers (single-block: all tensors are tiny at 16x16)
# --------------------------------------------------------------------------
def enc_stage(x_hwc, p):
    H, W, c_in = x_hwc.shape
    c_out = p["w"].shape[-1]
    HW = H * W
    xf = fold3_same(x_hwc)
    kern = functools.partial(_enc_stage_kernel, H=H, W=W, C3=3 * c_in)
    out = pl.pallas_call(
        kern,
        out_shape=jax.ShapeDtypeStruct((HW // 4, c_out), jnp.bfloat16),
        in_specs=[_v()] * 5,
        out_specs=_v(),
        scratch_shapes=[pltpu.VMEM((HW, c_out), jnp.float32)],
    )(xf, p["w"], p["b"], p["gamma"], p["beta"])
    return out.reshape(H // 2, W // 2, c_out)


def convlstm_step(x_hwc, w, b, hidden=HIDDEN):
    H, W, c_in = x_hwc.shape
    HW = H * W
    xf = fold3_same(x_hwc)
    kern = functools.partial(_convlstm_kernel, H=H, W=W, C3=3 * c_in, hidden=hidden)
    h = pl.pallas_call(
        kern,
        out_shape=jax.ShapeDtypeStruct((HW, hidden), jnp.bfloat16),
        in_specs=[_v()] * 3,
        out_specs=_v(),
    )(xf, w, b)
    return h.reshape(H, W, hidden)


def dec_stage(x_hwc, p):
    H, W, _ = x_hwc.shape
    c_out = p["w"].shape[-1]
    HW = H * W
    xf = fold2_deconv(x_hwc)
    kern = functools.partial(_dec_stage_kernel, H=H, W=W)
    phases = pl.pallas_call(
        kern,
        out_shape=jax.ShapeDtypeStruct((4, HW, c_out), jnp.bfloat16),
        in_specs=[_v()] * 5,
        out_specs=_v(),
    )(xf, p["w"], p["b"], p["gamma"], p["beta"])
    return interleave_phases(phases, H, W, c_out)


def dec_cls_stage(x_hwc, p, cls_w, cls_b):
    H, W, _ = x_hwc.shape
    HW = H * W
    xf = fold2_deconv(x_hwc)
    kern = functools.partial(_dec_cls_kernel, H=H, W=W)
    phases = pl.pallas_call(
        kern,
        out_shape=jax.ShapeDtypeStruct((HW, 4), jnp.float32),
        in_specs=[_v()] * 7,
        out_specs=_v(),
    )(xf, p["w"], p["b"], p["gamma"], p["beta"], cls_w, cls_b)
    score = phases.reshape(H, W, 2, 2)
    return jnp.transpose(score, (0, 2, 1, 3)).reshape(2 * H, 2 * W)


# --------------------------------------------------------------------------
# Deterministic parameter construction (initType == 'default', biases zero)
# --------------------------------------------------------------------------
def init_params(key, num_channels, hidden=HIDDEN):
    keys = iter(jax.random.split(key, 12))

    def normal(shape, n):
        return (jnp.sqrt(2.0 / n) * jax.random.normal(next(keys), shape)).astype(jnp.float32)

    def conv_block(cin, cout):
        w = normal((cout, cin, 3, 3), 9 * cout)
        return dict(w=conv_w_to_mat(w).astype(jnp.bfloat16),
                    b=jnp.zeros((1, cout), jnp.float32),
                    gamma=jnp.ones((1, cout), jnp.float32),
                    beta=jnp.zeros((1, cout), jnp.float32))

    def deconv_block(cin, cout):
        w = normal((cin, cout, 3, 3), 9 * cout)
        return dict(w=deconv_w_to_phase_mats(w).astype(jnp.bfloat16),
                    b=jnp.zeros((1, cout), jnp.float32),
                    gamma=jnp.ones((1, cout), jnp.float32),
                    beta=jnp.zeros((1, cout), jnp.float32))

    p = dict(
        conv1=conv_block(num_channels, 16),
        conv2=conv_block(16, 32),
        conv3=conv_block(32, 64),
        deconv3=deconv_block(64, 32),
        deconv2=deconv_block(32, 16),
        deconv1=deconv_block(16, 8),
    )
    # ConvLSTM conv: (4*hidden, 64+hidden, 3, 3).  With s=None, h == 0, so only the
    # x-part (first 64 input channels) of the weight contributes.
    lstm_w = normal((4 * hidden, 64 + hidden, 3, 3), 9 * 4 * hidden)
    p["lstm_w"] = conv_w_to_mat(lstm_w[:, :64, :, :]).astype(jnp.bfloat16)
    p["lstm_b"] = jnp.zeros((1, 4 * hidden), jnp.float32)
    cls_w = normal((1, 8, 1, 1), 1 * 1 * 1)
    p["cls_w"] = cls_w.reshape(1, 8)                     # row vector for the VPU weighted sum
    p["cls_b"] = jnp.zeros((1, 1), jnp.float32)
    return p


# --------------------------------------------------------------------------
# Forward pass (batch = 1, matching self.batchsize in the PyTorch module)
# --------------------------------------------------------------------------
def forward(x_nchw, params):
    x = jnp.transpose(x_nchw[0], (1, 2, 0)).astype(jnp.float32)   # (H, W, Cin)

    c1 = enc_stage(x, params["conv1"])           # (H/2, W/2, 16)
    c2 = enc_stage(c1, params["conv2"])          # (H/4, W/4, 32)
    c3 = enc_stage(c2, params["conv3"])          # (H/8, W/8, 64)

    h = convlstm_step(c3, params["lstm_w"], params["lstm_b"])     # (H/8, W/8, 64)

    d3 = dec_stage(h, params["deconv3"])         # (H/4, W/4, 32)
    d2 = dec_stage(d3, params["deconv2"])        # (H/2, W/2, 16)
    score = dec_cls_stage(d2, params["deconv1"], params["cls_w"], params["cls_b"])  # (H, W)

    # softmax=False in the constructor -> raw classifier scores.
    # TODO(synk): softmax branch (dim=1 over a single channel) not exercised.
    return score[None, None, :, :]               # (1, 1, H, W)


# --------------------------------------------------------------------------
if __name__ == "__main__":
    key = jax.random.PRNGKey(0)
    kx, kp = jax.random.split(key)

    num_channels, H, W = 4, 16, 16
    x = jax.random.normal(kx, (1, num_channels, H, W), dtype=jnp.float32)   # NCHW

    params = init_params(kp, num_channels)
    out = jax.jit(forward)(x, params)
    out = jax.block_until_ready(out)

    assert out.shape == (1, 1, H, W), out.shape
    assert bool(jnp.all(jnp.isfinite(out)))
    print("KERNEL_OK")
</pallas_src>

<mosaic_0001>
module attributes {stable_mosaic.version = 11 : i64} {
  func.func @_enc_stage_kernel(%arg0: memref<288x12xbf16, #tpu.memory_space<vmem>>, %arg1: memref<36x16xbf16, #tpu.memory_space<vmem>>, %arg2: memref<1x16xf32, #tpu.memory_space<vmem>>, %arg3: memref<1x16xf32, #tpu.memory_space<vmem>>, %arg4: memref<1x16xf32, #tpu.memory_space<vmem>>, %arg5: memref<64x16xbf16, #tpu.memory_space<vmem>>, %arg6: memref<256x16xf32, #tpu.memory_space<vmem>>) attributes {dimension_semantics = [], scalar_prefetch = 0 : i64, scratch_operands = 1 : i64, tpu.core_type = #tpu.core_type<tc>} {
    %c0 = arith.constant 0 : index
    %c0_0 = arith.constant 0 : index
    %0 = vector.load %arg0[%c0, %c0_0] : memref<288x12xbf16, #tpu.memory_space<vmem>>, vector<288x12xbf16>
    %c0_1 = arith.constant 0 : index
    %c0_2 = arith.constant 0 : index
    %1 = vector.load %arg1[%c0_1, %c0_2] : memref<36x16xbf16, #tpu.memory_space<vmem>>, vector<36x16xbf16>
    %2 = vector.extract_strided_slice %0 {offsets = [0, 0], sizes = [256, 12], strides = [1, 1]} : vector<288x12xbf16> to vector<256x12xbf16>
    %3 = vector.extract_strided_slice %1 {offsets = [0, 0], sizes = [12, 16], strides = [1, 1]} : vector<36x16xbf16> to vector<12x16xbf16>
    %cst = arith.constant dense<0.000000e+00> : vector<256x16xf32>
    %4 = tpu.matmul %2, %3, %cst {dimension_numbers = #tpu.dot_dimension_numbers<[1], [0], [0], [1], [0, 0, 1, 1], [], []>} : vector<256x12xbf16>, vector<12x16xbf16>, vector<256x16xf32> -> vector<256x16xf32>
    %5 = vector.extract_strided_slice %0 {offsets = [16, 0], sizes = [256, 12], strides = [1, 1]} : vector<288x12xbf16> to vector<256x12xbf16>
    %6 = vector.extract_strided_slice %1 {offsets = [12, 0], sizes = [12, 16], strides = [1, 1]} : vector<36x16xbf16> to vector<12x16xbf16>
    %cst_3 = arith.constant dense<0.000000e+00> : vector<256x16xf32>
    %7 = tpu.matmul %5, %6, %cst_3 {dimension_numbers = #tpu.dot_dimension_numbers<[1], [0], [0], [1], [0, 0, 1, 1], [], []>} : vector<256x12xbf16>, vector<12x16xbf16>, vector<256x16xf32> -> vector<256x16xf32>
    %8 = arith.addf %4, %7 : vector<256x16xf32>
    %9 = vector.extract_strided_slice %0 {offsets = [32, 0], sizes = [256, 12], strides = [1, 1]} : vector<288x12xbf16> to vector<256x12xbf16>
    %10 = vector.extract_strided_slice %1 {offsets = [24, 0], sizes = [12, 16], strides = [1, 1]} : vector<36x16xbf16> to vector<12x16xbf16>
    %cst_4 = arith.constant dense<0.000000e+00> : vector<256x16xf32>
    %11 = tpu.matmul %9, %10, %cst_4 {dimension_numbers = #tpu.dot_dimension_numbers<[1], [0], [0], [1], [0, 0, 1, 1], [], []>} : vector<256x12xbf16>, vector<12x16xbf16>, vector<256x16xf32> -> vector<256x16xf32>
    %12 = arith.addf %8, %11 : vector<256x16xf32>
    %c0_5 = arith.constant 0 : index
    %c0_6 = arith.constant 0 : index
    %13 = vector.load %arg2[%c0_5, %c0_6] : memref<1x16xf32, #tpu.memory_space<vmem>>, vector<1x16xf32>
    %14 = vector.broadcast %13 : vector<1x16xf32> to vector<256x16xf32>
    %15 = arith.addf %12, %14 : vector<256x16xf32>
    %cst_7 = arith.constant 0.000000e+00 : f32
    %16 = vector.broadcast %cst_7 : f32 to vector<256x16xf32>
    %17 = arith.maximumf %15, %16 : vector<256x16xf32>
    %cst_8 = arith.constant dense<0.000000e+00> : vector<16xf32>
    %18 = vector.multi_reduction <add>, %17, %cst_8 [0] : vector<256x16xf32> to vector<16xf32>
    %19 = vector.shape_cast %18 : vector<16xf32> to vector<1x16xf32>
    %cst_9 = arith.constant 2.560000e+02 : f32
    %20 = vector.broadcast %cst_9 : f32 to vector<1x16xf32>
    %21 = arith.divf %19, %20 : vector<1x16xf32>
    %22 = vector.broadcast %21 : vector<1x16xf32> to vector<256x16xf32>
    %23 = arith.subf %17, %22 : vector<256x16xf32>
    %24 = arith.mulf %23, %23 : vector<256x16xf32>
    %cst_10 = arith.constant dense<0.000000e+00> : vector<16xf32>
    %25 = vector.multi_reduction <add>, %24, %cst_10 [0] : vector<256x16xf32> to vector<16xf32>
    %26 = vector.shape_cast %25 : vector<16xf32> to vector<1x16xf32>
    %cst_11 = arith.constant 0.00392156886 : f32
    %27 = vector.broadcast %cst_11 : f32 to vector<1x16xf32>
    %28 = arith.mulf %26, %27 : vector<1x16xf32>
    %c0_12 = arith.constant 0 : index
    %c0_13 = arith.constant 0 : index
    %29 = vector.load %arg3[%c0_12, %c0_13] : memref<1x16xf32, #tpu.memory_space<vmem>>, vector<1x16xf32>
    %30 = math.sqrt %28 : vector<1x16xf32>
    %cst_14 = arith.constant 9.99999997E-7 : f32
    %31 = vector.broadcast %cst_14 : f32 to vector<1x16xf32>
    %32 = arith.addf %30, %31 : vector<1x16xf32>
    %33 = tpu.reciprocal %32 {approx = true} : vector<1x16xf32> -> vector<1x16xf32>
    %34 = arith.mulf %29, %33 : vector<1x16xf32>
    %35 = vector.broadcast %34 : vector<1x16xf32> to vector<256x16xf32>
    %36 = arith.mulf %23, %35 : vector<256x16xf32>
    %c0_15 = arith.constant 0 : index
    %c0_16 = arith.constant 0 : index
    %37 = vector.load %arg4[%c0_15, %c0_16] : memref<1x16xf32, #tpu.memory_space<vmem>>, vector<1x16xf32>
    %38 = vector.broadcast %37 : vector<1x16xf32> to vector<256x16xf32>
    %39 = arith.addf %36, %38 : vector<256x16xf32>
    %c0_17 = arith.constant 0 : index
    %c0_18 = arith.constant 0 : index
    %40 = vector.load %arg6[%c0_17, %c0_18] : memref<256x16xf32, #tpu.memory_space<vmem>>, vector<256x16xf32>
    tpu.vector_store %arg6[%c0_17, %c0_18], %39 {strides = array<i32>} : memref<256x16xf32, #tpu.memory_space<vmem>>, vector<256x16xf32>,
    %c0_19 = arith.constant 0 : index
    %c0_20 = arith.constant 0 : index
    %41 = tpu.strided_load %arg6[%c0_19, %c0_20] {strides = array<i32: 2, 1>} : memref<256x16xf32, #tpu.memory_space<vmem>>, vector<128x16xf32>
    %c1 = arith.constant 1 : index
    %c0_21 = arith.constant 0 : index
    %42 = tpu.strided_load %arg6[%c1, %c0_21] {strides = array<i32: 2, 1>} : memref<256x16xf32, #tpu.memory_space<vmem>>, vector<128x16xf32>
    %43 = arith.maximumf %41, %42 : vector<128x16xf32>
    %44 = vector.extract_strided_slice %43 {offsets = [0, 0], sizes = [8, 16], strides = [1, 1]} : vector<128x16xf32> to vector<8x16xf32>
    %45 = vector.extract_strided_slice %43 {offsets = [16, 0], sizes = [8, 16], strides = [1, 1]} : vector<128x16xf32> to vector<8x16xf32>
    %46 = vector.extract_strided_slice %43 {offsets = [32, 0], sizes = [8, 16], strides = [1, 1]} : vector<128x16xf32> to vector<8x16xf32>
    %47 = vector.extract_strided_slice %43 {offsets = [48, 0], sizes = [8, 16], strides = [1, 1]} : vector<128x16xf32> to vector<8x16xf32>
    %48 = vector.extract_strided_slice %43 {offsets = [64, 0], sizes = [8, 16], strides = [1, 1]} : vector<128x16xf32> to vector<8x16xf32>
    %49 = vector.extract_strided_slice %43 {offsets = [80, 0], sizes = [8, 16], strides = [1, 1]} : vector<128x16xf32> to vector<8x16xf32>
    %50 = vector.extract_strided_slice %43 {offsets = [96, 0], sizes = [8, 16], strides = [1, 1]} : vector<128x16xf32> to vector<8x16xf32>
    %51 = vector.extract_strided_slice %43 {offsets = [112, 0], sizes = [8, 16], strides = [1, 1]} : vector<128x16xf32> to vector<8x16xf32>
    %52 = tpu.concatenate %44, %45, %46, %47, %48, %49, %50, %51 in 0 : vector<8x16xf32>, vector<8x16xf32>, vector<8x16xf32>, vector<8x16xf32>, vector<8x16xf32>, vector<8x16xf32>, vector<8x16xf32>, vector<8x16xf32> -> vector<64x16xf32>
    %53 = vector.extract_strided_slice %43 {offsets = [8, 0], sizes = [8, 16], strides = [1, 1]} : vector<128x16xf32> to vector<8x16xf32>
    %54 = vector.extract_strided_slice %43 {offsets = [24, 0], sizes = [8, 16], strides = [1, 1]} : vector<128x16xf32> to vector<8x16xf32>
    %55 = vector.extract_strided_slice %43 {offsets = [40, 0], sizes = [8, 16], strides = [1, 1]} : vector<128x16xf32> to vector<8x16xf32>
    %56 = vector.extract_strided_slice %43 {offsets = [56, 0], sizes = [8, 16], strides = [1, 1]} : vector<128x16xf32> to vector<8x16xf32>
    %57 = vector.extract_strided_slice %43 {offsets = [72, 0], sizes = [8, 16], strides = [1, 1]} : vector<128x16xf32> to vector<8x16xf32>
    %58 = vector.extract_strided_slice %43 {offsets = [88, 0], sizes = [8, 16], strides = [1, 1]} : vector<128x16xf32> to vector<8x16xf32>
    %59 = vector.extract_strided_slice %43 {offsets = [104, 0], sizes = [8, 16], strides = [1, 1]} : vector<128x16xf32> to vector<8x16xf32>
    %60 = vector.extract_strided_slice %43 {offsets = [120, 0], sizes = [8, 16], strides = [1, 1]} : vector<128x16xf32> to vector<8x16xf32>
    %61 = tpu.concatenate %53, %54, %55, %56, %57, %58, %59, %60 in 0 : vector<8x16xf32>, vector<8x16xf32>, vector<8x16xf32>, vector<8x16xf32>, vector<8x16xf32>, vector<8x16xf32>, vector<8x16xf32>, vector<8x16xf32> -> vector<64x16xf32>
    %62 = arith.maximumf %52, %61 : vector<64x16xf32>
    %63 = arith.truncf %62 : vector<64x16xf32> to vector<64x16xbf16>
    %c0_22 = arith.constant 0 : index
    %c0_23 = arith.constant 0 : index
    %64 = vector.load %arg5[%c0_22, %c0_23] : memref<64x16xbf16, #tpu.memory_space<vmem>>, vector<64x16xbf16>
    tpu.vector_store %arg5[%c0_22, %c0_23], %63 {strides = array<i32>} : memref<64x16xbf16, #tpu.memory_space<vmem>>, vector<64x16xbf16>,
    return
  }
}

module attributes {stable_mosaic.version = 11 : i64} {
  func.func @_enc_stage_kernel(%arg0: memref<80x48xbf16, #tpu.memory_space<vmem>>, %arg1: memref<144x32xbf16, #tpu.memory_space<vmem>>, %arg2: memref<1x32xf32, #tpu.memory_space<vmem>>, %arg3: memref<1x32xf32, #tpu.memory_space<vmem>>, %arg4: memref<1x32xf32, #tpu.memory_space<vmem>>, %arg5: memref<16x32xbf16, #tpu.memory_space<vmem>>, %arg6: memref<64x32xf32, #tpu.memory_space<vmem>>) attributes {dimension_semantics = [], scalar_prefetch = 0 : i64, scratch_operands = 1 : i64, tpu.core_type = #tpu.core_type<tc>} {
    %c0 = arith.constant 0 : index
    %c0_0 = arith.constant 0 : index
    %0 = vector.load %arg0[%c0, %c0_0] : memref<80x48xbf16, #tpu.memory_space<vmem>>, vector<80x48xbf16>
    %c0_1 = arith.constant 0 : index
    %c0_2 = arith.constant 0 : index
    %1 = vector.load %arg1[%c0_1, %c0_2] : memref<144x32xbf16, #tpu.memory_space<vmem>>, vector<144x32xbf16>
    %2 = vector.extract_strided_slice %0 {offsets = [0, 0], sizes = [64, 48], strides = [1, 1]} : vector<80x48xbf16> to vector<64x48xbf16>
    %3 = vector.extract_strided_slice %1 {offsets = [0, 0], sizes = [48, 32], strides = [1, 1]} : vector<144x32xbf16> to vector<48x32xbf16>
    %cst = arith.constant dense<0.000000e+00> : vector<64x32xf32>
    %4 = tpu.matmul %2, %3, %cst {dimension_numbers = #tpu.dot_dimension_numbers<[1], [0], [0], [1], [0, 0, 1, 1], [], []>} : vector<64x48xbf16>, vector<48x32xbf16>, vector<64x32xf32> -> vector<64x32xf32>
    %5 = vector.extract_strided_slice %0 {offsets = [8, 0], sizes = [64, 48], strides = [1, 1]} : vector<80x48xbf16> to vector<64x48xbf16>
    %6 = vector.extract_strided_slice %1 {offsets = [48, 0], sizes = [48, 32], strides = [1, 1]} : vector<144x32xbf16> to vector<48x32xbf16>
    %cst_3 = arith.constant dense<0.000000e+00> : vector<64x32xf32>
    %7 = tpu.matmul %5, %6, %cst_3 {dimension_numbers = #tpu.dot_dimension_numbers<[1], [0], [0], [1], [0, 0, 1, 1], [], []>} : vector<64x48xbf16>, vector<48x32xbf16>, vector<64x32xf32> -> vector<64x32xf32>
    %8 = arith.addf %4, %7 : vector<64x32xf32>
    %9 = vector.extract_strided_slice %0 {offsets = [16, 0], sizes = [64, 48], strides = [1, 1]} : vector<80x48xbf16> to vector<64x48xbf16>
    %10 = vector.extract_strided_slice %1 {offsets = [96, 0], sizes = [48, 32], strides = [1, 1]} : vector<144x32xbf16> to vector<48x32xbf16>
    %cst_4 = arith.constant dense<0.000000e+00> : vector<64x32xf32>
    %11 = tpu.matmul %9, %10, %cst_4 {dimension_numbers = #tpu.dot_dimension_numbers<[1], [0], [0], [1], [0, 0, 1, 1], [], []>} : vector<64x48xbf16>, vector<48x32xbf16>, vector<64x32xf32> -> vector<64x32xf32>
    %12 = arith.addf %8, %11 : vector<64x32xf32>
    %c0_5 = arith.constant 0 : index
    %c0_6 = arith.constant 0 : index
    %13 = vector.load %arg2[%c0_5, %c0_6] : memref<1x32xf32, #tpu.memory_space<vmem>>, vector<1x32xf32>
    %14 = vector.broadcast %13 : vector<1x32xf32> to vector<64x32xf32>
    %15 = arith.addf %12, %14 : vector<64x32xf32>
    %cst_7 = arith.constant 0.000000e+00 : f32
    %16 = vector.broadcast %cst_7 : f32 to vector<64x32xf32>
    %17 = arith.maximumf %15, %16 : vector<64x32xf32>
    %cst_8 = arith.constant dense<0.000000e+00> : vector<32xf32>
    %18 = vector.multi_reduction <add>, %17, %cst_8 [0] : vector<64x32xf32> to vector<32xf32>
    %19 = vector.shape_cast %18 : vector<32xf32> to vector<1x32xf32>
    %cst_9 = arith.constant 6.400000e+01 : f32
    %20 = vector.broadcast %cst_9 : f32 to vector<1x32xf32>
    %21 = arith.divf %19, %20 : vector<1x32xf32>
    %22 = vector.broadcast %21 : vector<1x32xf32> to vector<64x32xf32>
    %23 = arith.subf %17, %22 : vector<64x32xf32>
    %24 = arith.mulf %23, %23 : vector<64x32xf32>
    %cst_10 = arith.constant dense<0.000000e+00> : vector<32xf32>
    %25 = vector.multi_reduction <add>, %24, %cst_10 [0] : vector<64x32xf32> to vector<32xf32>
    %26 = vector.shape_cast %25 : vector<32xf32> to vector<1x32xf32>
    %cst_11 = arith.constant 0.0158730168 : f32
    %27 = vector.broadcast %cst_11 : f32 to vector<1x32xf32>
    %28 = arith.mulf %26, %27 : vector<1x32xf32>
    %c0_12 = arith.constant 0 : index
    %c0_13 = arith.constant 0 : index
    %29 = vector.load %arg3[%c0_12, %c0_13] : memref<1x32xf32, #tpu.memory_space<vmem>>, vector<1x32xf32>
    %30 = math.sqrt %28 : vector<1x32xf32>
    %cst_14 = arith.constant 9.99999997E-7 : f32
    %31 = vector.broadcast %cst_14 : f32 to vector<1x32xf32>
    %32 = arith.addf %30, %31 : vector<1x32xf32>
    %33 = tpu.reciprocal %32 {approx = true} : vector<1x32xf32> -> vector<1x32xf32>
    %34 = arith.mulf %29, %33 : vector<1x32xf32>
    %35 = vector.broadcast %34 : vector<1x32xf32> to vector<64x32xf32>
    %36 = arith.mulf %23, %35 : vector<64x32xf32>
    %c0_15 = arith.constant 0 : index
    %c0_16 = arith.constant 0 : index
    %37 = vector.load %arg4[%c0_15, %c0_16] : memref<1x32xf32, #tpu.memory_space<vmem>>, vector<1x32xf32>
    %38 = vector.broadcast %37 : vector<1x32xf32> to vector<64x32xf32>
    %39 = arith.addf %36, %38 : vector<64x32xf32>
    %c0_17 = arith.constant 0 : index
    %c0_18 = arith.constant 0 : index
    %40 = vector.load %arg6[%c0_17, %c0_18] : memref<64x32xf32, #tpu.memory_space<vmem>>, vector<64x32xf32>
    tpu.vector_store %arg6[%c0_17, %c0_18], %39 {strides = array<i32>} : memref<64x32xf32, #tpu.memory_space<vmem>>, vector<64x32xf32>,
    %c0_19 = arith.constant 0 : index
    %c0_20 = arith.constant 0 : index
    %41 = tpu.strided_load %arg6[%c0_19, %c0_20] {strides = array<i32: 2, 1>} : memref<64x32xf32, #tpu.memory_space<vmem>>, vector<32x32xf32>
    %c1 = arith.constant 1 : index
    %c0_21 = arith.constant 0 : index
    %42 = tpu.strided_load %arg6[%c1, %c0_21] {strides = array<i32: 2, 1>} : memref<64x32xf32, #tpu.memory_space<vmem>>, vector<32x32xf32>
    %43 = arith.maximumf %41, %42 : vector<32x32xf32>
    %44 = vector.extract_strided_slice %43 {offsets = [0, 0], sizes = [4, 32], strides = [1, 1]} : vector<32x32xf32> to vector<4x32xf32>
    %45 = vector.extract_strided_slice %43 {offsets = [8, 0], sizes = [4, 32], strides = [1, 1]} : vector<32x32xf32> to vector<4x32xf32>
    %46 = vector.extract_strided_slice %43 {offsets = [16, 0], sizes = [4, 32], strides = [1, 1]} : vector<32x32xf32> to vector<4x32xf32>
    %47 = vector.extract_strided_slice %43 {offsets = [24, 0], sizes = [4, 32], strides = [1, 1]} : vector<32x32xf32> to vector<4x32xf32>
    %48 = tpu.concatenate %44, %45, %46, %47 in 0 : vector<4x32xf32>, vector<4x32xf32>, vector<4x32xf32>, vector<4x32xf32> -> vector<16x32xf32>
    %49 = vector.extract_strided_slice %43 {offsets = [4, 0], sizes = [4, 32], strides = [1, 1]} : vector<32x32xf32> to vector<4x32xf32>
    %50 = vector.extract_strided_slice %43 {offsets = [12, 0], sizes = [4, 32], strides = [1, 1]} : vector<32x32xf32> to vector<4x32xf32>
    %51 = vector.extract_strided_slice %43 {offsets = [20, 0], sizes = [4, 32], strides = [1, 1]} : vector<32x32xf32> to vector<4x32xf32>
    %52 = vector.extract_strided_slice %43 {offsets = [28, 0], sizes = [4, 32], strides = [1, 1]} : vector<32x32xf32> to vector<4x32xf32>
    %53 = tpu.concatenate %49, %50, %51, %52 in 0 : vector<4x32xf32>, vector<4x32xf32>, vector<4x32xf32>, vector<4x32xf32> -> vector<16x32xf32>
    %54 = arith.maximumf %48, %53 : vector<16x32xf32>
    %55 = arith.truncf %54 : vector<16x32xf32> to vector<16x32xbf16>
    %c0_22 = arith.constant 0 : index
    %c0_23 = arith.constant 0 : index
    %56 = vector.load %arg5[%c0_22, %c0_23] : memref<16x32xbf16, #tpu.memory_space<vmem>>, vector<16x32xbf16>
    tpu.vector_store %arg5[%c0_22, %c0_23], %55 {strides = array<i32>} : memref<16x32xbf16, #tpu.memory_space<vmem>>, vector<16x32xbf16>,
    return
  }
}

module attributes {stable_mosaic.version = 11 : i64} {
  func.func @_enc_stage_kernel(%arg0: memref<24x96xbf16, #tpu.memory_space<vmem>>, %arg1: memref<288x64xbf16, #tpu.memory_space<vmem>>, %arg2: memref<1x64xf32, #tpu.memory_space<vmem>>, %arg3: memref<1x64xf32, #tpu.memory_space<vmem>>, %arg4: memref<1x64xf32, #tpu.memory_space<vmem>>, %arg5: memref<4x64xbf16, #tpu.memory_space<vmem>>, %arg6: memref<16x64xf32, #tpu.memory_space<vmem>>) attributes {dimension_semantics = [], scalar_prefetch = 0 : i64, scratch_operands = 1 : i64, tpu.core_type = #tpu.core_type<tc>} {
    %c0 = arith.constant 0 : index
    %c0_0 = arith.constant 0 : index
    %0 = vector.load %arg0[%c0, %c0_0] : memref<24x96xbf16, #tpu.memory_space<vmem>>, vector<24x96xbf16>
    %c0_1 = arith.constant 0 : index
    %c0_2 = arith.constant 0 : index
    %1 = vector.load %arg1[%c0_1, %c0_2] : memref<288x64xbf16, #tpu.memory_space<vmem>>, vector<288x64xbf16>
    %2 = vector.extract_strided_slice %0 {offsets = [0, 0], sizes = [16, 96], strides = [1, 1]} : vector<24x96xbf16> to vector<16x96xbf16>
    %3 = vector.extract_strided_slice %1 {offsets = [0, 0], sizes = [96, 64], strides = [1, 1]} : vector<288x64xbf16> to vector<96x64xbf16>
    %cst = arith.constant dense<0.000000e+00> : vector<16x64xf32>
    %4 = tpu.matmul %2, %3, %cst {dimension_numbers = #tpu.dot_dimension_numbers<[1], [0], [0], [1], [0, 0, 1, 1], [], []>} : vector<16x96xbf16>, vector<96x64xbf16>, vector<16x64xf32> -> vector<16x64xf32>
    %5 = vector.extract_strided_slice %0 {offsets = [4, 0], sizes = [16, 96], strides = [1, 1]} : vector<24x96xbf16> to vector<16x96xbf16>
    %6 = vector.extract_strided_slice %1 {offsets = [96, 0], sizes = [96, 64], strides = [1, 1]} : vector<288x64xbf16> to vector<96x64xbf16>
    %cst_3 = arith.constant dense<0.000000e+00> : vector<16x64xf32>
    %7 = tpu.matmul %5, %6, %cst_3 {dimension_numbers = #tpu.dot_dimension_numbers<[1], [0], [0], [1], [0, 0, 1, 1], [], []>} : vector<16x96xbf16>, vector<96x64xbf16>, vector<16x64xf32> -> vector<16x64xf32>
    %8 = arith.addf %4, %7 : vector<16x64xf32>
    %9 = vector.extract_strided_slice %0 {offsets = [8, 0], sizes = [16, 96], strides = [1, 1]} : vector<24x96xbf16> to vector<16x96xbf16>
    %10 = vector.extract_strided_slice %1 {offsets = [192, 0], sizes = [96, 64], strides = [1, 1]} : vector<288x64xbf16> to vector<96x64xbf16>
    %cst_4 = arith.constant dense<0.000000e+00> : vector<16x64xf32>
    %11 = tpu.matmul %9, %10, %cst_4 {dimension_numbers = #tpu.dot_dimension_numbers<[1], [0], [0], [1], [0, 0, 1, 1], [], []>} : vector<16x96xbf16>, vector<96x64xbf16>, vector<16x64xf32> -> vector<16x64xf32>
    %12 = arith.addf %8, %11 : vector<16x64xf32>
    %c0_5 = arith.constant 0 : index
    %c0_6 = arith.constant 0 : index
    %13 = vector.load %arg2[%c0_5, %c0_6] : memref<1x64xf32, #tpu.memory_space<vmem>>, vector<1x64xf32>
    %14 = vector.broadcast %13 : vector<1x64xf32> to vector<16x64xf32>
    %15 = arith.addf %12, %14 : vector<16x64xf32>
    %cst_7 = arith.constant 0.000000e+00 : f32
    %16 = vector.broadcast %cst_7 : f32 to vector<16x64xf32>
    %17 = arith.maximumf %15, %16 : vector<16x64xf32>
    %cst_8 = arith.constant dense<0.000000e+00> : vector<64xf32>
    %18 = vector.multi_reduction <add>, %17, %cst_8 [0] : vector<16x64xf32> to vector<64xf32>
    %19 = vector.shape_cast %18 : vector<64xf32> to vector<1x64xf32>
    %cst_9 = arith.constant 1.600000e+01 : f32
    %20 = vector.broadcast %cst_9 : f32 to vector<1x64xf32>
    %21 = arith.divf %19, %20 : vector<1x64xf32>
    %22 = vector.broadcast %21 : vector<1x64xf32> to vector<16x64xf32>
    %23 = arith.subf %17, %22 : vector<16x64xf32>
    %24 = arith.mulf %23, %23 : vector<16x64xf32>
    %cst_10 = arith.constant dense<0.000000e+00> : vector<64xf32>
    %25 = vector.multi_reduction <add>, %24, %cst_10 [0] : vector<16x64xf32> to vector<64xf32>
    %26 = vector.shape_cast %25 : vector<64xf32> to vector<1x64xf32>
    %cst_11 = arith.constant 0.0666666701 : f32
    %27 = vector.broadcast %cst_11 : f32 to vector<1x64xf32>
    %28 = arith.mulf %26, %27 : vector<1x64xf32>
    %c0_12 = arith.constant 0 : index
    %c0_13 = arith.constant 0 : index
    %29 = vector.load %arg3[%c0_12, %c0_13] : memref<1x64xf32, #tpu.memory_space<vmem>>, vector<1x64xf32>
    %30 = math.sqrt %28 : vector<1x64xf32>
    %cst_14 = arith.constant 9.99999997E-7 : f32
    %31 = vector.broadcast %cst_14 : f32 to vector<1x64xf32>
    %32 = arith.addf %30, %31 : vector<1x64xf32>
    %33 = tpu.reciprocal %32 {approx = true} : vector<1x64xf32> -> vector<1x64xf32>
    %34 = arith.mulf %29, %33 : vector<1x64xf32>
    %35 = vector.broadcast %34 : vector<1x64xf32> to vector<16x64xf32>
    %36 = arith.mulf %23, %35 : vector<16x64xf32>
    %c0_15 = arith.constant 0 : index
    %c0_16 = arith.constant 0 : index
    %37 = vector.load %arg4[%c0_15, %c0_16] : memref<1x64xf32, #tpu.memory_space<vmem>>, vector<1x64xf32>
    %38 = vector.broadcast %37 : vector<1x64xf32> to vector<16x64xf32>
    %39 = arith.addf %36, %38 : vector<16x64xf32>
    %c0_17 = arith.constant 0 : index
    %c0_18 = arith.constant 0 : index
    %40 = vector.load %arg6[%c0_17, %c0_18] : memref<16x64xf32, #tpu.memory_space<vmem>>, vector<16x64xf32>
    tpu.vector_store %arg6[%c0_17, %c0_18], %39 {strides = array<i32>} : memref<16x64xf32, #tpu.memory_space<vmem>>, vector<16x64xf32>,
    %c0_19 = arith.constant 0 : index
    %c0_20 = arith.constant 0 : index
    %41 = tpu.strided_load %arg6[%c0_19, %c0_20] {strides = array<i32: 2, 1>} : memref<16x64xf32, #tpu.memory_space<vmem>>, vector<8x64xf32>
    %c1 = arith.constant 1 : index
    %c0_21 = arith.constant 0 : index
    %42 = tpu.strided_load %arg6[%c1, %c0_21] {strides = array<i32: 2, 1>} : memref<16x64xf32, #tpu.memory_space<vmem>>, vector<8x64xf32>
    %43 = arith.maximumf %41, %42 : vector<8x64xf32>
    %44 = vector.extract_strided_slice %43 {offsets = [0, 0], sizes = [2, 64], strides = [1, 1]} : vector<8x64xf32> to vector<2x64xf32>
    %45 = vector.extract_strided_slice %43 {offsets = [4, 0], sizes = [2, 64], strides = [1, 1]} : vector<8x64xf32> to vector<2x64xf32>
    %46 = tpu.concatenate %44, %45 in 0 : vector<2x64xf32>, vector<2x64xf32> -> vector<4x64xf32>
    %47 = vector.extract_strided_slice %43 {offsets = [2, 0], sizes = [2, 64], strides = [1, 1]} : vector<8x64xf32> to vector<2x64xf32>
    %48 = vector.extract_strided_slice %43 {offsets = [6, 0], sizes = [2, 64], strides = [1, 1]} : vector<8x64xf32> to vector<2x64xf32>
    %49 = tpu.concatenate %47, %48 in 0 : vector<2x64xf32>, vector<2x64xf32> -> vector<4x64xf32>
    %50 = arith.maximumf %46, %49 : vector<4x64xf32>
    %51 = arith.truncf %50 : vector<4x64xf32> to vector<4x64xbf16>
    %c0_22 = arith.constant 0 : index
    %c0_23 = arith.constant 0 : index
    %52 = vector.load %arg5[%c0_22, %c0_23] : memref<4x64xbf16, #tpu.memory_space<vmem>>, vector<4x64xbf16>
    tpu.vector_store %arg5[%c0_22, %c0_23], %51 {strides = array<i32>} : memref<4x64xbf16, #tpu.memory_space<vmem>>, vector<4x64xbf16>,
    return
  }
}

module attributes {stable_mosaic.version = 11 : i64} {
  func.func @_convlstm_kernel(%arg0: memref<8x192xbf16, #tpu.memory_space<vmem>>, %arg1: memref<576x256xbf16, #tpu.memory_space<vmem>>, %arg2: memref<1x256xf32, #tpu.memory_space<vmem>>, %arg3: memref<4x64xbf16, #tpu.memory_space<vmem>>) attributes {dimension_semantics = [], scalar_prefetch = 0 : i64, scratch_operands = 0 : i64, tpu.core_type = #tpu.core_type<tc>} {
    %c0 = arith.constant 0 : index
    %c0_0 = arith.constant 0 : index
    %0 = vector.load %arg0[%c0, %c0_0] : memref<8x192xbf16, #tpu.memory_space<vmem>>, vector<8x192xbf16>
    %c0_1 = arith.constant 0 : index
    %c0_2 = arith.constant 0 : index
    %1 = vector.load %arg1[%c0_1, %c0_2] : memref<576x256xbf16, #tpu.memory_space<vmem>>, vector<576x256xbf16>
    %2 = vector.extract_strided_slice %0 {offsets = [0, 0], sizes = [4, 192], strides = [1, 1]} : vector<8x192xbf16> to vector<4x192xbf16>
    %3 = vector.extract_strided_slice %1 {offsets = [0, 0], sizes = [192, 256], strides = [1, 1]} : vector<576x256xbf16> to vector<192x256xbf16>
    %cst = arith.constant dense<0.000000e+00> : vector<4x256xf32>
    %4 = tpu.matmul %2, %3, %cst {dimension_numbers = #tpu.dot_dimension_numbers<[1], [0], [0], [1], [0, 0, 1, 1], [], []>} : vector<4x192xbf16>, vector<192x256xbf16>, vector<4x256xf32> -> vector<4x256xf32>
    %5 = vector.extract_strided_slice %0 {offsets = [2, 0], sizes = [4, 192], strides = [1, 1]} : vector<8x192xbf16> to vector<4x192xbf16>
    %6 = vector.extract_strided_slice %1 {offsets = [192, 0], sizes = [192, 256], strides = [1, 1]} : vector<576x256xbf16> to vector<192x256xbf16>
    %cst_3 = arith.constant dense<0.000000e+00> : vector<4x256xf32>
    %7 = tpu.matmul %5, %6, %cst_3 {dimension_numbers = #tpu.dot_dimension_numbers<[1], [0], [0], [1], [0, 0, 1, 1], [], []>} : vector<4x192xbf16>, vector<192x256xbf16>, vector<4x256xf32> -> vector<4x256xf32>
    %8 = arith.addf %4, %7 : vector<4x256xf32>
    %9 = vector.extract_strided_slice %0 {offsets = [4, 0], sizes = [4, 192], strides = [1, 1]} : vector<8x192xbf16> to vector<4x192xbf16>
    %10 = vector.extract_strided_slice %1 {offsets = [384, 0], sizes = [192, 256], strides = [1, 1]} : vector<576x256xbf16> to vector<192x256xbf16>
    %cst_4 = arith.constant dense<0.000000e+00> : vector<4x256xf32>
    %11 = tpu.matmul %9, %10, %cst_4 {dimension_numbers = #tpu.dot_dimension_numbers<[1], [0], [0], [1], [0, 0, 1, 1], [], []>} : vector<4x192xbf16>, vector<192x256xbf16>, vector<4x256xf32> -> vector<4x256xf32>
    %12 = arith.addf %8, %11 : vector<4x256xf32>
    %c0_5 = arith.constant 0 : index
    %c0_6 = arith.constant 0 : index
    %13 = vector.load %arg2[%c0_5, %c0_6] : memref<1x256xf32, #tpu.memory_space<vmem>>, vector<1x256xf32>
    %14 = vector.broadcast %13 : vector<1x256xf32> to vector<4x256xf32>
    %15 = arith.addf %12, %14 : vector<4x256xf32>
    %16 = vector.extract_strided_slice %15 {offsets = [0, 0], sizes = [4, 192], strides = [1, 1]} : vector<4x256xf32> to vector<4x192xf32>
    %17 = arith.negf %16 : vector<4x192xf32>
    %18 = math.exp %17 : vector<4x192xf32>
    %cst_7 = arith.constant 1.000000e+00 : f32
    %19 = vector.broadcast %cst_7 : f32 to vector<4x192xf32>
    %20 = arith.addf %19, %18 : vector<4x192xf32>
    %21 = arith.divf %19, %20 : vector<4x192xf32>
    %22 = vector.extract_strided_slice %15 {offsets = [0, 192], sizes = [4, 64], strides = [1, 1]} : vector<4x256xf32> to vector<4x64xf32>
    %23 = math.tanh %22 : vector<4x64xf32>
    %24 = vector.extract_strided_slice %21 {offsets = [0, 0], sizes = [4, 64], strides = [1, 1]} : vector<4x192xf32> to vector<4x64xf32>
    %25 = vector.extract_strided_slice %21 {offsets = [0, 128], sizes = [4, 64], strides = [1, 1]} : vector<4x192xf32> to vector<4x64xf32>
    %26 = arith.mulf %24, %23 : vector<4x64xf32>
    %27 = math.tanh %26 : vector<4x64xf32>
    %28 = arith.mulf %25, %27 : vector<4x64xf32>
    %29 = arith.truncf %28 : vector<4x64xf32> to vector<4x64xbf16>
    %c0_8 = arith.constant 0 : index
    %c0_9 = arith.constant 0 : index
    %30 = vector.load %arg3[%c0_8, %c0_9] : memref<4x64xbf16, #tpu.memory_space<vmem>>, vector<4x64xbf16>
    tpu.vector_store %arg3[%c0_8, %c0_9], %29 {strides = array<i32>} : memref<4x64xbf16, #tpu.memory_space<vmem>>, vector<4x64xbf16>,
    return
  }
}

module attributes {stable_mosaic.version = 11 : i64} {
  func.func @_dec_stage_kernel(%arg0: memref<6x128xbf16, #tpu.memory_space<vmem>>, %arg1: memref<6x128x32xbf16, #tpu.memory_space<vmem>>, %arg2: memref<1x32xf32, #tpu.memory_space<vmem>>, %arg3: memref<1x32xf32, #tpu.memory_space<vmem>>, %arg4: memref<1x32xf32, #tpu.memory_space<vmem>>, %arg5: memref<4x4x32xbf16, #tpu.memory_space<vmem>>) attributes {dimension_semantics = [], scalar_prefetch = 0 : i64, scratch_operands = 0 : i64, tpu.core_type = #tpu.core_type<tc>} {
    %c0 = arith.constant 0 : index
    %c0_0 = arith.constant 0 : index
    %0 = vector.load %arg0[%c0, %c0_0] : memref<6x128xbf16, #tpu.memory_space<vmem>>, vector<6x128xbf16>
    %1 = vector.extract_strided_slice %0 {offsets = [0, 0], sizes = [4, 128], strides = [1, 1]} : vector<6x128xbf16> to vector<4x128xbf16>
    %2 = vector.extract_strided_slice %0 {offsets = [2, 0], sizes = [4, 128], strides = [1, 1]} : vector<6x128xbf16> to vector<4x128xbf16>
    %c0_1 = arith.constant 0 : index
    %c0_2 = arith.constant 0 : index
    %3 = vector.load %arg2[%c0_1, %c0_2] : memref<1x32xf32, #tpu.memory_space<vmem>>, vector<1x32xf32>
    %c0_3 = arith.constant 0 : index
    %c0_4 = arith.constant 0 : index
    %c0_5 = arith.constant 0 : index
    %4 = vector.load %arg1[%c0_3, %c0_4, %c0_5] : memref<6x128x32xbf16, #tpu.memory_space<vmem>>, vector<1x128x32xbf16>
    %5 = vector.shape_cast %4 : vector<1x128x32xbf16> to vector<128x32xbf16>
    %cst = arith.constant dense<0.000000e+00> : vector<4x32xf32>
    %6 = tpu.matmul %1, %5, %cst {dimension_numbers = #tpu.dot_dimension_numbers<[1], [0], [0], [1], [0, 0, 1, 1], [], []>} : vector<4x128xbf16>, vector<128x32xbf16>, vector<4x32xf32> -> vector<4x32xf32>
    %7 = vector.broadcast %3 : vector<1x32xf32> to vector<4x32xf32>
    %8 = arith.addf %6, %7 : vector<4x32xf32>
    %cst_6 = arith.constant 0.000000e+00 : f32
    %9 = vector.broadcast %cst_6 : f32 to vector<4x32xf32>
    %10 = arith.maximumf %8, %9 : vector<4x32xf32>
    %c1 = arith.constant 1 : index
    %c0_7 = arith.constant 0 : index
    %c0_8 = arith.constant 0 : index
    %11 = vector.load %arg1[%c1, %c0_7, %c0_8] : memref<6x128x32xbf16, #tpu.memory_space<vmem>>, vector<1x128x32xbf16>
    %12 = vector.shape_cast %11 : vector<1x128x32xbf16> to vector<128x32xbf16>
    %cst_9 = arith.constant dense<0.000000e+00> : vector<4x32xf32>
    %13 = tpu.matmul %1, %12, %cst_9 {dimension_numbers = #tpu.dot_dimension_numbers<[1], [0], [0], [1], [0, 0, 1, 1], [], []>} : vector<4x128xbf16>, vector<128x32xbf16>, vector<4x32xf32> -> vector<4x32xf32>
    %14 = vector.broadcast %3 : vector<1x32xf32> to vector<4x32xf32>
    %15 = arith.addf %13, %14 : vector<4x32xf32>
    %cst_10 = arith.constant 0.000000e+00 : f32
    %16 = vector.broadcast %cst_10 : f32 to vector<4x32xf32>
    %17 = arith.maximumf %15, %16 : vector<4x32xf32>
    %c2 = arith.constant 2 : index
    %c0_11 = arith.constant 0 : index
    %c0_12 = arith.constant 0 : index
    %18 = vector.load %arg1[%c2, %c0_11, %c0_12] : memref<6x128x32xbf16, #tpu.memory_space<vmem>>, vector<1x128x32xbf16>
    %19 = vector.shape_cast %18 : vector<1x128x32xbf16> to vector<128x32xbf16>
    %cst_13 = arith.constant dense<0.000000e+00> : vector<4x32xf32>
    %20 = tpu.matmul %1, %19, %cst_13 {dimension_numbers = #tpu.dot_dimension_numbers<[1], [0], [0], [1], [0, 0, 1, 1], [], []>} : vector<4x128xbf16>, vector<128x32xbf16>, vector<4x32xf32> -> vector<4x32xf32>
    %c3 = arith.constant 3 : index
    %c0_14 = arith.constant 0 : index
    %c0_15 = arith.constant 0 : index
    %21 = vector.load %arg1[%c3, %c0_14, %c0_15] : memref<6x128x32xbf16, #tpu.memory_space<vmem>>, vector<1x128x32xbf16>
    %22 = vector.shape_cast %21 : vector<1x128x32xbf16> to vector<128x32xbf16>
    %cst_16 = arith.constant dense<0.000000e+00> : vector<4x32xf32>
    %23 = tpu.matmul %2, %22, %cst_16 {dimension_numbers = #tpu.dot_dimension_numbers<[1], [0], [0], [1], [0, 0, 1, 1], [], []>} : vector<4x128xbf16>, vector<128x32xbf16>, vector<4x32xf32> -> vector<4x32xf32>
    %24 = arith.addf %20, %23 : vector<4x32xf32>
    %25 = vector.broadcast %3 : vector<1x32xf32> to vector<4x32xf32>
    %26 = arith.addf %24, %25 : vector<4x32xf32>
    %cst_17 = arith.constant 0.000000e+00 : f32
    %27 = vector.broadcast %cst_17 : f32 to vector<4x32xf32>
    %28 = arith.maximumf %26, %27 : vector<4x32xf32>
    %c4 = arith.constant 4 : index
    %c0_18 = arith.constant 0 : index
    %c0_19 = arith.constant 0 : index
    %29 = vector.load %arg1[%c4, %c0_18, %c0_19] : memref<6x128x32xbf16, #tpu.memory_space<vmem>>, vector<1x128x32xbf16>
    %30 = vector.shape_cast %29 : vector<1x128x32xbf16> to vector<128x32xbf16>
    %cst_20 = arith.constant dense<0.000000e+00> : vector<4x32xf32>
    %31 = tpu.matmul %1, %30, %cst_20 {dimension_numbers = #tpu.dot_dimension_numbers<[1], [0], [0], [1], [0, 0, 1, 1], [], []>} : vector<4x128xbf16>, vector<128x32xbf16>, vector<4x32xf32> -> vector<4x32xf32>
    %c5 = arith.constant 5 : index
    %c0_21 = arith.constant 0 : index
    %c0_22 = arith.constant 0 : index
    %32 = vector.load %arg1[%c5, %c0_21, %c0_22] : memref<6x128x32xbf16, #tpu.memory_space<vmem>>, vector<1x128x32xbf16>
    %33 = vector.shape_cast %32 : vector<1x128x32xbf16> to vector<128x32xbf16>
    %cst_23 = arith.constant dense<0.000000e+00> : vector<4x32xf32>
    %34 = tpu.matmul %2, %33, %cst_23 {dimension_numbers = #tpu.dot_dimension_numbers<[1], [0], [0], [1], [0, 0, 1, 1], [], []>} : vector<4x128xbf16>, vector<128x32xbf16>, vector<4x32xf32> -> vector<4x32xf32>
    %35 = arith.addf %31, %34 : vector<4x32xf32>
    %36 = vector.broadcast %3 : vector<1x32xf32> to vector<4x32xf32>
    %37 = arith.addf %35, %36 : vector<4x32xf32>
    %cst_24 = arith.constant 0.000000e+00 : f32
    %38 = vector.broadcast %cst_24 : f32 to vector<4x32xf32>
    %39 = arith.maximumf %37, %38 : vector<4x32xf32>
    %cst_25 = arith.constant dense<0.000000e+00> : vector<32xf32>
    %40 = vector.multi_reduction <add>, %10, %cst_25 [0] : vector<4x32xf32> to vector<32xf32>
    %41 = vector.shape_cast %40 : vector<32xf32> to vector<1x32xf32>
    %cst_26 = arith.constant dense<0.000000e+00> : vector<32xf32>
    %42 = vector.multi_reduction <add>, %17, %cst_26 [0] : vector<4x32xf32> to vector<32xf32>
    %43 = vector.shape_cast %42 : vector<32xf32> to vector<1x32xf32>
    %44 = arith.addf %41, %43 : vector<1x32xf32>
    %cst_27 = arith.constant dense<0.000000e+00> : vector<32xf32>
    %45 = vector.multi_reduction <add>, %28, %cst_27 [0] : vector<4x32xf32> to vector<32xf32>
    %46 = vector.shape_cast %45 : vector<32xf32> to vector<1x32xf32>
    %47 = arith.addf %44, %46 : vector<1x32xf32>
    %cst_28 = arith.constant dense<0.000000e+00> : vector<32xf32>
    %48 = vector.multi_reduction <add>, %39, %cst_28 [0] : vector<4x32xf32> to vector<32xf32>
    %49 = vector.shape_cast %48 : vector<32xf32> to vector<1x32xf32>
    %50 = arith.addf %47, %49 : vector<1x32xf32>
    %cst_29 = arith.constant 6.250000e-02 : f32
    %51 = vector.broadcast %cst_29 : f32 to vector<1x32xf32>
    %52 = arith.mulf %50, %51 : vector<1x32xf32>
    %53 = vector.broadcast %52 : vector<1x32xf32> to vector<4x32xf32>
    %54 = arith.subf %10, %53 : vector<4x32xf32>
    %55 = vector.broadcast %52 : vector<1x32xf32> to vector<4x32xf32>
    %56 = arith.subf %17, %55 : vector<4x32xf32>
    %57 = vector.broadcast %52 : vector<1x32xf32> to vector<4x32xf32>
    %58 = arith.subf %28, %57 : vector<4x32xf32>
    %59 = vector.broadcast %52 : vector<1x32xf32> to vector<4x32xf32>
    %60 = arith.subf %39, %59 : vector<4x32xf32>
    %61 = arith.mulf %54, %54 : vector<4x32xf32>
    %cst_30 = arith.constant dense<0.000000e+00> : vector<32xf32>
    %62 = vector.multi_reduction <add>, %61, %cst_30 [0] : vector<4x32xf32> to vector<32xf32>
    %63 = vector.shape_cast %62 : vector<32xf32> to vector<1x32xf32>
    %64 = arith.mulf %56, %56 : vector<4x32xf32>
    %cst_31 = arith.constant dense<0.000000e+00> : vector<32xf32>
    %65 = vector.multi_reduction <add>, %64, %cst_31 [0] : vector<4x32xf32> to vector<32xf32>
    %66 = vector.shape_cast %65 : vector<32xf32> to vector<1x32xf32>
    %67 = arith.addf %63, %66 : vector<1x32xf32>
    %68 = arith.mulf %58, %58 : vector<4x32xf32>
    %cst_32 = arith.constant dense<0.000000e+00> : vector<32xf32>
    %69 = vector.multi_reduction <add>, %68, %cst_32 [0] : vector<4x32xf32> to vector<32xf32>
    %70 = vector.shape_cast %69 : vector<32xf32> to vector<1x32xf32>
    %71 = arith.addf %67, %70 : vector<1x32xf32>
    %72 = arith.mulf %60, %60 : vector<4x32xf32>
    %cst_33 = arith.constant dense<0.000000e+00> : vector<32xf32>
    %73 = vector.multi_reduction <add>, %72, %cst_33 [0] : vector<4x32xf32> to vector<32xf32>
    %74 = vector.shape_cast %73 : vector<32xf32> to vector<1x32xf32>
    %75 = arith.addf %71, %74 : vector<1x32xf32>
    %cst_34 = arith.constant 0.0666666701 : f32
    %76 = vector.broadcast %cst_34 : f32 to vector<1x32xf32>
    %77 = arith.mulf %75, %76 : vector<1x32xf32>
    %c0_35 = arith.constant 0 : index
    %c0_36 = arith.constant 0 : index
    %78 = vector.load %arg3[%c0_35, %c0_36] : memref<1x32xf32, #tpu.memory_space<vmem>>, vector<1x32xf32>
    %79 = math.sqrt %77 : vector<1x32xf32>
    %cst_37 = arith.constant 9.99999997E-7 : f32
    %80 = vector.broadcast %cst_37 : f32 to vector<1x32xf32>
    %81 = arith.addf %79, %80 : vector<1x32xf32>
    %82 = tpu.reciprocal %81 {approx = true} : vector<1x32xf32> -> vector<1x32xf32>
    %83 = arith.mulf %78, %82 : vector<1x32xf32>
    %c0_38 = arith.constant 0 : index
    %c0_39 = arith.constant 0 : index
    %84 = vector.load %arg4[%c0_38, %c0_39] : memref<1x32xf32, #tpu.memory_space<vmem>>, vector<1x32xf32>
    %85 = vector.broadcast %83 : vector<1x32xf32> to vector<4x32xf32>
    %86 = arith.mulf %54, %85 : vector<4x32xf32>
    %87 = vector.broadcast %84 : vector<1x32xf32> to vector<4x32xf32>
    %88 = arith.addf %86, %87 : vector<4x32xf32>
    %89 = vector.broadcast %83 : vector<1x32xf32> to vector<4x32xf32>
    %90 = arith.mulf %56, %89 : vector<4x32xf32>
    %91 = vector.broadcast %84 : vector<1x32xf32> to vector<4x32xf32>
    %92 = arith.addf %90, %91 : vector<4x32xf32>
    %93 = vector.broadcast %83 : vector<1x32xf32> to vector<4x32xf32>
    %94 = arith.mulf %58, %93 : vector<4x32xf32>
    %95 = vector.broadcast %84 : vector<1x32xf32> to vector<4x32xf32>
    %96 = arith.addf %94, %95 : vector<4x32xf32>
    %97 = vector.broadcast %83 : vector<1x32xf32> to vector<4x32xf32>
    %98 = arith.mulf %60, %97 : vector<4x32xf32>
    %99 = vector.broadcast %84 : vector<1x32xf32> to vector<4x32xf32>
    %100 = arith.addf %98, %99 : vector<4x32xf32>
    %101 = arith.truncf %88 : vector<4x32xf32> to vector<4x32xbf16>
    %c0_40 = arith.constant 0 : index
    %c0_41 = arith.constant 0 : index
    %c0_42 = arith.constant 0 : index
    %102 = vector.load %arg5[%c0_40, %c0_41, %c0_42] : memref<4x4x32xbf16, #tpu.memory_space<vmem>>, vector<1x4x32xbf16>
    %103 = vector.shape_cast %102 : vector<1x4x32xbf16> to vector<4x32xbf16>
    %104 = vector.shape_cast %101 : vector<4x32xbf16> to vector<1x4x32xbf16>
    tpu.vector_store %arg5[%c0_40, %c0_41, %c0_42], %104 {strides = array<i32>} : memref<4x4x32xbf16, #tpu.memory_space<vmem>>, vector<1x4x32xbf16>,
    %105 = arith.truncf %92 : vector<4x32xf32> to vector<4x32xbf16>
    %c1_43 = arith.constant 1 : index
    %c0_44 = arith.constant 0 : index
    %c0_45 = arith.constant 0 : index
    %106 = vector.load %arg5[%c1_43, %c0_44, %c0_45] : memref<4x4x32xbf16, #tpu.memory_space<vmem>>, vector<1x4x32xbf16>
    %107 = vector.shape_cast %106 : vector<1x4x32xbf16> to vector<4x32xbf16>
    %108 = vector.shape_cast %105 : vector<4x32xbf16> to vector<1x4x32xbf16>
    tpu.vector_store %arg5[%c1_43, %c0_44, %c0_45], %108 {strides = array<i32>} : memref<4x4x32xbf16, #tpu.memory_space<vmem>>, vector<1x4x32xbf16>,
    %109 = arith.truncf %96 : vector<4x32xf32> to vector<4x32xbf16>
    %c2_46 = arith.constant 2 : index
    %c0_47 = arith.constant 0 : index
    %c0_48 = arith.constant 0 : index
    %110 = vector.load %arg5[%c2_46, %c0_47, %c0_48] : memref<4x4x32xbf16, #tpu.memory_space<vmem>>, vector<1x4x32xbf16>
    %111 = vector.shape_cast %110 : vector<1x4x32xbf16> to vector<4x32xbf16>
    %112 = vector.shape_cast %109 : vector<4x32xbf16> to vector<1x4x32xbf16>
    tpu.vector_store %arg5[%c2_46, %c0_47, %c0_48], %112 {strides = array<i32>} : memref<4x4x32xbf16, #tpu.memory_space<vmem>>, vector<1x4x32xbf16>,
    %113 = arith.truncf %100 : vector<4x32xf32> to vector<4x32xbf16>
    %c3_49 = arith.constant 3 : index
    %c0_50 = arith.constant 0 : index
    %c0_51 = arith.constant 0 : index
    %114 = vector.load %arg5[%c3_49, %c0_50, %c0_51] : memref<4x4x32xbf16, #tpu.memory_space<vmem>>, vector<1x4x32xbf16>
    %115 = vector.shape_cast %114 : vector<1x4x32xbf16> to vector<4x32xbf16>
    %116 = vector.shape_cast %113 : vector<4x32xbf16> to vector<1x4x32xbf16>
    tpu.vector_store %arg5[%c3_49, %c0_50, %c0_51], %116 {strides = array<i32>} : memref<4x4x32xbf16, #tpu.memory_space<vmem>>, vector<1x4x32xbf16>,
    return
  }
}

module attributes {stable_mosaic.version = 11 : i64} {
  func.func @_dec_stage_kernel(%arg0: memref<20x64xbf16, #tpu.memory_space<vmem>>, %arg1: memref<6x64x16xbf16, #tpu.memory_space<vmem>>, %arg2: memref<1x16xf32, #tpu.memory_space<vmem>>, %arg3: memref<1x16xf32, #tpu.memory_space<vmem>>, %arg4: memref<1x16xf32, #tpu.memory_space<vmem>>, %arg5: memref<4x16x16xbf16, #tpu.memory_space<vmem>>) attributes {dimension_semantics = [], scalar_prefetch = 0 : i64, scratch_operands = 0 : i64, tpu.core_type = #tpu.core_type<tc>} {
    %c0 = arith.constant 0 : index
    %c0_0 = arith.constant 0 : index
    %0 = vector.load %arg0[%c0, %c0_0] : memref<20x64xbf16, #tpu.memory_space<vmem>>, vector<20x64xbf16>
    %1 = vector.extract_strided_slice %0 {offsets = [0, 0], sizes = [16, 64], strides = [1, 1]} : vector<20x64xbf16> to vector<16x64xbf16>
    %2 = vector.extract_strided_slice %0 {offsets = [4, 0], sizes = [16, 64], strides = [1, 1]} : vector<20x64xbf16> to vector<16x64xbf16>
    %c0_1 = arith.constant 0 : index
    %c0_2 = arith.constant 0 : index
    %3 = vector.load %arg2[%c0_1, %c0_2] : memref<1x16xf32, #tpu.memory_space<vmem>>, vector<1x16xf32>
    %c0_3 = arith.constant 0 : index
    %c0_4 = arith.constant 0 : index
    %c0_5 = arith.constant 0 : index
    %4 = vector.load %arg1[%c0_3, %c0_4, %c0_5] : memref<6x64x16xbf16, #tpu.memory_space<vmem>>, vector<1x64x16xbf16>
    %5 = vector.shape_cast %4 : vector<1x64x16xbf16> to vector<64x16xbf16>
    %cst = arith.constant dense<0.000000e+00> : vector<16x16xf32>
    %6 = tpu.matmul %1, %5, %cst {dimension_numbers = #tpu.dot_dimension_numbers<[1], [0], [0], [1], [0, 0, 1, 1], [], []>} : vector<16x64xbf16>, vector<64x16xbf16>, vector<16x16xf32> -> vector<16x16xf32>
    %7 = vector.broadcast %3 : vector<1x16xf32> to vector<16x16xf32>
    %8 = arith.addf %6, %7 : vector<16x16xf32>
    %cst_6 = arith.constant 0.000000e+00 : f32
    %9 = vector.broadcast %cst_6 : f32 to vector<16x16xf32>
    %10 = arith.maximumf %8, %9 : vector<16x16xf32>
    %c1 = arith.constant 1 : index
    %c0_7 = arith.constant 0 : index
    %c0_8 = arith.constant 0 : index
    %11 = vector.load %arg1[%c1, %c0_7, %c0_8] : memref<6x64x16xbf16, #tpu.memory_space<vmem>>, vector<1x64x16xbf16>
    %12 = vector.shape_cast %11 : vector<1x64x16xbf16> to vector<64x16xbf16>
    %cst_9 = arith.constant dense<0.000000e+00> : vector<16x16xf32>
    %13 = tpu.matmul %1, %12, %cst_9 {dimension_numbers = #tpu.dot_dimension_numbers<[1], [0], [0], [1], [0, 0, 1, 1], [], []>} : vector<16x64xbf16>, vector<64x16xbf16>, vector<16x16xf32> -> vector<16x16xf32>
    %14 = vector.broadcast %3 : vector<1x16xf32> to vector<16x16xf32>
    %15 = arith.addf %13, %14 : vector<16x16xf32>
    %cst_10 = arith.constant 0.000000e+00 : f32
    %16 = vector.broadcast %cst_10 : f32 to vector<16x16xf32>
    %17 = arith.maximumf %15, %16 : vector<16x16xf32>
    %c2 = arith.constant 2 : index
    %c0_11 = arith.constant 0 : index
    %c0_12 = arith.constant 0 : index
    %18 = vector.load %arg1[%c2, %c0_11, %c0_12] : memref<6x64x16xbf16, #tpu.memory_space<vmem>>, vector<1x64x16xbf16>
    %19 = vector.shape_cast %18 : vector<1x64x16xbf16> to vector<64x16xbf16>
    %cst_13 = arith.constant dense<0.000000e+00> : vector<16x16xf32>
    %20 = tpu.matmul %1, %19, %cst_13 {dimension_numbers = #tpu.dot_dimension_numbers<[1], [0], [0], [1], [0, 0, 1, 1], [], []>} : vector<16x64xbf16>, vector<64x16xbf16>, vector<16x16xf32> -> vector<16x16xf32>
    %c3 = arith.constant 3 : index
    %c0_14 = arith.constant 0 : index
    %c0_15 = arith.constant 0 : index
    %21 = vector.load %arg1[%c3, %c0_14, %c0_15] : memref<6x64x16xbf16, #tpu.memory_space<vmem>>, vector<1x64x16xbf16>
    %22 = vector.shape_cast %21 : vector<1x64x16xbf16> to vector<64x16xbf16>
    %cst_16 = arith.constant dense<0.000000e+00> : vector<16x16xf32>
    %23 = tpu.matmul %2, %22, %cst_16 {dimension_numbers = #tpu.dot_dimension_numbers<[1], [0], [0], [1], [0, 0, 1, 1], [], []>} : vector<16x64xbf16>, vector<64x16xbf16>, vector<16x16xf32> -> vector<16x16xf32>
    %24 = arith.addf %20, %23 : vector<16x16xf32>
    %25 = vector.broadcast %3 : vector<1x16xf32> to vector<16x16xf32>
    %26 = arith.addf %24, %25 : vector<16x16xf32>
    %cst_17 = arith.constant 0.000000e+00 : f32
    %27 = vector.broadcast %cst_17 : f32 to vector<16x16xf32>
    %28 = arith.maximumf %26, %27 : vector<16x16xf32>
    %c4 = arith.constant 4 : index
    %c0_18 = arith.constant 0 : index
    %c0_19 = arith.constant 0 : index
    %29 = vector.load %arg1[%c4, %c0_18, %c0_19] : memref<6x64x16xbf16, #tpu.memory_space<vmem>>, vector<1x64x16xbf16>
    %30 = vector.shape_cast %29 : vector<1x64x16xbf16> to vector<64x16xbf16>
    %cst_20 = arith.constant dense<0.000000e+00> : vector<16x16xf32>
    %31 = tpu.matmul %1, %30, %cst_20 {dimension_numbers = #tpu.dot_dimension_numbers<[1], [0], [0], [1], [0, 0, 1, 1], [], []>} : vector<16x64xbf16>, vector<64x16xbf16>, vector<16x16xf32> -> vector<16x16xf32>
    %c5 = arith.constant 5 : index
    %c0_21 = arith.constant 0 : index
    %c0_22 = arith.constant 0 : index
    %32 = vector.load %arg1[%c5, %c0_21, %c0_22] : memref<6x64x16xbf16, #tpu.memory_space<vmem>>, vector<1x64x16xbf16>
    %33 = vector.shape_cast %32 : vector<1x64x16xbf16> to vector<64x16xbf16>
    %cst_23 = arith.constant dense<0.000000e+00> : vector<16x16xf32>
    %34 = tpu.matmul %2, %33, %cst_23 {dimension_numbers = #tpu.dot_dimension_numbers<[1], [0], [0], [1], [0, 0, 1, 1], [], []>} : vector<16x64xbf16>, vector<64x16xbf16>, vector<16x16xf32> -> vector<16x16xf32>
    %35 = arith.addf %31, %34 : vector<16x16xf32>
    %36 = vector.broadcast %3 : vector<1x16xf32> to vector<16x16xf32>
    %37 = arith.addf %35, %36 : vector<16x16xf32>
    %cst_24 = arith.constant 0.000000e+00 : f32
    %38 = vector.broadcast %cst_24 : f32 to vector<16x16xf32>
    %39 = arith.maximumf %37, %38 : vector<16x16xf32>
    %cst_25 = arith.constant dense<0.000000e+00> : vector<16xf32>
    %40 = vector.multi_reduction <add>, %10, %cst_25 [0] : vector<16x16xf32> to vector<16xf32>
    %41 = vector.shape_cast %40 : vector<16xf32> to vector<1x16xf32>
    %cst_26 = arith.constant dense<0.000000e+00> : vector<16xf32>
    %42 = vector.multi_reduction <add>, %17, %cst_26 [0] : vector<16x16xf32> to vector<16xf32>
    %43 = vector.shape_cast %42 : vector<16xf32> to vector<1x16xf32>
    %44 = arith.addf %41, %43 : vector<1x16xf32>
    %cst_27 = arith.constant dense<0.000000e+00> : vector<16xf32>
    %45 = vector.multi_reduction <add>, %28, %cst_27 [0] : vector<16x16xf32> to vector<16xf32>
    %46 = vector.shape_cast %45 : vector<16xf32> to vector<1x16xf32>
    %47 = arith.addf %44, %46 : vector<1x16xf32>
    %cst_28 = arith.constant dense<0.000000e+00> : vector<16xf32>
    %48 = vector.multi_reduction <add>, %39, %cst_28 [0] : vector<16x16xf32> to vector<16xf32>
    %49 = vector.shape_cast %48 : vector<16xf32> to vector<1x16xf32>
    %50 = arith.addf %47, %49 : vector<1x16xf32>
    %cst_29 = arith.constant 1.562500e-02 : f32
    %51 = vector.broadcast %cst_29 : f32 to vector<1x16xf32>
    %52 = arith.mulf %50, %51 : vector<1x16xf32>
    %53 = vector.broadcast %52 : vector<1x16xf32> to vector<16x16xf32>
    %54 = arith.subf %10, %53 : vector<16x16xf32>
    %55 = vector.broadcast %52 : vector<1x16xf32> to vector<16x16xf32>
    %56 = arith.subf %17, %55 : vector<16x16xf32>
    %57 = vector.broadcast %52 : vector<1x16xf32> to vector<16x16xf32>
    %58 = arith.subf %28, %57 : vector<16x16xf32>
    %59 = vector.broadcast %52 : vector<1x16xf32> to vector<16x16xf32>
    %60 = arith.subf %39, %59 : vector<16x16xf32>
    %61 = arith.mulf %54, %54 : vector<16x16xf32>
    %cst_30 = arith.constant dense<0.000000e+00> : vector<16xf32>
    %62 = vector.multi_reduction <add>, %61, %cst_30 [0] : vector<16x16xf32> to vector<16xf32>
    %63 = vector.shape_cast %62 : vector<16xf32> to vector<1x16xf32>
    %64 = arith.mulf %56, %56 : vector<16x16xf32>
    %cst_31 = arith.constant dense<0.000000e+00> : vector<16xf32>
    %65 = vector.multi_reduction <add>, %64, %cst_31 [0] : vector<16x16xf32> to vector<16xf32>
    %66 = vector.shape_cast %65 : vector<16xf32> to vector<1x16xf32>
    %67 = arith.addf %63, %66 : vector<1x16xf32>
    %68 = arith.mulf %58, %58 : vector<16x16xf32>
    %cst_32 = arith.constant dense<0.000000e+00> : vector<16xf32>
    %69 = vector.multi_reduction <add>, %68, %cst_32 [0] : vector<16x16xf32> to vector<16xf32>
    %70 = vector.shape_cast %69 : vector<16xf32> to vector<1x16xf32>
    %71 = arith.addf %67, %70 : vector<1x16xf32>
    %72 = arith.mulf %60, %60 : vector<16x16xf32>
    %cst_33 = arith.constant dense<0.000000e+00> : vector<16xf32>
    %73 = vector.multi_reduction <add>, %72, %cst_33 [0] : vector<16x16xf32> to vector<16xf32>
    %74 = vector.shape_cast %73 : vector<16xf32> to vector<1x16xf32>
    %75 = arith.addf %71, %74 : vector<1x16xf32>
    %cst_34 = arith.constant 0.0158730168 : f32
    %76 = vector.broadcast %cst_34 : f32 to vector<1x16xf32>
    %77 = arith.mulf %75, %76 : vector<1x16xf32>
    %c0_35 = arith.constant 0 : index
    %c0_36 = arith.constant 0 : index
    %78 = vector.load %arg3[%c0_35, %c0_36] : memref<1x16xf32, #tpu.memory_space<vmem>>, vector<1x16xf32>
    %79 = math.sqrt %77 : vector<1x16xf32>
    %cst_37 = arith.constant 9.99999997E-7 : f32
    %80 = vector.broadcast %cst_37 : f32 to vector<1x16xf32>
    %81 = arith.addf %79, %80 : vector<1x16xf32>
    %82 = tpu.reciprocal %81 {approx = true} : vector<1x16xf32> -> vector<1x16xf32>
    %83 = arith.mulf %78, %82 : vector<1x16xf32>
    %c0_38 = arith.constant 0 : index
    %c0_39 = arith.constant 0 : index
    %84 = vector.load %arg4[%c0_38, %c0_39] : memref<1x16xf32, #tpu.memory_space<vmem>>, vector<1x16xf32>
    %85 = vector.broadcast %83 : vector<1x16xf32> to vector<16x16xf32>
    %86 = arith.mulf %54, %85 : vector<16x16xf32>
    %87 = vector.broadcast %84 : vector<1x16xf32> to vector<16x16xf32>
    %88 = arith.addf %86, %87 : vector<16x16xf32>
    %89 = vector.broadcast %83 : vector<1x16xf32> to vector<16x16xf32>
    %90 = arith.mulf %56, %89 : vector<16x16xf32>
    %91 = vector.broadcast %84 : vector<1x16xf32> to vector<16x16xf32>
    %92 = arith.addf %90, %91 : vector<16x16xf32>
    %93 = vector.broadcast %83 : vector<1x16xf32> to vector<16x16xf32>
    %94 = arith.mulf %58, %93 : vector<16x16xf32>
    %95 = vector.broadcast %84 : vector<1x16xf32> to vector<16x16xf32>
    %96 = arith.addf %94, %95 : vector<16x16xf32>
    %97 = vector.broadcast %83 : vector<1x16xf32> to vector<16x16xf32>
    %98 = arith.mulf %60, %97 : vector<16x16xf32>
    %99 = vector.broadcast %84 : vector<1x16xf32> to vector<16x16xf32>
    %100 = arith.addf %98, %99 : vector<16x16xf32>
    %101 = arith.truncf %88 : vector<16x16xf32> to vector<16x16xbf16>
    %c0_40 = arith.constant 0 : index
    %c0_41 = arith.constant 0 : index
    %c0_42 = arith.constant 0 : index
    %102 = vector.load %arg5[%c0_40, %c0_41, %c0_42] : memref<4x16x16xbf16, #tpu.memory_space<vmem>>, vector<1x16x16xbf16>
    %103 = vector.shape_cast %102 : vector<1x16x16xbf16> to vector<16x16xbf16>
    %104 = vector.shape_cast %101 : vector<16x16xbf16> to vector<1x16x16xbf16>
    tpu.vector_store %arg5[%c0_40, %c0_41, %c0_42], %104 {strides = array<i32>} : memref<4x16x16xbf16, #tpu.memory_space<vmem>>, vector<1x16x16xbf16>,
    %105 = arith.truncf %92 : vector<16x16xf32> to vector<16x16xbf16>
    %c1_43 = arith.constant 1 : index
    %c0_44 = arith.constant 0 : index
    %c0_45 = arith.constant 0 : index
    %106 = vector.load %arg5[%c1_43, %c0_44, %c0_45] : memref<4x16x16xbf16, #tpu.memory_space<vmem>>, vector<1x16x16xbf16>
    %107 = vector.shape_cast %106 : vector<1x16x16xbf16> to vector<16x16xbf16>
    %108 = vector.shape_cast %105 : vector<16x16xbf16> to vector<1x16x16xbf16>
    tpu.vector_store %arg5[%c1_43, %c0_44, %c0_45], %108 {strides = array<i32>} : memref<4x16x16xbf16, #tpu.memory_space<vmem>>, vector<1x16x16xbf16>,
    %109 = arith.truncf %96 : vector<16x16xf32> to vector<16x16xbf16>
    %c2_46 = arith.constant 2 : index
    %c0_47 = arith.constant 0 : index
    %c0_48 = arith.constant 0 : index
    %110 = vector.load %arg5[%c2_46, %c0_47, %c0_48] : memref<4x16x16xbf16, #tpu.memory_space<vmem>>, vector<1x16x16xbf16>
    %111 = vector.shape_cast %110 : vector<1x16x16xbf16> to vector<16x16xbf16>
    %112 = vector.shape_cast %109 : vector<16x16xbf16> to vector<1x16x16xbf16>
    tpu.vector_store %arg5[%c2_46, %c0_47, %c0_48], %112 {strides = array<i32>} : memref<4x16x16xbf16, #tpu.memory_space<vmem>>, vector<1x16x16xbf16>,
    %113 = arith.truncf %100 : vector<16x16xf32> to vector<16x16xbf16>
    %c3_49 = arith.constant 3 : index
    %c0_50 = arith.constant 0 : index
    %c0_51 = arith.constant 0 : index
    %114 = vector.load %arg5[%c3_49, %c0_50, %c0_51] : memref<4x16x16xbf16, #tpu.memory_space<vmem>>, vector<1x16x16xbf16>
    %115 = vector.shape_cast %114 : vector<1x16x16xbf16> to vector<16x16xbf16>
    %116 = vector.shape_cast %113 : vector<16x16xbf16> to vector<1x16x16xbf16>
    tpu.vector_store %arg5[%c3_49, %c0_50, %c0_51], %116 {strides = array<i32>} : memref<4x16x16xbf16, #tpu.memory_space<vmem>>, vector<1x16x16xbf16>,
    return
  }
}

module attributes {stable_mosaic.version = 11 : i64} {
  func.func @_dec_cls_kernel(%arg0: memref<72x32xbf16, #tpu.memory_space<vmem>>, %arg1: memref<6x32x8xbf16, #tpu.memory_space<vmem>>, %arg2: memref<1x8xf32, #tpu.memory_space<vmem>>, %arg3: memref<1x8xf32, #tpu.memory_space<vmem>>, %arg4: memref<1x8xf32, #tpu.memory_space<vmem>>, %arg5: memref<1x8xf32, #tpu.memory_space<vmem>>, %arg6: memref<1x1xf32, #tpu.memory_space<vmem>>, %arg7: memref<64x4xf32, #tpu.memory_space<vmem>>) attributes {dimension_semantics = [], scalar_prefetch = 0 : i64, scratch_operands = 0 : i64, tpu.core_type = #tpu.core_type<tc>} {
    %c0 = arith.constant 0 : index
    %c0_0 = arith.constant 0 : index
    %0 = vector.load %arg0[%c0, %c0_0] : memref<72x32xbf16, #tpu.memory_space<vmem>>, vector<72x32xbf16>
    %1 = vector.extract_strided_slice %0 {offsets = [0, 0], sizes = [64, 32], strides = [1, 1]} : vector<72x32xbf16> to vector<64x32xbf16>
    %2 = vector.extract_strided_slice %0 {offsets = [8, 0], sizes = [64, 32], strides = [1, 1]} : vector<72x32xbf16> to vector<64x32xbf16>
    %c0_1 = arith.constant 0 : index
    %c0_2 = arith.constant 0 : index
    %3 = vector.load %arg2[%c0_1, %c0_2] : memref<1x8xf32, #tpu.memory_space<vmem>>, vector<1x8xf32>
    %c0_3 = arith.constant 0 : index
    %c0_4 = arith.constant 0 : index
    %c0_5 = arith.constant 0 : index
    %4 = vector.load %arg1[%c0_3, %c0_4, %c0_5] : memref<6x32x8xbf16, #tpu.memory_space<vmem>>, vector<1x32x8xbf16>
    %5 = vector.shape_cast %4 : vector<1x32x8xbf16> to vector<32x8xbf16>
    %cst = arith.constant dense<0.000000e+00> : vector<64x8xf32>
    %6 = tpu.matmul %1, %5, %cst {dimension_numbers = #tpu.dot_dimension_numbers<[1], [0], [0], [1], [0, 0, 1, 1], [], []>} : vector<64x32xbf16>, vector<32x8xbf16>, vector<64x8xf32> -> vector<64x8xf32>
    %7 = vector.broadcast %3 : vector<1x8xf32> to vector<64x8xf32>
    %8 = arith.addf %6, %7 : vector<64x8xf32>
    %cst_6 = arith.constant 0.000000e+00 : f32
    %9 = vector.broadcast %cst_6 : f32 to vector<64x8xf32>
    %10 = arith.maximumf %8, %9 : vector<64x8xf32>
    %c1 = arith.constant 1 : index
    %c0_7 = arith.constant 0 : index
    %c0_8 = arith.constant 0 : index
    %11 = vector.load %arg1[%c1, %c0_7, %c0_8] : memref<6x32x8xbf16, #tpu.memory_space<vmem>>, vector<1x32x8xbf16>
    %12 = vector.shape_cast %11 : vector<1x32x8xbf16> to vector<32x8xbf16>
    %cst_9 = arith.constant dense<0.000000e+00> : vector<64x8xf32>
    %13 = tpu.matmul %1, %12, %cst_9 {dimension_numbers = #tpu.dot_dimension_numbers<[1], [0], [0], [1], [0, 0, 1, 1], [], []>} : vector<64x32xbf16>, vector<32x8xbf16>, vector<64x8xf32> -> vector<64x8xf32>
    %14 = vector.broadcast %3 : vector<1x8xf32> to vector<64x8xf32>
    %15 = arith.addf %13, %14 : vector<64x8xf32>
    %cst_10 = arith.constant 0.000000e+00 : f32
    %16 = vector.broadcast %cst_10 : f32 to vector<64x8xf32>
    %17 = arith.maximumf %15, %16 : vector<64x8xf32>
    %c2 = arith.constant 2 : index
    %c0_11 = arith.constant 0 : index
    %c0_12 = arith.constant 0 : index
    %18 = vector.load %arg1[%c2, %c0_11, %c0_12] : memref<6x32x8xbf16, #tpu.memory_space<vmem>>, vector<1x32x8xbf16>
    %19 = vector.shape_cast %18 : vector<1x32x8xbf16> to vector<32x8xbf16>
    %cst_13 = arith.constant dense<0.000000e+00> : vector<64x8xf32>
    %20 = tpu.matmul %1, %19, %cst_13 {dimension_numbers = #tpu.dot_dimension_numbers<[1], [0], [0], [1], [0, 0, 1, 1], [], []>} : vector<64x32xbf16>, vector<32x8xbf16>, vector<64x8xf32> -> vector<64x8xf32>
    %c3 = arith.constant 3 : index
    %c0_14 = arith.constant 0 : index
    %c0_15 = arith.constant 0 : index
    %21 = vector.load %arg1[%c3, %c0_14, %c0_15] : memref<6x32x8xbf16, #tpu.memory_space<vmem>>, vector<1x32x8xbf16>
    %22 = vector.shape_cast %21 : vector<1x32x8xbf16> to vector<32x8xbf16>
    %cst_16 = arith.constant dense<0.000000e+00> : vector<64x8xf32>
    %23 = tpu.matmul %2, %22, %cst_16 {dimension_numbers = #tpu.dot_dimension_numbers<[1], [0], [0], [1], [0, 0, 1, 1], [], []>} : vector<64x32xbf16>, vector<32x8xbf16>, vector<64x8xf32> -> vector<64x8xf32>
    %24 = arith.addf %20, %23 : vector<64x8xf32>
    %25 = vector.broadcast %3 : vector<1x8xf32> to vector<64x8xf32>
    %26 = arith.addf %24, %25 : vector<64x8xf32>
    %cst_17 = arith.constant 0.000000e+00 : f32
    %27 = vector.broadcast %cst_17 : f32 to vector<64x8xf32>
    %28 = arith.maximumf %26, %27 : vector<64x8xf32>
    %c4 = arith.constant 4 : index
    %c0_18 = arith.constant 0 : index
    %c0_19 = arith.constant 0 : index
    %29 = vector.load %arg1[%c4, %c0_18, %c0_19] : memref<6x32x8xbf16, #tpu.memory_space<vmem>>, vector<1x32x8xbf16>
    %30 = vector.shape_cast %29 : vector<1x32x8xbf16> to vector<32x8xbf16>
    %cst_20 = arith.constant dense<0.000000e+00> : vector<64x8xf32>
    %31 = tpu.matmul %1, %30, %cst_20 {dimension_numbers = #tpu.dot_dimension_numbers<[1], [0], [0], [1], [0, 0, 1, 1], [], []>} : vector<64x32xbf16>, vector<32x8xbf16>, vector<64x8xf32> -> vector<64x8xf32>
    %c5 = arith.constant 5 : index
    %c0_21 = arith.constant 0 : index
    %c0_22 = arith.constant 0 : index
    %32 = vector.load %arg1[%c5, %c0_21, %c0_22] : memref<6x32x8xbf16, #tpu.memory_space<vmem>>, vector<1x32x8xbf16>
    %33 = vector.shape_cast %32 : vector<1x32x8xbf16> to vector<32x8xbf16>
    %cst_23 = arith.constant dense<0.000000e+00> : vector<64x8xf32>
    %34 = tpu.matmul %2, %33, %cst_23 {dimension_numbers = #tpu.dot_dimension_numbers<[1], [0], [0], [1], [0, 0, 1, 1], [], []>} : vector<64x32xbf16>, vector<32x8xbf16>, vector<64x8xf32> -> vector<64x8xf32>
    %35 = arith.addf %31, %34 : vector<64x8xf32>
    %36 = vector.broadcast %3 : vector<1x8xf32> to vector<64x8xf32>
    %37 = arith.addf %35, %36 : vector<64x8xf32>
    %cst_24 = arith.constant 0.000000e+00 : f32
    %38 = vector.broadcast %cst_24 : f32 to vector<64x8xf32>
    %39 = arith.maximumf %37, %38 : vector<64x8xf32>
    %cst_25 = arith.constant dense<0.000000e+00> : vector<8xf32>
    %40 = vector.multi_reduction <add>, %10, %cst_25 [0] : vector<64x8xf32> to vector<8xf32>
    %41 = vector.shape_cast %40 : vector<8xf32> to vector<1x8xf32>
    %cst_26 = arith.constant dense<0.000000e+00> : vector<8xf32>
    %42 = vector.multi_reduction <add>, %17, %cst_26 [0] : vector<64x8xf32> to vector<8xf32>
    %43 = vector.shape_cast %42 : vector<8xf32> to vector<1x8xf32>
    %44 = arith.addf %41, %43 : vector<1x8xf32>
    %cst_27 = arith.constant dense<0.000000e+00> : vector<8xf32>
    %45 = vector.multi_reduction <add>, %28, %cst_27 [0] : vector<64x8xf32> to vector<8xf32>
    %46 = vector.shape_cast %45 : vector<8xf32> to vector<1x8xf32>
    %47 = arith.addf %44, %46 : vector<1x8xf32>
    %cst_28 = arith.constant dense<0.000000e+00> : vector<8xf32>
    %48 = vector.multi_reduction <add>, %39, %cst_28 [0] : vector<64x8xf32> to vector<8xf32>
    %49 = vector.shape_cast %48 : vector<8xf32> to vector<1x8xf32>
    %50 = arith.addf %47, %49 : vector<1x8xf32>
    %cst_29 = arith.constant 3.906250e-03 : f32
    %51 = vector.broadcast %cst_29 : f32 to vector<1x8xf32>
    %52 = arith.mulf %50, %51 : vector<1x8xf32>
    %53 = vector.broadcast %52 : vector<1x8xf32> to vector<64x8xf32>
    %54 = arith.subf %10, %53 : vector<64x8xf32>
    %55 = vector.broadcast %52 : vector<1x8xf32> to vector<64x8xf32>
    %56 = arith.subf %17, %55 : vector<64x8xf32>
    %57 = vector.broadcast %52 : vector<1x8xf32> to vector<64x8xf32>
    %58 = arith.subf %28, %57 : vector<64x8xf32>
    %59 = vector.broadcast %52 : vector<1x8xf32> to vector<64x8xf32>
    %60 = arith.subf %39, %59 : vector<64x8xf32>
    %61 = arith.mulf %54, %54 : vector<64x8xf32>
    %cst_30 = arith.constant dense<0.000000e+00> : vector<8xf32>
    %62 = vector.multi_reduction <add>, %61, %cst_30 [0] : vector<64x8xf32> to vector<8xf32>
    %63 = vector.shape_cast %62 : vector<8xf32> to vector<1x8xf32>
    %64 = arith.mulf %56, %56 : vector<64x8xf32>
    %cst_31 = arith.constant dense<0.000000e+00> : vector<8xf32>
    %65 = vector.multi_reduction <add>, %64, %cst_31 [0] : vector<64x8xf32> to vector<8xf32>
    %66 = vector.shape_cast %65 : vector<8xf32> to vector<1x8xf32>
    %67 = arith.addf %63, %66 : vector<1x8xf32>
    %68 = arith.mulf %58, %58 : vector<64x8xf32>
    %cst_32 = arith.constant dense<0.000000e+00> : vector<8xf32>
    %69 = vector.multi_reduction <add>, %68, %cst_32 [0] : vector<64x8xf32> to vector<8xf32>
    %70 = vector.shape_cast %69 : vector<8xf32> to vector<1x8xf32>
    %71 = arith.addf %67, %70 : vector<1x8xf32>
    %72 = arith.mulf %60, %60 : vector<64x8xf32>
    %cst_33 = arith.constant dense<0.000000e+00> : vector<8xf32>
    %73 = vector.multi_reduction <add>, %72, %cst_33 [0] : vector<64x8xf32> to vector<8xf32>
    %74 = vector.shape_cast %73 : vector<8xf32> to vector<1x8xf32>
    %75 = arith.addf %71, %74 : vector<1x8xf32>
    %cst_34 = arith.constant 0.00392156886 : f32
    %76 = vector.broadcast %cst_34 : f32 to vector<1x8xf32>
    %77 = arith.mulf %75, %76 : vector<1x8xf32>
    %c0_35 = arith.constant 0 : index
    %c0_36 = arith.constant 0 : index
    %78 = vector.load %arg3[%c0_35, %c0_36] : memref<1x8xf32, #tpu.memory_space<vmem>>, vector<1x8xf32>
    %79 = math.sqrt %77 : vector<1x8xf32>
    %cst_37 = arith.constant 9.99999997E-7 : f32
    %80 = vector.broadcast %cst_37 : f32 to vector<1x8xf32>
    %81 = arith.addf %79, %80 : vector<1x8xf32>
    %82 = tpu.reciprocal %81 {approx = true} : vector<1x8xf32> -> vector<1x8xf32>
    %83 = arith.mulf %78, %82 : vector<1x8xf32>
    %c0_38 = arith.constant 0 : index
    %c0_39 = arith.constant 0 : index
    %84 = vector.load %arg4[%c0_38, %c0_39] : memref<1x8xf32, #tpu.memory_space<vmem>>, vector<1x8xf32>
    %85 = vector.broadcast %83 : vector<1x8xf32> to vector<64x8xf32>
    %86 = arith.mulf %54, %85 : vector<64x8xf32>
    %87 = vector.broadcast %84 : vector<1x8xf32> to vector<64x8xf32>
    %88 = arith.addf %86, %87 : vector<64x8xf32>
    %89 = vector.broadcast %83 : vector<1x8xf32> to vector<64x8xf32>
    %90 = arith.mulf %56, %89 : vector<64x8xf32>
    %91 = vector.broadcast %84 : vector<1x8xf32> to vector<64x8xf32>
    %92 = arith.addf %90, %91 : vector<64x8xf32>
    %93 = vector.broadcast %83 : vector<1x8xf32> to vector<64x8xf32>
    %94 = arith.mulf %58, %93 : vector<64x8xf32>
    %95 = vector.broadcast %84 : vector<1x8xf32> to vector<64x8xf32>
    %96 = arith.addf %94, %95 : vector<64x8xf32>
    %97 = vector.broadcast %83 : vector<1x8xf32> to vector<64x8xf32>
    %98 = arith.mulf %60, %97 : vector<64x8xf32>
    %99 = vector.broadcast %84 : vector<1x8xf32> to vector<64x8xf32>
    %100 = arith.addf %98, %99 : vector<64x8xf32>
    %c0_40 = arith.constant 0 : index
    %c0_41 = arith.constant 0 : index
    %101 = vector.load %arg5[%c0_40, %c0_41] : memref<1x8xf32, #tpu.memory_space<vmem>>, vector<1x8xf32>
    %102 = vector.broadcast %101 : vector<1x8xf32> to vector<64x8xf32>
    %103 = arith.mulf %88, %102 : vector<64x8xf32>
    %cst_42 = arith.constant dense<0.000000e+00> : vector<64xf32>
    %104 = vector.multi_reduction <add>, %103, %cst_42 [1] : vector<64x8xf32> to vector<64xf32>
    %105 = vector.shape_cast %104 : vector<64xf32> to vector<64x1xf32>
    %c0_43 = arith.constant 0 : index
    %c0_44 = arith.constant 0 : index
    %106 = vector.load %arg6[%c0_43, %c0_44] : memref<1x1xf32, #tpu.memory_space<vmem>>, vector<1x1xf32>
    %107 = vector.broadcast %106 : vector<1x1xf32> to vector<64x1xf32>
    %108 = arith.addf %105, %107 : vector<64x1xf32>
    %109 = vector.broadcast %101 : vector<1x8xf32> to vector<64x8xf32>
    %110 = arith.mulf %92, %109 : vector<64x8xf32>
    %cst_45 = arith.constant dense<0.000000e+00> : vector<64xf32>
    %111 = vector.multi_reduction <add>, %110, %cst_45 [1] : vector<64x8xf32> to vector<64xf32>
    %112 = vector.shape_cast %111 : vector<64xf32> to vector<64x1xf32>
    %c0_46 = arith.constant 0 : index
    %c0_47 = arith.constant 0 : index
    %113 = vector.load %arg6[%c0_46, %c0_47] : memref<1x1xf32, #tpu.memory_space<vmem>>, vector<1x1xf32>
    %114 = vector.broadcast %113 : vector<1x1xf32> to vector<64x1xf32>
    %115 = arith.addf %112, %114 : vector<64x1xf32>
    %116 = vector.broadcast %101 : vector<1x8xf32> to vector<64x8xf32>
    %117 = arith.mulf %96, %116 : vector<64x8xf32>
    %cst_48 = arith.constant dense<0.000000e+00> : vector<64xf32>
    %118 = vector.multi_reduction <add>, %117, %cst_48 [1] : vector<64x8xf32> to vector<64xf32>
    %119 = vector.shape_cast %118 : vector<64xf32> to vector<64x1xf32>
    %c0_49 = arith.constant 0 : index
    %c0_50 = arith.constant 0 : index
    %120 = vector.load %arg6[%c0_49, %c0_50] : memref<1x1xf32, #tpu.memory_space<vmem>>, vector<1x1xf32>
    %121 = vector.broadcast %120 : vector<1x1xf32> to vector<64x1xf32>
    %122 = arith.addf %119, %121 : vector<64x1xf32>
    %123 = vector.broadcast %101 : vector<1x8xf32> to vector<64x8xf32>
    %124 = arith.mulf %100, %123 : vector<64x8xf32>
    %cst_51 = arith.constant dense<0.000000e+00> : vector<64xf32>
    %125 = vector.multi_reduction <add>, %124, %cst_51 [1] : vector<64x8xf32> to vector<64xf32>
    %126 = vector.shape_cast %125 : vector<64xf32> to vector<64x1xf32>
    %c0_52 = arith.constant 0 : index
    %c0_53 = arith.constant 0 : index
    %127 = vector.load %arg6[%c0_52, %c0_53] : memref<1x1xf32, #tpu.memory_space<vmem>>, vector<1x1xf32>
    %128 = vector.broadcast %127 : vector<1x1xf32> to vector<64x1xf32>
    %129 = arith.addf %126, %128 : vector<64x1xf32>
    %130 = tpu.concatenate %108, %115, %122, %129 in 1 : vector<64x1xf32>, vector<64x1xf32>, vector<64x1xf32>, vector<64x1xf32> -> vector<64x4xf32>
    %c0_54 = arith.constant 0 : index
    %c0_55 = arith.constant 0 : index
    %131 = vector.load %arg7[%c0_54, %c0_55] : memref<64x4xf32, #tpu.memory_space<vmem>>, vector<64x4xf32>
    tpu.vector_store %arg7[%c0_54, %c0_55], %130 {strides = array<i32>} : memref<64x4xf32, #tpu.memory_space<vmem>>, vector<64x4xf32>,
    return
  }
}

</mosaic_0001>

<llo_original>
// kernel: forward.9
$region0: #{forward.9}
  #allocation0 [shape = 'u32[]', space=smem, size = 0x4, offset = 0x4, fixed_abs, tag = 'smem constant byte address 0x4 - core index']
  #allocation1 [shape = 'u32[144,128]{1,0:T(1,128)}', space=vmem, size = 0x12000, scoped, tag = 'internal scratch']
  #allocation2 [shape = 'f32[16,64]{1,0:T(8,128)}', space=vmem, size = 0x2000, scoped, tag = 'scratch operand']
  %s0 = inlined_call_operand.vmem [shape: bf16[24,96], index: 0, kind: input, shape index: {}]
  %s1 = inlined_call_operand.vmem [shape: bf16[288,64], index: 1, kind: input, shape index: {}]
  %s2 = inlined_call_operand.vmem [shape: f32[1,64], index: 2, kind: input, shape index: {}]
  %s3 = inlined_call_operand.vmem [shape: f32[1,64], index: 3, kind: input, shape index: {}]
  %s4 = inlined_call_operand.vmem [shape: f32[1,64], index: 4, kind: input, shape index: {}]
  %s5 = inlined_call_operand.vmem [shape: bf16[4,64], index: 5, kind: output, shape index: {}]
  %s6 = sld [smem:[#allocation0]]
  $region30: #{forward.9} parent=0
    _
  %s8 = ssub.s32 1, %s6
  %s9 = scalar_select 0, %s8, %s6
  // Predicated region
  $region2: #{forward.9} parent=0 // pred_check
    _
  $region3: #{forward.9} parent=0 // pred_check_branch
    %11 = sbr.rel (0) target = $region5
  $region4: #{forward.9} parent=0 // pred_region
    _
  $region5: #{forward.9} parent=0 // pred_fallthru
    _
  // Predicated region
  $region6: #{forward.9} parent=0 // pred_check
    _
  $region7: #{forward.9} parent=0 // pred_check_branch
    %13 = sbr.rel (0) target = $region9
  $region8: #{forward.9} parent=0 // pred_region
    _
  $region9: #{forward.9} parent=0 // pred_fallthru
    _
  // Predicated region
  $region10: #{forward.9} parent=0 // pred_check
    _
  $region11: #{forward.9} parent=0 // pred_check_branch
    %15 = sbr.rel (0) target = $region13
  $region12: #{forward.9} parent=0 // pred_region
    _
  $region13: #{forward.9} parent=0 // pred_fallthru
    _
  // Predicated region
  $region14: #{forward.9} parent=0 // pred_check
    _
  $region15: #{forward.9} parent=0 // pred_check_branch
    %17 = sbr.rel (0) target = $region17
  $region16: #{forward.9} parent=0 // pred_region
    _
  $region17: #{forward.9} parent=0 // pred_fallthru
    _
  // Predicated region
  $region18: #{forward.9} parent=0 // pred_check
    _
  $region19: #{forward.9} parent=0 // pred_check_branch
    %19 = sbr.rel (0) target = $region21
  $region20: #{forward.9} parent=0 // pred_region
    _
  $region21: #{forward.9} parent=0 // pred_fallthru
    _
  %v21 = vld [vmem:[%s0] sm:$0xf]
  %v22 = vld [vmem:[%s0 + $0x4] sm:$0xf]
  %v23 = vld [vmem:[%s0 + $0x8] sm:$0xf]
  %v24 = vld [vmem:[%s1] sm:$0xf]
  %v25 = vld [vmem:[%s1 + $0x4] sm:$0xf]
  %v26 = vld [vmem:[%s1 + $0x8] sm:$0xf]
  %v27 = vld [vmem:[%s1 + $0xc] sm:$0xf]
  %v28 = vld [vmem:[%s1 + $0x10] sm:$0xf]
  %v29 = vld [vmem:[%s1 + $0x14] sm:$0xf]
  %v30 = vld [vmem:[%s1 + $0x18] sm:$0xf]
  %v31 = vld [vmem:[%s1 + $0x1c] sm:$0xf]
  %v32 = vld [vmem:[%s1 + $0x20] sm:$0xf]
  %v33 = vld [vmem:[%s1 + $0x24] sm:$0xf]
  %v34 = vld [vmem:[%s1 + $0x28] sm:$0xf]
  %v35 = vld [vmem:[%s1 + $0x2c] sm:$0xf]
  %v36 = vld [vmem:[%s1 + $0x30] sm:$0xf]
  %v37 = vld [vmem:[%s1 + $0x34] sm:$0xf]
  %v38 = vld [vmem:[%s1 + $0x38] sm:$0xf]
  %v39 = vld [vmem:[%s1 + $0x3c] sm:$0xf]
  %v40 = vld [vmem:[%s1 + $0x40] sm:$0xf]
  %v41 = vld [vmem:[%s1 + $0x44] sm:$0xf]
  %v42 = vld [vmem:[%s1 + $0x48] sm:$0xf]
  %v43 = vld [vmem:[%s1 + $0x4c] sm:$0xf]
  %v44 = vld [vmem:[%s1 + $0x50] sm:$0xf]
  %v45 = vld [vmem:[%s1 + $0x54] sm:$0xf]
  %v46 = vld [vmem:[%s1 + $0x58] sm:$0xf]
  %v47 = vld [vmem:[%s1 + $0x5c] sm:$0xf]
  %v48 = vld [vmem:[%s1 + $0x60] sm:$0xf]
  %v49 = vld [vmem:[%s1 + $0x64] sm:$0xf]
  %v50 = vld [vmem:[%s1 + $0x68] sm:$0xf]
  %v51 = vld [vmem:[%s1 + $0x6c] sm:$0xf]
  %v52 = vld [vmem:[%s1 + $0x70] sm:$0xf]
  %v53 = vld [vmem:[%s1 + $0x74] sm:$0xf]
  %v54 = vld [vmem:[%s1 + $0x78] sm:$0xf]
  %v55 = vld [vmem:[%s1 + $0x7c] sm:$0xf]
  %v56 = vld [vmem:[%s1 + $0x80] sm:$0xf]
  %v57 = vld [vmem:[%s1 + $0x84] sm:$0xf]
  %v58 = vld [vmem:[%s1 + $0x88] sm:$0xf]
  %v59 = vld [vmem:[%s1 + $0x8c] sm:$0xf]
  %v63 = vunpack.c.l.b16 %v21
  %v64 = vunpack.c.l.b16 %v22
  %v65 = vunpack.c.l.b16 %v23
  %v66 = vpack.c.b16 %v64, %v63
  %v67 = vpack.c.b16 %v65, %v65
  %vm68 = vcmask 1045504
  %v69 = vrot.slane %v66, 2
  %v70 = vrot.slane %v67, 2
  %v71 = vsel %vm68, %v69, %v70
  %v84 = vunpack.c.l.b16 %v36
  %v85 = vunpack.c.l.b16 %v37
  %v86 = vunpack.c.l.b16 %v38
  %v87 = vunpack.c.l.b16 %v39
  %v88 = vunpack.c.l.b16 %v40
  %v89 = vunpack.c.l.b16 %v41
  %v90 = vunpack.c.l.b16 %v42
  %v91 = vunpack.c.l.b16 %v43
  %v92 = vunpack.c.l.b16 %v44
  %v93 = vunpack.c.l.b16 %v45
  %v94 = vunpack.c.l.b16 %v46
  %v95 = vunpack.c.l.b16 %v47
  %v96 = vpack.c.b16 %v85, %v84
  %v97 = vpack.c.b16 %v87, %v86
  %v98 = vpack.c.b16 %v89, %v88
  %v99 = vpack.c.b16 %v91, %v90
  %v100 = vpack.c.b16 %v93, %v92
  %v101 = vpack.c.b16 %v95, %v94
  %vm108 = vcmask 785408
  %v110 = vsel %vm108, %v71, 0
  %112 = vmatprep.subr.bf16.mxu0 0
  %113 = vmatpush1.bf16.msra.mxu0 %v96
  %114 = vmatprep.subr.bf16.mxu0 0
  %115 = vmatpush1.bf16.msra.mxu0 %v97
  %116 = vmatprep.subr.bf16.mxu0 0
  %117 = vmatpush1.bf16.msra.mxu0 %v98
  %118 = vmatprep.subr.bf16.mxu0 0
  %119 = vmatpush1.bf16.msra.mxu0 %v99
  %120 = vmatprep.subr.bf16.mxu0 0
  %121 = vmatpush1.bf16.msra.mxu0 %v100
  %122 = vmatprep.subr.bf16.mxu0 0
  %123 = vmatpush1.bf16.msra.mxu0 %v101
  %124 = vmatprep.subr.bf16.mxu0 0
  %125 = vmatpush1.bf16.msra.mxu0 0
  %126 = vmatprep.subr.bf16.mxu0 0
  %127 = vmatpush1.bf16.msra.mxu0 0
  %128 = vmatprep.subr.bf16.mxu0 0
  %129 = vmatpush1.bf16.msra.mxu0 0
  %130 = vmatprep.subr.bf16.mxu0 0
  %131 = vmatpush1.bf16.msra.mxu0 0
  %132 = vmatprep.subr.bf16.mxu0 0
  %133 = vmatpush1.bf16.msra.mxu0 0
  %134 = vmatprep.subr.bf16.mxu0 0
  %135 = vmatpush1.bf16.msra.mxu0 0
  %136 = vmatprep.subr.bf16.mxu0 0
  %137 = vmatpush1.bf16.msra.mxu0 0
  %138 = vmatprep.subr.bf16.mxu0 0
  %139 = vmatpush1.bf16.msra.mxu0 0
  %140 = vmatprep.subr.bf16.mxu0 0
  %141 = vmatpush1.bf16.msra.mxu0 0
  %142 = vmatprep.subr.bf16.mxu0 0
  %143 = vmatpush1.bf16.msra.mxu0 0
  %144 = vmatprep.mubr.bf16.mxu0 0
  %145 = vmatmul.mubr.bf16.gmra.mrb[0].mxu0 %v110
  %v146 = vpop.f32.mrb[0].mxu0
  %v147 = vadd.f32 0.0, %v146
  %v148 = vpop.f32.mrb[0].mxu0
  %v149 = vpop.f32.mrb[0].mxu0
  %v150 = vadd.f32 0.0, %v149
  %v151 = vpop.f32.mrb[0].mxu0
  %152 = vdwg.mxu0
  %v165 = vunpack.c.l.b16 %v24
  %v166 = vunpack.c.l.b16 %v25
  %v167 = vunpack.c.l.b16 %v26
  %v168 = vunpack.c.l.b16 %v27
  %v169 = vunpack.c.l.b16 %v28
  %v170 = vunpack.c.l.b16 %v29
  %v171 = vunpack.c.l.b16 %v30
  %v172 = vunpack.c.l.b16 %v31
  %v173 = vunpack.c.l.b16 %v32
  %v174 = vunpack.c.l.b16 %v33
  %v175 = vunpack.c.l.b16 %v34
  %v176 = vunpack.c.l.b16 %v35
  %v177 = vpack.c.b16 %v166, %v165
  %v178 = vpack.c.b16 %v168, %v167
  %v179 = vpack.c.b16 %v170, %v169
  %v180 = vpack.c.b16 %v172, %v171
  %v181 = vpack.c.b16 %v174, %v173
  %v182 = vpack.c.b16 %v176, %v175
  %v190 = vsel %vm108, %v66, 0
  %192 = vmatprep.subr.bf16.mxu0 0
  %193 = vmatpush1.bf16.msra.mxu0 %v177
  %194 = vmatprep.subr.bf16.mxu0 0
  %195 = vmatpush1.bf16.msra.mxu0 %v178
  %196 = vmatprep.subr.bf16.mxu0 0
  %197 = vmatpush1.bf16.msra.mxu0 %v179
  %198 = vmatprep.subr.bf16.mxu0 0
  %199 = vmatpush1.bf16.msra.mxu0 %v180
  %200 = vmatprep.subr.bf16.mxu0 0
  %201 = vmatpush1.bf16.msra.mxu0 %v181
  %202 = vmatprep.subr.bf16.mxu0 0
  %203 = vmatpush1.bf16.msra.mxu0 %v182
  %204 = vmatprep.subr.bf16.mxu0 0
  %205 = vmatpush1.bf16.msra.mxu0 0
  %206 = vmatprep.subr.bf16.mxu0 0
  %207 = vmatpush1.bf16.msra.mxu0 0
  %208 = vmatprep.subr.bf16.mxu0 0
  %209 = vmatpush1.bf16.msra.mxu0 0
  %210 = vmatprep.subr.bf16.mxu0 0
  %211 = vmatpush1.bf16.msra.mxu0 0
  %212 = vmatprep.subr.bf16.mxu0 0
  %213 = vmatpush1.bf16.msra.mxu0 0
  %214 = vmatprep.subr.bf16.mxu0 0
  %215 = vmatpush1.bf16.msra.mxu0 0
  %216 = vmatprep.subr.bf16.mxu0 0
  %217 = vmatpush1.bf16.msra.mxu0 0
  %218 = vmatprep.subr.bf16.mxu0 0
  %219 = vmatpush1.bf16.msra.mxu0 0
  %220 = vmatprep.subr.bf16.mxu0 0
  %221 = vmatpush1.bf16.msra.mxu0 0
  %222 = vmatprep.subr.bf16.mxu0 0
  %223 = vmatpush1.bf16.msra.mxu0 0
  %224 = vmatprep.mubr.bf16.mxu0 0
  %225 = vmatmul.mubr.bf16.gmra.mrb[0].mxu0 %v190
  %v226 = vpop.f32.mrb[0].mxu0
  %v227 = vadd.f32 %v147, %v226
  %v228 = vpop.f32.mrb[0].mxu0
  %v229 = vpop.f32.mrb[0].mxu0
  %v230 = vadd.f32 %v150, %v229
  %v231 = vpop.f32.mrb[0].mxu0
  %232 = vdwg.mxu0
  %v233 = vpack.c.b16 %v65, %v64
  %v246 = vunpack.c.l.b16 %v48
  %v247 = vunpack.c.l.b16 %v49
  %v248 = vunpack.c.l.b16 %v50
  %v249 = vunpack.c.l.b16 %v51
  %v250 = vunpack.c.l.b16 %v52
  %v251 = vunpack.c.l.b16 %v53
  %v252 = vunpack.c.l.b16 %v54
  %v253 = vunpack.c.l.b16 %v55
  %v254 = vunpack.c.l.b16 %v56
  %v255 = vunpack.c.l.b16 %v57
  %v256 = vunpack.c.l.b16 %v58
  %v257 = vunpack.c.l.b16 %v59
  %v258 = vpack.c.b16 %v247, %v246
  %v259 = vpack.c.b16 %v249, %v248
  %v260 = vpack.c.b16 %v251, %v250
  %v261 = vpack.c.b16 %v253, %v252
  %v262 = vpack.c.b16 %v255, %v254
  %v263 = vpack.c.b16 %v257, %v256
  %v271 = vsel %vm108, %v233, 0
  %273 = vmatprep.subr.bf16.mxu0 0
  %274 = vmatpush1.bf16.msra.mxu0 %v258
  %275 = vmatprep.subr.bf16.mxu0 0
  %276 = vmatpush1.bf16.msra.mxu0 %v259
  %277 = vmatprep.subr.bf16.mxu0 0
  %278 = vmatpush1.bf16.msra.mxu0 %v260
  %279 = vmatprep.subr.bf16.mxu0 0
  %280 = vmatpush1.bf16.msra.mxu0 %v261
  %281 = vmatprep.subr.bf16.mxu0 0
  %282 = vmatpush1.bf16.msra.mxu0 %v262
  %283 = vmatprep.subr.bf16.mxu0 0
  %284 = vmatpush1.bf16.msra.mxu0 %v263
  %285 = vmatprep.subr.bf16.mxu0 0
  %286 = vmatpush1.bf16.msra.mxu0 0
  %287 = vmatprep.subr.bf16.mxu0 0
  %288 = vmatpush1.bf16.msra.mxu0 0
  %289 = vmatprep.subr.bf16.mxu0 0
  %290 = vmatpush1.bf16.msra.mxu0 0
  %291 = vmatprep.subr.bf16.mxu0 0
  %292 = vmatpush1.bf16.msra.mxu0 0
  %293 = vmatprep.subr.bf16.mxu0 0
  %294 = vmatpush1.bf16.msra.mxu0 0
  %295 = vmatprep.subr.bf16.mxu0 0
  %296 = vmatpush1.bf16.msra.mxu0 0
  %297 = vmatprep.subr.bf16.mxu0 0
  %298 = vmatpush1.bf16.msra.mxu0 0
  %299 = vmatprep.subr.bf16.mxu0 0
  %300 = vmatpush1.bf16.msra.mxu0 0
  %301 = vmatprep.subr.bf16.mxu0 0
  %302 = vmatpush1.bf16.msra.mxu0 0
  %303 = vmatprep.subr.bf16.mxu0 0
  %304 = vmatpush1.bf16.msra.mxu0 0
  %305 = vmatprep.mubr.bf16.mxu0 0
  %306 = vmatmul.mubr.bf16.gmra.mrb[0].mxu0 %v271
  %v307 = vpop.f32.mrb[0].mxu0
  %v308 = vadd.f32 0.0, %v307
  %v309 = vpop.f32.mrb[0].mxu0
  %v310 = vpop.f32.mrb[0].mxu0
  %v311 = vadd.f32 0.0, %v310
  %v312 = vpop.f32.mrb[0].mxu0
  %313 = vdwg.mxu0
  %v314 = vadd.f32 %v227, %v308
  %v315 = vadd.f32 %v230, %v311
  %v316 = vld [vmem:[%s2] sm:$0x1]
  %v318 = vlaneseq
  %v319 = vshrl.u32 %v318, 7
  %v320 = vsub.s32 0, %v319
  %v321 = vrot.slane %v316, %v320
  %v323 = vadd.f32 %v314, %v321
  %v324 = vadd.f32 %v315, %v321
  %v325 = vmax.f32 %v323, 0.0
  %v326 = vmax.f32 %v324, 0.0
  %vm327 = vcmask 523264
  %v328 = vsel %vm327, %v325, 0.0
  %v329 = vsel %vm327, %v326, 0.0
  %v330 = vadd.f32 %v328, %v329
  %v331 = vrot.slane %v330, 4
  %v332 = vadd.f32 %v330, %v331
  %v333 = vrot.slane %v332, 2
  %v334 = vadd.f32 %v332, %v333
  %v335 = vrot.slane %v334, 1
  %v336 = vadd.f32 %v334, %v335
  %v337 = vrcp.pop 16.0
  %v338 = vmul.f32 %v336, %v337
  %v339 = vsub.f32 %v325, %v338
  %v340 = vsub.f32 %v326, %v338
  %v341 = vmul.f32 %v339, %v339
  %v342 = vmul.f32 %v340, %v340
  %v343 = vsel %vm327, %v341, 0.0
  %v344 = vsel %vm327, %v342, 0.0
  %v345 = vadd.f32 %v343, %v344
  %v346 = vrot.slane %v345, 4
  %v347 = vadd.f32 %v345, %v346
  %v348 = vrot.slane %v347, 2
  %v349 = vadd.f32 %v347, %v348
  %v350 = vrot.slane %v349, 1
  %v351 = vadd.f32 %v349, %v350
  %v352 = vmul.f32 %v351, 0.06666667
  %v353 = vld [vmem:[%s3] sm:$0x1]
  %v354 = vrsqrt.pop %v352
  %v355 = vmul.f32 %v352, %v354
  %vm356 = vcmp.eq.f32.partialorder %v352, inf
  %v357 = vsel %vm356, %v352, %v355
  %vm358 = vcmp.eq.f32.partialorder %v352, 0.0
  %v359 = vand.u32 %v352, 2147483648
  %v360 = vsel %vm358, %v359, %v357
  %v361 = vadd.f32 %v360, 1e-06
  %v362 = vrcp.pop %v361
  %v363 = vmul.f32 %v353, %v362
  %v365 = vlaneseq
  %v366 = vshrl.u32 %v365, 7
  %v367 = vsub.s32 0, %v366
  %v368 = vrot.slane %v363, %v367
  %v370 = vmul.f32 %v339, %v368
  %v371 = vmul.f32 %v340, %v368
  %v372 = vld [vmem:[%s4] sm:$0x1]
  %v374 = vlaneseq
  %v375 = vshrl.u32 %v374, 7
  %v376 = vsub.s32 0, %v375
  %v377 = vrot.slane %v372, %v376
  %v379 = vadd.f32 %v370, %v377
  %v380 = vadd.f32 %v371, %v377
  %381 = vst.msk [vmem:[#allocation2] sm:$0xff] %vm327, %v379
  %382 = vst.msk [vmem:[#allocation2 + $0x8] sm:$0xff] %vm327, %v380
  %v383 = vld [vmem:[#allocation2] ss:$2 sm:$0xff]
  %s384 = scalar_lea.vmem [#allocation2], 1
  %v385 = vld [vmem:[%s384] ss:$2 sm:$0xff]
  %v386 = vmax.f32 %v383, %v385
  %v388 = vrot.slane %v386, 2
  %vm390 = vcmask 1041408
  %v391 = vsel %vm390, %v386, %v388
  %v392 = vrot.slane %v386, 4
  %v394 = vsel %vm390, %v388, %v392
  %v395 = vmax.f32 %v391, %v394
  %v396 = vpack.c.bf16 %v395, %v395
  %vm397 = vcmask 517120
  %398 = vst.msk [vmem:[%s5] sm:$0x3] %vm397, %v396
  // Predicated region
  $region22: #{forward.9} parent=0 // pred_check
    _
  $region23: #{forward.9} parent=0 // pred_check_branch
    %400 = sbr.rel (0) target = $region25
  $region24: #{forward.9} parent=0 // pred_region
    _
  $region25: #{forward.9} parent=0 // pred_fallthru
    _
  // Predicated region
  $region26: #{forward.9} parent=0 // pred_check
    _
  $region27: #{forward.9} parent=0 // pred_check_branch
    %402 = sbr.rel (0) target = $region29
  $region28: #{forward.9} parent=0 // pred_region
    _
  $region29: #{forward.9} parent=0 // pred_fallthru
    _

// kernel: forward.8
$region0: #{forward.8}
  #allocation0 [shape = 'u32[]', space=smem, size = 0x4, offset = 0x4, fixed_abs, tag = 'smem constant byte address 0x4 - core index']
  #allocation1 [shape = 'u32[144,128]{1,0:T(1,128)}', space=vmem, size = 0x12000, scoped, tag = 'internal scratch']
  #allocation2 [shape = 'f32[64,32]{1,0:T(8,128)}', space=vmem, size = 0x8000, scoped, tag = 'scratch operand']
  %s0 = inlined_call_operand.vmem [shape: bf16[80,48], index: 0, kind: input, shape index: {}]
  %s1 = inlined_call_operand.vmem [shape: bf16[144,32], index: 1, kind: input, shape index: {}]
  %s2 = inlined_call_operand.vmem [shape: f32[1,32], index: 2, kind: input, shape index: {}]
  %s3 = inlined_call_operand.vmem [shape: f32[1,32], index: 3, kind: input, shape index: {}]
  %s4 = inlined_call_operand.vmem [shape: f32[1,32], index: 4, kind: input, shape index: {}]
  %s5 = inlined_call_operand.vmem [shape: bf16[16,32], index: 5, kind: output, shape index: {}]
  %s6 = sld [smem:[#allocation0]]
  $region30: #{forward.8} parent=0
    _
  %s8 = ssub.s32 1, %s6
  %s9 = scalar_select 0, %s8, %s6
  // Predicated region
  $region2: #{forward.8} parent=0 // pred_check
    _
  $region3: #{forward.8} parent=0 // pred_check_branch
    %11 = sbr.rel (0) target = $region5
  $region4: #{forward.8} parent=0 // pred_region
    _
  $region5: #{forward.8} parent=0 // pred_fallthru
    _
  // Predicated region
  $region6: #{forward.8} parent=0 // pred_check
    _
  $region7: #{forward.8} parent=0 // pred_check_branch
    %13 = sbr.rel (0) target = $region9
  $region8: #{forward.8} parent=0 // pred_region
    _
  $region9: #{forward.8} parent=0 // pred_fallthru
    _
  // Predicated region
  $region10: #{forward.8} parent=0 // pred_check
    _
  $region11: #{forward.8} parent=0 // pred_check_branch
    %15 = sbr.rel (0) target = $region13
  $region12: #{forward.8} parent=0 // pred_region
    _
  $region13: #{forward.8} parent=0 // pred_fallthru
    _
  // Predicated region
  $region14: #{forward.8} parent=0 // pred_check
    _
  $region15: #{forward.8} parent=0 // pred_check_branch
    %17 = sbr.rel (0) target = $region17
  $region16: #{forward.8} parent=0 // pred_region
    _
  $region17: #{forward.8} parent=0 // pred_fallthru
    _
  // Predicated region
  $region18: #{forward.8} parent=0 // pred_check
    _
  $region19: #{forward.8} parent=0 // pred_check_branch
    %19 = sbr.rel (0) target = $region21
  $region20: #{forward.8} parent=0 // pred_region
    _
  $region21: #{forward.8} parent=0 // pred_fallthru
    _
  %v21 = vld [vmem:[%s0] sm:$0xf]
  %v22 = vld [vmem:[%s0 + $0x4] sm:$0xf]
  %v23 = vld [vmem:[%s0 + $0x8] sm:$0xf]
  %v24 = vld [vmem:[%s0 + $0xc] sm:$0xf]
  %v25 = vld [vmem:[%s0 + $0x10] sm:$0xf]
  %v26 = vld [vmem:[%s0 + $0x14] sm:$0xf]
  %v27 = vld [vmem:[%s0 + $0x18] sm:$0xf]
  %v28 = vld [vmem:[%s0 + $0x1c] sm:$0xf]
  %v29 = vld [vmem:[%s0 + $0x20] sm:$0xf]
  %v30 = vld [vmem:[%s0 + $0x24] sm:$0xf]
  %v31 = vld [vmem:[%s1] sm:$0xf]
  %v32 = vld [vmem:[%s1 + $0x4] sm:$0xf]
  %v33 = vld [vmem:[%s1 + $0x8] sm:$0xf]
  %v34 = vld [vmem:[%s1 + $0xc] sm:$0xf]
  %v35 = vld [vmem:[%s1 + $0x10] sm:$0xf]
  %v36 = vld [vmem:[%s1 + $0x14] sm:$0xf]
  %v37 = vld [vmem:[%s1 + $0x18] sm:$0xf]
  %v38 = vld [vmem:[%s1 + $0x1c] sm:$0xf]
  %v39 = vld [vmem:[%s1 + $0x20] sm:$0xf]
  %v40 = vld [vmem:[%s1 + $0x24] sm:$0xf]
  %v41 = vld [vmem:[%s1 + $0x28] sm:$0xf]
  %v42 = vld [vmem:[%s1 + $0x2c] sm:$0xf]
  %v43 = vld [vmem:[%s1 + $0x30] sm:$0xf]
  %v44 = vld [vmem:[%s1 + $0x34] sm:$0xf]
  %v45 = vld [vmem:[%s1 + $0x38] sm:$0xf]
  %v46 = vld [vmem:[%s1 + $0x3c] sm:$0xf]
  %v47 = vld [vmem:[%s1 + $0x40] sm:$0xf]
  %v48 = vld [vmem:[%s1 + $0x44] sm:$0xf]
  %v57 = vunpack.c.l.b16 %v22
  %v58 = vunpack.c.l.b16 %v23
  %v59 = vunpack.c.l.b16 %v24
  %v60 = vunpack.c.l.b16 %v25
  %v61 = vunpack.c.l.b16 %v26
  %v62 = vunpack.c.l.b16 %v27
  %v63 = vunpack.c.l.b16 %v28
  %v64 = vunpack.c.l.b16 %v29
  %v65 = vpack.c.b16 %v58, %v57
  %v66 = vpack.c.b16 %v60, %v59
  %v67 = vpack.c.b16 %v62, %v61
  %v68 = vpack.c.b16 %v64, %v63
  %v75 = vunpack.c.l.b16 %v37
  %v76 = vunpack.c.l.b16 %v38
  %v77 = vunpack.c.l.b16 %v39
  %v78 = vunpack.c.l.b16 %v40
  %v79 = vunpack.c.l.b16 %v41
  %v80 = vunpack.c.l.b16 %v42
  %v81 = vpack.c.b16 %v76, %v75
  %v82 = vpack.c.b16 %v78, %v77
  %v83 = vpack.c.b16 %v80, %v79
  %vm87 = vcmask 392192
  %v89 = vsel %vm87, %v65, 0
  %v92 = vsel %vm87, %v66, 0
  %v95 = vsel %vm87, %v67, 0
  %v98 = vsel %vm87, %v68, 0
  %100 = vmatprep.subr.bf16.mxu0 0
  %101 = vmatpush1.bf16.msra.mxu0 %v81
  %102 = vmatprep.subr.bf16.mxu0 0
  %103 = vmatpush1.bf16.msra.mxu0 %v82
  %104 = vmatprep.subr.bf16.mxu0 0
  %105 = vmatpush1.bf16.msra.mxu0 %v83
  %106 = vmatprep.subr.bf16.mxu0 0
  %107 = vmatpush1.bf16.msra.mxu0 0
  %108 = vmatprep.subr.bf16.mxu0 0
  %109 = vmatpush1.bf16.msra.mxu0 0
  %110 = vmatprep.subr.bf16.mxu0 0
  %111 = vmatpush1.bf16.msra.mxu0 0
  %112 = vmatprep.subr.bf16.mxu0 0
  %113 = vmatpush1.bf16.msra.mxu0 0
  %114 = vmatprep.subr.bf16.mxu0 0
  %115 = vmatpush1.bf16.msra.mxu0 0
  %116 = vmatprep.subr.bf16.mxu0 0
  %117 = vmatpush1.bf16.msra.mxu0 0
  %118 = vmatprep.subr.bf16.mxu0 0
  %119 = vmatpush1.bf16.msra.mxu0 0
  %120 = vmatprep.subr.bf16.mxu0 0
  %121 = vmatpush1.bf16.msra.mxu0 0
  %122 = vmatprep.subr.bf16.mxu0 0
  %123 = vmatpush1.bf16.msra.mxu0 0
  %124 = vmatprep.subr.bf16.mxu0 0
  %125 = vmatpush1.bf16.msra.mxu0 0
  %126 = vmatprep.subr.bf16.mxu0 0
  %127 = vmatpush1.bf16.msra.mxu0 0
  %128 = vmatprep.subr.bf16.mxu0 0
  %129 = vmatpush1.bf16.msra.mxu0 0
  %130 = vmatprep.subr.bf16.mxu0 0
  %131 = vmatpush1.bf16.msra.mxu0 0
  %132 = vmatprep.mubr.bf16.mxu0 0
  %133 = vmatmul.mubr.bf16.gmra.mrb[0].mxu0 %v89
  %v134 = vpop.f32.mrb[0].mxu0
  %v135 = vadd.f32 0.0, %v134
  %v136 = vpop.f32.mrb[0].mxu0
  %v137 = vpop.f32.mrb[0].mxu0
  %v138 = vadd.f32 0.0, %v137
  %v139 = vpop.f32.mrb[0].mxu0
  %140 = vmatprep.mubr.bf16.mxu0 0
  %141 = vmatmul.mubr.bf16.gmra.mrb[0].mxu0 %v92
  %v142 = vpop.f32.mrb[0].mxu0
  %v143 = vadd.f32 0.0, %v142
  %v144 = vpop.f32.mrb[0].mxu0
  %v145 = vpop.f32.mrb[0].mxu0
  %v146 = vadd.f32 0.0, %v145
  %v147 = vpop.f32.mrb[0].mxu0
  %148 = vmatprep.mubr.bf16.mxu0 0
  %149 = vmatmul.mubr.bf16.gmra.mrb[0].mxu0 %v95
  %v150 = vpop.f32.mrb[0].mxu0
  %v151 = vadd.f32 0.0, %v150
  %v152 = vpop.f32.mrb[0].mxu0
  %v153 = vpop.f32.mrb[0].mxu0
  %v154 = vadd.f32 0.0, %v153
  %v155 = vpop.f32.mrb[0].mxu0
  %156 = vmatprep.mubr.bf16.mxu0 0
  %157 = vmatmul.mubr.bf16.gmra.mrb[0].mxu0 %v98
  %v158 = vpop.f32.mrb[0].mxu0
  %v159 = vadd.f32 0.0, %v158
  %v160 = vpop.f32.mrb[0].mxu0
  %v161 = vpop.f32.mrb[0].mxu0
  %v162 = vadd.f32 0.0, %v161
  %v163 = vpop.f32.mrb[0].mxu0
  %164 = vdwg.mxu0
  %v166 = vunpack.c.l.b16 %v21
  %v167 = vpack.c.b16 %v57, %v166
  %v168 = vpack.c.b16 %v59, %v58
  %v169 = vpack.c.b16 %v61, %v60
  %v170 = vpack.c.b16 %v63, %v62
  %v177 = vunpack.c.l.b16 %v31
  %v178 = vunpack.c.l.b16 %v32
  %v179 = vunpack.c.l.b16 %v33
  %v180 = vunpack.c.l.b16 %v34
  %v181 = vunpack.c.l.b16 %v35
  %v182 = vunpack.c.l.b16 %v36
  %v183 = vpack.c.b16 %v178, %v177
  %v184 = vpack.c.b16 %v180, %v179
  %v185 = vpack.c.b16 %v182, %v181
  %v190 = vsel %vm87, %v167, 0
  %v193 = vsel %vm87, %v168, 0
  %v196 = vsel %vm87, %v169, 0
  %v199 = vsel %vm87, %v170, 0
  %201 = vmatprep.subr.bf16.mxu0 0
  %202 = vmatpush1.bf16.msra.mxu0 %v183
  %203 = vmatprep.subr.bf16.mxu0 0
  %204 = vmatpush1.bf16.msra.mxu0 %v184
  %205 = vmatprep.subr.bf16.mxu0 0
  %206 = vmatpush1.bf16.msra.mxu0 %v185
  %207 = vmatprep.subr.bf16.mxu0 0
  %208 = vmatpush1.bf16.msra.mxu0 0
  %209 = vmatprep.subr.bf16.mxu0 0
  %210 = vmatpush1.bf16.msra.mxu0 0
  %211 = vmatprep.subr.bf16.mxu0 0
  %212 = vmatpush1.bf16.msra.mxu0 0
  %213 = vmatprep.subr.bf16.mxu0 0
  %214 = vmatpush1.bf16.msra.mxu0 0
  %215 = vmatprep.subr.bf16.mxu0 0
  %216 = vmatpush1.bf16.msra.mxu0 0
  %217 = vmatprep.subr.bf16.mxu0 0
  %218 = vmatpush1.bf16.msra.mxu0 0
  %219 = vmatprep.subr.bf16.mxu0 0
  %220 = vmatpush1.bf16.msra.mxu0 0
  %221 = vmatprep.subr.bf16.mxu0 0
  %222 = vmatpush1.bf16.msra.mxu0 0
  %223 = vmatprep.subr.bf16.mxu0 0
  %224 = vmatpush1.bf16.msra.mxu0 0
  %225 = vmatprep.subr.bf16.mxu0 0
  %226 = vmatpush1.bf16.msra.mxu0 0
  %227 = vmatprep.subr.bf16.mxu0 0
  %228 = vmatpush1.bf16.msra.mxu0 0
  %229 = vmatprep.subr.bf16.mxu0 0
  %230 = vmatpush1.bf16.msra.mxu0 0
  %231 = vmatprep.subr.bf16.mxu0 0
  %232 = vmatpush1.bf16.msra.mxu0 0
  %233 = vmatprep.mubr.bf16.mxu0 0
  %234 = vmatmul.mubr.bf16.gmra.mrb[0].mxu0 %v190
  %v235 = vpop.f32.mrb[0].mxu0
  %v236 = vadd.f32 %v135, %v235
  %v237 = vpop.f32.mrb[0].mxu0
  %v238 = vpop.f32.mrb[0].mxu0
  %v239 = vadd.f32 %v138, %v238
  %v240 = vpop.f32.mrb[0].mxu0
  %241 = vmatprep.mubr.bf16.mxu0 0
  %242 = vmatmul.mubr.bf16.gmra.mrb[0].mxu0 %v193
  %v243 = vpop.f32.mrb[0].mxu0
  %v244 = vadd.f32 %v143, %v243
  %v245 = vpop.f32.mrb[0].mxu0
  %v246 = vpop.f32.mrb[0].mxu0
  %v247 = vadd.f32 %v146, %v246
  %v248 = vpop.f32.mrb[0].mxu0
  %249 = vmatprep.mubr.bf16.mxu0 0
  %250 = vmatmul.mubr.bf16.gmra.mrb[0].mxu0 %v196
  %v251 = vpop.f32.mrb[0].mxu0
  %v252 = vadd.f32 %v151, %v251
  %v253 = vpop.f32.mrb[0].mxu0
  %v254 = vpop.f32.mrb[0].mxu0
  %v255 = vadd.f32 %v154, %v254
  %v256 = vpop.f32.mrb[0].mxu0
  %257 = vmatprep.mubr.bf16.mxu0 0
  %258 = vmatmul.mubr.bf16.gmra.mrb[0].mxu0 %v199
  %v259 = vpop.f32.mrb[0].mxu0
  %v260 = vadd.f32 %v159, %v259
  %v261 = vpop.f32.mrb[0].mxu0
  %v262 = vpop.f32.mrb[0].mxu0
  %v263 = vadd.f32 %v162, %v262
  %v264 = vpop.f32.mrb[0].mxu0
  %265 = vdwg.mxu0
  %v267 = vunpack.c.l.b16 %v30
  %v268 = vpack.c.b16 %v267, %v64
  %v275 = vunpack.c.l.b16 %v43
  %v276 = vunpack.c.l.b16 %v44
  %v277 = vunpack.c.l.b16 %v45
  %v278 = vunpack.c.l.b16 %v46
  %v279 = vunpack.c.l.b16 %v47
  %v280 = vunpack.c.l.b16 %v48
  %v281 = vpack.c.b16 %v276, %v275
  %v282 = vpack.c.b16 %v278, %v277
  %v283 = vpack.c.b16 %v280, %v279
  %v288 = vsel %vm87, %v268, 0
  %290 = vmatprep.subr.bf16.mxu0 0
  %291 = vmatpush1.bf16.msra.mxu0 %v281
  %292 = vmatprep.subr.bf16.mxu0 0
  %293 = vmatpush1.bf16.msra.mxu0 %v282
  %294 = vmatprep.subr.bf16.mxu0 0
  %295 = vmatpush1.bf16.msra.mxu0 %v283
  %296 = vmatprep.subr.bf16.mxu0 0
  %297 = vmatpush1.bf16.msra.mxu0 0
  %298 = vmatprep.subr.bf16.mxu0 0
  %299 = vmatpush1.bf16.msra.mxu0 0
  %300 = vmatprep.subr.bf16.mxu0 0
  %301 = vmatpush1.bf16.msra.mxu0 0
  %302 = vmatprep.subr.bf16.mxu0 0
  %303 = vmatpush1.bf16.msra.mxu0 0
  %304 = vmatprep.subr.bf16.mxu0 0
  %305 = vmatpush1.bf16.msra.mxu0 0
  %306 = vmatprep.subr.bf16.mxu0 0
  %307 = vmatpush1.bf16.msra.mxu0 0
  %308 = vmatprep.subr.bf16.mxu0 0
  %309 = vmatpush1.bf16.msra.mxu0 0
  %310 = vmatprep.subr.bf16.mxu0 0
  %311 = vmatpush1.bf16.msra.mxu0 0
  %312 = vmatprep.subr.bf16.mxu0 0
  %313 = vmatpush1.bf16.msra.mxu0 0
  %314 = vmatprep.subr.bf16.mxu0 0
  %315 = vmatpush1.bf16.msra.mxu0 0
  %316 = vmatprep.subr.bf16.mxu0 0
  %317 = vmatpush1.bf16.msra.mxu0 0
  %318 = vmatprep.subr.bf16.mxu0 0
  %319 = vmatpush1.bf16.msra.mxu0 0
  %320 = vmatprep.subr.bf16.mxu0 0
  %321 = vmatpush1.bf16.msra.mxu0 0
  %322 = vmatprep.mubr.bf16.mxu0 0
  %323 = vmatmul.mubr.bf16.gmra.mrb[0].mxu0 %v193
  %v324 = vpop.f32.mrb[0].mxu0
  %v325 = vadd.f32 0.0, %v324
  %v326 = vpop.f32.mrb[0].mxu0
  %v327 = vpop.f32.mrb[0].mxu0
  %v328 = vadd.f32 0.0, %v327
  %v329 = vpop.f32.mrb[0].mxu0
  %330 = vmatprep.mubr.bf16.mxu0 0
  %331 = vmatmul.mubr.bf16.gmra.mrb[0].mxu0 %v196
  %v332 = vpop.f32.mrb[0].mxu0
  %v333 = vadd.f32 0.0, %v332
  %v334 = vpop.f32.mrb[0].mxu0
  %v335 = vpop.f32.mrb[0].mxu0
  %v336 = vadd.f32 0.0, %v335
  %v337 = vpop.f32.mrb[0].mxu0
  %338 = vmatprep.mubr.bf16.mxu0 0
  %339 = vmatmul.mubr.bf16.gmra.mrb[0].mxu0 %v199
  %v340 = vpop.f32.mrb[0].mxu0
  %v341 = vadd.f32 0.0, %v340
  %v342 = vpop.f32.mrb[0].mxu0
  %v343 = vpop.f32.mrb[0].mxu0
  %v344 = vadd.f32 0.0, %v343
  %v345 = vpop.f32.mrb[0].mxu0
  %346 = vmatprep.mubr.bf16.mxu0 0
  %347 = vmatmul.mubr.bf16.gmra.mrb[0].mxu0 %v288
  %v348 = vpop.f32.mrb[0].mxu0
  %v349 = vadd.f32 0.0, %v348
  %v350 = vpop.f32.mrb[0].mxu0
  %v351 = vpop.f32.mrb[0].mxu0
  %v352 = vadd.f32 0.0, %v351
  %v353 = vpop.f32.mrb[0].mxu0
  %354 = vdwg.mxu0
  %v355 = vadd.f32 %v236, %v325
  %v356 = vadd.f32 %v239, %v328
  %v357 = vadd.f32 %v244, %v333
  %v358 = vadd.f32 %v247, %v336
  %v359 = vadd.f32 %v252, %v341
  %v360 = vadd.f32 %v255, %v344
  %v361 = vadd.f32 %v260, %v349
  %v362 = vadd.f32 %v263, %v352
  %v363 = vld [vmem:[%s2] sm:$0x1]
  %v365 = vlaneseq
  %v366 = vshrl.u32 %v365, 7
  %v367 = vsub.s32 0, %v366
  %v368 = vrot.slane %v363, %v367
  %v370 = vadd.f32 %v355, %v368
  %v371 = vadd.f32 %v356, %v368
  %v372 = vadd.f32 %v357, %v368
  %v373 = vadd.f32 %v358, %v368
  %v374 = vadd.f32 %v359, %v368
  %v375 = vadd.f32 %v360, %v368
  %v376 = vadd.f32 %v361, %v368
  %v377 = vadd.f32 %v362, %v368
  %v378 = vmax.f32 %v370, 0.0
  %v379 = vmax.f32 %v371, 0.0
  %v380 = vmax.f32 %v372, 0.0
  %v381 = vmax.f32 %v373, 0.0
  %v382 = vmax.f32 %v374, 0.0
  %v383 = vmax.f32 %v375, 0.0
  %v384 = vmax.f32 %v376, 0.0
  %v385 = vmax.f32 %v377, 0.0
  %vm386 = vcmask 261120
  %v387 = vsel %vm386, %v378, 0.0
  %v388 = vsel %vm386, %v379, 0.0
  %v389 = vadd.f32 %v387, %v388
  %v390 = vsel %vm386, %v380, 0.0
  %v391 = vadd.f32 %v389, %v390
  %v392 = vsel %vm386, %v381, 0.0
  %v393 = vadd.f32 %v391, %v392
  %v394 = vsel %vm386, %v382, 0.0
  %v395 = vadd.f32 %v393, %v394
  %v396 = vsel %vm386, %v383, 0.0
  %v397 = vadd.f32 %v395, %v396
  %v398 = vsel %vm386, %v384, 0.0
  %v399 = vadd.f32 %v397, %v398
  %v400 = vsel %vm386, %v385, 0.0
  %v401 = vadd.f32 %v399, %v400
  %v402 = vrot.slane %v401, 4
  %v403 = vadd.f32 %v401, %v402
  %v404 = vrot.slane %v403, 2
  %v405 = vadd.f32 %v403, %v404
  %v406 = vrot.slane %v405, 1
  %v407 = vadd.f32 %v405, %v406
  %v408 = vrcp.pop 64.0
  %v409 = vmul.f32 %v407, %v408
  %v410 = vsub.f32 %v378, %v409
  %v411 = vsub.f32 %v379, %v409
  %v412 = vsub.f32 %v380, %v409
  %v413 = vsub.f32 %v381, %v409
  %v414 = vsub.f32 %v382, %v409
  %v415 = vsub.f32 %v383, %v409
  %v416 = vsub.f32 %v384, %v409
  %v417 = vsub.f32 %v385, %v409
  %v418 = vmul.f32 %v410, %v410
  %v419 = vmul.f32 %v411, %v411
  %v420 = vmul.f32 %v412, %v412
  %v421 = vmul.f32 %v413, %v413
  %v422 = vmul.f32 %v414, %v414
  %v423 = vmul.f32 %v415, %v415
  %v424 = vmul.f32 %v416, %v416
  %v425 = vmul.f32 %v417, %v417
  %v426 = vsel %vm386, %v418, 0.0
  %v427 = vsel %vm386, %v419, 0.0
  %v428 = vadd.f32 %v426, %v427
  %v429 = vsel %vm386, %v420, 0.0
  %v430 = vadd.f32 %v428, %v429
  %v431 = vsel %vm386, %v421, 0.0
  %v432 = vadd.f32 %v430, %v431
  %v433 = vsel %vm386, %v422, 0.0
  %v434 = vadd.f32 %v432, %v433
  %v435 = vsel %vm386, %v423, 0.0
  %v436 = vadd.f32 %v434, %v435
  %v437 = vsel %vm386, %v424, 0.0
  %v438 = vadd.f32 %v436, %v437
  %v439 = vsel %vm386, %v425, 0.0
  %v440 = vadd.f32 %v438, %v439
  %v441 = vrot.slane %v440, 4
  %v442 = vadd.f32 %v440, %v441
  %v443 = vrot.slane %v442, 2
  %v444 = vadd.f32 %v442, %v443
  %v445 = vrot.slane %v444, 1
  %v446 = vadd.f32 %v444, %v445
  %v447 = vmul.f32 %v446, 0.015873017
  %v448 = vld [vmem:[%s3] sm:$0x1]
  %v449 = vrsqrt.pop %v447
  %v450 = vmul.f32 %v447, %v449
  %vm451 = vcmp.eq.f32.partialorder %v447, inf
  %v452 = vsel %vm451, %v447, %v450
  %vm453 = vcmp.eq.f32.partialorder %v447, 0.0
  %v454 = vand.u32 %v447, 2147483648
  %v455 = vsel %vm453, %v454, %v452
  %v456 = vadd.f32 %v455, 1e-06
  %v457 = vrcp.pop %v456
  %v458 = vmul.f32 %v448, %v457
  %v460 = vlaneseq
  %v461 = vshrl.u32 %v460, 7
  %v462 = vsub.s32 0, %v461
  %v463 = vrot.slane %v458, %v462
  %v465 = vmul.f32 %v410, %v463
  %v466 = vmul.f32 %v411, %v463
  %v467 = vmul.f32 %v412, %v463
  %v468 = vmul.f32 %v413, %v463
  %v469 = vmul.f32 %v414, %v463
  %v470 = vmul.f32 %v415, %v463
  %v471 = vmul.f32 %v416, %v463
  %v472 = vmul.f32 %v417, %v463
  %v473 = vld [vmem:[%s4] sm:$0x1]
  %v475 = vlaneseq
  %v476 = vshrl.u32 %v475, 7
  %v477 = vsub.s32 0, %v476
  %v478 = vrot.slane %v473, %v477
  %v480 = vadd.f32 %v465, %v478
  %v481 = vadd.f32 %v466, %v478
  %v482 = vadd.f32 %v467, %v478
  %v483 = vadd.f32 %v468, %v478
  %v484 = vadd.f32 %v469, %v478
  %v485 = vadd.f32 %v470, %v478
  %v486 = vadd.f32 %v471, %v478
  %v487 = vadd.f32 %v472, %v478
  %488 = vst.msk [vmem:[#allocation2] sm:$0xff] %vm386, %v480
  %489 = vst.msk [vmem:[#allocation2 + $0x8] sm:$0xff] %vm386, %v481
  %490 = vst.msk [vmem:[#allocation2 + $0x10] sm:$0xff] %vm386, %v482
  %491 = vst.msk [vmem:[#allocation2 + $0x18] sm:$0xff] %vm386, %v483
  %492 = vst.msk [vmem:[#allocation2 + $0x20] sm:$0xff] %vm386, %v484
  %493 = vst.msk [vmem:[#allocation2 + $0x28] sm:$0xff] %vm386, %v485
  %494 = vst.msk [vmem:[#allocation2 + $0x30] sm:$0xff] %vm386, %v486
  %495 = vst.msk [vmem:[#allocation2 + $0x38] sm:$0xff] %vm386, %v487
  %v496 = vld [vmem:[#allocation2] ss:$2 sm:$0xff]
  %s497 = scalar_lea.vmem [#allocation2], 16
  %v498 = vld [vmem:[%s497] ss:$2 sm:$0xff]
  %s499 = scalar_lea.vmem [#allocation2], 32
  %v500 = vld [vmem:[%s499] ss:$2 sm:$0xff]
  %s501 = scalar_lea.vmem [#allocation2], 48
  %v502 = vld [vmem:[%s501] ss:$2 sm:$0xff]
  %s503 = scalar_lea.vmem [#allocation2], 1
  %v504 = vld [vmem:[%s503] ss:$2 sm:$0xff]
  %s505 = scalar_lea.vmem [#allocation2], 17
  %v506 = vld [vmem:[%s505] ss:$2 sm:$0xff]
  %s507 = scalar_lea.vmem [#allocation2], 33
  %v508 = vld [vmem:[%s507] ss:$2 sm:$0xff]
  %s509 = scalar_lea.vmem [#allocation2], 49
  %v510 = vld [vmem:[%s509] ss:$2 sm:$0xff]
  %v511 = vmax.f32 %v496, %v504
  %v512 = vmax.f32 %v498, %v506
  %v513 = vmax.f32 %v500, %v508
  %v514 = vmax.f32 %v502, %v510
  %v516 = vrot.slane %v512, 4
  %v519 = vrot.slane %v514, 4
  %vm521 = vcmask 1043456
  %v522 = vsel %vm521, %v511, %v516
  %v523 = vsel %vm521, %v513, %v519
  %v525 = vrot.slane %v511, 4
  %v528 = vrot.slane %v513, 4
  %v530 = vsel %vm521, %v525, %v512
  %v531 = vsel %vm521, %v528, %v514
  %v532 = vmax.f32 %v522, %v530
  %v533 = vmax.f32 %v523, %v531
  %v534 = vpack.c.bf16 %v533, %v532
  %v536 = vunpack.c.l.b16 %v534
  %v537 = vunpack.c.h.b16 %v534
  %v538 = vpack.c.b16 %v536, %v536
  %v539 = vpack.c.b16 %v537, %v537
  %vm542 = vcmask 257024
  %543 = vst.msk [vmem:[%s5] sm:$0xf] %vm542, %v538
  %544 = vst.msk [vmem:[%s5 + $0x4] sm:$0xf] %vm542, %v539
  // Predicated region
  $region22: #{forward.8} parent=0 // pred_check
    _
  $region23: #{forward.8} parent=0 // pred_check_branch
    %546 = sbr.rel (0) target = $region25
  $region24: #{forward.8} parent=0 // pred_region
    _
  $region25: #{forward.8} parent=0 // pred_fallthru
    _
  // Predicated region
  $region26: #{forward.8} parent=0 // pred_check
    _
  $region27: #{forward.8} parent=0 // pred_check_branch
    %548 = sbr.rel (0) target = $region29
  $region28: #{forward.8} parent=0 // pred_region
    _
  $region29: #{forward.8} parent=0 // pred_fallthru
    _

// kernel: forward.10
$region0: #{forward.10}
  #allocation0 [shape = 'u32[]', space=smem, size = 0x4, offset = 0x4, fixed_abs, tag = 'smem constant byte address 0x4 - core index']
  #allocation1 [shape = 'u32[144,128]{1,0:T(1,128)}', space=vmem, size = 0x12000, scoped, tag = 'internal scratch']
  %s0 = inlined_call_operand.vmem [shape: bf16[8,192], index: 0, kind: input, shape index: {}]
  %s1 = inlined_call_operand.vmem [shape: bf16[576,256], index: 1, kind: input, shape index: {}]
  %s2 = inlined_call_operand.vmem [shape: f32[1,256], index: 2, kind: input, shape index: {}]
  %s3 = inlined_call_operand.vmem [shape: bf16[4,64], index: 3, kind: output, shape index: {}]
  %s4 = sld [smem:[#allocation0]]
  $region22: #{forward.10} parent=0
    _
  %s6 = ssub.s32 1, %s4
  %s7 = scalar_select 0, %s6, %s4
  // Predicated region
  $region2: #{forward.10} parent=0 // pred_check
    _
  $region3: #{forward.10} parent=0 // pred_check_branch
    %9 = sbr.rel (0) target = $region5
  $region4: #{forward.10} parent=0 // pred_region
    _
  $region5: #{forward.10} parent=0 // pred_fallthru
    _
  // Predicated region
  $region6: #{forward.10} parent=0 // pred_check
    _
  $region7: #{forward.10} parent=0 // pred_check_branch
    %11 = sbr.rel (0) target = $region9
  $region8: #{forward.10} parent=0 // pred_region
    _
  $region9: #{forward.10} parent=0 // pred_fallthru
    _
  // Predicated region
  $region10: #{forward.10} parent=0 // pred_check
    _
  $region11: #{forward.10} parent=0 // pred_check_branch
    %13 = sbr.rel (0) target = $region13
  $region12: #{forward.10} parent=0 // pred_region
    _
  $region13: #{forward.10} parent=0 // pred_fallthru
    _
  %v15 = vld [vmem:[%s0] sm:$0xff]
  %v16 = vld [vmem:[%s1] sm:$0xff]
  %v17 = vld [vmem:[%s1 + $0x8] sm:$0xff]
  %v18 = vld [vmem:[%s1 + $0x10] sm:$0xff]
  %v19 = vld [vmem:[%s1 + $0x18] sm:$0xff]
  %v20 = vld [vmem:[%s1 + $0x20] sm:$0xff]
  %v21 = vld [vmem:[%s1 + $0x28] sm:$0xff]
  %v22 = vld [vmem:[%s1 + $0x30] sm:$0xff]
  %v23 = vld [vmem:[%s1 + $0x38] sm:$0xff]
  %v24 = vld [vmem:[%s1 + $0x40] sm:$0xff]
  %v25 = vld [vmem:[%s1 + $0x48] sm:$0xff]
  %v26 = vld [vmem:[%s1 + $0x50] sm:$0xff]
  %v27 = vld [vmem:[%s1 + $0x58] sm:$0xff]
  %v28 = vld [vmem:[%s1 + $0x60] sm:$0xff]
  %v29 = vld [vmem:[%s1 + $0x68] sm:$0xff]
  %v30 = vld [vmem:[%s1 + $0x70] sm:$0xff]
  %v31 = vld [vmem:[%s1 + $0x78] sm:$0xff]
  %v32 = vld [vmem:[%s1 + $0x80] sm:$0xff]
  %v33 = vld [vmem:[%s1 + $0x88] sm:$0xff]
  %v34 = vld [vmem:[%s1 + $0x90] sm:$0xff]
  %v35 = vld [vmem:[%s1 + $0x98] sm:$0xff]
  %v36 = vld [vmem:[%s1 + $0xa0] sm:$0xff]
  %v37 = vld [vmem:[%s1 + $0xa8] sm:$0xff]
  %v38 = vld [vmem:[%s1 + $0xb0] sm:$0xff]
  %v39 = vld [vmem:[%s1 + $0xb8] sm:$0xff]
  %v40 = vld [vmem:[%s1 + $0xc0] sm:$0xff]
  %v41 = vld [vmem:[%s1 + $0xc8] sm:$0xff]
  %v42 = vld [vmem:[%s1 + $0xd0] sm:$0xff]
  %v43 = vld [vmem:[%s1 + $0xd8] sm:$0xff]
  %v44 = vld [vmem:[%s1 + $0xe0] sm:$0xff]
  %v45 = vld [vmem:[%s1 + $0xe8] sm:$0xff]
  %v46 = vld [vmem:[%s1 + $0xf0] sm:$0xff]
  %v47 = vld [vmem:[%s1 + $0xf8] sm:$0xff]
  %v48 = vld [vmem:[%s1 + $0x100] sm:$0xff]
  %v49 = vld [vmem:[%s1 + $0x108] sm:$0xff]
  %v50 = vld [vmem:[%s1 + $0x110] sm:$0xff]
  %v51 = vld [vmem:[%s1 + $0x118] sm:$0xff]
  %v52 = vld [vmem:[%s1 + $0x120] sm:$0xff]
  %v53 = vld [vmem:[%s1 + $0x128] sm:$0xff]
  %v54 = vld [vmem:[%s1 + $0x130] sm:$0xff]
  %v55 = vld [vmem:[%s1 + $0x138] sm:$0xff]
  %v56 = vld [vmem:[%s1 + $0x140] sm:$0xff]
  %v57 = vld [vmem:[%s1 + $0x148] sm:$0xff]
  %v58 = vld [vmem:[%s1 + $0x150] sm:$0xff]
  %v59 = vld [vmem:[%s1 + $0x158] sm:$0xff]
  %v60 = vld [vmem:[%s1 + $0x160] sm:$0xff]
  %v61 = vld [vmem:[%s1 + $0x168] sm:$0xff]
  %v62 = vld [vmem:[%s1 + $0x170] sm:$0xff]
  %v63 = vld [vmem:[%s1 + $0x178] sm:$0xff]
  %v64 = vld [vmem:[%s1 + $0x180] sm:$0xff]
  %v65 = vld [vmem:[%s1 + $0x188] sm:$0xff]
  %v66 = vld [vmem:[%s1 + $0x190] sm:$0xff]
  %v67 = vld [vmem:[%s1 + $0x198] sm:$0xff]
  %v68 = vld [vmem:[%s1 + $0x1a0] sm:$0xff]
  %v69 = vld [vmem:[%s1 + $0x1a8] sm:$0xff]
  %v70 = vld [vmem:[%s1 + $0x1b0] sm:$0xff]
  %v71 = vld [vmem:[%s1 + $0x1b8] sm:$0xff]
  %v72 = vld [vmem:[%s1 + $0x1c0] sm:$0xff]
  %v73 = vld [vmem:[%s1 + $0x1c8] sm:$0xff]
  %v74 = vld [vmem:[%s1 + $0x1d0] sm:$0xff]
  %v75 = vld [vmem:[%s1 + $0x1d8] sm:$0xff]
  %v76 = vld [vmem:[%s1 + $0x1e0] sm:$0xff]
  %v77 = vld [vmem:[%s1 + $0x1e8] sm:$0xff]
  %v78 = vld [vmem:[%s1 + $0x1f0] sm:$0xff]
  %v79 = vld [vmem:[%s1 + $0x1f8] sm:$0xff]
  %v80 = vld [vmem:[%s1 + $0x200] sm:$0xff]
  %v81 = vld [vmem:[%s1 + $0x208] sm:$0xff]
  %v82 = vld [vmem:[%s1 + $0x210] sm:$0xff]
  %v83 = vld [vmem:[%s1 + $0x218] sm:$0xff]
  %v84 = vld [vmem:[%s1 + $0x220] sm:$0xff]
  %v85 = vld [vmem:[%s1 + $0x228] sm:$0xff]
  %v86 = vld [vmem:[%s1 + $0x230] sm:$0xff]
  %v87 = vld [vmem:[%s1 + $0x238] sm:$0xff]
  %v89 = vunpack.c.l.b16 %v15
  %v90 = vunpack.c.h.b16 %v15
  %v91 = vpack.c.b16 %v89, %v89
  %v92 = vpack.c.b16 %v90, %v90
  %v93 = vrot.slane %v91, 1
  %v94 = vrot.slane %v92, 1
  %v120 = vunpack.c.l.b16 %v40
  %v121 = vunpack.c.h.b16 %v40
  %v122 = vunpack.c.l.b16 %v41
  %v123 = vunpack.c.h.b16 %v41
  %v124 = vunpack.c.l.b16 %v42
  %v125 = vunpack.c.h.b16 %v42
  %v126 = vunpack.c.l.b16 %v43
  %v127 = vunpack.c.h.b16 %v43
  %v128 = vunpack.c.l.b16 %v44
  %v129 = vunpack.c.h.b16 %v44
  %v130 = vunpack.c.l.b16 %v45
  %v131 = vunpack.c.h.b16 %v45
  %v132 = vunpack.c.l.b16 %v46
  %v133 = vunpack.c.h.b16 %v46
  %v134 = vunpack.c.l.b16 %v47
  %v135 = vunpack.c.h.b16 %v47
  %v136 = vunpack.c.l.b16 %v48
  %v137 = vunpack.c.h.b16 %v48
  %v138 = vunpack.c.l.b16 %v49
  %v139 = vunpack.c.h.b16 %v49
  %v140 = vunpack.c.l.b16 %v50
  %v141 = vunpack.c.h.b16 %v50
  %v142 = vunpack.c.l.b16 %v51
  %v143 = vunpack.c.h.b16 %v51
  %v144 = vunpack.c.l.b16 %v52
  %v145 = vunpack.c.h.b16 %v52
  %v146 = vunpack.c.l.b16 %v53
  %v147 = vunpack.c.h.b16 %v53
  %v148 = vunpack.c.l.b16 %v54
  %v149 = vunpack.c.h.b16 %v54
  %v150 = vunpack.c.l.b16 %v55
  %v151 = vunpack.c.h.b16 %v55
  %v152 = vunpack.c.l.b16 %v56
  %v153 = vunpack.c.h.b16 %v56
  %v154 = vunpack.c.l.b16 %v57
  %v155 = vunpack.c.h.b16 %v57
  %v156 = vunpack.c.l.b16 %v58
  %v157 = vunpack.c.h.b16 %v58
  %v158 = vunpack.c.l.b16 %v59
  %v159 = vunpack.c.h.b16 %v59
  %v160 = vunpack.c.l.b16 %v60
  %v161 = vunpack.c.h.b16 %v60
  %v162 = vunpack.c.l.b16 %v61
  %v163 = vunpack.c.h.b16 %v61
  %v164 = vunpack.c.l.b16 %v62
  %v165 = vunpack.c.h.b16 %v62
  %v166 = vunpack.c.l.b16 %v63
  %v167 = vunpack.c.h.b16 %v63
  %v168 = vpack.c.b16 %v122, %v120
  %v169 = vpack.c.b16 %v123, %v121
  %v170 = vpack.c.b16 %v126, %v124
  %v171 = vpack.c.b16 %v127, %v125
  %v172 = vpack.c.b16 %v130, %v128
  %v173 = vpack.c.b16 %v131, %v129
  %v174 = vpack.c.b16 %v134, %v132
  %v175 = vpack.c.b16 %v135, %v133
  %v176 = vpack.c.b16 %v138, %v136
  %v177 = vpack.c.b16 %v139, %v137
  %v178 = vpack.c.b16 %v142, %v140
  %v179 = vpack.c.b16 %v143, %v141
  %v180 = vpack.c.b16 %v146, %v144
  %v181 = vpack.c.b16 %v147, %v145
  %v182 = vpack.c.b16 %v150, %v148
  %v183 = vpack.c.b16 %v151, %v149
  %v184 = vpack.c.b16 %v154, %v152
  %v185 = vpack.c.b16 %v155, %v153
  %v186 = vpack.c.b16 %v158, %v156
  %v187 = vpack.c.b16 %v159, %v157
  %v188 = vpack.c.b16 %v162, %v160
  %v189 = vpack.c.b16 %v163, %v161
  %v190 = vpack.c.b16 %v166, %v164
  %v191 = vpack.c.b16 %v167, %v165
  %vm216 = vcmask 523264
  %v218 = vsel %vm216, %v94, 0
  %220 = vmatprep.subr.bf16.mxu0 %v169
  %221 = vmatpush1.bf16.msra.mxu0 %v168
  %222 = vmatprep.subr.bf16.mxu0 %v171
  %223 = vmatpush1.bf16.msra.mxu0 %v170
  %224 = vmatprep.subr.bf16.mxu0 %v173
  %225 = vmatpush1.bf16.msra.mxu0 %v172
  %226 = vmatprep.subr.bf16.mxu0 %v175
  %227 = vmatpush1.bf16.msra.mxu0 %v174
  %228 = vmatprep.subr.bf16.mxu0 %v177
  %229 = vmatpush1.bf16.msra.mxu0 %v176
  %230 = vmatprep.subr.bf16.mxu0 %v179
  %231 = vmatpush1.bf16.msra.mxu0 %v178
  %232 = vmatprep.subr.bf16.mxu0 %v181
  %233 = vmatpush1.bf16.msra.mxu0 %v180
  %234 = vmatprep.subr.bf16.mxu0 %v183
  %235 = vmatpush1.bf16.msra.mxu0 %v182
  %236 = vmatprep.subr.bf16.mxu0 %v185
  %237 = vmatpush1.bf16.msra.mxu0 %v184
  %238 = vmatprep.subr.bf16.mxu0 %v187
  %239 = vmatpush1.bf16.msra.mxu0 %v186
  %240 = vmatprep.subr.bf16.mxu0 %v189
  %241 = vmatpush1.bf16.msra.mxu0 %v188
  %242 = vmatprep.subr.bf16.mxu0 %v191
  %243 = vmatpush1.bf16.msra.mxu0 %v190
  %244 = vmatprep.subr.bf16.mxu0 0
  %245 = vmatpush1.bf16.msra.mxu0 0
  %246 = vmatprep.subr.bf16.mxu0 0
  %247 = vmatpush1.bf16.msra.mxu0 0
  %248 = vmatprep.subr.bf16.mxu0 0
  %249 = vmatpush1.bf16.msra.mxu0 0
  %250 = vmatprep.subr.bf16.mxu0 0
  %251 = vmatpush1.bf16.msra.mxu0 0
  %252 = vmatprep.mubr.bf16.mxu0 %v218
  %253 = vmatmul.mubr.bf16.gmra.mrb[0].mxu0 %v93
  %v254 = vpop.f32.mrb[0].mxu0
  %v255 = vadd.f32 0.0, %v254
  %v256 = vpop.f32.mrb[0].mxu0
  %v257 = vadd.f32 0.0, %v256
  %v258 = vpop.f32.mrb[0].mxu0
  %v259 = vpop.f32.mrb[0].mxu0
  %260 = vdwg.mxu0
  %v286 = vunpack.c.l.b16 %v16
  %v287 = vunpack.c.h.b16 %v16
  %v288 = vunpack.c.l.b16 %v17
  %v289 = vunpack.c.h.b16 %v17
  %v290 = vunpack.c.l.b16 %v18
  %v291 = vunpack.c.h.b16 %v18
  %v292 = vunpack.c.l.b16 %v19
  %v293 = vunpack.c.h.b16 %v19
  %v294 = vunpack.c.l.b16 %v20
  %v295 = vunpack.c.h.b16 %v20
  %v296 = vunpack.c.l.b16 %v21
  %v297 = vunpack.c.h.b16 %v21
  %v298 = vunpack.c.l.b16 %v22
  %v299 = vunpack.c.h.b16 %v22
  %v300 = vunpack.c.l.b16 %v23
  %v301 = vunpack.c.h.b16 %v23
  %v302 = vunpack.c.l.b16 %v24
  %v303 = vunpack.c.h.b16 %v24
  %v304 = vunpack.c.l.b16 %v25
  %v305 = vunpack.c.h.b16 %v25
  %v306 = vunpack.c.l.b16 %v26
  %v307 = vunpack.c.h.b16 %v26
  %v308 = vunpack.c.l.b16 %v27
  %v309 = vunpack.c.h.b16 %v27
  %v310 = vunpack.c.l.b16 %v28
  %v311 = vunpack.c.h.b16 %v28
  %v312 = vunpack.c.l.b16 %v29
  %v313 = vunpack.c.h.b16 %v29
  %v314 = vunpack.c.l.b16 %v30
  %v315 = vunpack.c.h.b16 %v30
  %v316 = vunpack.c.l.b16 %v31
  %v317 = vunpack.c.h.b16 %v31
  %v318 = vunpack.c.l.b16 %v32
  %v319 = vunpack.c.h.b16 %v32
  %v320 = vunpack.c.l.b16 %v33
  %v321 = vunpack.c.h.b16 %v33
  %v322 = vunpack.c.l.b16 %v34
  %v323 = vunpack.c.h.b16 %v34
  %v324 = vunpack.c.l.b16 %v35
  %v325 = vunpack.c.h.b16 %v35
  %v326 = vunpack.c.l.b16 %v36
  %v327 = vunpack.c.h.b16 %v36
  %v328 = vunpack.c.l.b16 %v37
  %v329 = vunpack.c.h.b16 %v37
  %v330 = vunpack.c.l.b16 %v38
  %v331 = vunpack.c.h.b16 %v38
  %v332 = vunpack.c.l.b16 %v39
  %v333 = vunpack.c.h.b16 %v39
  %v334 = vpack.c.b16 %v288, %v286
  %v335 = vpack.c.b16 %v289, %v287
  %v336 = vpack.c.b16 %v292, %v290
  %v337 = vpack.c.b16 %v293, %v291
  %v338 = vpack.c.b16 %v296, %v294
  %v339 = vpack.c.b16 %v297, %v295
  %v340 = vpack.c.b16 %v300, %v298
  %v341 = vpack.c.b16 %v301, %v299
  %v342 = vpack.c.b16 %v304, %v302
  %v343 = vpack.c.b16 %v305, %v303
  %v344 = vpack.c.b16 %v308, %v306
  %v345 = vpack.c.b16 %v309, %v307
  %v346 = vpack.c.b16 %v312, %v310
  %v347 = vpack.c.b16 %v313, %v311
  %v348 = vpack.c.b16 %v316, %v314
  %v349 = vpack.c.b16 %v317, %v315
  %v350 = vpack.c.b16 %v320, %v318
  %v351 = vpack.c.b16 %v321, %v319
  %v352 = vpack.c.b16 %v324, %v322
  %v353 = vpack.c.b16 %v325, %v323
  %v354 = vpack.c.b16 %v328, %v326
  %v355 = vpack.c.b16 %v329, %v327
  %v356 = vpack.c.b16 %v332, %v330
  %v357 = vpack.c.b16 %v333, %v331
  %v383 = vsel %vm216, %v92, 0
  %385 = vmatprep.subr.bf16.mxu0 %v335
  %386 = vmatpush1.bf16.msra.mxu0 %v334
  %387 = vmatprep.subr.bf16.mxu0 %v337
  %388 = vmatpush1.bf16.msra.mxu0 %v336
  %389 = vmatprep.subr.bf16.mxu0 %v339
  %390 = vmatpush1.bf16.msra.mxu0 %v338
  %391 = vmatprep.subr.bf16.mxu0 %v341
  %392 = vmatpush1.bf16.msra.mxu0 %v340
  %393 = vmatprep.subr.bf16.mxu0 %v343
  %394 = vmatpush1.bf16.msra.mxu0 %v342
  %395 = vmatprep.subr.bf16.mxu0 %v345
  %396 = vmatpush1.bf16.msra.mxu0 %v344
  %397 = vmatprep.subr.bf16.mxu0 %v347
  %398 = vmatpush1.bf16.msra.mxu0 %v346
  %399 = vmatprep.subr.bf16.mxu0 %v349
  %400 = vmatpush1.bf16.msra.mxu0 %v348
  %401 = vmatprep.subr.bf16.mxu0 %v351
  %402 = vmatpush1.bf16.msra.mxu0 %v350
  %403 = vmatprep.subr.bf16.mxu0 %v353
  %404 = vmatpush1.bf16.msra.mxu0 %v352
  %405 = vmatprep.subr.bf16.mxu0 %v355
  %406 = vmatpush1.bf16.msra.mxu0 %v354
  %407 = vmatprep.subr.bf16.mxu0 %v357
  %408 = vmatpush1.bf16.msra.mxu0 %v356
  %409 = vmatprep.subr.bf16.mxu0 0
  %410 = vmatpush1.bf16.msra.mxu0 0
  %411 = vmatprep.subr.bf16.mxu0 0
  %412 = vmatpush1.bf16.msra.mxu0 0
  %413 = vmatprep.subr.bf16.mxu0 0
  %414 = vmatpush1.bf16.msra.mxu0 0
  %415 = vmatprep.subr.bf16.mxu0 0
  %416 = vmatpush1.bf16.msra.mxu0 0
  %417 = vmatprep.mubr.bf16.mxu0 %v383
  %418 = vmatmul.mubr.bf16.gmra.mrb[0].mxu0 %v91
  %v419 = vpop.f32.mrb[0].mxu0
  %v420 = vadd.f32 %v255, %v419
  %v421 = vpop.f32.mrb[0].mxu0
  %v422 = vadd.f32 %v257, %v421
  %v423 = vpop.f32.mrb[0].mxu0
  %v424 = vpop.f32.mrb[0].mxu0
  %425 = vdwg.mxu0
  %v426 = vrot.slane %v91, 2
  %v427 = vrot.slane %v92, 2
  %v453 = vunpack.c.l.b16 %v64
  %v454 = vunpack.c.h.b16 %v64
  %v455 = vunpack.c.l.b16 %v65
  %v456 = vunpack.c.h.b16 %v65
  %v457 = vunpack.c.l.b16 %v66
  %v458 = vunpack.c.h.b16 %v66
  %v459 = vunpack.c.l.b16 %v67
  %v460 = vunpack.c.h.b16 %v67
  %v461 = vunpack.c.l.b16 %v68
  %v462 = vunpack.c.h.b16 %v68
  %v463 = vunpack.c.l.b16 %v69
  %v464 = vunpack.c.h.b16 %v69
  %v465 = vunpack.c.l.b16 %v70
  %v466 = vunpack.c.h.b16 %v70
  %v467 = vunpack.c.l.b16 %v71
  %v468 = vunpack.c.h.b16 %v71
  %v469 = vunpack.c.l.b16 %v72
  %v470 = vunpack.c.h.b16 %v72
  %v471 = vunpack.c.l.b16 %v73
  %v472 = vunpack.c.h.b16 %v73
  %v473 = vunpack.c.l.b16 %v74
  %v474 = vunpack.c.h.b16 %v74
  %v475 = vunpack.c.l.b16 %v75
  %v476 = vunpack.c.h.b16 %v75
  %v477 = vunpack.c.l.b16 %v76
  %v478 = vunpack.c.h.b16 %v76
  %v479 = vunpack.c.l.b16 %v77
  %v480 = vunpack.c.h.b16 %v77
  %v481 = vunpack.c.l.b16 %v78
  %v482 = vunpack.c.h.b16 %v78
  %v483 = vunpack.c.l.b16 %v79
  %v484 = vunpack.c.h.b16 %v79
  %v485 = vunpack.c.l.b16 %v80
  %v486 = vunpack.c.h.b16 %v80
  %v487 = vunpack.c.l.b16 %v81
  %v488 = vunpack.c.h.b16 %v81
  %v489 = vunpack.c.l.b16 %v82
  %v490 = vunpack.c.h.b16 %v82
  %v491 = vunpack.c.l.b16 %v83
  %v492 = vunpack.c.h.b16 %v83
  %v493 = vunpack.c.l.b16 %v84
  %v494 = vunpack.c.h.b16 %v84
  %v495 = vunpack.c.l.b16 %v85
  %v496 = vunpack.c.h.b16 %v85
  %v497 = vunpack.c.l.b16 %v86
  %v498 = vunpack.c.h.b16 %v86
  %v499 = vunpack.c.l.b16 %v87
  %v500 = vunpack.c.h.b16 %v87
  %v501 = vpack.c.b16 %v455, %v453
  %v502 = vpack.c.b16 %v456, %v454
  %v503 = vpack.c.b16 %v459, %v457
  %v504 = vpack.c.b16 %v460, %v458
  %v505 = vpack.c.b16 %v463, %v461
  %v506 = vpack.c.b16 %v464, %v462
  %v507 = vpack.c.b16 %v467, %v465
  %v508 = vpack.c.b16 %v468, %v466
  %v509 = vpack.c.b16 %v471, %v469
  %v510 = vpack.c.b16 %v472, %v470
  %v511 = vpack.c.b16 %v475, %v473
  %v512 = vpack.c.b16 %v476, %v474
  %v513 = vpack.c.b16 %v479, %v477
  %v514 = vpack.c.b16 %v480, %v478
  %v515 = vpack.c.b16 %v483, %v481
  %v516 = vpack.c.b16 %v484, %v482
  %v517 = vpack.c.b16 %v487, %v485
  %v518 = vpack.c.b16 %v488, %v486
  %v519 = vpack.c.b16 %v491, %v489
  %v520 = vpack.c.b16 %v492, %v490
  %v521 = vpack.c.b16 %v495, %v493
  %v522 = vpack.c.b16 %v496, %v494
  %v523 = vpack.c.b16 %v499, %v497
  %v524 = vpack.c.b16 %v500, %v498
  %v550 = vsel %vm216, %v427, 0
  %552 = vmatprep.subr.bf16.mxu0 %v502
  %553 = vmatpush1.bf16.msra.mxu0 %v501
  %554 = vmatprep.subr.bf16.mxu0 %v504
  %555 = vmatpush1.bf16.msra.mxu0 %v503
  %556 = vmatprep.subr.bf16.mxu0 %v506
  %557 = vmatpush1.bf16.msra.mxu0 %v505
  %558 = vmatprep.subr.bf16.mxu0 %v508
  %559 = vmatpush1.bf16.msra.mxu0 %v507
  %560 = vmatprep.subr.bf16.mxu0 %v510
  %561 = vmatpush1.bf16.msra.mxu0 %v509
  %562 = vmatprep.subr.bf16.mxu0 %v512
  %563 = vmatpush1.bf16.msra.mxu0 %v511
  %564 = vmatprep.subr.bf16.mxu0 %v514
  %565 = vmatpush1.bf16.msra.mxu0 %v513
  %566 = vmatprep.subr.bf16.mxu0 %v516
  %567 = vmatpush1.bf16.msra.mxu0 %v515
  %568 = vmatprep.subr.bf16.mxu0 %v518
  %569 = vmatpush1.bf16.msra.mxu0 %v517
  %570 = vmatprep.subr.bf16.mxu0 %v520
  %571 = vmatpush1.bf16.msra.mxu0 %v519
  %572 = vmatprep.subr.bf16.mxu0 %v522
  %573 = vmatpush1.bf16.msra.mxu0 %v521
  %574 = vmatprep.subr.bf16.mxu0 %v524
  %575 = vmatpush1.bf16.msra.mxu0 %v523
  %576 = vmatprep.subr.bf16.mxu0 0
  %577 = vmatpush1.bf16.msra.mxu0 0
  %578 = vmatprep.subr.bf16.mxu0 0
  %579 = vmatpush1.bf16.msra.mxu0 0
  %580 = vmatprep.subr.bf16.mxu0 0
  %581 = vmatpush1.bf16.msra.mxu0 0
  %582 = vmatprep.subr.bf16.mxu0 0
  %583 = vmatpush1.bf16.msra.mxu0 0
  %584 = vmatprep.mubr.bf16.mxu0 %v550
  %585 = vmatmul.mubr.bf16.gmra.mrb[0].mxu0 %v426
  %v586 = vpop.f32.mrb[0].mxu0
  %v587 = vadd.f32 0.0, %v586
  %v588 = vpop.f32.mrb[0].mxu0
  %v589 = vadd.f32 0.0, %v588
  %v590 = vpop.f32.mrb[0].mxu0
  %v591 = vpop.f32.mrb[0].mxu0
  %592 = vdwg.mxu0
  %v593 = vadd.f32 %v420, %v587
  %v594 = vadd.f32 %v422, %v589
  %v595 = vld [vmem:[%s2] sm:$0x3]
  %v597 = vlaneseq
  %v598 = vshrl.u32 %v597, 7
  %v599 = vsub.s32 0, %v598
  %v600 = vrot.slane %v595, %v599
  %v601 = vlaneseq
  %v602 = vshrl.u32 %v601, 7
  %v603 = vsub.s32 1, %v602
  %v604 = vrot.slane %v595, %v603
  %v607 = vadd.f32 %v593, %v600
  %v608 = vadd.f32 %v594, %v604
  %v609 = vxor.u32 %v607, 2147483648
  %v610 = vxor.u32 %v608, 2147483648
  %v611 = vmul.f32 %v609, 1.442695
  %v612 = vpow.pop %v611
  %v613 = vmul.f32 %v610, 1.442695
  %v614 = vpow.pop %v613
  %v615 = vadd.f32 %v612, 1.0
  %v616 = vadd.f32 %v614, 1.0
  %v617 = vrcp.pop %v615
  %v618 = vmul.f32 1.0, %v617
  %v619 = vrcp.pop %v616
  %v620 = vmul.f32 1.0, %v619
  %v621 = vtanh.pop %v608
  %623 = vrot.lane.b32.xlu0 %v621, 64
  %v624 = vpop.permute.xlu0 %623
  %v626 = vmul.f32 %v618, %v624
  %v627 = vtanh.pop %v626
  %v628 = vmul.f32 %v620, %v627
  %v629 = vpack.c.bf16 %v628, %v628
  %vm630 = vcmask 517120
  %631 = vst.msk [vmem:[%s3] sm:$0x3] %vm630, %v629
  // Predicated region
  $region14: #{forward.10} parent=0 // pred_check
    _
  $region15: #{forward.10} parent=0 // pred_check_branch
    %633 = sbr.rel (0) target = $region17
  $region16: #{forward.10} parent=0 // pred_region
    _
  $region17: #{forward.10} parent=0 // pred_fallthru
    _
  // Predicated region
  $region18: #{forward.10} parent=0 // pred_check
    _
  $region19: #{forward.10} parent=0 // pred_check_branch
    %635 = sbr.rel (0) target = $region21
  $region20: #{forward.10} parent=0 // pred_region
    _
  $region21: #{forward.10} parent=0 // pred_fallthru
    _

// kernel: forward.7
$region0: #{forward.7}
  #allocation0 [shape = 'u32[]', space=smem, size = 0x4, offset = 0x4, fixed_abs, tag = 'smem constant byte address 0x4 - core index']
  #allocation1 [shape = 'u32[144,128]{1,0:T(1,128)}', space=vmem, size = 0x12000, scoped, tag = 'internal scratch']
  #allocation2 [shape = 'f32[256,16]{1,0:T(8,128)}', space=vmem, size = 0x20000, scoped, tag = 'scratch operand']
  %s0 = inlined_call_operand.vmem [shape: bf16[288,12], index: 0, kind: input, shape index: {}]
  %s1 = inlined_call_operand.vmem [shape: bf16[36,16], index: 1, kind: input, shape index: {}]
  %s2 = inlined_call_operand.vmem [shape: f32[1,16], index: 2, kind: input, shape index: {}]
  %s3 = inlined_call_operand.vmem [shape: f32[1,16], index: 3, kind: input, shape index: {}]
  %s4 = inlined_call_operand.vmem [shape: f32[1,16], index: 4, kind: input, shape index: {}]
  %s5 = inlined_call_operand.vmem [shape: bf16[64,16], index: 5, kind: output, shape index: {}]
  %s6 = sld [smem:[#allocation0]]
  $region30: #{forward.7} parent=0
    _
  %s8 = ssub.s32 1, %s6
  %s9 = scalar_select 0, %s8, %s6
  // Predicated region
  $region2: #{forward.7} parent=0 // pred_check
    _
  $region3: #{forward.7} parent=0 // pred_check_branch
    %11 = sbr.rel (0) target = $region5
  $region4: #{forward.7} parent=0 // pred_region
    _
  $region5: #{forward.7} parent=0 // pred_fallthru
    _
  // Predicated region
  $region6: #{forward.7} parent=0 // pred_check
    _
  $region7: #{forward.7} parent=0 // pred_check_branch
    %13 = sbr.rel (0) target = $region9
  $region8: #{forward.7} parent=0 // pred_region
    _
  $region9: #{forward.7} parent=0 // pred_fallthru
    _
  // Predicated region
  $region10: #{forward.7} parent=0 // pred_check
    _
  $region11: #{forward.7} parent=0 // pred_check_branch
    %15 = sbr.rel (0) target = $region13
  $region12: #{forward.7} parent=0 // pred_region
    _
  $region13: #{forward.7} parent=0 // pred_fallthru
    _
  // Predicated region
  $region14: #{forward.7} parent=0 // pred_check
    _
  $region15: #{forward.7} parent=0 // pred_check_branch
    %17 = sbr.rel (0) target = $region17
  $region16: #{forward.7} parent=0 // pred_region
    _
  $region17: #{forward.7} parent=0 // pred_fallthru
    _
  // Predicated region
  $region18: #{forward.7} parent=0 // pred_check
    _
  $region19: #{forward.7} parent=0 // pred_check_branch
    %19 = sbr.rel (0) target = $region21
  $region20: #{forward.7} parent=0 // pred_region
    _
  $region21: #{forward.7} parent=0 // pred_fallthru
    _
  %v21 = vld [vmem:[%s0] sm:$0xf]
  %v22 = vld [vmem:[%s0 + $0x4] sm:$0xf]
  %v23 = vld [vmem:[%s0 + $0x8] sm:$0xf]
  %v24 = vld [vmem:[%s0 + $0xc] sm:$0xf]
  %v25 = vld [vmem:[%s0 + $0x10] sm:$0xf]
  %v26 = vld [vmem:[%s0 + $0x14] sm:$0xf]
  %v27 = vld [vmem:[%s0 + $0x18] sm:$0xf]
  %v28 = vld [vmem:[%s0 + $0x1c] sm:$0xf]
  %v29 = vld [vmem:[%s0 + $0x20] sm:$0xf]
  %v30 = vld [vmem:[%s0 + $0x24] sm:$0xf]
  %v31 = vld [vmem:[%s0 + $0x28] sm:$0xf]
  %v32 = vld [vmem:[%s0 + $0x2c] sm:$0xf]
  %v33 = vld [vmem:[%s0 + $0x30] sm:$0xf]
  %v34 = vld [vmem:[%s0 + $0x34] sm:$0xf]
  %v35 = vld [vmem:[%s0 + $0x38] sm:$0xf]
  %v36 = vld [vmem:[%s0 + $0x3c] sm:$0xf]
  %v37 = vld [vmem:[%s0 + $0x40] sm:$0xf]
  %v38 = vld [vmem:[%s0 + $0x44] sm:$0xf]
  %v39 = vld [vmem:[%s0 + $0x48] sm:$0xf]
  %v40 = vld [vmem:[%s0 + $0x4c] sm:$0xf]
  %v41 = vld [vmem:[%s0 + $0x50] sm:$0xf]
  %v42 = vld [vmem:[%s0 + $0x54] sm:$0xf]
  %v43 = vld [vmem:[%s0 + $0x58] sm:$0xf]
  %v44 = vld [vmem:[%s0 + $0x5c] sm:$0xf]
  %v45 = vld [vmem:[%s0 + $0x60] sm:$0xf]
  %v46 = vld [vmem:[%s0 + $0x64] sm:$0xf]
  %v47 = vld [vmem:[%s0 + $0x68] sm:$0xf]
  %v48 = vld [vmem:[%s0 + $0x6c] sm:$0xf]
  %v49 = vld [vmem:[%s0 + $0x70] sm:$0xf]
  %v50 = vld [vmem:[%s0 + $0x74] sm:$0xf]
  %v51 = vld [vmem:[%s0 + $0x78] sm:$0xf]
  %v52 = vld [vmem:[%s0 + $0x7c] sm:$0xf]
  %v53 = vld [vmem:[%s0 + $0x80] sm:$0xf]
  %v54 = vld [vmem:[%s0 + $0x84] sm:$0xf]
  %v55 = vld [vmem:[%s0 + $0x88] sm:$0xf]
  %v56 = vld [vmem:[%s0 + $0x8c] sm:$0xf]
  %v57 = vld [vmem:[%s1] sm:$0xf]
  %v58 = vld [vmem:[%s1 + $0x4] sm:$0xf]
  %v59 = vld [vmem:[%s1 + $0x8] sm:$0xf]
  %v60 = vld [vmem:[%s1 + $0xc] sm:$0xf]
  %v61 = vld [vmem:[%s1 + $0x10] sm:$0x3]
  %v94 = vunpack.c.l.b16 %v23
  %v95 = vunpack.c.l.b16 %v24
  %v96 = vunpack.c.l.b16 %v25
  %v97 = vunpack.c.l.b16 %v26
  %v98 = vunpack.c.l.b16 %v27
  %v99 = vunpack.c.l.b16 %v28
  %v100 = vunpack.c.l.b16 %v29
  %v101 = vunpack.c.l.b16 %v30
  %v102 = vunpack.c.l.b16 %v31
  %v103 = vunpack.c.l.b16 %v32
  %v104 = vunpack.c.l.b16 %v33
  %v105 = vunpack.c.l.b16 %v34
  %v106 = vunpack.c.l.b16 %v35
  %v107 = vunpack.c.l.b16 %v36
  %v108 = vunpack.c.l.b16 %v37
  %v109 = vunpack.c.l.b16 %v38
  %v110 = vunpack.c.l.b16 %v39
  %v111 = vunpack.c.l.b16 %v40
  %v112 = vunpack.c.l.b16 %v41
  %v113 = vunpack.c.l.b16 %v42
  %v114 = vunpack.c.l.b16 %v43
  %v115 = vunpack.c.l.b16 %v44
  %v116 = vunpack.c.l.b16 %v45
  %v117 = vunpack.c.l.b16 %v46
  %v118 = vunpack.c.l.b16 %v47
  %v119 = vunpack.c.l.b16 %v48
  %v120 = vunpack.c.l.b16 %v49
  %v121 = vunpack.c.l.b16 %v50
  %v122 = vunpack.c.l.b16 %v51
  %v123 = vunpack.c.l.b16 %v52
  %v124 = vunpack.c.l.b16 %v53
  %v125 = vunpack.c.l.b16 %v54
  %v126 = vpack.c.b16 %v95, %v94
  %v127 = vpack.c.b16 %v97, %v96
  %v128 = vpack.c.b16 %v99, %v98
  %v129 = vpack.c.b16 %v101, %v100
  %v130 = vpack.c.b16 %v103, %v102
  %v131 = vpack.c.b16 %v105, %v104
  %v132 = vpack.c.b16 %v107, %v106
  %v133 = vpack.c.b16 %v109, %v108
  %v134 = vpack.c.b16 %v111, %v110
  %v135 = vpack.c.b16 %v113, %v112
  %v136 = vpack.c.b16 %v115, %v114
  %v137 = vpack.c.b16 %v117, %v116
  %v138 = vpack.c.b16 %v119, %v118
  %v139 = vpack.c.b16 %v121, %v120
  %v140 = vpack.c.b16 %v123, %v122
  %v141 = vpack.c.b16 %v125, %v124
  %v144 = vunpack.c.l.b16 %v58
  %v145 = vunpack.c.l.b16 %v59
  %v146 = vpack.c.b16 %v145, %v144
  %v147 = vrot.slane %v146, 2
  %vm148 = vcmask 97280
  %v150 = vsel %vm148, %v126, 0
  %v153 = vsel %vm148, %v127, 0
  %v156 = vsel %vm148, %v128, 0
  %v159 = vsel %vm148, %v129, 0
  %v162 = vsel %vm148, %v130, 0
  %v165 = vsel %vm148, %v131, 0
  %v168 = vsel %vm148, %v132, 0
  %v171 = vsel %vm148, %v133, 0
  %v174 = vsel %vm148, %v134, 0
  %v177 = vsel %vm148, %v135, 0
  %v180 = vsel %vm148, %v136, 0
  %v183 = vsel %vm148, %v137, 0
  %v186 = vsel %vm148, %v138, 0
  %v189 = vsel %vm148, %v139, 0
  %v192 = vsel %vm148, %v140, 0
  %v195 = vsel %vm148, %v141, 0
  %vm197 = vcmask 1045504
  %v199 = vsel %vm197, %v147, 0
  %201 = vmatprep.subr.bf16.mxu0 0
  %202 = vmatpush1.bf16.msra.mxu0 %v199
  %203 = vmatprep.subr.bf16.mxu0 0
  %204 = vmatpush1.bf16.msra.mxu0 0
  %205 = vmatprep.subr.bf16.mxu0 0
  %206 = vmatpush1.bf16.msra.mxu0 0
  %207 = vmatprep.subr.bf16.mxu0 0
  %208 = vmatpush1.bf16.msra.mxu0 0
  %209 = vmatprep.subr.bf16.mxu0 0
  %210 = vmatpush1.bf16.msra.mxu0 0
  %211 = vmatprep.subr.bf16.mxu0 0
  %212 = vmatpush1.bf16.msra.mxu0 0
  %213 = vmatprep.subr.bf16.mxu0 0
  %214 = vmatpush1.bf16.msra.mxu0 0
  %215 = vmatprep.subr.bf16.mxu0 0
  %216 = vmatpush1.bf16.msra.mxu0 0
  %217 = vmatprep.subr.bf16.mxu0 0
  %218 = vmatpush1.bf16.msra.mxu0 0
  %219 = vmatprep.subr.bf16.mxu0 0
  %220 = vmatpush1.bf16.msra.mxu0 0
  %221 = vmatprep.subr.bf16.mxu0 0
  %222 = vmatpush1.bf16.msra.mxu0 0
  %223 = vmatprep.subr.bf16.mxu0 0
  %224 = vmatpush1.bf16.msra.mxu0 0
  %225 = vmatprep.subr.bf16.mxu0 0
  %226 = vmatpush1.bf16.msra.mxu0 0
  %227 = vmatprep.subr.bf16.mxu0 0
  %228 = vmatpush1.bf16.msra.mxu0 0
  %229 = vmatprep.subr.bf16.mxu0 0
  %230 = vmatpush1.bf16.msra.mxu0 0
  %231 = vmatprep.subr.bf16.mxu0 0
  %232 = vmatpush1.bf16.msra.mxu0 0
  %233 = vmatprep.mubr.bf16.mxu0 0
  %234 = vmatmul.mubr.bf16.gmra.mrb[0].mxu0 %v150
  %v235 = vpop.f32.mrb[0].mxu0
  %v236 = vadd.f32 0.0, %v235
  %v237 = vpop.f32.mrb[0].mxu0
  %v238 = vpop.f32.mrb[0].mxu0
  %v239 = vadd.f32 0.0, %v238
  %v240 = vpop.f32.mrb[0].mxu0
  %241 = vmatprep.mubr.bf16.mxu0 0
  %242 = vmatmul.mubr.bf16.gmra.mrb[0].mxu0 %v153
  %v243 = vpop.f32.mrb[0].mxu0
  %v244 = vadd.f32 0.0, %v243
  %v245 = vpop.f32.mrb[0].mxu0
  %v246 = vpop.f32.mrb[0].mxu0
  %v247 = vadd.f32 0.0, %v246
  %v248 = vpop.f32.mrb[0].mxu0
  %249 = vmatprep.mubr.bf16.mxu0 0
  %250 = vmatmul.mubr.bf16.gmra.mrb[0].mxu0 %v156
  %v251 = vpop.f32.mrb[0].mxu0
  %v252 = vadd.f32 0.0, %v251
  %v253 = vpop.f32.mrb[0].mxu0
  %v254 = vpop.f32.mrb[0].mxu0
  %v255 = vadd.f32 0.0, %v254
  %v256 = vpop.f32.mrb[0].mxu0
  %257 = vmatprep.mubr.bf16.mxu0 0
  %258 = vmatmul.mubr.bf16.gmra.mrb[0].mxu0 %v159
  %v259 = vpop.f32.mrb[0].mxu0
  %v260 = vadd.f32 0.0, %v259
  %v261 = vpop.f32.mrb[0].mxu0
  %v262 = vpop.f32.mrb[0].mxu0
  %v263 = vadd.f32 0.0, %v262
  %v264 = vpop.f32.mrb[0].mxu0
  %265 = vmatprep.mubr.bf16.mxu0 0
  %266 = vmatmul.mubr.bf16.gmra.mrb[0].mxu0 %v162
  %v267 = vpop.f32.mrb[0].mxu0
  %v268 = vadd.f32 0.0, %v267
  %v269 = vpop.f32.mrb[0].mxu0
  %v270 = vpop.f32.mrb[0].mxu0
  %v271 = vadd.f32 0.0, %v270
  %v272 = vpop.f32.mrb[0].mxu0
  %273 = vmatprep.mubr.bf16.mxu0 0
  %274 = vmatmul.mubr.bf16.gmra.mrb[0].mxu0 %v165
  %v275 = vpop.f32.mrb[0].mxu0
  %v276 = vadd.f32 0.0, %v275
  %v277 = vpop.f32.mrb[0].mxu0
  %v278 = vpop.f32.mrb[0].mxu0
  %v279 = vadd.f32 0.0, %v278
  %v280 = vpop.f32.mrb[0].mxu0
  %281 = vmatprep.mubr.bf16.mxu0 0
  %282 = vmatmul.mubr.bf16.gmra.mrb[0].mxu0 %v168
  %v283 = vpop.f32.mrb[0].mxu0
  %v284 = vadd.f32 0.0, %v283
  %v285 = vpop.f32.mrb[0].mxu0
  %v286 = vpop.f32.mrb[0].mxu0
  %v287 = vadd.f32 0.0, %v286
  %v288 = vpop.f32.mrb[0].mxu0
  %289 = vmatprep.mubr.bf16.mxu0 0
  %290 = vmatmul.mubr.bf16.gmra.mrb[0].mxu0 %v171
  %v291 = vpop.f32.mrb[0].mxu0
  %v292 = vadd.f32 0.0, %v291
  %v293 = vpop.f32.mrb[0].mxu0
  %v294 = vpop.f32.mrb[0].mxu0
  %v295 = vadd.f32 0.0, %v294
  %v296 = vpop.f32.mrb[0].mxu0
  %297 = vmatprep.mubr.bf16.mxu0 0
  %298 = vmatmul.mubr.bf16.gmra.mrb[0].mxu0 %v174
  %v299 = vpop.f32.mrb[0].mxu0
  %v300 = vadd.f32 0.0, %v299
  %v301 = vpop.f32.mrb[0].mxu0
  %v302 = vpop.f32.mrb[0].mxu0
  %v303 = vadd.f32 0.0, %v302
  %v304 = vpop.f32.mrb[0].mxu0
  %305 = vmatprep.mubr.bf16.mxu0 0
  %306 = vmatmul.mubr.bf16.gmra.mrb[0].mxu0 %v177
  %v307 = vpop.f32.mrb[0].mxu0
  %v308 = vadd.f32 0.0, %v307
  %v309 = vpop.f32.mrb[0].mxu0
  %v310 = vpop.f32.mrb[0].mxu0
  %v311 = vadd.f32 0.0, %v310
  %v312 = vpop.f32.mrb[0].mxu0
  %313 = vmatprep.mubr.bf16.mxu0 0
  %314 = vmatmul.mubr.bf16.gmra.mrb[0].mxu0 %v180
  %v315 = vpop.f32.mrb[0].mxu0
  %v316 = vadd.f32 0.0, %v315
  %v317 = vpop.f32.mrb[0].mxu0
  %v318 = vpop.f32.mrb[0].mxu0
  %v319 = vadd.f32 0.0, %v318
  %v320 = vpop.f32.mrb[0].mxu0
  %321 = vmatprep.mubr.bf16.mxu0 0
  %322 = vmatmul.mubr.bf16.gmra.mrb[0].mxu0 %v183
  %v323 = vpop.f32.mrb[0].mxu0
  %v324 = vadd.f32 0.0, %v323
  %v325 = vpop.f32.mrb[0].mxu0
  %v326 = vpop.f32.mrb[0].mxu0
  %v327 = vadd.f32 0.0, %v326
  %v328 = vpop.f32.mrb[0].mxu0
  %329 = vmatprep.mubr.bf16.mxu0 0
  %330 = vmatmul.mubr.bf16.gmra.mrb[0].mxu0 %v186
  %v331 = vpop.f32.mrb[0].mxu0
  %v332 = vadd.f32 0.0, %v331
  %v333 = vpop.f32.mrb[0].mxu0
  %v334 = vpop.f32.mrb[0].mxu0
  %v335 = vadd.f32 0.0, %v334
  %v336 = vpop.f32.mrb[0].mxu0
  %337 = vmatprep.mubr.bf16.mxu0 0
  %338 = vmatmul.mubr.bf16.gmra.mrb[0].mxu0 %v189
  %v339 = vpop.f32.mrb[0].mxu0
  %v340 = vadd.f32 0.0, %v339
  %v341 = vpop.f32.mrb[0].mxu0
  %v342 = vpop.f32.mrb[0].mxu0
  %v343 = vadd.f32 0.0, %v342
  %v344 = vpop.f32.mrb[0].mxu0
  %345 = vmatprep.mubr.bf16.mxu0 0
  %346 = vmatmul.mubr.bf16.gmra.mrb[0].mxu0 %v192
  %v347 = vpop.f32.mrb[0].mxu0
  %v348 = vadd.f32 0.0, %v347
  %v349 = vpop.f32.mrb[0].mxu0
  %v350 = vpop.f32.mrb[0].mxu0
  %v351 = vadd.f32 0.0, %v350
  %v352 = vpop.f32.mrb[0].mxu0
  %353 = vmatprep.mubr.bf16.mxu0 0
  %354 = vmatmul.mubr.bf16.gmra.mrb[0].mxu0 %v195
  %v355 = vpop.f32.mrb[0].mxu0
  %v356 = vadd.f32 0.0, %v355
  %v357 = vpop.f32.mrb[0].mxu0
  %v358 = vpop.f32.mrb[0].mxu0
  %v359 = vadd.f32 0.0, %v358
  %v360 = vpop.f32.mrb[0].mxu0
  %361 = vdwg.mxu0
  %v364 = vunpack.c.l.b16 %v21
  %v365 = vunpack.c.l.b16 %v22
  %v366 = vpack.c.b16 %v365, %v364
  %v368 = vunpack.c.l.b16 %v57
  %v369 = vpack.c.b16 %v144, %v368
  %v371 = vsel %vm148, %v366, 0
  %v374 = vsel %vm197, %v369, 0
  %376 = vmatprep.subr.bf16.mxu0 0
  %377 = vmatpush1.bf16.msra.mxu0 %v374
  %378 = vmatprep.subr.bf16.mxu0 0
  %379 = vmatpush1.bf16.msra.mxu0 0
  %380 = vmatprep.subr.bf16.mxu0 0
  %381 = vmatpush1.bf16.msra.mxu0 0
  %382 = vmatprep.subr.bf16.mxu0 0
  %383 = vmatpush1.bf16.msra.mxu0 0
  %384 = vmatprep.subr.bf16.mxu0 0
  %385 = vmatpush1.bf16.msra.mxu0 0
  %386 = vmatprep.subr.bf16.mxu0 0
  %387 = vmatpush1.bf16.msra.mxu0 0
  %388 = vmatprep.subr.bf16.mxu0 0
  %389 = vmatpush1.bf16.msra.mxu0 0
  %390 = vmatprep.subr.bf16.mxu0 0
  %391 = vmatpush1.bf16.msra.mxu0 0
  %392 = vmatprep.subr.bf16.mxu0 0
  %393 = vmatpush1.bf16.msra.mxu0 0
  %394 = vmatprep.subr.bf16.mxu0 0
  %395 = vmatpush1.bf16.msra.mxu0 0
  %396 = vmatprep.subr.bf16.mxu0 0
  %397 = vmatpush1.bf16.msra.mxu0 0
  %398 = vmatprep.subr.bf16.mxu0 0
  %399 = vmatpush1.bf16.msra.mxu0 0
  %400 = vmatprep.subr.bf16.mxu0 0
  %401 = vmatpush1.bf16.msra.mxu0 0
  %402 = vmatprep.subr.bf16.mxu0 0
  %403 = vmatpush1.bf16.msra.mxu0 0
  %404 = vmatprep.subr.bf16.mxu0 0
  %405 = vmatpush1.bf16.msra.mxu0 0
  %406 = vmatprep.subr.bf16.mxu0 0
  %407 = vmatpush1.bf16.msra.mxu0 0
  %408 = vmatprep.mubr.bf16.mxu0 0
  %409 = vmatmul.mubr.bf16.gmra.mrb[0].mxu0 %v371
  %v410 = vpop.f32.mrb[0].mxu0
  %v411 = vadd.f32 %v236, %v410
  %v412 = vpop.f32.mrb[0].mxu0
  %v413 = vpop.f32.mrb[0].mxu0
  %v414 = vadd.f32 %v239, %v413
  %v415 = vpop.f32.mrb[0].mxu0
  %416 = vmatprep.mubr.bf16.mxu0 0
  %417 = vmatmul.mubr.bf16.gmra.mrb[0].mxu0 %v150
  %v418 = vpop.f32.mrb[0].mxu0
  %v419 = vadd.f32 %v244, %v418
  %v420 = vpop.f32.mrb[0].mxu0
  %v421 = vpop.f32.mrb[0].mxu0
  %v422 = vadd.f32 %v247, %v421
  %v423 = vpop.f32.mrb[0].mxu0
  %424 = vmatprep.mubr.bf16.mxu0 0
  %425 = vmatmul.mubr.bf16.gmra.mrb[0].mxu0 %v153
  %v426 = vpop.f32.mrb[0].mxu0
  %v427 = vadd.f32 %v252, %v426
  %v428 = vpop.f32.mrb[0].mxu0
  %v429 = vpop.f32.mrb[0].mxu0
  %v430 = vadd.f32 %v255, %v429
  %v431 = vpop.f32.mrb[0].mxu0
  %432 = vmatprep.mubr.bf16.mxu0 0
  %433 = vmatmul.mubr.bf16.gmra.mrb[0].mxu0 %v156
  %v434 = vpop.f32.mrb[0].mxu0
  %v435 = vadd.f32 %v260, %v434
  %v436 = vpop.f32.mrb[0].mxu0
  %v437 = vpop.f32.mrb[0].mxu0
  %v438 = vadd.f32 %v263, %v437
  %v439 = vpop.f32.mrb[0].mxu0
  %440 = vmatprep.mubr.bf16.mxu0 0
  %441 = vmatmul.mubr.bf16.gmra.mrb[0].mxu0 %v159
  %v442 = vpop.f32.mrb[0].mxu0
  %v443 = vadd.f32 %v268, %v442
  %v444 = vpop.f32.mrb[0].mxu0
  %v445 = vpop.f32.mrb[0].mxu0
  %v446 = vadd.f32 %v271, %v445
  %v447 = vpop.f32.mrb[0].mxu0
  %448 = vmatprep.mubr.bf16.mxu0 0
  %449 = vmatmul.mubr.bf16.gmra.mrb[0].mxu0 %v162
  %v450 = vpop.f32.mrb[0].mxu0
  %v451 = vadd.f32 %v276, %v450
  %v452 = vpop.f32.mrb[0].mxu0
  %v453 = vpop.f32.mrb[0].mxu0
  %v454 = vadd.f32 %v279, %v453
  %v455 = vpop.f32.mrb[0].mxu0
  %456 = vmatprep.mubr.bf16.mxu0 0
  %457 = vmatmul.mubr.bf16.gmra.mrb[0].mxu0 %v165
  %v458 = vpop.f32.mrb[0].mxu0
  %v459 = vadd.f32 %v284, %v458
  %v460 = vpop.f32.mrb[0].mxu0
  %v461 = vpop.f32.mrb[0].mxu0
  %v462 = vadd.f32 %v287, %v461
  %v463 = vpop.f32.mrb[0].mxu0
  %464 = vmatprep.mubr.bf16.mxu0 0
  %465 = vmatmul.mubr.bf16.gmra.mrb[0].mxu0 %v168
  %v466 = vpop.f32.mrb[0].mxu0
  %v467 = vadd.f32 %v292, %v466
  %v468 = vpop.f32.mrb[0].mxu0
  %v469 = vpop.f32.mrb[0].mxu0
  %v470 = vadd.f32 %v295, %v469
  %v471 = vpop.f32.mrb[0].mxu0
  %472 = vmatprep.mubr.bf16.mxu0 0
  %473 = vmatmul.mubr.bf16.gmra.mrb[0].mxu0 %v171
  %v474 = vpop.f32.mrb[0].mxu0
  %v475 = vadd.f32 %v300, %v474
  %v476 = vpop.f32.mrb[0].mxu0
  %v477 = vpop.f32.mrb[0].mxu0
  %v478 = vadd.f32 %v303, %v477
  %v479 = vpop.f32.mrb[0].mxu0
  %480 = vmatprep.mubr.bf16.mxu0 0
  %481 = vmatmul.mubr.bf16.gmra.mrb[0].mxu0 %v174
  %v482 = vpop.f32.mrb[0].mxu0
  %v483 = vadd.f32 %v308, %v482
  %v484 = vpop.f32.mrb[0].mxu0
  %v485 = vpop.f32.mrb[0].mxu0
  %v486 = vadd.f32 %v311, %v485
  %v487 = vpop.f32.mrb[0].mxu0
  %488 = vmatprep.mubr.bf16.mxu0 0
  %489 = vmatmul.mubr.bf16.gmra.mrb[0].mxu0 %v177
  %v490 = vpop.f32.mrb[0].mxu0
  %v491 = vadd.f32 %v316, %v490
  %v492 = vpop.f32.mrb[0].mxu0
  %v493 = vpop.f32.mrb[0].mxu0
  %v494 = vadd.f32 %v319, %v493
  %v495 = vpop.f32.mrb[0].mxu0
  %496 = vmatprep.mubr.bf16.mxu0 0
  %497 = vmatmul.mubr.bf16.gmra.mrb[0].mxu0 %v180
  %v498 = vpop.f32.mrb[0].mxu0
  %v499 = vadd.f32 %v324, %v498
  %v500 = vpop.f32.mrb[0].mxu0
  %v501 = vpop.f32.mrb[0].mxu0
  %v502 = vadd.f32 %v327, %v501
  %v503 = vpop.f32.mrb[0].mxu0
  %504 = vmatprep.mubr.bf16.mxu0 0
  %505 = vmatmul.mubr.bf16.gmra.mrb[0].mxu0 %v183
  %v506 = vpop.f32.mrb[0].mxu0
  %v507 = vadd.f32 %v332, %v506
  %v508 = vpop.f32.mrb[0].mxu0
  %v509 = vpop.f32.mrb[0].mxu0
  %v510 = vadd.f32 %v335, %v509
  %v511 = vpop.f32.mrb[0].mxu0
  %512 = vmatprep.mubr.bf16.mxu0 0
  %513 = vmatmul.mubr.bf16.gmra.mrb[0].mxu0 %v186
  %v514 = vpop.f32.mrb[0].mxu0
  %v515 = vadd.f32 %v340, %v514
  %v516 = vpop.f32.mrb[0].mxu0
  %v517 = vpop.f32.mrb[0].mxu0
  %v518 = vadd.f32 %v343, %v517
  %v519 = vpop.f32.mrb[0].mxu0
  %520 = vmatprep.mubr.bf16.mxu0 0
  %521 = vmatmul.mubr.bf16.gmra.mrb[0].mxu0 %v189
  %v522 = vpop.f32.mrb[0].mxu0
  %v523 = vadd.f32 %v348, %v522
  %v524 = vpop.f32.mrb[0].mxu0
  %v525 = vpop.f32.mrb[0].mxu0
  %v526 = vadd.f32 %v351, %v525
  %v527 = vpop.f32.mrb[0].mxu0
  %528 = vmatprep.mubr.bf16.mxu0 0
  %529 = vmatmul.mubr.bf16.gmra.mrb[0].mxu0 %v192
  %v530 = vpop.f32.mrb[0].mxu0
  %v531 = vadd.f32 %v356, %v530
  %v532 = vpop.f32.mrb[0].mxu0
  %v533 = vpop.f32.mrb[0].mxu0
  %v534 = vadd.f32 %v359, %v533
  %v535 = vpop.f32.mrb[0].mxu0
  %536 = vdwg.mxu0
  %v539 = vunpack.c.l.b16 %v55
  %v540 = vunpack.c.l.b16 %v56
  %v541 = vpack.c.b16 %v540, %v539
  %v544 = vunpack.c.l.b16 %v60
  %v545 = vunpack.c.l.b16 %v61
  %v546 = vpack.c.b16 %v545, %v544
  %v548 = vsel %vm148, %v541, 0
  %v551 = vsel %vm197, %v546, 0
  %553 = vmatprep.subr.bf16.mxu0 0
  %554 = vmatpush1.bf16.msra.mxu0 %v551
  %555 = vmatprep.subr.bf16.mxu0 0
  %556 = vmatpush1.bf16.msra.mxu0 0
  %557 = vmatprep.subr.bf16.mxu0 0
  %558 = vmatpush1.bf16.msra.mxu0 0
  %559 = vmatprep.subr.bf16.mxu0 0
  %560 = vmatpush1.bf16.msra.mxu0 0
  %561 = vmatprep.subr.bf16.mxu0 0
  %562 = vmatpush1.bf16.msra.mxu0 0
  %563 = vmatprep.subr.bf16.mxu0 0
  %564 = vmatpush1.bf16.msra.mxu0 0
  %565 = vmatprep.subr.bf16.mxu0 0
  %566 = vmatpush1.bf16.msra.mxu0 0
  %567 = vmatprep.subr.bf16.mxu0 0
  %568 = vmatpush1.bf16.msra.mxu0 0
  %569 = vmatprep.subr.bf16.mxu0 0
  %570 = vmatpush1.bf16.msra.mxu0 0
  %571 = vmatprep.subr.bf16.mxu0 0
  %572 = vmatpush1.bf16.msra.mxu0 0
  %573 = vmatprep.subr.bf16.mxu0 0
  %574 = vmatpush1.bf16.msra.mxu0 0
  %575 = vmatprep.subr.bf16.mxu0 0
  %576 = vmatpush1.bf16.msra.mxu0 0
  %577 = vmatprep.subr.bf16.mxu0 0
  %578 = vmatpush1.bf16.msra.mxu0 0
  %579 = vmatprep.subr.bf16.mxu0 0
  %580 = vmatpush1.bf16.msra.mxu0 0
  %581 = vmatprep.subr.bf16.mxu0 0
  %582 = vmatpush1.bf16.msra.mxu0 0
  %583 = vmatprep.subr.bf16.mxu0 0
  %584 = vmatpush1.bf16.msra.mxu0 0
  %585 = vmatprep.mubr.bf16.mxu0 0
  %586 = vmatmul.mubr.bf16.gmra.mrb[0].mxu0 %v153
  %v587 = vpop.f32.mrb[0].mxu0
  %v588 = vadd.f32 0.0, %v587
  %v589 = vpop.f32.mrb[0].mxu0
  %v590 = vpop.f32.mrb[0].mxu0
  %v591 = vadd.f32 0.0, %v590
  %v592 = vpop.f32.mrb[0].mxu0
  %593 = vmatprep.mubr.bf16.mxu0 0
  %594 = vmatmul.mubr.bf16.gmra.mrb[0].mxu0 %v156
  %v595 = vpop.f32.mrb[0].mxu0
  %v596 = vadd.f32 0.0, %v595
  %v597 = vpop.f32.mrb[0].mxu0
  %v598 = vpop.f32.mrb[0].mxu0
  %v599 = vadd.f32 0.0, %v598
  %v600 = vpop.f32.mrb[0].mxu0
  %601 = vmatprep.mubr.bf16.mxu0 0
  %602 = vmatmul.mubr.bf16.gmra.mrb[0].mxu0 %v159
  %v603 = vpop.f32.mrb[0].mxu0
  %v604 = vadd.f32 0.0, %v603
  %v605 = vpop.f32.mrb[0].mxu0
  %v606 = vpop.f32.mrb[0].mxu0
  %v607 = vadd.f32 0.0, %v606
  %v608 = vpop.f32.mrb[0].mxu0
  %609 = vmatprep.mubr.bf16.mxu0 0
  %610 = vmatmul.mubr.bf16.gmra.mrb[0].mxu0 %v162
  %v611 = vpop.f32.mrb[0].mxu0
  %v612 = vadd.f32 0.0, %v611
  %v613 = vpop.f32.mrb[0].mxu0
  %v614 = vpop.f32.mrb[0].mxu0
  %v615 = vadd.f32 0.0, %v614
  %v616 = vpop.f32.mrb[0].mxu0
  %617 = vmatprep.mubr.bf16.mxu0 0
  %618 = vmatmul.mubr.bf16.gmra.mrb[0].mxu0 %v165
  %v619 = vpop.f32.mrb[0].mxu0
  %v620 = vadd.f32 0.0, %v619
  %v621 = vpop.f32.mrb[0].mxu0
  %v622 = vpop.f32.mrb[0].mxu0
  %v623 = vadd.f32 0.0, %v622
  %v624 = vpop.f32.mrb[0].mxu0
  %625 = vmatprep.mubr.bf16.mxu0 0
  %626 = vmatmul.mubr.bf16.gmra.mrb[0].mxu0 %v168
  %v627 = vpop.f32.mrb[0].mxu0
  %v628 = vadd.f32 0.0, %v627
  %v629 = vpop.f32.mrb[0].mxu0
  %v630 = vpop.f32.mrb[0].mxu0
  %v631 = vadd.f32 0.0, %v630
  %v632 = vpop.f32.mrb[0].mxu0
  %633 = vmatprep.mubr.bf16.mxu0 0
  %634 = vmatmul.mubr.bf16.gmra.mrb[0].mxu0 %v171
  %v635 = vpop.f32.mrb[0].mxu0
  %v636 = vadd.f32 0.0, %v635
  %v637 = vpop.f32.mrb[0].mxu0
  %v638 = vpop.f32.mrb[0].mxu0
  %v639 = vadd.f32 0.0, %v638
  %v640 = vpop.f32.mrb[0].mxu0
  %641 = vmatprep.mubr.bf16.mxu0 0
  %642 = vmatmul.mubr.bf16.gmra.mrb[0].mxu0 %v174
  %v643 = vpop.f32.mrb[0].mxu0
  %v644 = vadd.f32 0.0, %v643
  %v645 = vpop.f32.mrb[0].mxu0
  %v646 = vpop.f32.mrb[0].mxu0
  %v647 = vadd.f32 0.0, %v646
  %v648 = vpop.f32.mrb[0].mxu0
  %649 = vmatprep.mubr.bf16.mxu0 0
  %650 = vmatmul.mubr.bf16.gmra.mrb[0].mxu0 %v177
  %v651 = vpop.f32.mrb[0].mxu0
  %v652 = vadd.f32 0.0, %v651
  %v653 = vpop.f32.mrb[0].mxu0
  %v654 = vpop.f32.mrb[0].mxu0
  %v655 = vadd.f32 0.0, %v654
  %v656 = vpop.f32.mrb[0].mxu0
  %657 = vmatprep.mubr.bf16.mxu0 0
  %658 = vmatmul.mubr.bf16.gmra.mrb[0].mxu0 %v180
  %v659 = vpop.f32.mrb[0].mxu0
  %v660 = vadd.f32 0.0, %v659
  %v661 = vpop.f32.mrb[0].mxu0
  %v662 = vpop.f32.mrb[0].mxu0
  %v663 = vadd.f32 0.0, %v662
  %v664 = vpop.f32.mrb[0].mxu0
  %665 = vmatprep.mubr.bf16.mxu0 0
  %666 = vmatmul.mubr.bf16.gmra.mrb[0].mxu0 %v183
  %v667 = vpop.f32.mrb[0].mxu0
  %v668 = vadd.f32 0.0, %v667
  %v669 = vpop.f32.mrb[0].mxu0
  %v670 = vpop.f32.mrb[0].mxu0
  %v671 = vadd.f32 0.0, %v670
  %v672 = vpop.f32.mrb[0].mxu0
  %673 = vmatprep.mubr.bf16.mxu0 0
  %674 = vmatmul.mubr.bf16.gmra.mrb[0].mxu0 %v186
  %v675 = vpop.f32.mrb[0].mxu0
  %v676 = vadd.f32 0.0, %v675
  %v677 = vpop.f32.mrb[0].mxu0
  %v678 = vpop.f32.mrb[0].mxu0
  %v679 = vadd.f32 0.0, %v678
  %v680 = vpop.f32.mrb[0].mxu0
  %681 = vmatprep.mubr.bf16.mxu0 0
  %682 = vmatmul.mubr.bf16.gmra.mrb[0].mxu0 %v189
  %v683 = vpop.f32.mrb[0].mxu0
  %v684 = vadd.f32 0.0, %v683
  %v685 = vpop.f32.mrb[0].mxu0
  %v686 = vpop.f32.mrb[0].mxu0
  %v687 = vadd.f32 0.0, %v686
  %v688 = vpop.f32.mrb[0].mxu0
  %689 = vmatprep.mubr.bf16.mxu0 0
  %690 = vmatmul.mubr.bf16.gmra.mrb[0].mxu0 %v192
  %v691 = vpop.f32.mrb[0].mxu0
  %v692 = vadd.f32 0.0, %v691
  %v693 = vpop.f32.mrb[0].mxu0
  %v694 = vpop.f32.mrb[0].mxu0
  %v695 = vadd.f32 0.0, %v694
  %v696 = vpop.f32.mrb[0].mxu0
  %697 = vmatprep.mubr.bf16.mxu0 0
  %698 = vmatmul.mubr.bf16.gmra.mrb[0].mxu0 %v195
  %v699 = vpop.f32.mrb[0].mxu0
  %v700 = vadd.f32 0.0, %v699
  %v701 = vpop.f32.mrb[0].mxu0
  %v702 = vpop.f32.mrb[0].mxu0
  %v703 = vadd.f32 0.0, %v702
  %v704 = vpop.f32.mrb[0].mxu0
  %705 = vmatprep.mubr.bf16.mxu0 0
  %706 = vmatmul.mubr.bf16.gmra.mrb[0].mxu0 %v548
  %v707 = vpop.f32.mrb[0].mxu0
  %v708 = vadd.f32 0.0, %v707
  %v709 = vpop.f32.mrb[0].mxu0
  %v710 = vpop.f32.mrb[0].mxu0
  %v711 = vadd.f32 0.0, %v710
  %v712 = vpop.f32.mrb[0].mxu0
  %713 = vdwg.mxu0
  %v714 = vadd.f32 %v411, %v588
  %v715 = vadd.f32 %v414, %v591
  %v716 = vadd.f32 %v419, %v596
  %v717 = vadd.f32 %v422, %v599
  %v718 = vadd.f32 %v427, %v604
  %v719 = vadd.f32 %v430, %v607
  %v720 = vadd.f32 %v435, %v612
  %v721 = vadd.f32 %v438, %v615
  %v722 = vadd.f32 %v443, %v620
  %v723 = vadd.f32 %v446, %v623
  %v724 = vadd.f32 %v451, %v628
  %v725 = vadd.f32 %v454, %v631
  %v726 = vadd.f32 %v459, %v636
  %v727 = vadd.f32 %v462, %v639
  %v728 = vadd.f32 %v467, %v644
  %v729 = vadd.f32 %v470, %v647
  %v730 = vadd.f32 %v475, %v652
  %v731 = vadd.f32 %v478, %v655
  %v732 = vadd.f32 %v483, %v660
  %v733 = vadd.f32 %v486, %v663
  %v734 = vadd.f32 %v491, %v668
  %v735 = vadd.f32 %v494, %v671
  %v736 = vadd.f32 %v499, %v676
  %v737 = vadd.f32 %v502, %v679
  %v738 = vadd.f32 %v507, %v684
  %v739 = vadd.f32 %v510, %v687
  %v740 = vadd.f32 %v515, %v692
  %v741 = vadd.f32 %v518, %v695
  %v742 = vadd.f32 %v523, %v700
  %v743 = vadd.f32 %v526, %v703
  %v744 = vadd.f32 %v531, %v708
  %v745 = vadd.f32 %v534, %v711
  %v746 = vld [vmem:[%s2] sm:$0x1]
  %v748 = vlaneseq
  %v749 = vshrl.u32 %v748, 7
  %v750 = vsub.s32 0, %v749
  %v751 = vrot.slane %v746, %v750
  %v753 = vadd.f32 %v714, %v751
  %v754 = vadd.f32 %v715, %v751
  %v755 = vadd.f32 %v716, %v751
  %v756 = vadd.f32 %v717, %v751
  %v757 = vadd.f32 %v718, %v751
  %v758 = vadd.f32 %v719, %v751
  %v759 = vadd.f32 %v720, %v751
  %v760 = vadd.f32 %v721, %v751
  %v761 = vadd.f32 %v722, %v751
  %v762 = vadd.f32 %v723, %v751
  %v763 = vadd.f32 %v724, %v751
  %v764 = vadd.f32 %v725, %v751
  %v765 = vadd.f32 %v726, %v751
  %v766 = vadd.f32 %v727, %v751
  %v767 = vadd.f32 %v728, %v751
  %v768 = vadd.f32 %v729, %v751
  %v769 = vadd.f32 %v730, %v751
  %v770 = vadd.f32 %v731, %v751
  %v771 = vadd.f32 %v732, %v751
  %v772 = vadd.f32 %v733, %v751
  %v773 = vadd.f32 %v734, %v751
  %v774 = vadd.f32 %v735, %v751
  %v775 = vadd.f32 %v736, %v751
  %v776 = vadd.f32 %v737, %v751
  %v777 = vadd.f32 %v738, %v751
  %v778 = vadd.f32 %v739, %v751
  %v779 = vadd.f32 %v740, %v751
  %v780 = vadd.f32 %v741, %v751
  %v781 = vadd.f32 %v742, %v751
  %v782 = vadd.f32 %v743, %v751
  %v783 = vadd.f32 %v744, %v751
  %v784 = vadd.f32 %v745, %v751
  %v785 = vmax.f32 %v753, 0.0
  %v786 = vmax.f32 %v754, 0.0
  %v787 = vmax.f32 %v755, 0.0
  %v788 = vmax.f32 %v756, 0.0
  %v789 = vmax.f32 %v757, 0.0
  %v790 = vmax.f32 %v758, 0.0
  %v791 = vmax.f32 %v759, 0.0
  %v792 = vmax.f32 %v760, 0.0
  %v793 = vmax.f32 %v761, 0.0
  %v794 = vmax.f32 %v762, 0.0
  %v795 = vmax.f32 %v763, 0.0
  %v796 = vmax.f32 %v764, 0.0
  %v797 = vmax.f32 %v765, 0.0
  %v798 = vmax.f32 %v766, 0.0
  %v799 = vmax.f32 %v767, 0.0
  %v800 = vmax.f32 %v768, 0.0
  %v801 = vmax.f32 %v769, 0.0
  %v802 = vmax.f32 %v770, 0.0
  %v803 = vmax.f32 %v771, 0.0
  %v804 = vmax.f32 %v772, 0.0
  %v805 = vmax.f32 %v773, 0.0
  %v806 = vmax.f32 %v774, 0.0
  %v807 = vmax.f32 %v775, 0.0
  %v808 = vmax.f32 %v776, 0.0
  %v809 = vmax.f32 %v777, 0.0
  %v810 = vmax.f32 %v778, 0.0
  %v811 = vmax.f32 %v779, 0.0
  %v812 = vmax.f32 %v780, 0.0
  %v813 = vmax.f32 %v781, 0.0
  %v814 = vmax.f32 %v782, 0.0
  %v815 = vmax.f32 %v783, 0.0
  %v816 = vmax.f32 %v784, 0.0
  %vm817 = vcmask 130048
  %v818 = vsel %vm817, %v785, 0.0
  %v819 = vsel %vm817, %v786, 0.0
  %v820 = vadd.f32 %v818, %v819
  %v821 = vsel %vm817, %v787, 0.0
  %v822 = vadd.f32 %v820, %v821
  %v823 = vsel %vm817, %v788, 0.0
  %v824 = vadd.f32 %v822, %v823
  %v825 = vsel %vm817, %v789, 0.0
  %v826 = vadd.f32 %v824, %v825
  %v827 = vsel %vm817, %v790, 0.0
  %v828 = vadd.f32 %v826, %v827
  %v829 = vsel %vm817, %v791, 0.0
  %v830 = vadd.f32 %v828, %v829
  %v831 = vsel %vm817, %v792, 0.0
  %v832 = vadd.f32 %v830, %v831
  %v833 = vsel %vm817, %v793, 0.0
  %v834 = vadd.f32 %v832, %v833
  %v835 = vsel %vm817, %v794, 0.0
  %v836 = vadd.f32 %v834, %v835
  %v837 = vsel %vm817, %v795, 0.0
  %v838 = vadd.f32 %v836, %v837
  %v839 = vsel %vm817, %v796, 0.0
  %v840 = vadd.f32 %v838, %v839
  %v841 = vsel %vm817, %v797, 0.0
  %v842 = vadd.f32 %v840, %v841
  %v843 = vsel %vm817, %v798, 0.0
  %v844 = vadd.f32 %v842, %v843
  %v845 = vsel %vm817, %v799, 0.0
  %v846 = vadd.f32 %v844, %v845
  %v847 = vsel %vm817, %v800, 0.0
  %v848 = vadd.f32 %v846, %v847
  %v849 = vsel %vm817, %v801, 0.0
  %v850 = vadd.f32 %v848, %v849
  %v851 = vsel %vm817, %v802, 0.0
  %v852 = vadd.f32 %v850, %v851
  %v853 = vsel %vm817, %v803, 0.0
  %v854 = vadd.f32 %v852, %v853
  %v855 = vsel %vm817, %v804, 0.0
  %v856 = vadd.f32 %v854, %v855
  %v857 = vsel %vm817, %v805, 0.0
  %v858 = vadd.f32 %v856, %v857
  %v859 = vsel %vm817, %v806, 0.0
  %v860 = vadd.f32 %v858, %v859
  %v861 = vsel %vm817, %v807, 0.0
  %v862 = vadd.f32 %v860, %v861
  %v863 = vsel %vm817, %v808, 0.0
  %v864 = vadd.f32 %v862, %v863
  %v865 = vsel %vm817, %v809, 0.0
  %v866 = vadd.f32 %v864, %v865
  %v867 = vsel %vm817, %v810, 0.0
  %v868 = vadd.f32 %v866, %v867
  %v869 = vsel %vm817, %v811, 0.0
  %v870 = vadd.f32 %v868, %v869
  %v871 = vsel %vm817, %v812, 0.0
  %v872 = vadd.f32 %v870, %v871
  %v873 = vsel %vm817, %v813, 0.0
  %v874 = vadd.f32 %v872, %v873
  %v875 = vsel %vm817, %v814, 0.0
  %v876 = vadd.f32 %v874, %v875
  %v877 = vsel %vm817, %v815, 0.0
  %v878 = vadd.f32 %v876, %v877
  %v879 = vsel %vm817, %v816, 0.0
  %v880 = vadd.f32 %v878, %v879
  %v881 = vrot.slane %v880, 4
  %v882 = vadd.f32 %v880, %v881
  %v883 = vrot.slane %v882, 2
  %v884 = vadd.f32 %v882, %v883
  %v885 = vrot.slane %v884, 1
  %v886 = vadd.f32 %v884, %v885
  %v887 = vrcp.pop 256.0
  %v888 = vmul.f32 %v886, %v887
  %v889 = vsub.f32 %v785, %v888
  %v890 = vsub.f32 %v786, %v888
  %v891 = vsub.f32 %v787, %v888
  %v892 = vsub.f32 %v788, %v888
  %v893 = vsub.f32 %v789, %v888
  %v894 = vsub.f32 %v790, %v888
  %v895 = vsub.f32 %v791, %v888
  %v896 = vsub.f32 %v792, %v888
  %v897 = vsub.f32 %v793, %v888
  %v898 = vsub.f32 %v794, %v888
  %v899 = vsub.f32 %v795, %v888
  %v900 = vsub.f32 %v796, %v888
  %v901 = vsub.f32 %v797, %v888
  %v902 = vsub.f32 %v798, %v888
  %v903 = vsub.f32 %v799, %v888
  %v904 = vsub.f32 %v800, %v888
  %v905 = vsub.f32 %v801, %v888
  %v906 = vsub.f32 %v802, %v888
  %v907 = vsub.f32 %v803, %v888
  %v908 = vsub.f32 %v804, %v888
  %v909 = vsub.f32 %v805, %v888
  %v910 = vsub.f32 %v806, %v888
  %v911 = vsub.f32 %v807, %v888
  %v912 = vsub.f32 %v808, %v888
  %v913 = vsub.f32 %v809, %v888
  %v914 = vsub.f32 %v810, %v888
  %v915 = vsub.f32 %v811, %v888
  %v916 = vsub.f32 %v812, %v888
  %v917 = vsub.f32 %v813, %v888
  %v918 = vsub.f32 %v814, %v888
  %v919 = vsub.f32 %v815, %v888
  %v920 = vsub.f32 %v816, %v888
  %v921 = vmul.f32 %v889, %v889
  %v922 = vmul.f32 %v890, %v890
  %v923 = vmul.f32 %v891, %v891
  %v924 = vmul.f32 %v892, %v892
  %v925 = vmul.f32 %v893, %v893
  %v926 = vmul.f32 %v894, %v894
  %v927 = vmul.f32 %v895, %v895
  %v928 = vmul.f32 %v896, %v896
  %v929 = vmul.f32 %v897, %v897
  %v930 = vmul.f32 %v898, %v898
  %v931 = vmul.f32 %v899, %v899
  %v932 = vmul.f32 %v900, %v900
  %v933 = vmul.f32 %v901, %v901
  %v934 = vmul.f32 %v902, %v902
  %v935 = vmul.f32 %v903, %v903
  %v936 = vmul.f32 %v904, %v904
  %v937 = vmul.f32 %v905, %v905
  %v938 = vmul.f32 %v906, %v906
  %v939 = vmul.f32 %v907, %v907
  %v940 = vmul.f32 %v908, %v908
  %v941 = vmul.f32 %v909, %v909
  %v942 = vmul.f32 %v910, %v910
  %v943 = vmul.f32 %v911, %v911
  %v944 = vmul.f32 %v912, %v912
  %v945 = vmul.f32 %v913, %v913
  %v946 = vmul.f32 %v914, %v914
  %v947 = vmul.f32 %v915, %v915
  %v948 = vmul.f32 %v916, %v916
  %v949 = vmul.f32 %v917, %v917
  %v950 = vmul.f32 %v918, %v918
  %v951 = vmul.f32 %v919, %v919
  %v952 = vmul.f32 %v920, %v920
  %v953 = vsel %vm817, %v921, 0.0
  %v954 = vsel %vm817, %v922, 0.0
  %v955 = vadd.f32 %v953, %v954
  %v956 = vsel %vm817, %v923, 0.0
  %v957 = vadd.f32 %v955, %v956
  %v958 = vsel %vm817, %v924, 0.0
  %v959 = vadd.f32 %v957, %v958
  %v960 = vsel %vm817, %v925, 0.0
  %v961 = vadd.f32 %v959, %v960
  %v962 = vsel %vm817, %v926, 0.0
  %v963 = vadd.f32 %v961, %v962
  %v964 = vsel %vm817, %v927, 0.0
  %v965 = vadd.f32 %v963, %v964
  %v966 = vsel %vm817, %v928, 0.0
  %v967 = vadd.f32 %v965, %v966
  %v968 = vsel %vm817, %v929, 0.0
  %v969 = vadd.f32 %v967, %v968
  %v970 = vsel %vm817, %v930, 0.0
  %v971 = vadd.f32 %v969, %v970
  %v972 = vsel %vm817, %v931, 0.0
  %v973 = vadd.f32 %v971, %v972
  %v974 = vsel %vm817, %v932, 0.0
  %v975 = vadd.f32 %v973, %v974
  %v976 = vsel %vm817, %v933, 0.0
  %v977 = vadd.f32 %v975, %v976
  %v978 = vsel %vm817, %v934, 0.0
  %v979 = vadd.f32 %v977, %v978
  %v980 = vsel %vm817, %v935, 0.0
  %v981 = vadd.f32 %v979, %v980
  %v982 = vsel %vm817, %v936, 0.0
  %v983 = vadd.f32 %v981, %v982
  %v984 = vsel %vm817, %v937, 0.0
  %v985 = vadd.f32 %v983, %v984
  %v986 = vsel %vm817, %v938, 0.0
  %v987 = vadd.f32 %v985, %v986
  %v988 = vsel %vm817, %v939, 0.0
  %v989 = vadd.f32 %v987, %v988
  %v990 = vsel %vm817, %v940, 0.0
  %v991 = vadd.f32 %v989, %v990
  %v992 = vsel %vm817, %v941, 0.0
  %v993 = vadd.f32 %v991, %v992
  %v994 = vsel %vm817, %v942, 0.0
  %v995 = vadd.f32 %v993, %v994
  %v996 = vsel %vm817, %v943, 0.0
  %v997 = vadd.f32 %v995, %v996
  %v998 = vsel %vm817, %v944, 0.0
  %v999 = vadd.f32 %v997, %v998
  %v1000 = vsel %vm817, %v945, 0.0
  %v1001 = vadd.f32 %v999, %v1000
  %v1002 = vsel %vm817, %v946, 0.0
  %v1003 = vadd.f32 %v1001, %v1002
  %v1004 = vsel %vm817, %v947, 0.0
  %v1005 = vadd.f32 %v1003, %v1004
  %v1006 = vsel %vm817, %v948, 0.0
  %v1007 = vadd.f32 %v1005, %v1006
  %v1008 = vsel %vm817, %v949, 0.0
  %v1009 = vadd.f32 %v1007, %v1008
  %v1010 = vsel %vm817, %v950, 0.0
  %v1011 = vadd.f32 %v1009, %v1010
  %v1012 = vsel %vm817, %v951, 0.0
  %v1013 = vadd.f32 %v1011, %v1012
  %v1014 = vsel %vm817, %v952, 0.0
  %v1015 = vadd.f32 %v1013, %v1014
  %v1016 = vrot.slane %v1015, 4
  %v1017 = vadd.f32 %v1015, %v1016
  %v1018 = vrot.slane %v1017, 2
  %v1019 = vadd.f32 %v1017, %v1018
  %v1020 = vrot.slane %v1019, 1
  %v1021 = vadd.f32 %v1019, %v1020
  %v1022 = vmul.f32 %v1021, 0.003921569
  %v1023 = vld [vmem:[%s3] sm:$0x1]
  %v1024 = vrsqrt.pop %v1022
  %v1025 = vmul.f32 %v1022, %v1024
  %vm1026 = vcmp.eq.f32.partialorder %v1022, inf
  %v1027 = vsel %vm1026, %v1022, %v1025
  %vm1028 = vcmp.eq.f32.partialorder %v1022, 0.0
  %v1029 = vand.u32 %v1022, 2147483648
  %v1030 = vsel %vm1028, %v1029, %v1027
  %v1031 = vadd.f32 %v1030, 1e-06
  %v1032 = vrcp.pop %v1031
  %v1033 = vmul.f32 %v1023, %v1032
  %v1035 = vlaneseq
  %v1036 = vshrl.u32 %v1035, 7
  %v1037 = vsub.s32 0, %v1036
  %v1038 = vrot.slane %v1033, %v1037
  %v1040 = vmul.f32 %v889, %v1038
  %v1041 = vmul.f32 %v890, %v1038
  %v1042 = vmul.f32 %v891, %v1038
  %v1043 = vmul.f32 %v892, %v1038
  %v1044 = vmul.f32 %v893, %v1038
  %v1045 = vmul.f32 %v894, %v1038
  %v1046 = vmul.f32 %v895, %v1038
  %v1047 = vmul.f32 %v896, %v1038
  %v1048 = vmul.f32 %v897, %v1038
  %v1049 = vmul.f32 %v898, %v1038
  %v1050 = vmul.f32 %v899, %v1038
  %v1051 = vmul.f32 %v900, %v1038
  %v1052 = vmul.f32 %v901, %v1038
  %v1053 = vmul.f32 %v902, %v1038
  %v1054 = vmul.f32 %v903, %v1038
  %v1055 = vmul.f32 %v904, %v1038
  %v1056 = vmul.f32 %v905, %v1038
  %v1057 = vmul.f32 %v906, %v1038
  %v1058 = vmul.f32 %v907, %v1038
  %v1059 = vmul.f32 %v908, %v1038
  %v1060 = vmul.f32 %v909, %v1038
  %v1061 = vmul.f32 %v910, %v1038
  %v1062 = vmul.f32 %v911, %v1038
  %v1063 = vmul.f32 %v912, %v1038
  %v1064 = vmul.f32 %v913, %v1038
  %v1065 = vmul.f32 %v914, %v1038
  %v1066 = vmul.f32 %v915, %v1038
  %v1067 = vmul.f32 %v916, %v1038
  %v1068 = vmul.f32 %v917, %v1038
  %v1069 = vmul.f32 %v918, %v1038
  %v1070 = vmul.f32 %v919, %v1038
  %v1071 = vmul.f32 %v920, %v1038
  %v1072 = vld [vmem:[%s4] sm:$0x1]
  %v1074 = vlaneseq
  %v1075 = vshrl.u32 %v1074, 7
  %v1076 = vsub.s32 0, %v1075
  %v1077 = vrot.slane %v1072, %v1076
  %v1079 = vadd.f32 %v1040, %v1077
  %v1080 = vadd.f32 %v1041, %v1077
  %v1081 = vadd.f32 %v1042, %v1077
  %v1082 = vadd.f32 %v1043, %v1077
  %v1083 = vadd.f32 %v1044, %v1077
  %v1084 = vadd.f32 %v1045, %v1077
  %v1085 = vadd.f32 %v1046, %v1077
  %v1086 = vadd.f32 %v1047, %v1077
  %v1087 = vadd.f32 %v1048, %v1077
  %v1088 = vadd.f32 %v1049, %v1077
  %v1089 = vadd.f32 %v1050, %v1077
  %v1090 = vadd.f32 %v1051, %v1077
  %v1091 = vadd.f32 %v1052, %v1077
  %v1092 = vadd.f32 %v1053, %v1077
  %v1093 = vadd.f32 %v1054, %v1077
  %v1094 = vadd.f32 %v1055, %v1077
  %v1095 = vadd.f32 %v1056, %v1077
  %v1096 = vadd.f32 %v1057, %v1077
  %v1097 = vadd.f32 %v1058, %v1077
  %v1098 = vadd.f32 %v1059, %v1077
  %v1099 = vadd.f32 %v1060, %v1077
  %v1100 = vadd.f32 %v1061, %v1077
  %v1101 = vadd.f32 %v1062, %v1077
  %v1102 = vadd.f32 %v1063, %v1077
  %v1103 = vadd.f32 %v1064, %v1077
  %v1104 = vadd.f32 %v1065, %v1077
  %v1105 = vadd.f32 %v1066, %v1077
  %v1106 = vadd.f32 %v1067, %v1077
  %v1107 = vadd.f32 %v1068, %v1077
  %v1108 = vadd.f32 %v1069, %v1077
  %v1109 = vadd.f32 %v1070, %v1077
  %v1110 = vadd.f32 %v1071, %v1077
  %1111 = vst.msk [vmem:[#allocation2] sm:$0xff] %vm817, %v1079
  %1112 = vst.msk [vmem:[#allocation2 + $0x8] sm:$0xff] %vm817, %v1080
  %1113 = vst.msk [vmem:[#allocation2 + $0x10] sm:$0xff] %vm817, %v1081
  %1114 = vst.msk [vmem:[#allocation2 + $0x18] sm:$0xff] %vm817, %v1082
  %1115 = vst.msk [vmem:[#allocation2 + $0x20] sm:$0xff] %vm817, %v1083
  %1116 = vst.msk [vmem:[#allocation2 + $0x28] sm:$0xff] %vm817, %v1084
  %1117 = vst.msk [vmem:[#allocation2 + $0x30] sm:$0xff] %vm817, %v1085
  %1118 = vst.msk [vmem:[#allocation2 + $0x38] sm:$0xff] %vm817, %v1086
  %1119 = vst.msk [vmem:[#allocation2 + $0x40] sm:$0xff] %vm817, %v1087
  %1120 = vst.msk [vmem:[#allocation2 + $0x48] sm:$0xff] %vm817, %v1088
  %1121 = vst.msk [vmem:[#allocation2 + $0x50] sm:$0xff] %vm817, %v1089
  %1122 = vst.msk [vmem:[#allocation2 + $0x58] sm:$0xff] %vm817, %v1090
  %1123 = vst.msk [vmem:[#allocation2 + $0x60] sm:$0xff] %vm817, %v1091
  %1124 = vst.msk [vmem:[#allocation2 + $0x68] sm:$0xff] %vm817, %v1092
  %1125 = vst.msk [vmem:[#allocation2 + $0x70] sm:$0xff] %vm817, %v1093
  %1126 = vst.msk [vmem:[#allocation2 + $0x78] sm:$0xff] %vm817, %v1094
  %1127 = vst.msk [vmem:[#allocation2 + $0x80] sm:$0xff] %vm817, %v1095
  %1128 = vst.msk [vmem:[#allocation2 + $0x88] sm:$0xff] %vm817, %v1096
  %1129 = vst.msk [vmem:[#allocation2 + $0x90] sm:$0xff] %vm817, %v1097
  %1130 = vst.msk [vmem:[#allocation2 + $0x98] sm:$0xff] %vm817, %v1098
  %1131 = vst.msk [vmem:[#allocation2 + $0xa0] sm:$0xff] %vm817, %v1099
  %1132 = vst.msk [vmem:[#allocation2 + $0xa8] sm:$0xff] %vm817, %v1100
  %1133 = vst.msk [vmem:[#allocation2 + $0xb0] sm:$0xff] %vm817, %v1101
  %1134 = vst.msk [vmem:[#allocation2 + $0xb8] sm:$0xff] %vm817, %v1102
  %1135 = vst.msk [vmem:[#allocation2 + $0xc0] sm:$0xff] %vm817, %v1103
  %1136 = vst.msk [vmem:[#allocation2 + $0xc8] sm:$0xff] %vm817, %v1104
  %1137 = vst.msk [vmem:[#allocation2 + $0xd0] sm:$0xff] %vm817, %v1105
  %1138 = vst.msk [vmem:[#allocation2 + $0xd8] sm:$0xff] %vm817, %v1106
  %1139 = vst.msk [vmem:[#allocation2 + $0xe0] sm:$0xff] %vm817, %v1107
  %1140 = vst.msk [vmem:[#allocation2 + $0xe8] sm:$0xff] %vm817, %v1108
  %1141 = vst.msk [vmem:[#allocation2 + $0xf0] sm:$0xff] %vm817, %v1109
  %1142 = vst.msk [vmem:[#allocation2 + $0xf8] sm:$0xff] %vm817, %v1110
  %v1143 = vld [vmem:[#allocation2] ss:$2 sm:$0xff]
  %s1144 = scalar_lea.vmem [#allocation2], 16
  %v1145 = vld [vmem:[%s1144] ss:$2 sm:$0xff]
  %s1146 = scalar_lea.vmem [#allocation2], 32
  %v1147 = vld [vmem:[%s1146] ss:$2 sm:$0xff]
  %s1148 = scalar_lea.vmem [#allocation2], 48
  %v1149 = vld [vmem:[%s1148] ss:$2 sm:$0xff]
  %s1150 = scalar_lea.vmem [#allocation2], 64
  %v1151 = vld [vmem:[%s1150] ss:$2 sm:$0xff]
  %s1152 = scalar_lea.vmem [#allocation2], 80
  %v1153 = vld [vmem:[%s1152] ss:$2 sm:$0xff]
  %s1154 = scalar_lea.vmem [#allocation2], 96
  %v1155 = vld [vmem:[%s1154] ss:$2 sm:$0xff]
  %s1156 = scalar_lea.vmem [#allocation2], 112
  %v1157 = vld [vmem:[%s1156] ss:$2 sm:$0xff]
  %s1158 = scalar_lea.vmem [#allocation2], 128
  %v1159 = vld [vmem:[%s1158] ss:$2 sm:$0xff]
  %s1160 = scalar_lea.vmem [#allocation2], 144
  %v1161 = vld [vmem:[%s1160] ss:$2 sm:$0xff]
  %s1162 = scalar_lea.vmem [#allocation2], 160
  %v1163 = vld [vmem:[%s1162] ss:$2 sm:$0xff]
  %s1164 = scalar_lea.vmem [#allocation2], 176
  %v1165 = vld [vmem:[%s1164] ss:$2 sm:$0xff]
  %s1166 = scalar_lea.vmem [#allocation2], 192
  %v1167 = vld [vmem:[%s1166] ss:$2 sm:$0xff]
  %s1168 = scalar_lea.vmem [#allocation2], 208
  %v1169 = vld [vmem:[%s1168] ss:$2 sm:$0xff]
  %s1170 = scalar_lea.vmem [#allocation2], 224
  %v1171 = vld [vmem:[%s1170] ss:$2 sm:$0xff]
  %s1172 = scalar_lea.vmem [#allocation2], 240
  %v1173 = vld [vmem:[%s1172] ss:$2 sm:$0xff]
  %s1174 = scalar_lea.vmem [#allocation2], 1
  %v1175 = vld [vmem:[%s1174] ss:$2 sm:$0xff]
  %s1176 = scalar_lea.vmem [#allocation2], 17
  %v1177 = vld [vmem:[%s1176] ss:$2 sm:$0xff]
  %s1178 = scalar_lea.vmem [#allocation2], 33
  %v1179 = vld [vmem:[%s1178] ss:$2 sm:$0xff]
  %s1180 = scalar_lea.vmem [#allocation2], 49
  %v1181 = vld [vmem:[%s1180] ss:$2 sm:$0xff]
  %s1182 = scalar_lea.vmem [#allocation2], 65
  %v1183 = vld [vmem:[%s1182] ss:$2 sm:$0xff]
  %s1184 = scalar_lea.vmem [#allocation2], 81
  %v1185 = vld [vmem:[%s1184] ss:$2 sm:$0xff]
  %s1186 = scalar_lea.vmem [#allocation2], 97
  %v1187 = vld [vmem:[%s1186] ss:$2 sm:$0xff]
  %s1188 = scalar_lea.vmem [#allocation2], 113
  %v1189 = vld [vmem:[%s1188] ss:$2 sm:$0xff]
  %s1190 = scalar_lea.vmem [#allocation2], 129
  %v1191 = vld [vmem:[%s1190] ss:$2 sm:$0xff]
  %s1192 = scalar_lea.vmem [#allocation2], 145
  %v1193 = vld [vmem:[%s1192] ss:$2 sm:$0xff]
  %s1194 = scalar_lea.vmem [#allocation2], 161
  %v1195 = vld [vmem:[%s1194] ss:$2 sm:$0xff]
  %s1196 = scalar_lea.vmem [#allocation2], 177
  %v1197 = vld [vmem:[%s1196] ss:$2 sm:$0xff]
  %s1198 = scalar_lea.vmem [#allocation2], 193
  %v1199 = vld [vmem:[%s1198] ss:$2 sm:$0xff]
  %s1200 = scalar_lea.vmem [#allocation2], 209
  %v1201 = vld [vmem:[%s1200] ss:$2 sm:$0xff]
  %s1202 = scalar_lea.vmem [#allocation2], 225
  %v1203 = vld [vmem:[%s1202] ss:$2 sm:$0xff]
  %s1204 = scalar_lea.vmem [#allocation2], 241
  %v1205 = vld [vmem:[%s1204] ss:$2 sm:$0xff]
  %v1206 = vmax.f32 %v1143, %v1175
  %v1207 = vmax.f32 %v1145, %v1177
  %v1208 = vmax.f32 %v1147, %v1179
  %v1209 = vmax.f32 %v1149, %v1181
  %v1210 = vmax.f32 %v1151, %v1183
  %v1211 = vmax.f32 %v1153, %v1185
  %v1212 = vmax.f32 %v1155, %v1187
  %v1213 = vmax.f32 %v1157, %v1189
  %v1214 = vmax.f32 %v1159, %v1191
  %v1215 = vmax.f32 %v1161, %v1193
  %v1216 = vmax.f32 %v1163, %v1195
  %v1217 = vmax.f32 %v1165, %v1197
  %v1218 = vmax.f32 %v1167, %v1199
  %v1219 = vmax.f32 %v1169, %v1201
  %v1220 = vmax.f32 %v1171, %v1203
  %v1221 = vmax.f32 %v1173, %v1205
  %v1222 = vmax.f32 %v1206, %v1207
  %v1223 = vmax.f32 %v1208, %v1209
  %v1224 = vmax.f32 %v1210, %v1211
  %v1225 = vmax.f32 %v1212, %v1213
  %v1226 = vmax.f32 %v1214, %v1215
  %v1227 = vmax.f32 %v1216, %v1217
  %v1228 = vmax.f32 %v1218, %v1219
  %v1229 = vmax.f32 %v1220, %v1221
  %v1230 = vpack.c.bf16 %v1223, %v1222
  %v1231 = vpack.c.bf16 %v1225, %v1224
  %v1232 = vpack.c.bf16 %v1227, %v1226
  %v1233 = vpack.c.bf16 %v1229, %v1228
  %v1238 = vunpack.c.l.b16 %v1230
  %v1239 = vunpack.c.h.b16 %v1230
  %v1240 = vunpack.c.l.b16 %v1231
  %v1241 = vunpack.c.h.b16 %v1231
  %v1242 = vunpack.c.l.b16 %v1232
  %v1243 = vunpack.c.h.b16 %v1232
  %v1244 = vunpack.c.l.b16 %v1233
  %v1245 = vunpack.c.h.b16 %v1233
  %v1246 = vpack.c.b16 %v1238, %v1238
  %v1247 = vpack.c.b16 %v1239, %v1239
  %v1248 = vpack.c.b16 %v1240, %v1240
  %v1249 = vpack.c.b16 %v1241, %v1241
  %v1250 = vpack.c.b16 %v1242, %v1242
  %v1251 = vpack.c.b16 %v1243, %v1243
  %v1252 = vpack.c.b16 %v1244, %v1244
  %v1253 = vpack.c.b16 %v1245, %v1245
  %vm1262 = vcmask 125952
  %1263 = vst.msk [vmem:[%s5] sm:$0xf] %vm1262, %v1246
  %1264 = vst.msk [vmem:[%s5 + $0x4] sm:$0xf] %vm1262, %v1247
  %1265 = vst.msk [vmem:[%s5 + $0x8] sm:$0xf] %vm1262, %v1248
  %1266 = vst.msk [vmem:[%s5 + $0xc] sm:$0xf] %vm1262, %v1249
  %1267 = vst.msk [vmem:[%s5 + $0x10] sm:$0xf] %vm1262, %v1250
  %1268 = vst.msk [vmem:[%s5 + $0x14] sm:$0xf] %vm1262, %v1251
  %1269 = vst.msk [vmem:[%s5 + $0x18] sm:$0xf] %vm1262, %v1252
  %1270 = vst.msk [vmem:[%s5 + $0x1c] sm:$0xf] %vm1262, %v1253
  // Predicated region
  $region22: #{forward.7} parent=0 // pred_check
    _
  $region23: #{forward.7} parent=0 // pred_check_branch
    %1272 = sbr.rel (0) target = $region25
  $region24: #{forward.7} parent=0 // pred_region
    _
  $region25: #{forward.7} parent=0 // pred_fallthru
    _
  // Predicated region
  $region26: #{forward.7} parent=0 // pred_check
    _
  $region27: #{forward.7} parent=0 // pred_check_branch
    %1274 = sbr.rel (0) target = $region29
  $region28: #{forward.7} parent=0 // pred_region
    _
  $region29: #{forward.7} parent=0 // pred_fallthru
    _

// kernel: forward.12
$region0: #{forward.12}
  #allocation0 [shape = 'u32[]', space=smem, size = 0x4, offset = 0x4, fixed_abs, tag = 'smem constant byte address 0x4 - core index']
  #allocation1 [shape = 'u32[144,128]{1,0:T(1,128)}', space=vmem, size = 0x12000, scoped, tag = 'internal scratch']
  %s0 = inlined_call_operand.vmem [shape: bf16[20,64], index: 0, kind: input, shape index: {}]
  %s1 = inlined_call_operand.vmem [shape: bf16[6,64,16], index: 1, kind: input, shape index: {}]
  %s2 = inlined_call_operand.vmem [shape: f32[1,16], index: 2, kind: input, shape index: {}]
  %s3 = inlined_call_operand.vmem [shape: f32[1,16], index: 3, kind: input, shape index: {}]
  %s4 = inlined_call_operand.vmem [shape: f32[1,16], index: 4, kind: input, shape index: {}]
  %s5 = inlined_call_operand.vmem [shape: bf16[4,16,16], index: 5, kind: output, shape index: {}]
  %s6 = sld [smem:[#allocation0]]
  $region30: #{forward.12} parent=0
    _
  %s8 = ssub.s32 1, %s6
  %s9 = scalar_select 0, %s8, %s6
  // Predicated region
  $region2: #{forward.12} parent=0 // pred_check
    _
  $region3: #{forward.12} parent=0 // pred_check_branch
    %11 = sbr.rel (0) target = $region5
  $region4: #{forward.12} parent=0 // pred_region
    _
  $region5: #{forward.12} parent=0 // pred_fallthru
    _
  // Predicated region
  $region6: #{forward.12} parent=0 // pred_check
    _
  $region7: #{forward.12} parent=0 // pred_check_branch
    %13 = sbr.rel (0) target = $region9
  $region8: #{forward.12} parent=0 // pred_region
    _
  $region9: #{forward.12} parent=0 // pred_fallthru
    _
  // Predicated region
  $region10: #{forward.12} parent=0 // pred_check
    _
  $region11: #{forward.12} parent=0 // pred_check_branch
    %15 = sbr.rel (0) target = $region13
  $region12: #{forward.12} parent=0 // pred_region
    _
  $region13: #{forward.12} parent=0 // pred_fallthru
    _
  // Predicated region
  $region14: #{forward.12} parent=0 // pred_check
    _
  $region15: #{forward.12} parent=0 // pred_check_branch
    %17 = sbr.rel (0) target = $region17
  $region16: #{forward.12} parent=0 // pred_region
    _
  $region17: #{forward.12} parent=0 // pred_fallthru
    _
  // Predicated region
  $region18: #{forward.12} parent=0 // pred_check
    _
  $region19: #{forward.12} parent=0 // pred_check_branch
    %19 = sbr.rel (0) target = $region21
  $region20: #{forward.12} parent=0 // pred_region
    _
  $region21: #{forward.12} parent=0 // pred_fallthru
    _
  %v21 = vld [vmem:[%s0] sm:$0xf]
  %v22 = vld [vmem:[%s0 + $0x4] sm:$0xf]
  %v23 = vld [vmem:[%s0 + $0x8] sm:$0x3]
  %v24 = vld [vmem:[%s2] sm:$0x1]
  %v25 = vld [vmem:[%s1] sm:$0xf]
  %v26 = vld [vmem:[%s1 + $0x4] sm:$0xf]
  %v27 = vld [vmem:[%s1 + $0x8] sm:$0xf]
  %v28 = vld [vmem:[%s1 + $0xc] sm:$0xf]
  %v29 = vld [vmem:[%s1 + $0x10] sm:$0xf]
  %v30 = vld [vmem:[%s1 + $0x14] sm:$0xf]
  %v31 = vld [vmem:[%s1 + $0x18] sm:$0xf]
  %v32 = vld [vmem:[%s1 + $0x1c] sm:$0xf]
  %v34 = vlaneseq
  %v35 = vshrl.u32 %v34, 7
  %v36 = vsub.s32 0, %v35
  %v37 = vrot.slane %v24, %v36
  %v41 = vunpack.c.l.b16 %v21
  %v42 = vunpack.c.l.b16 %v22
  %v43 = vpack.c.b16 %v42, %v41
  %v52 = vunpack.c.l.b16 %v25
  %v53 = vunpack.c.l.b16 %v26
  %v54 = vunpack.c.l.b16 %v27
  %v55 = vunpack.c.l.b16 %v28
  %v56 = vunpack.c.l.b16 %v29
  %v57 = vunpack.c.l.b16 %v30
  %v58 = vunpack.c.l.b16 %v31
  %v59 = vunpack.c.l.b16 %v32
  %v60 = vpack.c.b16 %v53, %v52
  %v61 = vpack.c.b16 %v55, %v54
  %v62 = vpack.c.b16 %v57, %v56
  %v63 = vpack.c.b16 %v59, %v58
  %vm68 = vcmask 523264
  %v70 = vsel %vm68, %v43, 0
  %72 = vmatprep.subr.bf16.mxu0 0
  %73 = vmatpush1.bf16.msra.mxu0 %v60
  %74 = vmatprep.subr.bf16.mxu0 0
  %75 = vmatpush1.bf16.msra.mxu0 %v61
  %76 = vmatprep.subr.bf16.mxu0 0
  %77 = vmatpush1.bf16.msra.mxu0 %v62
  %78 = vmatprep.subr.bf16.mxu0 0
  %79 = vmatpush1.bf16.msra.mxu0 %v63
  %80 = vmatprep.subr.bf16.mxu0 0
  %81 = vmatpush1.bf16.msra.mxu0 0
  %82 = vmatprep.subr.bf16.mxu0 0
  %83 = vmatpush1.bf16.msra.mxu0 0
  %84 = vmatprep.subr.bf16.mxu0 0
  %85 = vmatpush1.bf16.msra.mxu0 0
  %86 = vmatprep.subr.bf16.mxu0 0
  %87 = vmatpush1.bf16.msra.mxu0 0
  %88 = vmatprep.subr.bf16.mxu0 0
  %89 = vmatpush1.bf16.msra.mxu0 0
  %90 = vmatprep.subr.bf16.mxu0 0
  %91 = vmatpush1.bf16.msra.mxu0 0
  %92 = vmatprep.subr.bf16.mxu0 0
  %93 = vmatpush1.bf16.msra.mxu0 0
  %94 = vmatprep.subr.bf16.mxu0 0
  %95 = vmatpush1.bf16.msra.mxu0 0
  %96 = vmatprep.subr.bf16.mxu0 0
  %97 = vmatpush1.bf16.msra.mxu0 0
  %98 = vmatprep.subr.bf16.mxu0 0
  %99 = vmatpush1.bf16.msra.mxu0 0
  %100 = vmatprep.subr.bf16.mxu0 0
  %101 = vmatpush1.bf16.msra.mxu0 0
  %102 = vmatprep.subr.bf16.mxu0 0
  %103 = vmatpush1.bf16.msra.mxu0 0
  %104 = vmatprep.mubr.bf16.mxu0 0
  %105 = vmatmul.mubr.bf16.gmra.mrb[0].mxu0 %v70
  %v106 = vpop.f32.mrb[0].mxu0
  %v107 = vadd.f32 %v37, %v106
  %v108 = vpop.f32.mrb[0].mxu0
  %v109 = vpop.f32.mrb[0].mxu0
  %v110 = vadd.f32 %v37, %v109
  %v111 = vpop.f32.mrb[0].mxu0
  %112 = vdwg.mxu0
  %v113 = vmax.f32 %v107, 0.0
  %v114 = vmax.f32 %v110, 0.0
  %s115 = scalar_lea.vmem %s1, 32
  %v116 = vld [vmem:[%s115] sm:$0xf]
  %v117 = vld [vmem:[%s115 + $0x4] sm:$0xf]
  %v118 = vld [vmem:[%s115 + $0x8] sm:$0xf]
  %v119 = vld [vmem:[%s115 + $0xc] sm:$0xf]
  %v120 = vld [vmem:[%s115 + $0x10] sm:$0xf]
  %v121 = vld [vmem:[%s115 + $0x14] sm:$0xf]
  %v122 = vld [vmem:[%s115 + $0x18] sm:$0xf]
  %v123 = vld [vmem:[%s115 + $0x1c] sm:$0xf]
  %v132 = vunpack.c.l.b16 %v116
  %v133 = vunpack.c.l.b16 %v117
  %v134 = vunpack.c.l.b16 %v118
  %v135 = vunpack.c.l.b16 %v119
  %v136 = vunpack.c.l.b16 %v120
  %v137 = vunpack.c.l.b16 %v121
  %v138 = vunpack.c.l.b16 %v122
  %v139 = vunpack.c.l.b16 %v123
  %v140 = vpack.c.b16 %v133, %v132
  %v141 = vpack.c.b16 %v135, %v134
  %v142 = vpack.c.b16 %v137, %v136
  %v143 = vpack.c.b16 %v139, %v138
  %148 = vmatprep.subr.bf16.mxu0 0
  %149 = vmatpush1.bf16.msra.mxu0 %v140
  %150 = vmatprep.subr.bf16.mxu0 0
  %151 = vmatpush1.bf16.msra.mxu0 %v141
  %152 = vmatprep.subr.bf16.mxu0 0
  %153 = vmatpush1.bf16.msra.mxu0 %v142
  %154 = vmatprep.subr.bf16.mxu0 0
  %155 = vmatpush1.bf16.msra.mxu0 %v143
  %156 = vmatprep.subr.bf16.mxu0 0
  %157 = vmatpush1.bf16.msra.mxu0 0
  %158 = vmatprep.subr.bf16.mxu0 0
  %159 = vmatpush1.bf16.msra.mxu0 0
  %160 = vmatprep.subr.bf16.mxu0 0
  %161 = vmatpush1.bf16.msra.mxu0 0
  %162 = vmatprep.subr.bf16.mxu0 0
  %163 = vmatpush1.bf16.msra.mxu0 0
  %164 = vmatprep.subr.bf16.mxu0 0
  %165 = vmatpush1.bf16.msra.mxu0 0
  %166 = vmatprep.subr.bf16.mxu0 0
  %167 = vmatpush1.bf16.msra.mxu0 0
  %168 = vmatprep.subr.bf16.mxu0 0
  %169 = vmatpush1.bf16.msra.mxu0 0
  %170 = vmatprep.subr.bf16.mxu0 0
  %171 = vmatpush1.bf16.msra.mxu0 0
  %172 = vmatprep.subr.bf16.mxu0 0
  %173 = vmatpush1.bf16.msra.mxu0 0
  %174 = vmatprep.subr.bf16.mxu0 0
  %175 = vmatpush1.bf16.msra.mxu0 0
  %176 = vmatprep.subr.bf16.mxu0 0
  %177 = vmatpush1.bf16.msra.mxu0 0
  %178 = vmatprep.subr.bf16.mxu0 0
  %179 = vmatpush1.bf16.msra.mxu0 0
  %180 = vmatprep.mubr.bf16.mxu0 0
  %181 = vmatmul.mubr.bf16.gmra.mrb[0].mxu0 %v70
  %v182 = vpop.f32.mrb[0].mxu0
  %v183 = vadd.f32 %v37, %v182
  %v184 = vpop.f32.mrb[0].mxu0
  %v185 = vpop.f32.mrb[0].mxu0
  %v186 = vadd.f32 %v37, %v185
  %v187 = vpop.f32.mrb[0].mxu0
  %188 = vdwg.mxu0
  %v189 = vmax.f32 %v183, 0.0
  %v190 = vmax.f32 %v186, 0.0
  %s191 = scalar_lea.vmem %s1, 64
  %v192 = vld [vmem:[%s191] sm:$0xf]
  %v193 = vld [vmem:[%s191 + $0x4] sm:$0xf]
  %v194 = vld [vmem:[%s191 + $0x8] sm:$0xf]
  %v195 = vld [vmem:[%s191 + $0xc] sm:$0xf]
  %v196 = vld [vmem:[%s191 + $0x10] sm:$0xf]
  %v197 = vld [vmem:[%s191 + $0x14] sm:$0xf]
  %v198 = vld [vmem:[%s191 + $0x18] sm:$0xf]
  %v199 = vld [vmem:[%s191 + $0x1c] sm:$0xf]
  %s200 = scalar_lea.vmem %s1, 96
  %v201 = vld [vmem:[%s200] sm:$0xf]
  %v202 = vld [vmem:[%s200 + $0x4] sm:$0xf]
  %v203 = vld [vmem:[%s200 + $0x8] sm:$0xf]
  %v204 = vld [vmem:[%s200 + $0xc] sm:$0xf]
  %v205 = vld [vmem:[%s200 + $0x10] sm:$0xf]
  %v206 = vld [vmem:[%s200 + $0x14] sm:$0xf]
  %v207 = vld [vmem:[%s200 + $0x18] sm:$0xf]
  %v208 = vld [vmem:[%s200 + $0x1c] sm:$0xf]
  %v210 = vunpack.c.l.b16 %v23
  %v211 = vpack.c.b16 %v210, %v210
  %vm212 = vcmask 1045504
  %v213 = vrot.slane %v43, 2
  %v214 = vrot.slane %v211, 2
  %v215 = vsel %vm212, %v213, %v214
  %v224 = vunpack.c.l.b16 %v201
  %v225 = vunpack.c.l.b16 %v202
  %v226 = vunpack.c.l.b16 %v203
  %v227 = vunpack.c.l.b16 %v204
  %v228 = vunpack.c.l.b16 %v205
  %v229 = vunpack.c.l.b16 %v206
  %v230 = vunpack.c.l.b16 %v207
  %v231 = vunpack.c.l.b16 %v208
  %v232 = vpack.c.b16 %v225, %v224
  %v233 = vpack.c.b16 %v227, %v226
  %v234 = vpack.c.b16 %v229, %v228
  %v235 = vpack.c.b16 %v231, %v230
  %v241 = vsel %vm68, %v215, 0
  %243 = vmatprep.subr.bf16.mxu0 0
  %244 = vmatpush1.bf16.msra.mxu0 %v232
  %245 = vmatprep.subr.bf16.mxu0 0
  %246 = vmatpush1.bf16.msra.mxu0 %v233
  %247 = vmatprep.subr.bf16.mxu0 0
  %248 = vmatpush1.bf16.msra.mxu0 %v234
  %249 = vmatprep.subr.bf16.mxu0 0
  %250 = vmatpush1.bf16.msra.mxu0 %v235
  %251 = vmatprep.subr.bf16.mxu0 0
  %252 = vmatpush1.bf16.msra.mxu0 0
  %253 = vmatprep.subr.bf16.mxu0 0
  %254 = vmatpush1.bf16.msra.mxu0 0
  %255 = vmatprep.subr.bf16.mxu0 0
  %256 = vmatpush1.bf16.msra.mxu0 0
  %257 = vmatprep.subr.bf16.mxu0 0
  %258 = vmatpush1.bf16.msra.mxu0 0
  %259 = vmatprep.subr.bf16.mxu0 0
  %260 = vmatpush1.bf16.msra.mxu0 0
  %261 = vmatprep.subr.bf16.mxu0 0
  %262 = vmatpush1.bf16.msra.mxu0 0
  %263 = vmatprep.subr.bf16.mxu0 0
  %264 = vmatpush1.bf16.msra.mxu0 0
  %265 = vmatprep.subr.bf16.mxu0 0
  %266 = vmatpush1.bf16.msra.mxu0 0
  %267 = vmatprep.subr.bf16.mxu0 0
  %268 = vmatpush1.bf16.msra.mxu0 0
  %269 = vmatprep.subr.bf16.mxu0 0
  %270 = vmatpush1.bf16.msra.mxu0 0
  %271 = vmatprep.subr.bf16.mxu0 0
  %272 = vmatpush1.bf16.msra.mxu0 0
  %273 = vmatprep.subr.bf16.mxu0 0
  %274 = vmatpush1.bf16.msra.mxu0 0
  %275 = vmatprep.mubr.bf16.mxu0 0
  %276 = vmatmul.mubr.bf16.gmra.mrb[0].mxu0 %v241
  %v277 = vpop.f32.mrb[0].mxu0
  %v278 = vadd.f32 0.0, %v277
  %v279 = vpop.f32.mrb[0].mxu0
  %v280 = vpop.f32.mrb[0].mxu0
  %v281 = vadd.f32 0.0, %v280
  %v282 = vpop.f32.mrb[0].mxu0
  %283 = vdwg.mxu0
  %v292 = vunpack.c.l.b16 %v192
  %v293 = vunpack.c.l.b16 %v193
  %v294 = vunpack.c.l.b16 %v194
  %v295 = vunpack.c.l.b16 %v195
  %v296 = vunpack.c.l.b16 %v196
  %v297 = vunpack.c.l.b16 %v197
  %v298 = vunpack.c.l.b16 %v198
  %v299 = vunpack.c.l.b16 %v199
  %v300 = vpack.c.b16 %v293, %v292
  %v301 = vpack.c.b16 %v295, %v294
  %v302 = vpack.c.b16 %v297, %v296
  %v303 = vpack.c.b16 %v299, %v298
  %308 = vmatprep.subr.bf16.mxu0 0
  %309 = vmatpush1.bf16.msra.mxu0 %v300
  %310 = vmatprep.subr.bf16.mxu0 0
  %311 = vmatpush1.bf16.msra.mxu0 %v301
  %312 = vmatprep.subr.bf16.mxu0 0
  %313 = vmatpush1.bf16.msra.mxu0 %v302
  %314 = vmatprep.subr.bf16.mxu0 0
  %315 = vmatpush1.bf16.msra.mxu0 %v303
  %316 = vmatprep.subr.bf16.mxu0 0
  %317 = vmatpush1.bf16.msra.mxu0 0
  %318 = vmatprep.subr.bf16.mxu0 0
  %319 = vmatpush1.bf16.msra.mxu0 0
  %320 = vmatprep.subr.bf16.mxu0 0
  %321 = vmatpush1.bf16.msra.mxu0 0
  %322 = vmatprep.subr.bf16.mxu0 0
  %323 = vmatpush1.bf16.msra.mxu0 0
  %324 = vmatprep.subr.bf16.mxu0 0
  %325 = vmatpush1.bf16.msra.mxu0 0
  %326 = vmatprep.subr.bf16.mxu0 0
  %327 = vmatpush1.bf16.msra.mxu0 0
  %328 = vmatprep.subr.bf16.mxu0 0
  %329 = vmatpush1.bf16.msra.mxu0 0
  %330 = vmatprep.subr.bf16.mxu0 0
  %331 = vmatpush1.bf16.msra.mxu0 0
  %332 = vmatprep.subr.bf16.mxu0 0
  %333 = vmatpush1.bf16.msra.mxu0 0
  %334 = vmatprep.subr.bf16.mxu0 0
  %335 = vmatpush1.bf16.msra.mxu0 0
  %336 = vmatprep.subr.bf16.mxu0 0
  %337 = vmatpush1.bf16.msra.mxu0 0
  %338 = vmatprep.subr.bf16.mxu0 0
  %339 = vmatpush1.bf16.msra.mxu0 0
  %340 = vmatprep.mubr.bf16.mxu0 0
  %341 = vmatmul.mubr.bf16.gmra.mrb[0].mxu0 %v70
  %v342 = vpop.f32.mrb[0].mxu0
  %v343 = vadd.f32 %v278, %v342
  %v344 = vpop.f32.mrb[0].mxu0
  %v345 = vpop.f32.mrb[0].mxu0
  %v346 = vadd.f32 %v281, %v345
  %v347 = vpop.f32.mrb[0].mxu0
  %348 = vdwg.mxu0
  %v349 = vadd.f32 %v343, %v37
  %v350 = vadd.f32 %v346, %v37
  %v351 = vmax.f32 %v349, 0.0
  %v352 = vmax.f32 %v350, 0.0
  %s353 = scalar_lea.vmem %s1, 128
  %v354 = vld [vmem:[%s353] sm:$0xf]
  %v355 = vld [vmem:[%s353 + $0x4] sm:$0xf]
  %v356 = vld [vmem:[%s353 + $0x8] sm:$0xf]
  %v357 = vld [vmem:[%s353 + $0xc] sm:$0xf]
  %v358 = vld [vmem:[%s353 + $0x10] sm:$0xf]
  %v359 = vld [vmem:[%s353 + $0x14] sm:$0xf]
  %v360 = vld [vmem:[%s353 + $0x18] sm:$0xf]
  %v361 = vld [vmem:[%s353 + $0x1c] sm:$0xf]
  %s362 = scalar_lea.vmem %s1, 160
  %v363 = vld [vmem:[%s362] sm:$0xf]
  %v364 = vld [vmem:[%s362 + $0x4] sm:$0xf]
  %v365 = vld [vmem:[%s362 + $0x8] sm:$0xf]
  %v366 = vld [vmem:[%s362 + $0xc] sm:$0xf]
  %v367 = vld [vmem:[%s362 + $0x10] sm:$0xf]
  %v368 = vld [vmem:[%s362 + $0x14] sm:$0xf]
  %v369 = vld [vmem:[%s362 + $0x18] sm:$0xf]
  %v370 = vld [vmem:[%s362 + $0x1c] sm:$0xf]
  %v379 = vunpack.c.l.b16 %v363
  %v380 = vunpack.c.l.b16 %v364
  %v381 = vunpack.c.l.b16 %v365
  %v382 = vunpack.c.l.b16 %v366
  %v383 = vunpack.c.l.b16 %v367
  %v384 = vunpack.c.l.b16 %v368
  %v385 = vunpack.c.l.b16 %v369
  %v386 = vunpack.c.l.b16 %v370
  %v387 = vpack.c.b16 %v380, %v379
  %v388 = vpack.c.b16 %v382, %v381
  %v389 = vpack.c.b16 %v384, %v383
  %v390 = vpack.c.b16 %v386, %v385
  %395 = vmatprep.subr.bf16.mxu0 0
  %396 = vmatpush1.bf16.msra.mxu0 %v387
  %397 = vmatprep.subr.bf16.mxu0 0
  %398 = vmatpush1.bf16.msra.mxu0 %v388
  %399 = vmatprep.subr.bf16.mxu0 0
  %400 = vmatpush1.bf16.msra.mxu0 %v389
  %401 = vmatprep.subr.bf16.mxu0 0
  %402 = vmatpush1.bf16.msra.mxu0 %v390
  %403 = vmatprep.subr.bf16.mxu0 0
  %404 = vmatpush1.bf16.msra.mxu0 0
  %405 = vmatprep.subr.bf16.mxu0 0
  %406 = vmatpush1.bf16.msra.mxu0 0
  %407 = vmatprep.subr.bf16.mxu0 0
  %408 = vmatpush1.bf16.msra.mxu0 0
  %409 = vmatprep.subr.bf16.mxu0 0
  %410 = vmatpush1.bf16.msra.mxu0 0
  %411 = vmatprep.subr.bf16.mxu0 0
  %412 = vmatpush1.bf16.msra.mxu0 0
  %413 = vmatprep.subr.bf16.mxu0 0
  %414 = vmatpush1.bf16.msra.mxu0 0
  %415 = vmatprep.subr.bf16.mxu0 0
  %416 = vmatpush1.bf16.msra.mxu0 0
  %417 = vmatprep.subr.bf16.mxu0 0
  %418 = vmatpush1.bf16.msra.mxu0 0
  %419 = vmatprep.subr.bf16.mxu0 0
  %420 = vmatpush1.bf16.msra.mxu0 0
  %421 = vmatprep.subr.bf16.mxu0 0
  %422 = vmatpush1.bf16.msra.mxu0 0
  %423 = vmatprep.subr.bf16.mxu0 0
  %424 = vmatpush1.bf16.msra.mxu0 0
  %425 = vmatprep.subr.bf16.mxu0 0
  %426 = vmatpush1.bf16.msra.mxu0 0
  %427 = vmatprep.mubr.bf16.mxu0 0
  %428 = vmatmul.mubr.bf16.gmra.mrb[0].mxu0 %v241
  %v429 = vpop.f32.mrb[0].mxu0
  %v430 = vadd.f32 0.0, %v429
  %v431 = vpop.f32.mrb[0].mxu0
  %v432 = vpop.f32.mrb[0].mxu0
  %v433 = vadd.f32 0.0, %v432
  %v434 = vpop.f32.mrb[0].mxu0
  %435 = vdwg.mxu0
  %v444 = vunpack.c.l.b16 %v354
  %v445 = vunpack.c.l.b16 %v355
  %v446 = vunpack.c.l.b16 %v356
  %v447 = vunpack.c.l.b16 %v357
  %v448 = vunpack.c.l.b16 %v358
  %v449 = vunpack.c.l.b16 %v359
  %v450 = vunpack.c.l.b16 %v360
  %v451 = vunpack.c.l.b16 %v361
  %v452 = vpack.c.b16 %v445, %v444
  %v453 = vpack.c.b16 %v447, %v446
  %v454 = vpack.c.b16 %v449, %v448
  %v455 = vpack.c.b16 %v451, %v450
  %460 = vmatprep.subr.bf16.mxu0 0
  %461 = vmatpush1.bf16.msra.mxu0 %v452
  %462 = vmatprep.subr.bf16.mxu0 0
  %463 = vmatpush1.bf16.msra.mxu0 %v453
  %464 = vmatprep.subr.bf16.mxu0 0
  %465 = vmatpush1.bf16.msra.mxu0 %v454
  %466 = vmatprep.subr.bf16.mxu0 0
  %467 = vmatpush1.bf16.msra.mxu0 %v455
  %468 = vmatprep.subr.bf16.mxu0 0
  %469 = vmatpush1.bf16.msra.mxu0 0
  %470 = vmatprep.subr.bf16.mxu0 0
  %471 = vmatpush1.bf16.msra.mxu0 0
  %472 = vmatprep.subr.bf16.mxu0 0
  %473 = vmatpush1.bf16.msra.mxu0 0
  %474 = vmatprep.subr.bf16.mxu0 0
  %475 = vmatpush1.bf16.msra.mxu0 0
  %476 = vmatprep.subr.bf16.mxu0 0
  %477 = vmatpush1.bf16.msra.mxu0 0
  %478 = vmatprep.subr.bf16.mxu0 0
  %479 = vmatpush1.bf16.msra.mxu0 0
  %480 = vmatprep.subr.bf16.mxu0 0
  %481 = vmatpush1.bf16.msra.mxu0 0
  %482 = vmatprep.subr.bf16.mxu0 0
  %483 = vmatpush1.bf16.msra.mxu0 0
  %484 = vmatprep.subr.bf16.mxu0 0
  %485 = vmatpush1.bf16.msra.mxu0 0
  %486 = vmatprep.subr.bf16.mxu0 0
  %487 = vmatpush1.bf16.msra.mxu0 0
  %488 = vmatprep.subr.bf16.mxu0 0
  %489 = vmatpush1.bf16.msra.mxu0 0
  %490 = vmatprep.subr.bf16.mxu0 0
  %491 = vmatpush1.bf16.msra.mxu0 0
  %492 = vmatprep.mubr.bf16.mxu0 0
  %493 = vmatmul.mubr.bf16.gmra.mrb[0].mxu0 %v70
  %v494 = vpop.f32.mrb[0].mxu0
  %v495 = vadd.f32 %v430, %v494
  %v496 = vpop.f32.mrb[0].mxu0
  %v497 = vpop.f32.mrb[0].mxu0
  %v498 = vadd.f32 %v433, %v497
  %v499 = vpop.f32.mrb[0].mxu0
  %500 = vdwg.mxu0
  %v501 = vadd.f32 %v495, %v37
  %v502 = vadd.f32 %v498, %v37
  %v503 = vmax.f32 %v501, 0.0
  %v504 = vmax.f32 %v502, 0.0
  %vm505 = vcmask 130048
  %v506 = vsel %vm505, %v113, 0.0
  %v507 = vsel %vm505, %v114, 0.0
  %v508 = vadd.f32 %v506, %v507
  %v509 = vrot.slane %v508, 4
  %v510 = vadd.f32 %v508, %v509
  %v511 = vrot.slane %v510, 2
  %v512 = vadd.f32 %v510, %v511
  %v513 = vrot.slane %v512, 1
  %v514 = vadd.f32 %v512, %v513
  %v515 = vsel %vm505, %v189, 0.0
  %v516 = vsel %vm505, %v190, 0.0
  %v517 = vadd.f32 %v515, %v516
  %v518 = vrot.slane %v517, 4
  %v519 = vadd.f32 %v517, %v518
  %v520 = vrot.slane %v519, 2
  %v521 = vadd.f32 %v519, %v520
  %v522 = vrot.slane %v521, 1
  %v523 = vadd.f32 %v521, %v522
  %v524 = vadd.f32 %v514, %v523
  %v525 = vsel %vm505, %v351, 0.0
  %v526 = vsel %vm505, %v352, 0.0
  %v527 = vadd.f32 %v525, %v526
  %v528 = vrot.slane %v527, 4
  %v529 = vadd.f32 %v527, %v528
  %v530 = vrot.slane %v529, 2
  %v531 = vadd.f32 %v529, %v530
  %v532 = vrot.slane %v531, 1
  %v533 = vadd.f32 %v531, %v532
  %v534 = vadd.f32 %v524, %v533
  %v535 = vsel %vm505, %v503, 0.0
  %v536 = vsel %vm505, %v504, 0.0
  %v537 = vadd.f32 %v535, %v536
  %v538 = vrot.slane %v537, 4
  %v539 = vadd.f32 %v537, %v538
  %v540 = vrot.slane %v539, 2
  %v541 = vadd.f32 %v539, %v540
  %v542 = vrot.slane %v541, 1
  %v543 = vadd.f32 %v541, %v542
  %v544 = vadd.f32 %v534, %v543
  %v545 = vmul.f32 %v544, 0.015625
  %v546 = vsub.f32 %v113, %v545
  %v547 = vsub.f32 %v114, %v545
  %v548 = vsub.f32 %v189, %v545
  %v549 = vsub.f32 %v190, %v545
  %v550 = vsub.f32 %v351, %v545
  %v551 = vsub.f32 %v352, %v545
  %v552 = vsub.f32 %v503, %v545
  %v553 = vsub.f32 %v504, %v545
  %v554 = vmul.f32 %v546, %v546
  %v555 = vmul.f32 %v547, %v547
  %v556 = vsel %vm505, %v554, 0.0
  %v557 = vsel %vm505, %v555, 0.0
  %v558 = vadd.f32 %v556, %v557
  %v559 = vrot.slane %v558, 4
  %v560 = vadd.f32 %v558, %v559
  %v561 = vrot.slane %v560, 2
  %v562 = vadd.f32 %v560, %v561
  %v563 = vrot.slane %v562, 1
  %v564 = vadd.f32 %v562, %v563
  %v565 = vmul.f32 %v548, %v548
  %v566 = vmul.f32 %v549, %v549
  %v567 = vsel %vm505, %v565, 0.0
  %v568 = vsel %vm505, %v566, 0.0
  %v569 = vadd.f32 %v567, %v568
  %v570 = vrot.slane %v569, 4
  %v571 = vadd.f32 %v569, %v570
  %v572 = vrot.slane %v571, 2
  %v573 = vadd.f32 %v571, %v572
  %v574 = vrot.slane %v573, 1
  %v575 = vadd.f32 %v573, %v574
  %v576 = vadd.f32 %v564, %v575
  %v577 = vmul.f32 %v550, %v550
  %v578 = vmul.f32 %v551, %v551
  %v579 = vsel %vm505, %v577, 0.0
  %v580 = vsel %vm505, %v578, 0.0
  %v581 = vadd.f32 %v579, %v580
  %v582 = vrot.slane %v581, 4
  %v583 = vadd.f32 %v581, %v582
  %v584 = vrot.slane %v583, 2
  %v585 = vadd.f32 %v583, %v584
  %v586 = vrot.slane %v585, 1
  %v587 = vadd.f32 %v585, %v586
  %v588 = vadd.f32 %v576, %v587
  %v589 = vmul.f32 %v552, %v552
  %v590 = vmul.f32 %v553, %v553
  %v591 = vsel %vm505, %v589, 0.0
  %v592 = vsel %vm505, %v590, 0.0
  %v593 = vadd.f32 %v591, %v592
  %v594 = vrot.slane %v593, 4
  %v595 = vadd.f32 %v593, %v594
  %v596 = vrot.slane %v595, 2
  %v597 = vadd.f32 %v595, %v596
  %v598 = vrot.slane %v597, 1
  %v599 = vadd.f32 %v597, %v598
  %v600 = vadd.f32 %v588, %v599
  %v601 = vmul.f32 %v600, 0.015873017
  %v602 = vld [vmem:[%s3] sm:$0x1]
  %v603 = vrsqrt.pop %v601
  %v604 = vmul.f32 %v601, %v603
  %vm605 = vcmp.eq.f32.partialorder %v601, inf
  %v606 = vsel %vm605, %v601, %v604
  %vm607 = vcmp.eq.f32.partialorder %v601, 0.0
  %v608 = vand.u32 %v601, 2147483648
  %v609 = vsel %vm607, %v608, %v606
  %v610 = vadd.f32 %v609, 1e-06
  %v611 = vrcp.pop %v610
  %v612 = vmul.f32 %v602, %v611
  %v613 = vld [vmem:[%s4] sm:$0x1]
  %v615 = vlaneseq
  %v616 = vshrl.u32 %v615, 7
  %v617 = vsub.s32 0, %v616
  %v618 = vrot.slane %v612, %v617
  %v620 = vmul.f32 %v546, %v618
  %v621 = vmul.f32 %v547, %v618
  %v623 = vlaneseq
  %v624 = vshrl.u32 %v623, 7
  %v625 = vsub.s32 0, %v624
  %v626 = vrot.slane %v613, %v625
  %v628 = vadd.f32 %v620, %v626
  %v629 = vadd.f32 %v621, %v626
  %v630 = vmul.f32 %v548, %v618
  %v631 = vmul.f32 %v549, %v618
  %v632 = vadd.f32 %v630, %v626
  %v633 = vadd.f32 %v631, %v626
  %v634 = vmul.f32 %v550, %v618
  %v635 = vmul.f32 %v551, %v618
  %v636 = vadd.f32 %v634, %v626
  %v637 = vadd.f32 %v635, %v626
  %v638 = vmul.f32 %v552, %v618
  %v639 = vmul.f32 %v553, %v618
  %v640 = vadd.f32 %v638, %v626
  %v641 = vadd.f32 %v639, %v626
  %v642 = vpack.c.bf16 %v629, %v628
  %v644 = vunpack.c.l.b16 %v642
  %v645 = vunpack.c.h.b16 %v642
  %v646 = vpack.c.b16 %v644, %v644
  %v647 = vpack.c.b16 %v645, %v645
  %vm650 = vcmask 125952
  %651 = vst.msk [vmem:[%s5] sm:$0xf] %vm650, %v646
  %652 = vst.msk [vmem:[%s5 + $0x4] sm:$0xf] %vm650, %v647
  %v653 = vpack.c.bf16 %v633, %v632
  %v655 = vunpack.c.l.b16 %v653
  %v656 = vunpack.c.h.b16 %v653
  %v657 = vpack.c.b16 %v655, %v655
  %v658 = vpack.c.b16 %v656, %v656
  %s661 = scalar_lea.vmem %s5, 8
  %662 = vst.msk [vmem:[%s661] sm:$0xf] %vm650, %v657
  %663 = vst.msk [vmem:[%s661 + $0x4] sm:$0xf] %vm650, %v658
  %v664 = vpack.c.bf16 %v637, %v636
  %v666 = vunpack.c.l.b16 %v664
  %v667 = vunpack.c.h.b16 %v664
  %v668 = vpack.c.b16 %v666, %v666
  %v669 = vpack.c.b16 %v667, %v667
  %s672 = scalar_lea.vmem %s5, 16
  %673 = vst.msk [vmem:[%s672] sm:$0xf] %vm650, %v668
  %674 = vst.msk [vmem:[%s672 + $0x4] sm:$0xf] %vm650, %v669
  %v675 = vpack.c.bf16 %v641, %v640
  %v677 = vunpack.c.l.b16 %v675
  %v678 = vunpack.c.h.b16 %v675
  %v679 = vpack.c.b16 %v677, %v677
  %v680 = vpack.c.b16 %v678, %v678
  %s683 = scalar_lea.vmem %s5, 24
  %684 = vst.msk [vmem:[%s683] sm:$0xf] %vm650, %v679
  %685 = vst.msk [vmem:[%s683 + $0x4] sm:$0xf] %vm650, %v680
  // Predicated region
  $region22: #{forward.12} parent=0 // pred_check
    _
  $region23: #{forward.12} parent=0 // pred_check_branch
    %687 = sbr.rel (0) target = $region25
  $region24: #{forward.12} parent=0 // pred_region
    _
  $region25: #{forward.12} parent=0 // pred_fallthru
    _
  // Predicated region
  $region26: #{forward.12} parent=0 // pred_check
    _
  $region27: #{forward.12} parent=0 // pred_check_branch
    %689 = sbr.rel (0) target = $region29
  $region28: #{forward.12} parent=0 // pred_region
    _
  $region29: #{forward.12} parent=0 // pred_fallthru
    _

// kernel: forward.11
$region0: #{forward.11}
  #allocation0 [shape = 'u32[]', space=smem, size = 0x4, offset = 0x4, fixed_abs, tag = 'smem constant byte address 0x4 - core index']
  #allocation1 [shape = 'u32[144,128]{1,0:T(1,128)}', space=vmem, size = 0x12000, scoped, tag = 'internal scratch']
  %s0 = inlined_call_operand.vmem [shape: bf16[6,128], index: 0, kind: input, shape index: {}]
  %s1 = inlined_call_operand.vmem [shape: bf16[6,128,32], index: 1, kind: input, shape index: {}]
  %s2 = inlined_call_operand.vmem [shape: f32[1,32], index: 2, kind: input, shape index: {}]
  %s3 = inlined_call_operand.vmem [shape: f32[1,32], index: 3, kind: input, shape index: {}]
  %s4 = inlined_call_operand.vmem [shape: f32[1,32], index: 4, kind: input, shape index: {}]
  %s5 = inlined_call_operand.vmem [shape: bf16[4,4,32], index: 5, kind: output, shape index: {}]
  %s6 = sld [smem:[#allocation0]]
  $region30: #{forward.11} parent=0
    _
  %s8 = ssub.s32 1, %s6
  %s9 = scalar_select 0, %s8, %s6
  // Predicated region
  $region2: #{forward.11} parent=0 // pred_check
    _
  $region3: #{forward.11} parent=0 // pred_check_branch
    %11 = sbr.rel (0) target = $region5
  $region4: #{forward.11} parent=0 // pred_region
    _
  $region5: #{forward.11} parent=0 // pred_fallthru
    _
  // Predicated region
  $region6: #{forward.11} parent=0 // pred_check
    _
  $region7: #{forward.11} parent=0 // pred_check_branch
    %13 = sbr.rel (0) target = $region9
  $region8: #{forward.11} parent=0 // pred_region
    _
  $region9: #{forward.11} parent=0 // pred_fallthru
    _
  // Predicated region
  $region10: #{forward.11} parent=0 // pred_check
    _
  $region11: #{forward.11} parent=0 // pred_check_branch
    %15 = sbr.rel (0) target = $region13
  $region12: #{forward.11} parent=0 // pred_region
    _
  $region13: #{forward.11} parent=0 // pred_fallthru
    _
  // Predicated region
  $region14: #{forward.11} parent=0 // pred_check
    _
  $region15: #{forward.11} parent=0 // pred_check_branch
    %17 = sbr.rel (0) target = $region17
  $region16: #{forward.11} parent=0 // pred_region
    _
  $region17: #{forward.11} parent=0 // pred_fallthru
    _
  // Predicated region
  $region18: #{forward.11} parent=0 // pred_check
    _
  $region19: #{forward.11} parent=0 // pred_check_branch
    %19 = sbr.rel (0) target = $region21
  $region20: #{forward.11} parent=0 // pred_region
    _
  $region21: #{forward.11} parent=0 // pred_fallthru
    _
  %v21 = vld [vmem:[%s0] sm:$0x7]
  %v22 = vld [vmem:[%s2] sm:$0x1]
  %v23 = vld [vmem:[%s1] sm:$0xf]
  %v24 = vld [vmem:[%s1 + $0x4] sm:$0xf]
  %v25 = vld [vmem:[%s1 + $0x8] sm:$0xf]
  %v26 = vld [vmem:[%s1 + $0xc] sm:$0xf]
  %v27 = vld [vmem:[%s1 + $0x10] sm:$0xf]
  %v28 = vld [vmem:[%s1 + $0x14] sm:$0xf]
  %v29 = vld [vmem:[%s1 + $0x18] sm:$0xf]
  %v30 = vld [vmem:[%s1 + $0x1c] sm:$0xf]
  %v31 = vld [vmem:[%s1 + $0x20] sm:$0xf]
  %v32 = vld [vmem:[%s1 + $0x24] sm:$0xf]
  %v33 = vld [vmem:[%s1 + $0x28] sm:$0xf]
  %v34 = vld [vmem:[%s1 + $0x2c] sm:$0xf]
  %v35 = vld [vmem:[%s1 + $0x30] sm:$0xf]
  %v36 = vld [vmem:[%s1 + $0x34] sm:$0xf]
  %v37 = vld [vmem:[%s1 + $0x38] sm:$0xf]
  %v38 = vld [vmem:[%s1 + $0x3c] sm:$0xf]
  %v40 = vlaneseq
  %v41 = vshrl.u32 %v40, 7
  %v42 = vsub.s32 0, %v41
  %v43 = vrot.slane %v22, %v42
  %v61 = vunpack.c.l.b16 %v23
  %v62 = vunpack.c.l.b16 %v24
  %v63 = vunpack.c.l.b16 %v25
  %v64 = vunpack.c.l.b16 %v26
  %v65 = vunpack.c.l.b16 %v27
  %v66 = vunpack.c.l.b16 %v28
  %v67 = vunpack.c.l.b16 %v29
  %v68 = vunpack.c.l.b16 %v30
  %v69 = vunpack.c.l.b16 %v31
  %v70 = vunpack.c.l.b16 %v32
  %v71 = vunpack.c.l.b16 %v33
  %v72 = vunpack.c.l.b16 %v34
  %v73 = vunpack.c.l.b16 %v35
  %v74 = vunpack.c.l.b16 %v36
  %v75 = vunpack.c.l.b16 %v37
  %v76 = vunpack.c.l.b16 %v38
  %v77 = vpack.c.b16 %v62, %v61
  %v78 = vpack.c.b16 %v64, %v63
  %v79 = vpack.c.b16 %v66, %v65
  %v80 = vpack.c.b16 %v68, %v67
  %v81 = vpack.c.b16 %v70, %v69
  %v82 = vpack.c.b16 %v72, %v71
  %v83 = vpack.c.b16 %v74, %v73
  %v84 = vpack.c.b16 %v76, %v75
  %93 = vmatprep.subr.bf16.mxu0 0
  %94 = vmatpush1.bf16.msra.mxu0 %v77
  %95 = vmatprep.subr.bf16.mxu0 0
  %96 = vmatpush1.bf16.msra.mxu0 %v78
  %97 = vmatprep.subr.bf16.mxu0 0
  %98 = vmatpush1.bf16.msra.mxu0 %v79
  %99 = vmatprep.subr.bf16.mxu0 0
  %100 = vmatpush1.bf16.msra.mxu0 %v80
  %101 = vmatprep.subr.bf16.mxu0 0
  %102 = vmatpush1.bf16.msra.mxu0 %v81
  %103 = vmatprep.subr.bf16.mxu0 0
  %104 = vmatpush1.bf16.msra.mxu0 %v82
  %105 = vmatprep.subr.bf16.mxu0 0
  %106 = vmatpush1.bf16.msra.mxu0 %v83
  %107 = vmatprep.subr.bf16.mxu0 0
  %108 = vmatpush1.bf16.msra.mxu0 %v84
  %109 = vmatprep.subr.bf16.mxu0 0
  %110 = vmatpush1.bf16.msra.mxu0 0
  %111 = vmatprep.subr.bf16.mxu0 0
  %112 = vmatpush1.bf16.msra.mxu0 0
  %113 = vmatprep.subr.bf16.mxu0 0
  %114 = vmatpush1.bf16.msra.mxu0 0
  %115 = vmatprep.subr.bf16.mxu0 0
  %116 = vmatpush1.bf16.msra.mxu0 0
  %117 = vmatprep.subr.bf16.mxu0 0
  %118 = vmatpush1.bf16.msra.mxu0 0
  %119 = vmatprep.subr.bf16.mxu0 0
  %120 = vmatpush1.bf16.msra.mxu0 0
  %121 = vmatprep.subr.bf16.mxu0 0
  %122 = vmatpush1.bf16.msra.mxu0 0
  %123 = vmatprep.subr.bf16.mxu0 0
  %124 = vmatpush1.bf16.msra.mxu0 0
  %125 = vmatprep.mubr.bf16.mxu0 0
  %126 = vmatmul.mubr.bf16.gmra.mrb[0].mxu0 %v21
  %v127 = vpop.f32.mrb[0].mxu0
  %v128 = vadd.f32 %v43, %v127
  %v129 = vpop.f32.mrb[0].mxu0
  %v130 = vpop.f32.mrb[0].mxu0
  %v131 = vpop.f32.mrb[0].mxu0
  %132 = vdwg.mxu0
  %v133 = vmax.f32 %v128, 0.0
  %s134 = scalar_lea.vmem %s1, 64
  %v135 = vld [vmem:[%s134] sm:$0xf]
  %v136 = vld [vmem:[%s134 + $0x4] sm:$0xf]
  %v137 = vld [vmem:[%s134 + $0x8] sm:$0xf]
  %v138 = vld [vmem:[%s134 + $0xc] sm:$0xf]
  %v139 = vld [vmem:[%s134 + $0x10] sm:$0xf]
  %v140 = vld [vmem:[%s134 + $0x14] sm:$0xf]
  %v141 = vld [vmem:[%s134 + $0x18] sm:$0xf]
  %v142 = vld [vmem:[%s134 + $0x1c] sm:$0xf]
  %v143 = vld [vmem:[%s134 + $0x20] sm:$0xf]
  %v144 = vld [vmem:[%s134 + $0x24] sm:$0xf]
  %v145 = vld [vmem:[%s134 + $0x28] sm:$0xf]
  %v146 = vld [vmem:[%s134 + $0x2c] sm:$0xf]
  %v147 = vld [vmem:[%s134 + $0x30] sm:$0xf]
  %v148 = vld [vmem:[%s134 + $0x34] sm:$0xf]
  %v149 = vld [vmem:[%s134 + $0x38] sm:$0xf]
  %v150 = vld [vmem:[%s134 + $0x3c] sm:$0xf]
  %v167 = vunpack.c.l.b16 %v135
  %v168 = vunpack.c.l.b16 %v136
  %v169 = vunpack.c.l.b16 %v137
  %v170 = vunpack.c.l.b16 %v138
  %v171 = vunpack.c.l.b16 %v139
  %v172 = vunpack.c.l.b16 %v140
  %v173 = vunpack.c.l.b16 %v141
  %v174 = vunpack.c.l.b16 %v142
  %v175 = vunpack.c.l.b16 %v143
  %v176 = vunpack.c.l.b16 %v144
  %v177 = vunpack.c.l.b16 %v145
  %v178 = vunpack.c.l.b16 %v146
  %v179 = vunpack.c.l.b16 %v147
  %v180 = vunpack.c.l.b16 %v148
  %v181 = vunpack.c.l.b16 %v149
  %v182 = vunpack.c.l.b16 %v150
  %v183 = vpack.c.b16 %v168, %v167
  %v184 = vpack.c.b16 %v170, %v169
  %v185 = vpack.c.b16 %v172, %v171
  %v186 = vpack.c.b16 %v174, %v173
  %v187 = vpack.c.b16 %v176, %v175
  %v188 = vpack.c.b16 %v178, %v177
  %v189 = vpack.c.b16 %v180, %v179
  %v190 = vpack.c.b16 %v182, %v181
  %199 = vmatprep.subr.bf16.mxu0 0
  %200 = vmatpush1.bf16.msra.mxu0 %v183
  %201 = vmatprep.subr.bf16.mxu0 0
  %202 = vmatpush1.bf16.msra.mxu0 %v184
  %203 = vmatprep.subr.bf16.mxu0 0
  %204 = vmatpush1.bf16.msra.mxu0 %v185
  %205 = vmatprep.subr.bf16.mxu0 0
  %206 = vmatpush1.bf16.msra.mxu0 %v186
  %207 = vmatprep.subr.bf16.mxu0 0
  %208 = vmatpush1.bf16.msra.mxu0 %v187
  %209 = vmatprep.subr.bf16.mxu0 0
  %210 = vmatpush1.bf16.msra.mxu0 %v188
  %211 = vmatprep.subr.bf16.mxu0 0
  %212 = vmatpush1.bf16.msra.mxu0 %v189
  %213 = vmatprep.subr.bf16.mxu0 0
  %214 = vmatpush1.bf16.msra.mxu0 %v190
  %215 = vmatprep.subr.bf16.mxu0 0
  %216 = vmatpush1.bf16.msra.mxu0 0
  %217 = vmatprep.subr.bf16.mxu0 0
  %218 = vmatpush1.bf16.msra.mxu0 0
  %219 = vmatprep.subr.bf16.mxu0 0
  %220 = vmatpush1.bf16.msra.mxu0 0
  %221 = vmatprep.subr.bf16.mxu0 0
  %222 = vmatpush1.bf16.msra.mxu0 0
  %223 = vmatprep.subr.bf16.mxu0 0
  %224 = vmatpush1.bf16.msra.mxu0 0
  %225 = vmatprep.subr.bf16.mxu0 0
  %226 = vmatpush1.bf16.msra.mxu0 0
  %227 = vmatprep.subr.bf16.mxu0 0
  %228 = vmatpush1.bf16.msra.mxu0 0
  %229 = vmatprep.subr.bf16.mxu0 0
  %230 = vmatpush1.bf16.msra.mxu0 0
  %231 = vmatprep.mubr.bf16.mxu0 0
  %232 = vmatmul.mubr.bf16.gmra.mrb[0].mxu0 %v21
  %v233 = vpop.f32.mrb[0].mxu0
  %v234 = vadd.f32 %v43, %v233
  %v235 = vpop.f32.mrb[0].mxu0
  %v236 = vpop.f32.mrb[0].mxu0
  %v237 = vpop.f32.mrb[0].mxu0
  %238 = vdwg.mxu0
  %v239 = vmax.f32 %v234, 0.0
  %s240 = scalar_lea.vmem %s1, 128
  %v241 = vld [vmem:[%s240] sm:$0xf]
  %v242 = vld [vmem:[%s240 + $0x4] sm:$0xf]
  %v243 = vld [vmem:[%s240 + $0x8] sm:$0xf]
  %v244 = vld [vmem:[%s240 + $0xc] sm:$0xf]
  %v245 = vld [vmem:[%s240 + $0x10] sm:$0xf]
  %v246 = vld [vmem:[%s240 + $0x14] sm:$0xf]
  %v247 = vld [vmem:[%s240 + $0x18] sm:$0xf]
  %v248 = vld [vmem:[%s240 + $0x1c] sm:$0xf]
  %v249 = vld [vmem:[%s240 + $0x20] sm:$0xf]
  %v250 = vld [vmem:[%s240 + $0x24] sm:$0xf]
  %v251 = vld [vmem:[%s240 + $0x28] sm:$0xf]
  %v252 = vld [vmem:[%s240 + $0x2c] sm:$0xf]
  %v253 = vld [vmem:[%s240 + $0x30] sm:$0xf]
  %v254 = vld [vmem:[%s240 + $0x34] sm:$0xf]
  %v255 = vld [vmem:[%s240 + $0x38] sm:$0xf]
  %v256 = vld [vmem:[%s240 + $0x3c] sm:$0xf]
  %s257 = scalar_lea.vmem %s1, 192
  %v258 = vld [vmem:[%s257] sm:$0xf]
  %v259 = vld [vmem:[%s257 + $0x4] sm:$0xf]
  %v260 = vld [vmem:[%s257 + $0x8] sm:$0xf]
  %v261 = vld [vmem:[%s257 + $0xc] sm:$0xf]
  %v262 = vld [vmem:[%s257 + $0x10] sm:$0xf]
  %v263 = vld [vmem:[%s257 + $0x14] sm:$0xf]
  %v264 = vld [vmem:[%s257 + $0x18] sm:$0xf]
  %v265 = vld [vmem:[%s257 + $0x1c] sm:$0xf]
  %v266 = vld [vmem:[%s257 + $0x20] sm:$0xf]
  %v267 = vld [vmem:[%s257 + $0x24] sm:$0xf]
  %v268 = vld [vmem:[%s257 + $0x28] sm:$0xf]
  %v269 = vld [vmem:[%s257 + $0x2c] sm:$0xf]
  %v270 = vld [vmem:[%s257 + $0x30] sm:$0xf]
  %v271 = vld [vmem:[%s257 + $0x34] sm:$0xf]
  %v272 = vld [vmem:[%s257 + $0x38] sm:$0xf]
  %v273 = vld [vmem:[%s257 + $0x3c] sm:$0xf]
  %v275 = vunpack.c.l.b16 %v21
  %v276 = vpack.c.b16 %v275, %v275
  %v277 = vrot.slane %v276, 1
  %v295 = vunpack.c.l.b16 %v258
  %v296 = vunpack.c.l.b16 %v259
  %v297 = vunpack.c.l.b16 %v260
  %v298 = vunpack.c.l.b16 %v261
  %v299 = vunpack.c.l.b16 %v262
  %v300 = vunpack.c.l.b16 %v263
  %v301 = vunpack.c.l.b16 %v264
  %v302 = vunpack.c.l.b16 %v265
  %v303 = vunpack.c.l.b16 %v266
  %v304 = vunpack.c.l.b16 %v267
  %v305 = vunpack.c.l.b16 %v268
  %v306 = vunpack.c.l.b16 %v269
  %v307 = vunpack.c.l.b16 %v270
  %v308 = vunpack.c.l.b16 %v271
  %v309 = vunpack.c.l.b16 %v272
  %v310 = vunpack.c.l.b16 %v273
  %v311 = vpack.c.b16 %v296, %v295
  %v312 = vpack.c.b16 %v298, %v297
  %v313 = vpack.c.b16 %v300, %v299
  %v314 = vpack.c.b16 %v302, %v301
  %v315 = vpack.c.b16 %v304, %v303
  %v316 = vpack.c.b16 %v306, %v305
  %v317 = vpack.c.b16 %v308, %v307
  %v318 = vpack.c.b16 %v310, %v309
  %327 = vmatprep.subr.bf16.mxu0 0
  %328 = vmatpush1.bf16.msra.mxu0 %v311
  %329 = vmatprep.subr.bf16.mxu0 0
  %330 = vmatpush1.bf16.msra.mxu0 %v312
  %331 = vmatprep.subr.bf16.mxu0 0
  %332 = vmatpush1.bf16.msra.mxu0 %v313
  %333 = vmatprep.subr.bf16.mxu0 0
  %334 = vmatpush1.bf16.msra.mxu0 %v314
  %335 = vmatprep.subr.bf16.mxu0 0
  %336 = vmatpush1.bf16.msra.mxu0 %v315
  %337 = vmatprep.subr.bf16.mxu0 0
  %338 = vmatpush1.bf16.msra.mxu0 %v316
  %339 = vmatprep.subr.bf16.mxu0 0
  %340 = vmatpush1.bf16.msra.mxu0 %v317
  %341 = vmatprep.subr.bf16.mxu0 0
  %342 = vmatpush1.bf16.msra.mxu0 %v318
  %343 = vmatprep.subr.bf16.mxu0 0
  %344 = vmatpush1.bf16.msra.mxu0 0
  %345 = vmatprep.subr.bf16.mxu0 0
  %346 = vmatpush1.bf16.msra.mxu0 0
  %347 = vmatprep.subr.bf16.mxu0 0
  %348 = vmatpush1.bf16.msra.mxu0 0
  %349 = vmatprep.subr.bf16.mxu0 0
  %350 = vmatpush1.bf16.msra.mxu0 0
  %351 = vmatprep.subr.bf16.mxu0 0
  %352 = vmatpush1.bf16.msra.mxu0 0
  %353 = vmatprep.subr.bf16.mxu0 0
  %354 = vmatpush1.bf16.msra.mxu0 0
  %355 = vmatprep.subr.bf16.mxu0 0
  %356 = vmatpush1.bf16.msra.mxu0 0
  %357 = vmatprep.subr.bf16.mxu0 0
  %358 = vmatpush1.bf16.msra.mxu0 0
  %359 = vmatprep.mubr.bf16.mxu0 0
  %360 = vmatmul.mubr.bf16.gmra.mrb[0].mxu0 %v277
  %v361 = vpop.f32.mrb[0].mxu0
  %v362 = vadd.f32 0.0, %v361
  %v363 = vpop.f32.mrb[0].mxu0
  %v364 = vpop.f32.mrb[0].mxu0
  %v365 = vpop.f32.mrb[0].mxu0
  %366 = vdwg.mxu0
  %v383 = vunpack.c.l.b16 %v241
  %v384 = vunpack.c.l.b16 %v242
  %v385 = vunpack.c.l.b16 %v243
  %v386 = vunpack.c.l.b16 %v244
  %v387 = vunpack.c.l.b16 %v245
  %v388 = vunpack.c.l.b16 %v246
  %v389 = vunpack.c.l.b16 %v247
  %v390 = vunpack.c.l.b16 %v248
  %v391 = vunpack.c.l.b16 %v249
  %v392 = vunpack.c.l.b16 %v250
  %v393 = vunpack.c.l.b16 %v251
  %v394 = vunpack.c.l.b16 %v252
  %v395 = vunpack.c.l.b16 %v253
  %v396 = vunpack.c.l.b16 %v254
  %v397 = vunpack.c.l.b16 %v255
  %v398 = vunpack.c.l.b16 %v256
  %v399 = vpack.c.b16 %v384, %v383
  %v400 = vpack.c.b16 %v386, %v385
  %v401 = vpack.c.b16 %v388, %v387
  %v402 = vpack.c.b16 %v390, %v389
  %v403 = vpack.c.b16 %v392, %v391
  %v404 = vpack.c.b16 %v394, %v393
  %v405 = vpack.c.b16 %v396, %v395
  %v406 = vpack.c.b16 %v398, %v397
  %415 = vmatprep.subr.bf16.mxu0 0
  %416 = vmatpush1.bf16.msra.mxu0 %v399
  %417 = vmatprep.subr.bf16.mxu0 0
  %418 = vmatpush1.bf16.msra.mxu0 %v400
  %419 = vmatprep.subr.bf16.mxu0 0
  %420 = vmatpush1.bf16.msra.mxu0 %v401
  %421 = vmatprep.subr.bf16.mxu0 0
  %422 = vmatpush1.bf16.msra.mxu0 %v402
  %423 = vmatprep.subr.bf16.mxu0 0
  %424 = vmatpush1.bf16.msra.mxu0 %v403
  %425 = vmatprep.subr.bf16.mxu0 0
  %426 = vmatpush1.bf16.msra.mxu0 %v404
  %427 = vmatprep.subr.bf16.mxu0 0
  %428 = vmatpush1.bf16.msra.mxu0 %v405
  %429 = vmatprep.subr.bf16.mxu0 0
  %430 = vmatpush1.bf16.msra.mxu0 %v406
  %431 = vmatprep.subr.bf16.mxu0 0
  %432 = vmatpush1.bf16.msra.mxu0 0
  %433 = vmatprep.subr.bf16.mxu0 0
  %434 = vmatpush1.bf16.msra.mxu0 0
  %435 = vmatprep.subr.bf16.mxu0 0
  %436 = vmatpush1.bf16.msra.mxu0 0
  %437 = vmatprep.subr.bf16.mxu0 0
  %438 = vmatpush1.bf16.msra.mxu0 0
  %439 = vmatprep.subr.bf16.mxu0 0
  %440 = vmatpush1.bf16.msra.mxu0 0
  %441 = vmatprep.subr.bf16.mxu0 0
  %442 = vmatpush1.bf16.msra.mxu0 0
  %443 = vmatprep.subr.bf16.mxu0 0
  %444 = vmatpush1.bf16.msra.mxu0 0
  %445 = vmatprep.subr.bf16.mxu0 0
  %446 = vmatpush1.bf16.msra.mxu0 0
  %447 = vmatprep.mubr.bf16.mxu0 0
  %448 = vmatmul.mubr.bf16.gmra.mrb[0].mxu0 %v21
  %v449 = vpop.f32.mrb[0].mxu0
  %v450 = vadd.f32 %v362, %v449
  %v451 = vpop.f32.mrb[0].mxu0
  %v452 = vpop.f32.mrb[0].mxu0
  %v453 = vpop.f32.mrb[0].mxu0
  %454 = vdwg.mxu0
  %v455 = vadd.f32 %v450, %v43
  %v456 = vmax.f32 %v455, 0.0
  %s457 = scalar_lea.vmem %s1, 256
  %v458 = vld [vmem:[%s457] sm:$0xf]
  %v459 = vld [vmem:[%s457 + $0x4] sm:$0xf]
  %v460 = vld [vmem:[%s457 + $0x8] sm:$0xf]
  %v461 = vld [vmem:[%s457 + $0xc] sm:$0xf]
  %v462 = vld [vmem:[%s457 + $0x10] sm:$0xf]
  %v463 = vld [vmem:[%s457 + $0x14] sm:$0xf]
  %v464 = vld [vmem:[%s457 + $0x18] sm:$0xf]
  %v465 = vld [vmem:[%s457 + $0x1c] sm:$0xf]
  %v466 = vld [vmem:[%s457 + $0x20] sm:$0xf]
  %v467 = vld [vmem:[%s457 + $0x24] sm:$0xf]
  %v468 = vld [vmem:[%s457 + $0x28] sm:$0xf]
  %v469 = vld [vmem:[%s457 + $0x2c] sm:$0xf]
  %v470 = vld [vmem:[%s457 + $0x30] sm:$0xf]
  %v471 = vld [vmem:[%s457 + $0x34] sm:$0xf]
  %v472 = vld [vmem:[%s457 + $0x38] sm:$0xf]
  %v473 = vld [vmem:[%s457 + $0x3c] sm:$0xf]
  %s474 = scalar_lea.vmem %s1, 320
  %v475 = vld [vmem:[%s474] sm:$0xf]
  %v476 = vld [vmem:[%s474 + $0x4] sm:$0xf]
  %v477 = vld [vmem:[%s474 + $0x8] sm:$0xf]
  %v478 = vld [vmem:[%s474 + $0xc] sm:$0xf]
  %v479 = vld [vmem:[%s474 + $0x10] sm:$0xf]
  %v480 = vld [vmem:[%s474 + $0x14] sm:$0xf]
  %v481 = vld [vmem:[%s474 + $0x18] sm:$0xf]
  %v482 = vld [vmem:[%s474 + $0x1c] sm:$0xf]
  %v483 = vld [vmem:[%s474 + $0x20] sm:$0xf]
  %v484 = vld [vmem:[%s474 + $0x24] sm:$0xf]
  %v485 = vld [vmem:[%s474 + $0x28] sm:$0xf]
  %v486 = vld [vmem:[%s474 + $0x2c] sm:$0xf]
  %v487 = vld [vmem:[%s474 + $0x30] sm:$0xf]
  %v488 = vld [vmem:[%s474 + $0x34] sm:$0xf]
  %v489 = vld [vmem:[%s474 + $0x38] sm:$0xf]
  %v490 = vld [vmem:[%s474 + $0x3c] sm:$0xf]
  %v507 = vunpack.c.l.b16 %v475
  %v508 = vunpack.c.l.b16 %v476
  %v509 = vunpack.c.l.b16 %v477
  %v510 = vunpack.c.l.b16 %v478
  %v511 = vunpack.c.l.b16 %v479
  %v512 = vunpack.c.l.b16 %v480
  %v513 = vunpack.c.l.b16 %v481
  %v514 = vunpack.c.l.b16 %v482
  %v515 = vunpack.c.l.b16 %v483
  %v516 = vunpack.c.l.b16 %v484
  %v517 = vunpack.c.l.b16 %v485
  %v518 = vunpack.c.l.b16 %v486
  %v519 = vunpack.c.l.b16 %v487
  %v520 = vunpack.c.l.b16 %v488
  %v521 = vunpack.c.l.b16 %v489
  %v522 = vunpack.c.l.b16 %v490
  %v523 = vpack.c.b16 %v508, %v507
  %v524 = vpack.c.b16 %v510, %v509
  %v525 = vpack.c.b16 %v512, %v511
  %v526 = vpack.c.b16 %v514, %v513
  %v527 = vpack.c.b16 %v516, %v515
  %v528 = vpack.c.b16 %v518, %v517
  %v529 = vpack.c.b16 %v520, %v519
  %v530 = vpack.c.b16 %v522, %v521
  %539 = vmatprep.subr.bf16.mxu0 0
  %540 = vmatpush1.bf16.msra.mxu0 %v523
  %541 = vmatprep.subr.bf16.mxu0 0
  %542 = vmatpush1.bf16.msra.mxu0 %v524
  %543 = vmatprep.subr.bf16.mxu0 0
  %544 = vmatpush1.bf16.msra.mxu0 %v525
  %545 = vmatprep.subr.bf16.mxu0 0
  %546 = vmatpush1.bf16.msra.mxu0 %v526
  %547 = vmatprep.subr.bf16.mxu0 0
  %548 = vmatpush1.bf16.msra.mxu0 %v527
  %549 = vmatprep.subr.bf16.mxu0 0
  %550 = vmatpush1.bf16.msra.mxu0 %v528
  %551 = vmatprep.subr.bf16.mxu0 0
  %552 = vmatpush1.bf16.msra.mxu0 %v529
  %553 = vmatprep.subr.bf16.mxu0 0
  %554 = vmatpush1.bf16.msra.mxu0 %v530
  %555 = vmatprep.subr.bf16.mxu0 0
  %556 = vmatpush1.bf16.msra.mxu0 0
  %557 = vmatprep.subr.bf16.mxu0 0
  %558 = vmatpush1.bf16.msra.mxu0 0
  %559 = vmatprep.subr.bf16.mxu0 0
  %560 = vmatpush1.bf16.msra.mxu0 0
  %561 = vmatprep.subr.bf16.mxu0 0
  %562 = vmatpush1.bf16.msra.mxu0 0
  %563 = vmatprep.subr.bf16.mxu0 0
  %564 = vmatpush1.bf16.msra.mxu0 0
  %565 = vmatprep.subr.bf16.mxu0 0
  %566 = vmatpush1.bf16.msra.mxu0 0
  %567 = vmatprep.subr.bf16.mxu0 0
  %568 = vmatpush1.bf16.msra.mxu0 0
  %569 = vmatprep.subr.bf16.mxu0 0
  %570 = vmatpush1.bf16.msra.mxu0 0
  %571 = vmatprep.mubr.bf16.mxu0 0
  %572 = vmatmul.mubr.bf16.gmra.mrb[0].mxu0 %v277
  %v573 = vpop.f32.mrb[0].mxu0
  %v574 = vadd.f32 0.0, %v573
  %v575 = vpop.f32.mrb[0].mxu0
  %v576 = vpop.f32.mrb[0].mxu0
  %v577 = vpop.f32.mrb[0].mxu0
  %578 = vdwg.mxu0
  %v595 = vunpack.c.l.b16 %v458
  %v596 = vunpack.c.l.b16 %v459
  %v597 = vunpack.c.l.b16 %v460
  %v598 = vunpack.c.l.b16 %v461
  %v599 = vunpack.c.l.b16 %v462
  %v600 = vunpack.c.l.b16 %v463
  %v601 = vunpack.c.l.b16 %v464
  %v602 = vunpack.c.l.b16 %v465
  %v603 = vunpack.c.l.b16 %v466
  %v604 = vunpack.c.l.b16 %v467
  %v605 = vunpack.c.l.b16 %v468
  %v606 = vunpack.c.l.b16 %v469
  %v607 = vunpack.c.l.b16 %v470
  %v608 = vunpack.c.l.b16 %v471
  %v609 = vunpack.c.l.b16 %v472
  %v610 = vunpack.c.l.b16 %v473
  %v611 = vpack.c.b16 %v596, %v595
  %v612 = vpack.c.b16 %v598, %v597
  %v613 = vpack.c.b16 %v600, %v599
  %v614 = vpack.c.b16 %v602, %v601
  %v615 = vpack.c.b16 %v604, %v603
  %v616 = vpack.c.b16 %v606, %v605
  %v617 = vpack.c.b16 %v608, %v607
  %v618 = vpack.c.b16 %v610, %v609
  %627 = vmatprep.subr.bf16.mxu0 0
  %628 = vmatpush1.bf16.msra.mxu0 %v611
  %629 = vmatprep.subr.bf16.mxu0 0
  %630 = vmatpush1.bf16.msra.mxu0 %v612
  %631 = vmatprep.subr.bf16.mxu0 0
  %632 = vmatpush1.bf16.msra.mxu0 %v613
  %633 = vmatprep.subr.bf16.mxu0 0
  %634 = vmatpush1.bf16.msra.mxu0 %v614
  %635 = vmatprep.subr.bf16.mxu0 0
  %636 = vmatpush1.bf16.msra.mxu0 %v615
  %637 = vmatprep.subr.bf16.mxu0 0
  %638 = vmatpush1.bf16.msra.mxu0 %v616
  %639 = vmatprep.subr.bf16.mxu0 0
  %640 = vmatpush1.bf16.msra.mxu0 %v617
  %641 = vmatprep.subr.bf16.mxu0 0
  %642 = vmatpush1.bf16.msra.mxu0 %v618
  %643 = vmatprep.subr.bf16.mxu0 0
  %644 = vmatpush1.bf16.msra.mxu0 0
  %645 = vmatprep.subr.bf16.mxu0 0
  %646 = vmatpush1.bf16.msra.mxu0 0
  %647 = vmatprep.subr.bf16.mxu0 0
  %648 = vmatpush1.bf16.msra.mxu0 0
  %649 = vmatprep.subr.bf16.mxu0 0
  %650 = vmatpush1.bf16.msra.mxu0 0
  %651 = vmatprep.subr.bf16.mxu0 0
  %652 = vmatpush1.bf16.msra.mxu0 0
  %653 = vmatprep.subr.bf16.mxu0 0
  %654 = vmatpush1.bf16.msra.mxu0 0
  %655 = vmatprep.subr.bf16.mxu0 0
  %656 = vmatpush1.bf16.msra.mxu0 0
  %657 = vmatprep.subr.bf16.mxu0 0
  %658 = vmatpush1.bf16.msra.mxu0 0
  %659 = vmatprep.mubr.bf16.mxu0 0
  %660 = vmatmul.mubr.bf16.gmra.mrb[0].mxu0 %v21
  %v661 = vpop.f32.mrb[0].mxu0
  %v662 = vadd.f32 %v574, %v661
  %v663 = vpop.f32.mrb[0].mxu0
  %v664 = vpop.f32.mrb[0].mxu0
  %v665 = vpop.f32.mrb[0].mxu0
  %666 = vdwg.mxu0
  %v667 = vadd.f32 %v662, %v43
  %v668 = vmax.f32 %v667, 0.0
  %vm669 = vcmask 257024
  %v670 = vsel %vm669, %v133, 0.0
  %v671 = vrot.slane %v670, 4
  %v672 = vadd.f32 %v670, %v671
  %v673 = vrot.slane %v672, 2
  %v674 = vadd.f32 %v672, %v673
  %v675 = vrot.slane %v674, 1
  %v676 = vadd.f32 %v674, %v675
  %v677 = vsel %vm669, %v239, 0.0
  %v678 = vrot.slane %v677, 4
  %v679 = vadd.f32 %v677, %v678
  %v680 = vrot.slane %v679, 2
  %v681 = vadd.f32 %v679, %v680
  %v682 = vrot.slane %v681, 1
  %v683 = vadd.f32 %v681, %v682
  %v684 = vadd.f32 %v676, %v683
  %v685 = vsel %vm669, %v456, 0.0
  %v686 = vrot.slane %v685, 4
  %v687 = vadd.f32 %v685, %v686
  %v688 = vrot.slane %v687, 2
  %v689 = vadd.f32 %v687, %v688
  %v690 = vrot.slane %v689, 1
  %v691 = vadd.f32 %v689, %v690
  %v692 = vadd.f32 %v684, %v691
  %v693 = vsel %vm669, %v668, 0.0
  %v694 = vrot.slane %v693, 4
  %v695 = vadd.f32 %v693, %v694
  %v696 = vrot.slane %v695, 2
  %v697 = vadd.f32 %v695, %v696
  %v698 = vrot.slane %v697, 1
  %v699 = vadd.f32 %v697, %v698
  %v700 = vadd.f32 %v692, %v699
  %v701 = vmul.f32 %v700, 0.0625
  %v702 = vsub.f32 %v133, %v701
  %v703 = vsub.f32 %v239, %v701
  %v704 = vsub.f32 %v456, %v701
  %v705 = vsub.f32 %v668, %v701
  %v706 = vmul.f32 %v702, %v702
  %v707 = vsel %vm669, %v706, 0.0
  %v708 = vrot.slane %v707, 4
  %v709 = vadd.f32 %v707, %v708
  %v710 = vrot.slane %v709, 2
  %v711 = vadd.f32 %v709, %v710
  %v712 = vrot.slane %v711, 1
  %v713 = vadd.f32 %v711, %v712
  %v714 = vmul.f32 %v703, %v703
  %v715 = vsel %vm669, %v714, 0.0
  %v716 = vrot.slane %v715, 4
  %v717 = vadd.f32 %v715, %v716
  %v718 = vrot.slane %v717, 2
  %v719 = vadd.f32 %v717, %v718
  %v720 = vrot.slane %v719, 1
  %v721 = vadd.f32 %v719, %v720
  %v722 = vadd.f32 %v713, %v721
  %v723 = vmul.f32 %v704, %v704
  %v724 = vsel %vm669, %v723, 0.0
  %v725 = vrot.slane %v724, 4
  %v726 = vadd.f32 %v724, %v725
  %v727 = vrot.slane %v726, 2
  %v728 = vadd.f32 %v726, %v727
  %v729 = vrot.slane %v728, 1
  %v730 = vadd.f32 %v728, %v729
  %v731 = vadd.f32 %v722, %v730
  %v732 = vmul.f32 %v705, %v705
  %v733 = vsel %vm669, %v732, 0.0
  %v734 = vrot.slane %v733, 4
  %v735 = vadd.f32 %v733, %v734
  %v736 = vrot.slane %v735, 2
  %v737 = vadd.f32 %v735, %v736
  %v738 = vrot.slane %v737, 1
  %v739 = vadd.f32 %v737, %v738
  %v740 = vadd.f32 %v731, %v739
  %v741 = vmul.f32 %v740, 0.06666667
  %v742 = vld [vmem:[%s3] sm:$0x1]
  %v743 = vrsqrt.pop %v741
  %v744 = vmul.f32 %v741, %v743
  %vm745 = vcmp.eq.f32.partialorder %v741, inf
  %v746 = vsel %vm745, %v741, %v744
  %vm747 = vcmp.eq.f32.partialorder %v741, 0.0
  %v748 = vand.u32 %v741, 2147483648
  %v749 = vsel %vm747, %v748, %v746
  %v750 = vadd.f32 %v749, 1e-06
  %v751 = vrcp.pop %v750
  %v752 = vmul.f32 %v742, %v751
  %v753 = vld [vmem:[%s4] sm:$0x1]
  %v755 = vlaneseq
  %v756 = vshrl.u32 %v755, 7
  %v757 = vsub.s32 0, %v756
  %v758 = vrot.slane %v752, %v757
  %v760 = vmul.f32 %v702, %v758
  %v762 = vlaneseq
  %v763 = vshrl.u32 %v762, 7
  %v764 = vsub.s32 0, %v763
  %v765 = vrot.slane %v753, %v764
  %v767 = vadd.f32 %v760, %v765
  %v768 = vmul.f32 %v703, %v758
  %v769 = vadd.f32 %v768, %v765
  %v770 = vmul.f32 %v704, %v758
  %v771 = vadd.f32 %v770, %v765
  %v772 = vmul.f32 %v705, %v758
  %v773 = vadd.f32 %v772, %v765
  %v774 = vpack.c.bf16 %v767, %v767
  %vm775 = vcmask 254976
  %776 = vst.msk [vmem:[%s5] sm:$0x3] %vm775, %v774
  %v777 = vpack.c.bf16 %v769, %v769
  %s778 = scalar_lea.vmem %s5, 2
  %779 = vst.msk [vmem:[%s778] sm:$0x3] %vm775, %v777
  %v780 = vpack.c.bf16 %v771, %v771
  %s781 = scalar_lea.vmem %s5, 4
  %782 = vst.msk [vmem:[%s781] sm:$0x3] %vm775, %v780
  %v783 = vpack.c.bf16 %v773, %v773
  %s784 = scalar_lea.vmem %s5, 6
  %785 = vst.msk [vmem:[%s784] sm:$0x3] %vm775, %v783
  // Predicated region
  $region22: #{forward.11} parent=0 // pred_check
    _
  $region23: #{forward.11} parent=0 // pred_check_branch
    %787 = sbr.rel (0) target = $region25
  $region24: #{forward.11} parent=0 // pred_region
    _
  $region25: #{forward.11} parent=0 // pred_fallthru
    _
  // Predicated region
  $region26: #{forward.11} parent=0 // pred_check
    _
  $region27: #{forward.11} parent=0 // pred_check_branch
    %789 = sbr.rel (0) target = $region29
  $region28: #{forward.11} parent=0 // pred_region
    _
  $region29: #{forward.11} parent=0 // pred_fallthru
    _

// kernel: forward.13
$region0: #{forward.13}
  #allocation0 [shape = 'u32[]', space=smem, size = 0x4, offset = 0x4, fixed_abs, tag = 'smem constant byte address 0x4 - core index']
  #allocation1 [shape = 'u32[144,128]{1,0:T(1,128)}', space=vmem, size = 0x12000, scoped, tag = 'internal scratch']
  #allocation2 [shape = 'f32[1,1]{1,0:T(1,128)S(1)}', space=vmem, size = 0x200, scoped, tag = 'scoped memory for forward.13']
  %s0 = inlined_call_operand.vmem [shape: bf16[72,32], index: 0, kind: input, shape index: {}]
  %s1 = inlined_call_operand.vmem [shape: bf16[6,32,8], index: 1, kind: input, shape index: {}]
  %s2 = inlined_call_operand.vmem [shape: f32[1,8], index: 2, kind: input, shape index: {}]
  %s3 = inlined_call_operand.vmem [shape: f32[1,8], index: 3, kind: input, shape index: {}]
  %s4 = inlined_call_operand.vmem [shape: f32[1,8], index: 4, kind: input, shape index: {}]
  %s5 = inlined_call_operand.vmem [shape: f32[1,8], index: 5, kind: input, shape index: {}]
  %s6 = inlined_call_operand.<no memory space> [shape: f32[1,1], index: 6, kind: input, shape index: {}]
  %s7 = inlined_call_operand.vmem [shape: f32[64,4], index: 7, kind: output, shape index: {}]
  %s8 = sld [smem:[#allocation0]]
  $region38: #{forward.13} parent=0
    _
  %s10 = ssub.s32 1, %s8
  %s11 = scalar_select 0, %s10, %s8
  %v12 = vstv %s6
  %13 = vst [vmem:[#allocation2] sm:$0x1] %v12
  // Predicated region
  $region2: #{forward.13} parent=0 // pred_check
    _
  $region3: #{forward.13} parent=0 // pred_check_branch
    %15 = sbr.rel (0) target = $region5
  $region4: #{forward.13} parent=0 // pred_region
    _
  $region5: #{forward.13} parent=0 // pred_fallthru
    _
  // Predicated region
  $region6: #{forward.13} parent=0 // pred_check
    _
  $region7: #{forward.13} parent=0 // pred_check_branch
    %17 = sbr.rel (0) target = $region9
  $region8: #{forward.13} parent=0 // pred_region
    _
  $region9: #{forward.13} parent=0 // pred_fallthru
    _
  // Predicated region
  $region10: #{forward.13} parent=0 // pred_check
    _
  $region11: #{forward.13} parent=0 // pred_check_branch
    %19 = sbr.rel (0) target = $region13
  $region12: #{forward.13} parent=0 // pred_region
    _
  $region13: #{forward.13} parent=0 // pred_fallthru
    _
  // Predicated region
  $region14: #{forward.13} parent=0 // pred_check
    _
  $region15: #{forward.13} parent=0 // pred_check_branch
    %21 = sbr.rel (0) target = $region17
  $region16: #{forward.13} parent=0 // pred_region
    _
  $region17: #{forward.13} parent=0 // pred_fallthru
    _
  // Predicated region
  $region18: #{forward.13} parent=0 // pred_check
    _
  $region19: #{forward.13} parent=0 // pred_check_branch
    %23 = sbr.rel (0) target = $region21
  $region20: #{forward.13} parent=0 // pred_region
    _
  $region21: #{forward.13} parent=0 // pred_fallthru
    _
  // Predicated region
  $region22: #{forward.13} parent=0 // pred_check
    _
  $region23: #{forward.13} parent=0 // pred_check_branch
    %25 = sbr.rel (0) target = $region25
  $region24: #{forward.13} parent=0 // pred_region
    _
  $region25: #{forward.13} parent=0 // pred_fallthru
    _
  // Predicated region
  $region26: #{forward.13} parent=0 // pred_check
    _
  $region27: #{forward.13} parent=0 // pred_check_branch
    %27 = sbr.rel (0) target = $region29
  $region28: #{forward.13} parent=0 // pred_region
    _
  $region29: #{forward.13} parent=0 // pred_fallthru
    _
  %v29 = vld [vmem:[%s0] sm:$0xf]
  %v30 = vld [vmem:[%s0 + $0x4] sm:$0xf]
  %v31 = vld [vmem:[%s0 + $0x8] sm:$0xf]
  %v32 = vld [vmem:[%s0 + $0xc] sm:$0xf]
  %v33 = vld [vmem:[%s0 + $0x10] sm:$0xf]
  %v34 = vld [vmem:[%s0 + $0x14] sm:$0xf]
  %v35 = vld [vmem:[%s0 + $0x18] sm:$0xf]
  %v36 = vld [vmem:[%s0 + $0x1c] sm:$0xf]
  %v37 = vld [vmem:[%s0 + $0x20] sm:$0xf]
  %v38 = vld [vmem:[%s2] sm:$0x1]
  %v39 = vld [vmem:[%s1] sm:$0xf]
  %v40 = vld [vmem:[%s1 + $0x4] sm:$0xf]
  %v41 = vld [vmem:[%s1 + $0x8] sm:$0xf]
  %v42 = vld [vmem:[%s1 + $0xc] sm:$0xf]
  %v44 = vlaneseq
  %v45 = vshrl.u32 %v44, 7
  %v46 = vsub.s32 0, %v45
  %v47 = vrot.slane %v38, %v46
  %v57 = vunpack.c.l.b16 %v29
  %v58 = vunpack.c.l.b16 %v30
  %v59 = vunpack.c.l.b16 %v31
  %v60 = vunpack.c.l.b16 %v32
  %v61 = vunpack.c.l.b16 %v33
  %v62 = vunpack.c.l.b16 %v34
  %v63 = vunpack.c.l.b16 %v35
  %v64 = vunpack.c.l.b16 %v36
  %v65 = vpack.c.b16 %v58, %v57
  %v66 = vpack.c.b16 %v60, %v59
  %v67 = vpack.c.b16 %v62, %v61
  %v68 = vpack.c.b16 %v64, %v63
  %v73 = vunpack.c.l.b16 %v39
  %v74 = vunpack.c.l.b16 %v40
  %v75 = vunpack.c.l.b16 %v41
  %v76 = vunpack.c.l.b16 %v42
  %v77 = vpack.c.b16 %v74, %v73
  %v78 = vpack.c.b16 %v76, %v75
  %vm81 = vcmask 261120
  %v83 = vsel %vm81, %v65, 0
  %v86 = vsel %vm81, %v66, 0
  %v89 = vsel %vm81, %v67, 0
  %v92 = vsel %vm81, %v68, 0
  %94 = vmatprep.subr.bf16.mxu0 0
  %95 = vmatpush1.bf16.msra.mxu0 %v77
  %96 = vmatprep.subr.bf16.mxu0 0
  %97 = vmatpush1.bf16.msra.mxu0 %v78
  %98 = vmatprep.subr.bf16.mxu0 0
  %99 = vmatpush1.bf16.msra.mxu0 0
  %100 = vmatprep.subr.bf16.mxu0 0
  %101 = vmatpush1.bf16.msra.mxu0 0
  %102 = vmatprep.subr.bf16.mxu0 0
  %103 = vmatpush1.bf16.msra.mxu0 0
  %104 = vmatprep.subr.bf16.mxu0 0
  %105 = vmatpush1.bf16.msra.mxu0 0
  %106 = vmatprep.subr.bf16.mxu0 0
  %107 = vmatpush1.bf16.msra.mxu0 0
  %108 = vmatprep.subr.bf16.mxu0 0
  %109 = vmatpush1.bf16.msra.mxu0 0
  %110 = vmatprep.subr.bf16.mxu0 0
  %111 = vmatpush1.bf16.msra.mxu0 0
  %112 = vmatprep.subr.bf16.mxu0 0
  %113 = vmatpush1.bf16.msra.mxu0 0
  %114 = vmatprep.subr.bf16.mxu0 0
  %115 = vmatpush1.bf16.msra.mxu0 0
  %116 = vmatprep.subr.bf16.mxu0 0
  %117 = vmatpush1.bf16.msra.mxu0 0
  %118 = vmatprep.subr.bf16.mxu0 0
  %119 = vmatpush1.bf16.msra.mxu0 0
  %120 = vmatprep.subr.bf16.mxu0 0
  %121 = vmatpush1.bf16.msra.mxu0 0
  %122 = vmatprep.subr.bf16.mxu0 0
  %123 = vmatpush1.bf16.msra.mxu0 0
  %124 = vmatprep.subr.bf16.mxu0 0
  %125 = vmatpush1.bf16.msra.mxu0 0
  %126 = vmatprep.mubr.bf16.mxu0 0
  %127 = vmatmul.mubr.bf16.gmra.mrb[0].mxu0 %v83
  %v128 = vpop.f32.mrb[0].mxu0
  %v129 = vadd.f32 %v47, %v128
  %v130 = vpop.f32.mrb[0].mxu0
  %v131 = vpop.f32.mrb[0].mxu0
  %v132 = vadd.f32 %v47, %v131
  %v133 = vpop.f32.mrb[0].mxu0
  %134 = vmatprep.mubr.bf16.mxu0 0
  %135 = vmatmul.mubr.bf16.gmra.mrb[0].mxu0 %v86
  %v136 = vpop.f32.mrb[0].mxu0
  %v137 = vadd.f32 %v47, %v136
  %v138 = vpop.f32.mrb[0].mxu0
  %v139 = vpop.f32.mrb[0].mxu0
  %v140 = vadd.f32 %v47, %v139
  %v141 = vpop.f32.mrb[0].mxu0
  %142 = vmatprep.mubr.bf16.mxu0 0
  %143 = vmatmul.mubr.bf16.gmra.mrb[0].mxu0 %v89
  %v144 = vpop.f32.mrb[0].mxu0
  %v145 = vadd.f32 %v47, %v144
  %v146 = vpop.f32.mrb[0].mxu0
  %v147 = vpop.f32.mrb[0].mxu0
  %v148 = vadd.f32 %v47, %v147
  %v149 = vpop.f32.mrb[0].mxu0
  %150 = vmatprep.mubr.bf16.mxu0 0
  %151 = vmatmul.mubr.bf16.gmra.mrb[0].mxu0 %v92
  %v152 = vpop.f32.mrb[0].mxu0
  %v153 = vadd.f32 %v47, %v152
  %v154 = vpop.f32.mrb[0].mxu0
  %v155 = vpop.f32.mrb[0].mxu0
  %v156 = vadd.f32 %v47, %v155
  %v157 = vpop.f32.mrb[0].mxu0
  %158 = vdwg.mxu0
  %v159 = vmax.f32 %v129, 0.0
  %v160 = vmax.f32 %v132, 0.0
  %v161 = vmax.f32 %v137, 0.0
  %v162 = vmax.f32 %v140, 0.0
  %v163 = vmax.f32 %v145, 0.0
  %v164 = vmax.f32 %v148, 0.0
  %v165 = vmax.f32 %v153, 0.0
  %v166 = vmax.f32 %v156, 0.0
  %s167 = scalar_lea.vmem %s1, 16
  %v168 = vld [vmem:[%s167] sm:$0xf]
  %v169 = vld [vmem:[%s167 + $0x4] sm:$0xf]
  %v170 = vld [vmem:[%s167 + $0x8] sm:$0xf]
  %v171 = vld [vmem:[%s167 + $0xc] sm:$0xf]
  %v176 = vunpack.c.l.b16 %v168
  %v177 = vunpack.c.l.b16 %v169
  %v178 = vunpack.c.l.b16 %v170
  %v179 = vunpack.c.l.b16 %v171
  %v180 = vpack.c.b16 %v177, %v176
  %v181 = vpack.c.b16 %v179, %v178
  %184 = vmatprep.subr.bf16.mxu0 0
  %185 = vmatpush1.bf16.msra.mxu0 %v180
  %186 = vmatprep.subr.bf16.mxu0 0
  %187 = vmatpush1.bf16.msra.mxu0 %v181
  %188 = vmatprep.subr.bf16.mxu0 0
  %189 = vmatpush1.bf16.msra.mxu0 0
  %190 = vmatprep.subr.bf16.mxu0 0
  %191 = vmatpush1.bf16.msra.mxu0 0
  %192 = vmatprep.subr.bf16.mxu0 0
  %193 = vmatpush1.bf16.msra.mxu0 0
  %194 = vmatprep.subr.bf16.mxu0 0
  %195 = vmatpush1.bf16.msra.mxu0 0
  %196 = vmatprep.subr.bf16.mxu0 0
  %197 = vmatpush1.bf16.msra.mxu0 0
  %198 = vmatprep.subr.bf16.mxu0 0
  %199 = vmatpush1.bf16.msra.mxu0 0
  %200 = vmatprep.subr.bf16.mxu0 0
  %201 = vmatpush1.bf16.msra.mxu0 0
  %202 = vmatprep.subr.bf16.mxu0 0
  %203 = vmatpush1.bf16.msra.mxu0 0
  %204 = vmatprep.subr.bf16.mxu0 0
  %205 = vmatpush1.bf16.msra.mxu0 0
  %206 = vmatprep.subr.bf16.mxu0 0
  %207 = vmatpush1.bf16.msra.mxu0 0
  %208 = vmatprep.subr.bf16.mxu0 0
  %209 = vmatpush1.bf16.msra.mxu0 0
  %210 = vmatprep.subr.bf16.mxu0 0
  %211 = vmatpush1.bf16.msra.mxu0 0
  %212 = vmatprep.subr.bf16.mxu0 0
  %213 = vmatpush1.bf16.msra.mxu0 0
  %214 = vmatprep.subr.bf16.mxu0 0
  %215 = vmatpush1.bf16.msra.mxu0 0
  %216 = vmatprep.mubr.bf16.mxu0 0
  %217 = vmatmul.mubr.bf16.gmra.mrb[0].mxu0 %v83
  %v218 = vpop.f32.mrb[0].mxu0
  %v219 = vadd.f32 %v47, %v218
  %v220 = vpop.f32.mrb[0].mxu0
  %v221 = vpop.f32.mrb[0].mxu0
  %v222 = vadd.f32 %v47, %v221
  %v223 = vpop.f32.mrb[0].mxu0
  %224 = vmatprep.mubr.bf16.mxu0 0
  %225 = vmatmul.mubr.bf16.gmra.mrb[0].mxu0 %v86
  %v226 = vpop.f32.mrb[0].mxu0
  %v227 = vadd.f32 %v47, %v226
  %v228 = vpop.f32.mrb[0].mxu0
  %v229 = vpop.f32.mrb[0].mxu0
  %v230 = vadd.f32 %v47, %v229
  %v231 = vpop.f32.mrb[0].mxu0
  %232 = vmatprep.mubr.bf16.mxu0 0
  %233 = vmatmul.mubr.bf16.gmra.mrb[0].mxu0 %v89
  %v234 = vpop.f32.mrb[0].mxu0
  %v235 = vadd.f32 %v47, %v234
  %v236 = vpop.f32.mrb[0].mxu0
  %v237 = vpop.f32.mrb[0].mxu0
  %v238 = vadd.f32 %v47, %v237
  %v239 = vpop.f32.mrb[0].mxu0
  %240 = vmatprep.mubr.bf16.mxu0 0
  %241 = vmatmul.mubr.bf16.gmra.mrb[0].mxu0 %v92
  %v242 = vpop.f32.mrb[0].mxu0
  %v243 = vadd.f32 %v47, %v242
  %v244 = vpop.f32.mrb[0].mxu0
  %v245 = vpop.f32.mrb[0].mxu0
  %v246 = vadd.f32 %v47, %v245
  %v247 = vpop.f32.mrb[0].mxu0
  %248 = vdwg.mxu0
  %v249 = vmax.f32 %v219, 0.0
  %v250 = vmax.f32 %v222, 0.0
  %v251 = vmax.f32 %v227, 0.0
  %v252 = vmax.f32 %v230, 0.0
  %v253 = vmax.f32 %v235, 0.0
  %v254 = vmax.f32 %v238, 0.0
  %v255 = vmax.f32 %v243, 0.0
  %v256 = vmax.f32 %v246, 0.0
  %s257 = scalar_lea.vmem %s1, 32
  %v258 = vld [vmem:[%s257] sm:$0xf]
  %v259 = vld [vmem:[%s257 + $0x4] sm:$0xf]
  %v260 = vld [vmem:[%s257 + $0x8] sm:$0xf]
  %v261 = vld [vmem:[%s257 + $0xc] sm:$0xf]
  %s262 = scalar_lea.vmem %s1, 48
  %v263 = vld [vmem:[%s262] sm:$0xf]
  %v264 = vld [vmem:[%s262 + $0x4] sm:$0xf]
  %v265 = vld [vmem:[%s262 + $0x8] sm:$0xf]
  %v266 = vld [vmem:[%s262 + $0xc] sm:$0xf]
  %v268 = vunpack.c.l.b16 %v37
  %v269 = vpack.c.b16 %v59, %v58
  %v270 = vpack.c.b16 %v61, %v60
  %v271 = vpack.c.b16 %v63, %v62
  %v272 = vpack.c.b16 %v268, %v64
  %v277 = vunpack.c.l.b16 %v263
  %v278 = vunpack.c.l.b16 %v264
  %v279 = vunpack.c.l.b16 %v265
  %v280 = vunpack.c.l.b16 %v266
  %v281 = vpack.c.b16 %v278, %v277
  %v282 = vpack.c.b16 %v280, %v279
  %v286 = vsel %vm81, %v269, 0
  %v289 = vsel %vm81, %v270, 0
  %v292 = vsel %vm81, %v271, 0
  %v295 = vsel %vm81, %v272, 0
  %297 = vmatprep.subr.bf16.mxu0 0
  %298 = vmatpush1.bf16.msra.mxu0 %v281
  %299 = vmatprep.subr.bf16.mxu0 0
  %300 = vmatpush1.bf16.msra.mxu0 %v282
  %301 = vmatprep.subr.bf16.mxu0 0
  %302 = vmatpush1.bf16.msra.mxu0 0
  %303 = vmatprep.subr.bf16.mxu0 0
  %304 = vmatpush1.bf16.msra.mxu0 0
  %305 = vmatprep.subr.bf16.mxu0 0
  %306 = vmatpush1.bf16.msra.mxu0 0
  %307 = vmatprep.subr.bf16.mxu0 0
  %308 = vmatpush1.bf16.msra.mxu0 0
  %309 = vmatprep.subr.bf16.mxu0 0
  %310 = vmatpush1.bf16.msra.mxu0 0
  %311 = vmatprep.subr.bf16.mxu0 0
  %312 = vmatpush1.bf16.msra.mxu0 0
  %313 = vmatprep.subr.bf16.mxu0 0
  %314 = vmatpush1.bf16.msra.mxu0 0
  %315 = vmatprep.subr.bf16.mxu0 0
  %316 = vmatpush1.bf16.msra.mxu0 0
  %317 = vmatprep.subr.bf16.mxu0 0
  %318 = vmatpush1.bf16.msra.mxu0 0
  %319 = vmatprep.subr.bf16.mxu0 0
  %320 = vmatpush1.bf16.msra.mxu0 0
  %321 = vmatprep.subr.bf16.mxu0 0
  %322 = vmatpush1.bf16.msra.mxu0 0
  %323 = vmatprep.subr.bf16.mxu0 0
  %324 = vmatpush1.bf16.msra.mxu0 0
  %325 = vmatprep.subr.bf16.mxu0 0
  %326 = vmatpush1.bf16.msra.mxu0 0
  %327 = vmatprep.subr.bf16.mxu0 0
  %328 = vmatpush1.bf16.msra.mxu0 0
  %329 = vmatprep.mubr.bf16.mxu0 0
  %330 = vmatmul.mubr.bf16.gmra.mrb[0].mxu0 %v286
  %v331 = vpop.f32.mrb[0].mxu0
  %v332 = vadd.f32 0.0, %v331
  %v333 = vpop.f32.mrb[0].mxu0
  %v334 = vpop.f32.mrb[0].mxu0
  %v335 = vadd.f32 0.0, %v334
  %v336 = vpop.f32.mrb[0].mxu0
  %337 = vmatprep.mubr.bf16.mxu0 0
  %338 = vmatmul.mubr.bf16.gmra.mrb[0].mxu0 %v289
  %v339 = vpop.f32.mrb[0].mxu0
  %v340 = vadd.f32 0.0, %v339
  %v341 = vpop.f32.mrb[0].mxu0
  %v342 = vpop.f32.mrb[0].mxu0
  %v343 = vadd.f32 0.0, %v342
  %v344 = vpop.f32.mrb[0].mxu0
  %345 = vmatprep.mubr.bf16.mxu0 0
  %346 = vmatmul.mubr.bf16.gmra.mrb[0].mxu0 %v292
  %v347 = vpop.f32.mrb[0].mxu0
  %v348 = vadd.f32 0.0, %v347
  %v349 = vpop.f32.mrb[0].mxu0
  %v350 = vpop.f32.mrb[0].mxu0
  %v351 = vadd.f32 0.0, %v350
  %v352 = vpop.f32.mrb[0].mxu0
  %353 = vmatprep.mubr.bf16.mxu0 0
  %354 = vmatmul.mubr.bf16.gmra.mrb[0].mxu0 %v295
  %v355 = vpop.f32.mrb[0].mxu0
  %v356 = vadd.f32 0.0, %v355
  %v357 = vpop.f32.mrb[0].mxu0
  %v358 = vpop.f32.mrb[0].mxu0
  %v359 = vadd.f32 0.0, %v358
  %v360 = vpop.f32.mrb[0].mxu0
  %361 = vdwg.mxu0
  %v366 = vunpack.c.l.b16 %v258
  %v367 = vunpack.c.l.b16 %v259
  %v368 = vunpack.c.l.b16 %v260
  %v369 = vunpack.c.l.b16 %v261
  %v370 = vpack.c.b16 %v367, %v366
  %v371 = vpack.c.b16 %v369, %v368
  %374 = vmatprep.subr.bf16.mxu0 0
  %375 = vmatpush1.bf16.msra.mxu0 %v370
  %376 = vmatprep.subr.bf16.mxu0 0
  %377 = vmatpush1.bf16.msra.mxu0 %v371
  %378 = vmatprep.subr.bf16.mxu0 0
  %379 = vmatpush1.bf16.msra.mxu0 0
  %380 = vmatprep.subr.bf16.mxu0 0
  %381 = vmatpush1.bf16.msra.mxu0 0
  %382 = vmatprep.subr.bf16.mxu0 0
  %383 = vmatpush1.bf16.msra.mxu0 0
  %384 = vmatprep.subr.bf16.mxu0 0
  %385 = vmatpush1.bf16.msra.mxu0 0
  %386 = vmatprep.subr.bf16.mxu0 0
  %387 = vmatpush1.bf16.msra.mxu0 0
  %388 = vmatprep.subr.bf16.mxu0 0
  %389 = vmatpush1.bf16.msra.mxu0 0
  %390 = vmatprep.subr.bf16.mxu0 0
  %391 = vmatpush1.bf16.msra.mxu0 0
  %392 = vmatprep.subr.bf16.mxu0 0
  %393 = vmatpush1.bf16.msra.mxu0 0
  %394 = vmatprep.subr.bf16.mxu0 0
  %395 = vmatpush1.bf16.msra.mxu0 0
  %396 = vmatprep.subr.bf16.mxu0 0
  %397 = vmatpush1.bf16.msra.mxu0 0
  %398 = vmatprep.subr.bf16.mxu0 0
  %399 = vmatpush1.bf16.msra.mxu0 0
  %400 = vmatprep.subr.bf16.mxu0 0
  %401 = vmatpush1.bf16.msra.mxu0 0
  %402 = vmatprep.subr.bf16.mxu0 0
  %403 = vmatpush1.bf16.msra.mxu0 0
  %404 = vmatprep.subr.bf16.mxu0 0
  %405 = vmatpush1.bf16.msra.mxu0 0
  %406 = vmatprep.mubr.bf16.mxu0 0
  %407 = vmatmul.mubr.bf16.gmra.mrb[0].mxu0 %v83
  %v408 = vpop.f32.mrb[0].mxu0
  %v409 = vadd.f32 %v332, %v408
  %v410 = vpop.f32.mrb[0].mxu0
  %v411 = vpop.f32.mrb[0].mxu0
  %v412 = vadd.f32 %v335, %v411
  %v413 = vpop.f32.mrb[0].mxu0
  %414 = vmatprep.mubr.bf16.mxu0 0
  %415 = vmatmul.mubr.bf16.gmra.mrb[0].mxu0 %v86
  %v416 = vpop.f32.mrb[0].mxu0
  %v417 = vadd.f32 %v340, %v416
  %v418 = vpop.f32.mrb[0].mxu0
  %v419 = vpop.f32.mrb[0].mxu0
  %v420 = vadd.f32 %v343, %v419
  %v421 = vpop.f32.mrb[0].mxu0
  %422 = vmatprep.mubr.bf16.mxu0 0
  %423 = vmatmul.mubr.bf16.gmra.mrb[0].mxu0 %v89
  %v424 = vpop.f32.mrb[0].mxu0
  %v425 = vadd.f32 %v348, %v424
  %v426 = vpop.f32.mrb[0].mxu0
  %v427 = vpop.f32.mrb[0].mxu0
  %v428 = vadd.f32 %v351, %v427
  %v429 = vpop.f32.mrb[0].mxu0
  %430 = vmatprep.mubr.bf16.mxu0 0
  %431 = vmatmul.mubr.bf16.gmra.mrb[0].mxu0 %v92
  %v432 = vpop.f32.mrb[0].mxu0
  %v433 = vadd.f32 %v356, %v432
  %v434 = vpop.f32.mrb[0].mxu0
  %v435 = vpop.f32.mrb[0].mxu0
  %v436 = vadd.f32 %v359, %v435
  %v437 = vpop.f32.mrb[0].mxu0
  %438 = vdwg.mxu0
  %v439 = vadd.f32 %v409, %v47
  %v440 = vadd.f32 %v412, %v47
  %v441 = vadd.f32 %v417, %v47
  %v442 = vadd.f32 %v420, %v47
  %v443 = vadd.f32 %v425, %v47
  %v444 = vadd.f32 %v428, %v47
  %v445 = vadd.f32 %v433, %v47
  %v446 = vadd.f32 %v436, %v47
  %v447 = vmax.f32 %v439, 0.0
  %v448 = vmax.f32 %v440, 0.0
  %v449 = vmax.f32 %v441, 0.0
  %v450 = vmax.f32 %v442, 0.0
  %v451 = vmax.f32 %v443, 0.0
  %v452 = vmax.f32 %v444, 0.0
  %v453 = vmax.f32 %v445, 0.0
  %v454 = vmax.f32 %v446, 0.0
  %s455 = scalar_lea.vmem %s1, 64
  %v456 = vld [vmem:[%s455] sm:$0xf]
  %v457 = vld [vmem:[%s455 + $0x4] sm:$0xf]
  %v458 = vld [vmem:[%s455 + $0x8] sm:$0xf]
  %v459 = vld [vmem:[%s455 + $0xc] sm:$0xf]
  %s460 = scalar_lea.vmem %s1, 80
  %v461 = vld [vmem:[%s460] sm:$0xf]
  %v462 = vld [vmem:[%s460 + $0x4] sm:$0xf]
  %v463 = vld [vmem:[%s460 + $0x8] sm:$0xf]
  %v464 = vld [vmem:[%s460 + $0xc] sm:$0xf]
  %v469 = vunpack.c.l.b16 %v461
  %v470 = vunpack.c.l.b16 %v462
  %v471 = vunpack.c.l.b16 %v463
  %v472 = vunpack.c.l.b16 %v464
  %v473 = vpack.c.b16 %v470, %v469
  %v474 = vpack.c.b16 %v472, %v471
  %477 = vmatprep.subr.bf16.mxu0 0
  %478 = vmatpush1.bf16.msra.mxu0 %v473
  %479 = vmatprep.subr.bf16.mxu0 0
  %480 = vmatpush1.bf16.msra.mxu0 %v474
  %481 = vmatprep.subr.bf16.mxu0 0
  %482 = vmatpush1.bf16.msra.mxu0 0
  %483 = vmatprep.subr.bf16.mxu0 0
  %484 = vmatpush1.bf16.msra.mxu0 0
  %485 = vmatprep.subr.bf16.mxu0 0
  %486 = vmatpush1.bf16.msra.mxu0 0
  %487 = vmatprep.subr.bf16.mxu0 0
  %488 = vmatpush1.bf16.msra.mxu0 0
  %489 = vmatprep.subr.bf16.mxu0 0
  %490 = vmatpush1.bf16.msra.mxu0 0
  %491 = vmatprep.subr.bf16.mxu0 0
  %492 = vmatpush1.bf16.msra.mxu0 0
  %493 = vmatprep.subr.bf16.mxu0 0
  %494 = vmatpush1.bf16.msra.mxu0 0
  %495 = vmatprep.subr.bf16.mxu0 0
  %496 = vmatpush1.bf16.msra.mxu0 0
  %497 = vmatprep.subr.bf16.mxu0 0
  %498 = vmatpush1.bf16.msra.mxu0 0
  %499 = vmatprep.subr.bf16.mxu0 0
  %500 = vmatpush1.bf16.msra.mxu0 0
  %501 = vmatprep.subr.bf16.mxu0 0
  %502 = vmatpush1.bf16.msra.mxu0 0
  %503 = vmatprep.subr.bf16.mxu0 0
  %504 = vmatpush1.bf16.msra.mxu0 0
  %505 = vmatprep.subr.bf16.mxu0 0
  %506 = vmatpush1.bf16.msra.mxu0 0
  %507 = vmatprep.subr.bf16.mxu0 0
  %508 = vmatpush1.bf16.msra.mxu0 0
  %509 = vmatprep.mubr.bf16.mxu0 0
  %510 = vmatmul.mubr.bf16.gmra.mrb[0].mxu0 %v286
  %v511 = vpop.f32.mrb[0].mxu0
  %v512 = vadd.f32 0.0, %v511
  %v513 = vpop.f32.mrb[0].mxu0
  %v514 = vpop.f32.mrb[0].mxu0
  %v515 = vadd.f32 0.0, %v514
  %v516 = vpop.f32.mrb[0].mxu0
  %517 = vmatprep.mubr.bf16.mxu0 0
  %518 = vmatmul.mubr.bf16.gmra.mrb[0].mxu0 %v289
  %v519 = vpop.f32.mrb[0].mxu0
  %v520 = vadd.f32 0.0, %v519
  %v521 = vpop.f32.mrb[0].mxu0
  %v522 = vpop.f32.mrb[0].mxu0
  %v523 = vadd.f32 0.0, %v522
  %v524 = vpop.f32.mrb[0].mxu0
  %525 = vmatprep.mubr.bf16.mxu0 0
  %526 = vmatmul.mubr.bf16.gmra.mrb[0].mxu0 %v292
  %v527 = vpop.f32.mrb[0].mxu0
  %v528 = vadd.f32 0.0, %v527
  %v529 = vpop.f32.mrb[0].mxu0
  %v530 = vpop.f32.mrb[0].mxu0
  %v531 = vadd.f32 0.0, %v530
  %v532 = vpop.f32.mrb[0].mxu0
  %533 = vmatprep.mubr.bf16.mxu0 0
  %534 = vmatmul.mubr.bf16.gmra.mrb[0].mxu0 %v295
  %v535 = vpop.f32.mrb[0].mxu0
  %v536 = vadd.f32 0.0, %v535
  %v537 = vpop.f32.mrb[0].mxu0
  %v538 = vpop.f32.mrb[0].mxu0
  %v539 = vadd.f32 0.0, %v538
  %v540 = vpop.f32.mrb[0].mxu0
  %541 = vdwg.mxu0
  %v546 = vunpack.c.l.b16 %v456
  %v547 = vunpack.c.l.b16 %v457
  %v548 = vunpack.c.l.b16 %v458
  %v549 = vunpack.c.l.b16 %v459
  %v550 = vpack.c.b16 %v547, %v546
  %v551 = vpack.c.b16 %v549, %v548
  %554 = vmatprep.subr.bf16.mxu0 0
  %555 = vmatpush1.bf16.msra.mxu0 %v550
  %556 = vmatprep.subr.bf16.mxu0 0
  %557 = vmatpush1.bf16.msra.mxu0 %v551
  %558 = vmatprep.subr.bf16.mxu0 0
  %559 = vmatpush1.bf16.msra.mxu0 0
  %560 = vmatprep.subr.bf16.mxu0 0
  %561 = vmatpush1.bf16.msra.mxu0 0
  %562 = vmatprep.subr.bf16.mxu0 0
  %563 = vmatpush1.bf16.msra.mxu0 0
  %564 = vmatprep.subr.bf16.mxu0 0
  %565 = vmatpush1.bf16.msra.mxu0 0
  %566 = vmatprep.subr.bf16.mxu0 0
  %567 = vmatpush1.bf16.msra.mxu0 0
  %568 = vmatprep.subr.bf16.mxu0 0
  %569 = vmatpush1.bf16.msra.mxu0 0
  %570 = vmatprep.subr.bf16.mxu0 0
  %571 = vmatpush1.bf16.msra.mxu0 0
  %572 = vmatprep.subr.bf16.mxu0 0
  %573 = vmatpush1.bf16.msra.mxu0 0
  %574 = vmatprep.subr.bf16.mxu0 0
  %575 = vmatpush1.bf16.msra.mxu0 0
  %576 = vmatprep.subr.bf16.mxu0 0
  %577 = vmatpush1.bf16.msra.mxu0 0
  %578 = vmatprep.subr.bf16.mxu0 0
  %579 = vmatpush1.bf16.msra.mxu0 0
  %580 = vmatprep.subr.bf16.mxu0 0
  %581 = vmatpush1.bf16.msra.mxu0 0
  %582 = vmatprep.subr.bf16.mxu0 0
  %583 = vmatpush1.bf16.msra.mxu0 0
  %584 = vmatprep.subr.bf16.mxu0 0
  %585 = vmatpush1.bf16.msra.mxu0 0
  %586 = vmatprep.mubr.bf16.mxu0 0
  %587 = vmatmul.mubr.bf16.gmra.mrb[0].mxu0 %v83
  %v588 = vpop.f32.mrb[0].mxu0
  %v589 = vadd.f32 %v512, %v588
  %v590 = vpop.f32.mrb[0].mxu0
  %v591 = vpop.f32.mrb[0].mxu0
  %v592 = vadd.f32 %v515, %v591
  %v593 = vpop.f32.mrb[0].mxu0
  %594 = vmatprep.mubr.bf16.mxu0 0
  %595 = vmatmul.mubr.bf16.gmra.mrb[0].mxu0 %v86
  %v596 = vpop.f32.mrb[0].mxu0
  %v597 = vadd.f32 %v520, %v596
  %v598 = vpop.f32.mrb[0].mxu0
  %v599 = vpop.f32.mrb[0].mxu0
  %v600 = vadd.f32 %v523, %v599
  %v601 = vpop.f32.mrb[0].mxu0
  %602 = vmatprep.mubr.bf16.mxu0 0
  %603 = vmatmul.mubr.bf16.gmra.mrb[0].mxu0 %v89
  %v604 = vpop.f32.mrb[0].mxu0
  %v605 = vadd.f32 %v528, %v604
  %v606 = vpop.f32.mrb[0].mxu0
  %v607 = vpop.f32.mrb[0].mxu0
  %v608 = vadd.f32 %v531, %v607
  %v609 = vpop.f32.mrb[0].mxu0
  %610 = vmatprep.mubr.bf16.mxu0 0
  %611 = vmatmul.mubr.bf16.gmra.mrb[0].mxu0 %v92
  %v612 = vpop.f32.mrb[0].mxu0
  %v613 = vadd.f32 %v536, %v612
  %v614 = vpop.f32.mrb[0].mxu0
  %v615 = vpop.f32.mrb[0].mxu0
  %v616 = vadd.f32 %v539, %v615
  %v617 = vpop.f32.mrb[0].mxu0
  %618 = vdwg.mxu0
  %v619 = vadd.f32 %v589, %v47
  %v620 = vadd.f32 %v592, %v47
  %v621 = vadd.f32 %v597, %v47
  %v622 = vadd.f32 %v600, %v47
  %v623 = vadd.f32 %v605, %v47
  %v624 = vadd.f32 %v608, %v47
  %v625 = vadd.f32 %v613, %v47
  %v626 = vadd.f32 %v616, %v47
  %v627 = vmax.f32 %v619, 0.0
  %v628 = vmax.f32 %v620, 0.0
  %v629 = vmax.f32 %v621, 0.0
  %v630 = vmax.f32 %v622, 0.0
  %v631 = vmax.f32 %v623, 0.0
  %v632 = vmax.f32 %v624, 0.0
  %v633 = vmax.f32 %v625, 0.0
  %v634 = vmax.f32 %v626, 0.0
  %vm635 = vcmask 64512
  %v636 = vsel %vm635, %v159, 0.0
  %v637 = vsel %vm635, %v160, 0.0
  %v638 = vadd.f32 %v636, %v637
  %v639 = vsel %vm635, %v161, 0.0
  %v640 = vadd.f32 %v638, %v639
  %v641 = vsel %vm635, %v162, 0.0
  %v642 = vadd.f32 %v640, %v641
  %v643 = vsel %vm635, %v163, 0.0
  %v644 = vadd.f32 %v642, %v643
  %v645 = vsel %vm635, %v164, 0.0
  %v646 = vadd.f32 %v644, %v645
  %v647 = vsel %vm635, %v165, 0.0
  %v648 = vadd.f32 %v646, %v647
  %v649 = vsel %vm635, %v166, 0.0
  %v650 = vadd.f32 %v648, %v649
  %v651 = vrot.slane %v650, 4
  %v652 = vadd.f32 %v650, %v651
  %v653 = vrot.slane %v652, 2
  %v654 = vadd.f32 %v652, %v653
  %v655 = vrot.slane %v654, 1
  %v656 = vadd.f32 %v654, %v655
  %v657 = vsel %vm635, %v249, 0.0
  %v658 = vsel %vm635, %v250, 0.0
  %v659 = vadd.f32 %v657, %v658
  %v660 = vsel %vm635, %v251, 0.0
  %v661 = vadd.f32 %v659, %v660
  %v662 = vsel %vm635, %v252, 0.0
  %v663 = vadd.f32 %v661, %v662
  %v664 = vsel %vm635, %v253, 0.0
  %v665 = vadd.f32 %v663, %v664
  %v666 = vsel %vm635, %v254, 0.0
  %v667 = vadd.f32 %v665, %v666
  %v668 = vsel %vm635, %v255, 0.0
  %v669 = vadd.f32 %v667, %v668
  %v670 = vsel %vm635, %v256, 0.0
  %v671 = vadd.f32 %v669, %v670
  %v672 = vrot.slane %v671, 4
  %v673 = vadd.f32 %v671, %v672
  %v674 = vrot.slane %v673, 2
  %v675 = vadd.f32 %v673, %v674
  %v676 = vrot.slane %v675, 1
  %v677 = vadd.f32 %v675, %v676
  %v678 = vadd.f32 %v656, %v677
  %v679 = vsel %vm635, %v447, 0.0
  %v680 = vsel %vm635, %v448, 0.0
  %v681 = vadd.f32 %v679, %v680
  %v682 = vsel %vm635, %v449, 0.0
  %v683 = vadd.f32 %v681, %v682
  %v684 = vsel %vm635, %v450, 0.0
  %v685 = vadd.f32 %v683, %v684
  %v686 = vsel %vm635, %v451, 0.0
  %v687 = vadd.f32 %v685, %v686
  %v688 = vsel %vm635, %v452, 0.0
  %v689 = vadd.f32 %v687, %v688
  %v690 = vsel %vm635, %v453, 0.0
  %v691 = vadd.f32 %v689, %v690
  %v692 = vsel %vm635, %v454, 0.0
  %v693 = vadd.f32 %v691, %v692
  %v694 = vrot.slane %v693, 4
  %v695 = vadd.f32 %v693, %v694
  %v696 = vrot.slane %v695, 2
  %v697 = vadd.f32 %v695, %v696
  %v698 = vrot.slane %v697, 1
  %v699 = vadd.f32 %v697, %v698
  %v700 = vadd.f32 %v678, %v699
  %v701 = vsel %vm635, %v627, 0.0
  %v702 = vsel %vm635, %v628, 0.0
  %v703 = vadd.f32 %v701, %v702
  %v704 = vsel %vm635, %v629, 0.0
  %v705 = vadd.f32 %v703, %v704
  %v706 = vsel %vm635, %v630, 0.0
  %v707 = vadd.f32 %v705, %v706
  %v708 = vsel %vm635, %v631, 0.0
  %v709 = vadd.f32 %v707, %v708
  %v710 = vsel %vm635, %v632, 0.0
  %v711 = vadd.f32 %v709, %v710
  %v712 = vsel %vm635, %v633, 0.0
  %v713 = vadd.f32 %v711, %v712
  %v714 = vsel %vm635, %v634, 0.0
  %v715 = vadd.f32 %v713, %v714
  %v716 = vrot.slane %v715, 4
  %v717 = vadd.f32 %v715, %v716
  %v718 = vrot.slane %v717, 2
  %v719 = vadd.f32 %v717, %v718
  %v720 = vrot.slane %v719, 1
  %v721 = vadd.f32 %v719, %v720
  %v722 = vadd.f32 %v700, %v721
  %v723 = vmul.f32 %v722, 0.00390625
  %v724 = vsub.f32 %v159, %v723
  %v725 = vsub.f32 %v160, %v723
  %v726 = vsub.f32 %v161, %v723
  %v727 = vsub.f32 %v162, %v723
  %v728 = vsub.f32 %v163, %v723
  %v729 = vsub.f32 %v164, %v723
  %v730 = vsub.f32 %v165, %v723
  %v731 = vsub.f32 %v166, %v723
  %v732 = vsub.f32 %v249, %v723
  %v733 = vsub.f32 %v250, %v723
  %v734 = vsub.f32 %v251, %v723
  %v735 = vsub.f32 %v252, %v723
  %v736 = vsub.f32 %v253, %v723
  %v737 = vsub.f32 %v254, %v723
  %v738 = vsub.f32 %v255, %v723
  %v739 = vsub.f32 %v256, %v723
  %v740 = vsub.f32 %v447, %v723
  %v741 = vsub.f32 %v448, %v723
  %v742 = vsub.f32 %v449, %v723
  %v743 = vsub.f32 %v450, %v723
  %v744 = vsub.f32 %v451, %v723
  %v745 = vsub.f32 %v452, %v723
  %v746 = vsub.f32 %v453, %v723
  %v747 = vsub.f32 %v454, %v723
  %v748 = vsub.f32 %v627, %v723
  %v749 = vsub.f32 %v628, %v723
  %v750 = vsub.f32 %v629, %v723
  %v751 = vsub.f32 %v630, %v723
  %v752 = vsub.f32 %v631, %v723
  %v753 = vsub.f32 %v632, %v723
  %v754 = vsub.f32 %v633, %v723
  %v755 = vsub.f32 %v634, %v723
  %v756 = vmul.f32 %v724, %v724
  %v757 = vmul.f32 %v725, %v725
  %v758 = vmul.f32 %v726, %v726
  %v759 = vmul.f32 %v727, %v727
  %v760 = vmul.f32 %v728, %v728
  %v761 = vmul.f32 %v729, %v729
  %v762 = vmul.f32 %v730, %v730
  %v763 = vmul.f32 %v731, %v731
  %v764 = vsel %vm635, %v756, 0.0
  %v765 = vsel %vm635, %v757, 0.0
  %v766 = vadd.f32 %v764, %v765
  %v767 = vsel %vm635, %v758, 0.0
  %v768 = vadd.f32 %v766, %v767
  %v769 = vsel %vm635, %v759, 0.0
  %v770 = vadd.f32 %v768, %v769
  %v771 = vsel %vm635, %v760, 0.0
  %v772 = vadd.f32 %v770, %v771
  %v773 = vsel %vm635, %v761, 0.0
  %v774 = vadd.f32 %v772, %v773
  %v775 = vsel %vm635, %v762, 0.0
  %v776 = vadd.f32 %v774, %v775
  %v777 = vsel %vm635, %v763, 0.0
  %v778 = vadd.f32 %v776, %v777
  %v779 = vrot.slane %v778, 4
  %v780 = vadd.f32 %v778, %v779
  %v781 = vrot.slane %v780, 2
  %v782 = vadd.f32 %v780, %v781
  %v783 = vrot.slane %v782, 1
  %v784 = vadd.f32 %v782, %v783
  %v785 = vmul.f32 %v732, %v732
  %v786 = vmul.f32 %v733, %v733
  %v787 = vmul.f32 %v734, %v734
  %v788 = vmul.f32 %v735, %v735
  %v789 = vmul.f32 %v736, %v736
  %v790 = vmul.f32 %v737, %v737
  %v791 = vmul.f32 %v738, %v738
  %v792 = vmul.f32 %v739, %v739
  %v793 = vsel %vm635, %v785, 0.0
  %v794 = vsel %vm635, %v786, 0.0
  %v795 = vadd.f32 %v793, %v794
  %v796 = vsel %vm635, %v787, 0.0
  %v797 = vadd.f32 %v795, %v796
  %v798 = vsel %vm635, %v788, 0.0
  %v799 = vadd.f32 %v797, %v798
  %v800 = vsel %vm635, %v789, 0.0
  %v801 = vadd.f32 %v799, %v800
  %v802 = vsel %vm635, %v790, 0.0
  %v803 = vadd.f32 %v801, %v802
  %v804 = vsel %vm635, %v791, 0.0
  %v805 = vadd.f32 %v803, %v804
  %v806 = vsel %vm635, %v792, 0.0
  %v807 = vadd.f32 %v805, %v806
  %v808 = vrot.slane %v807, 4
  %v809 = vadd.f32 %v807, %v808
  %v810 = vrot.slane %v809, 2
  %v811 = vadd.f32 %v809, %v810
  %v812 = vrot.slane %v811, 1
  %v813 = vadd.f32 %v811, %v812
  %v814 = vadd.f32 %v784, %v813
  %v815 = vmul.f32 %v740, %v740
  %v816 = vmul.f32 %v741, %v741
  %v817 = vmul.f32 %v742, %v742
  %v818 = vmul.f32 %v743, %v743
  %v819 = vmul.f32 %v744, %v744
  %v820 = vmul.f32 %v745, %v745
  %v821 = vmul.f32 %v746, %v746
  %v822 = vmul.f32 %v747, %v747
  %v823 = vsel %vm635, %v815, 0.0
  %v824 = vsel %vm635, %v816, 0.0
  %v825 = vadd.f32 %v823, %v824
  %v826 = vsel %vm635, %v817, 0.0
  %v827 = vadd.f32 %v825, %v826
  %v828 = vsel %vm635, %v818, 0.0
  %v829 = vadd.f32 %v827, %v828
  %v830 = vsel %vm635, %v819, 0.0
  %v831 = vadd.f32 %v829, %v830
  %v832 = vsel %vm635, %v820, 0.0
  %v833 = vadd.f32 %v831, %v832
  %v834 = vsel %vm635, %v821, 0.0
  %v835 = vadd.f32 %v833, %v834
  %v836 = vsel %vm635, %v822, 0.0
  %v837 = vadd.f32 %v835, %v836
  %v838 = vrot.slane %v837, 4
  %v839 = vadd.f32 %v837, %v838
  %v840 = vrot.slane %v839, 2
  %v841 = vadd.f32 %v839, %v840
  %v842 = vrot.slane %v841, 1
  %v843 = vadd.f32 %v841, %v842
  %v844 = vadd.f32 %v814, %v843
  %v845 = vmul.f32 %v748, %v748
  %v846 = vmul.f32 %v749, %v749
  %v847 = vmul.f32 %v750, %v750
  %v848 = vmul.f32 %v751, %v751
  %v849 = vmul.f32 %v752, %v752
  %v850 = vmul.f32 %v753, %v753
  %v851 = vmul.f32 %v754, %v754
  %v852 = vmul.f32 %v755, %v755
  %v853 = vsel %vm635, %v845, 0.0
  %v854 = vsel %vm635, %v846, 0.0
  %v855 = vadd.f32 %v853, %v854
  %v856 = vsel %vm635, %v847, 0.0
  %v857 = vadd.f32 %v855, %v856
  %v858 = vsel %vm635, %v848, 0.0
  %v859 = vadd.f32 %v857, %v858
  %v860 = vsel %vm635, %v849, 0.0
  %v861 = vadd.f32 %v859, %v860
  %v862 = vsel %vm635, %v850, 0.0
  %v863 = vadd.f32 %v861, %v862
  %v864 = vsel %vm635, %v851, 0.0
  %v865 = vadd.f32 %v863, %v864
  %v866 = vsel %vm635, %v852, 0.0
  %v867 = vadd.f32 %v865, %v866
  %v868 = vrot.slane %v867, 4
  %v869 = vadd.f32 %v867, %v868
  %v870 = vrot.slane %v869, 2
  %v871 = vadd.f32 %v869, %v870
  %v872 = vrot.slane %v871, 1
  %v873 = vadd.f32 %v871, %v872
  %v874 = vadd.f32 %v844, %v873
  %v875 = vmul.f32 %v874, 0.003921569
  %v876 = vld [vmem:[%s3] sm:$0x1]
  %v877 = vrsqrt.pop %v875
  %v878 = vmul.f32 %v875, %v877
  %vm879 = vcmp.eq.f32.partialorder %v875, inf
  %v880 = vsel %vm879, %v875, %v878
  %vm881 = vcmp.eq.f32.partialorder %v875, 0.0
  %v882 = vand.u32 %v875, 2147483648
  %v883 = vsel %vm881, %v882, %v880
  %v884 = vadd.f32 %v883, 1e-06
  %v885 = vrcp.pop %v884
  %v886 = vmul.f32 %v876, %v885
  %v887 = vld [vmem:[%s4] sm:$0x1]
  %v889 = vlaneseq
  %v890 = vshrl.u32 %v889, 7
  %v891 = vsub.s32 0, %v890
  %v892 = vrot.slane %v886, %v891
  %v894 = vmul.f32 %v724, %v892
  %v895 = vmul.f32 %v725, %v892
  %v896 = vmul.f32 %v726, %v892
  %v897 = vmul.f32 %v727, %v892
  %v898 = vmul.f32 %v728, %v892
  %v899 = vmul.f32 %v729, %v892
  %v900 = vmul.f32 %v730, %v892
  %v901 = vmul.f32 %v731, %v892
  %v903 = vlaneseq
  %v904 = vshrl.u32 %v903, 7
  %v905 = vsub.s32 0, %v904
  %v906 = vrot.slane %v887, %v905
  %v908 = vadd.f32 %v894, %v906
  %v909 = vadd.f32 %v895, %v906
  %v910 = vadd.f32 %v896, %v906
  %v911 = vadd.f32 %v897, %v906
  %v912 = vadd.f32 %v898, %v906
  %v913 = vadd.f32 %v899, %v906
  %v914 = vadd.f32 %v900, %v906
  %v915 = vadd.f32 %v901, %v906
  %v916 = vmul.f32 %v732, %v892
  %v917 = vmul.f32 %v733, %v892
  %v918 = vmul.f32 %v734, %v892
  %v919 = vmul.f32 %v735, %v892
  %v920 = vmul.f32 %v736, %v892
  %v921 = vmul.f32 %v737, %v892
  %v922 = vmul.f32 %v738, %v892
  %v923 = vmul.f32 %v739, %v892
  %v924 = vadd.f32 %v916, %v906
  %v925 = vadd.f32 %v917, %v906
  %v926 = vadd.f32 %v918, %v906
  %v927 = vadd.f32 %v919, %v906
  %v928 = vadd.f32 %v920, %v906
  %v929 = vadd.f32 %v921, %v906
  %v930 = vadd.f32 %v922, %v906
  %v931 = vadd.f32 %v923, %v906
  %v932 = vmul.f32 %v740, %v892
  %v933 = vmul.f32 %v741, %v892
  %v934 = vmul.f32 %v742, %v892
  %v935 = vmul.f32 %v743, %v892
  %v936 = vmul.f32 %v744, %v892
  %v937 = vmul.f32 %v745, %v892
  %v938 = vmul.f32 %v746, %v892
  %v939 = vmul.f32 %v747, %v892
  %v940 = vadd.f32 %v932, %v906
  %v941 = vadd.f32 %v933, %v906
  %v942 = vadd.f32 %v934, %v906
  %v943 = vadd.f32 %v935, %v906
  %v944 = vadd.f32 %v936, %v906
  %v945 = vadd.f32 %v937, %v906
  %v946 = vadd.f32 %v938, %v906
  %v947 = vadd.f32 %v939, %v906
  %v948 = vmul.f32 %v748, %v892
  %v949 = vmul.f32 %v749, %v892
  %v950 = vmul.f32 %v750, %v892
  %v951 = vmul.f32 %v751, %v892
  %v952 = vmul.f32 %v752, %v892
  %v953 = vmul.f32 %v753, %v892
  %v954 = vmul.f32 %v754, %v892
  %v955 = vmul.f32 %v755, %v892
  %v956 = vadd.f32 %v948, %v906
  %v957 = vadd.f32 %v949, %v906
  %v958 = vadd.f32 %v950, %v906
  %v959 = vadd.f32 %v951, %v906
  %v960 = vadd.f32 %v952, %v906
  %v961 = vadd.f32 %v953, %v906
  %v962 = vadd.f32 %v954, %v906
  %v963 = vadd.f32 %v955, %v906
  %v964 = vld [vmem:[%s5] sm:$0x1]
  %v966 = vlaneseq
  %v967 = vshrl.u32 %v966, 7
  %v968 = vsub.s32 0, %v967
  %v969 = vrot.slane %v964, %v968
  %v971 = vmul.f32 %v908, %v969
  %v972 = vmul.f32 %v909, %v969
  %v973 = vmul.f32 %v910, %v969
  %v974 = vmul.f32 %v911, %v969
  %v975 = vmul.f32 %v912, %v969
  %v976 = vmul.f32 %v913, %v969
  %v977 = vmul.f32 %v914, %v969
  %v978 = vmul.f32 %v915, %v969
  %v979 = vsel %vm635, %v971, 0.0
  %980 = vadd.xlane.f32.xlu0 %v979
  %v981 = vpop.xlane.xlu0 %980
  %v982 = vsel %vm635, %v972, 0.0
  %983 = vadd.xlane.f32.xlu0 %v982
  %v984 = vpop.xlane.xlu0 %983
  %v985 = vsel %vm635, %v973, 0.0
  %986 = vadd.xlane.f32.xlu0 %v985
  %v987 = vpop.xlane.xlu0 %986
  %v988 = vsel %vm635, %v974, 0.0
  %989 = vadd.xlane.f32.xlu0 %v988
  %v990 = vpop.xlane.xlu0 %989
  %v991 = vsel %vm635, %v975, 0.0
  %992 = vadd.xlane.f32.xlu0 %v991
  %v993 = vpop.xlane.xlu0 %992
  %v994 = vsel %vm635, %v976, 0.0
  %995 = vadd.xlane.f32.xlu0 %v994
  %v996 = vpop.xlane.xlu0 %995
  %v997 = vsel %vm635, %v977, 0.0
  %998 = vadd.xlane.f32.xlu0 %v997
  %v999 = vpop.xlane.xlu0 %998
  %v1000 = vsel %vm635, %v978, 0.0
  %1001 = vadd.xlane.f32.xlu0 %v1000
  %v1002 = vpop.xlane.xlu0 %1001
  %v1003 = vld [vmem:[#allocation2] sm:$0x1]
  %v1005 = vlaneseq
  %v1006 = vshrl.u32 %v1005, 7
  %v1007 = vsub.s32 0, %v1006
  %v1008 = vrot.slane %v1003, %v1007
  %v1010 = vadd.f32 %v981, %v1008
  %v1011 = vadd.f32 %v984, %v1008
  %v1012 = vadd.f32 %v987, %v1008
  %v1013 = vadd.f32 %v990, %v1008
  %v1014 = vadd.f32 %v993, %v1008
  %v1015 = vadd.f32 %v996, %v1008
  %v1016 = vadd.f32 %v999, %v1008
  %v1017 = vadd.f32 %v1002, %v1008
  %v1018 = vmul.f32 %v924, %v969
  %v1019 = vmul.f32 %v925, %v969
  %v1020 = vmul.f32 %v926, %v969
  %v1021 = vmul.f32 %v927, %v969
  %v1022 = vmul.f32 %v928, %v969
  %v1023 = vmul.f32 %v929, %v969
  %v1024 = vmul.f32 %v930, %v969
  %v1025 = vmul.f32 %v931, %v969
  %v1026 = vsel %vm635, %v1018, 0.0
  %1027 = vadd.xlane.f32.xlu0 %v1026
  %v1028 = vpop.xlane.xlu0 %1027
  %v1029 = vsel %vm635, %v1019, 0.0
  %1030 = vadd.xlane.f32.xlu0 %v1029
  %v1031 = vpop.xlane.xlu0 %1030
  %v1032 = vsel %vm635, %v1020, 0.0
  %1033 = vadd.xlane.f32.xlu0 %v1032
  %v1034 = vpop.xlane.xlu0 %1033
  %v1035 = vsel %vm635, %v1021, 0.0
  %1036 = vadd.xlane.f32.xlu0 %v1035
  %v1037 = vpop.xlane.xlu0 %1036
  %v1038 = vsel %vm635, %v1022, 0.0
  %1039 = vadd.xlane.f32.xlu0 %v1038
  %v1040 = vpop.xlane.xlu0 %1039
  %v1041 = vsel %vm635, %v1023, 0.0
  %1042 = vadd.xlane.f32.xlu0 %v1041
  %v1043 = vpop.xlane.xlu0 %1042
  %v1044 = vsel %vm635, %v1024, 0.0
  %1045 = vadd.xlane.f32.xlu0 %v1044
  %v1046 = vpop.xlane.xlu0 %1045
  %v1047 = vsel %vm635, %v1025, 0.0
  %1048 = vadd.xlane.f32.xlu0 %v1047
  %v1049 = vpop.xlane.xlu0 %1048
  %v1050 = vadd.f32 %v1028, %v1008
  %v1051 = vadd.f32 %v1031, %v1008
  %v1052 = vadd.f32 %v1034, %v1008
  %v1053 = vadd.f32 %v1037, %v1008
  %v1054 = vadd.f32 %v1040, %v1008
  %v1055 = vadd.f32 %v1043, %v1008
  %v1056 = vadd.f32 %v1046, %v1008
  %v1057 = vadd.f32 %v1049, %v1008
  %v1058 = vmul.f32 %v940, %v969
  %v1059 = vmul.f32 %v941, %v969
  %v1060 = vmul.f32 %v942, %v969
  %v1061 = vmul.f32 %v943, %v969
  %v1062 = vmul.f32 %v944, %v969
  %v1063 = vmul.f32 %v945, %v969
  %v1064 = vmul.f32 %v946, %v969
  %v1065 = vmul.f32 %v947, %v969
  %v1066 = vsel %vm635, %v1058, 0.0
  %1067 = vadd.xlane.f32.xlu0 %v1066
  %v1068 = vpop.xlane.xlu0 %1067
  %v1069 = vsel %vm635, %v1059, 0.0
  %1070 = vadd.xlane.f32.xlu0 %v1069
  %v1071 = vpop.xlane.xlu0 %1070
  %v1072 = vsel %vm635, %v1060, 0.0
  %1073 = vadd.xlane.f32.xlu0 %v1072
  %v1074 = vpop.xlane.xlu0 %1073
  %v1075 = vsel %vm635, %v1061, 0.0
  %1076 = vadd.xlane.f32.xlu0 %v1075
  %v1077 = vpop.xlane.xlu0 %1076
  %v1078 = vsel %vm635, %v1062, 0.0
  %1079 = vadd.xlane.f32.xlu0 %v1078
  %v1080 = vpop.xlane.xlu0 %1079
  %v1081 = vsel %vm635, %v1063, 0.0
  %1082 = vadd.xlane.f32.xlu0 %v1081
  %v1083 = vpop.xlane.xlu0 %1082
  %v1084 = vsel %vm635, %v1064, 0.0
  %1085 = vadd.xlane.f32.xlu0 %v1084
  %v1086 = vpop.xlane.xlu0 %1085
  %v1087 = vsel %vm635, %v1065, 0.0
  %1088 = vadd.xlane.f32.xlu0 %v1087
  %v1089 = vpop.xlane.xlu0 %1088
  %v1090 = vadd.f32 %v1068, %v1008
  %v1091 = vadd.f32 %v1071, %v1008
  %v1092 = vadd.f32 %v1074, %v1008
  %v1093 = vadd.f32 %v1077, %v1008
  %v1094 = vadd.f32 %v1080, %v1008
  %v1095 = vadd.f32 %v1083, %v1008
  %v1096 = vadd.f32 %v1086, %v1008
  %v1097 = vadd.f32 %v1089, %v1008
  %v1098 = vmul.f32 %v956, %v969
  %v1099 = vmul.f32 %v957, %v969
  %v1100 = vmul.f32 %v958, %v969
  %v1101 = vmul.f32 %v959, %v969
  %v1102 = vmul.f32 %v960, %v969
  %v1103 = vmul.f32 %v961, %v969
  %v1104 = vmul.f32 %v962, %v969
  %v1105 = vmul.f32 %v963, %v969
  %v1106 = vsel %vm635, %v1098, 0.0
  %1107 = vadd.xlane.f32.xlu0 %v1106
  %v1108 = vpop.xlane.xlu0 %1107
  %v1109 = vsel %vm635, %v1099, 0.0
  %1110 = vadd.xlane.f32.xlu0 %v1109
  %v1111 = vpop.xlane.xlu0 %1110
  %v1112 = vsel %vm635, %v1100, 0.0
  %1113 = vadd.xlane.f32.xlu0 %v1112
  %v1114 = vpop.xlane.xlu0 %1113
  %v1115 = vsel %vm635, %v1101, 0.0
  %1116 = vadd.xlane.f32.xlu0 %v1115
  %v1117 = vpop.xlane.xlu0 %1116
  %v1118 = vsel %vm635, %v1102, 0.0
  %1119 = vadd.xlane.f32.xlu0 %v1118
  %v1120 = vpop.xlane.xlu0 %1119
  %v1121 = vsel %vm635, %v1103, 0.0
  %1122 = vadd.xlane.f32.xlu0 %v1121
  %v1123 = vpop.xlane.xlu0 %1122
  %v1124 = vsel %vm635, %v1104, 0.0
  %1125 = vadd.xlane.f32.xlu0 %v1124
  %v1126 = vpop.xlane.xlu0 %1125
  %v1127 = vsel %vm635, %v1105, 0.0
  %1128 = vadd.xlane.f32.xlu0 %v1127
  %v1129 = vpop.xlane.xlu0 %1128
  %v1130 = vadd.f32 %v1108, %v1008
  %v1131 = vadd.f32 %v1111, %v1008
  %v1132 = vadd.f32 %v1114, %v1008
  %v1133 = vadd.f32 %v1117, %v1008
  %v1134 = vadd.f32 %v1120, %v1008
  %v1135 = vadd.f32 %v1123, %v1008
  %v1136 = vadd.f32 %v1126, %v1008
  %v1137 = vadd.f32 %v1129, %v1008
  %1146 = vrot.lane.b32.xlu0 %v1050, 1
  %v1147 = vpop.permute.xlu0 %1146
  %1148 = vrot.lane.b32.xlu0 %v1051, 1
  %v1149 = vpop.permute.xlu0 %1148
  %1150 = vrot.lane.b32.xlu0 %v1052, 1
  %v1151 = vpop.permute.xlu0 %1150
  %1152 = vrot.lane.b32.xlu0 %v1053, 1
  %v1153 = vpop.permute.xlu0 %1152
  %1154 = vrot.lane.b32.xlu0 %v1054, 1
  %v1155 = vpop.permute.xlu0 %1154
  %1156 = vrot.lane.b32.xlu0 %v1055, 1
  %v1157 = vpop.permute.xlu0 %1156
  %1158 = vrot.lane.b32.xlu0 %v1056, 1
  %v1159 = vpop.permute.xlu0 %1158
  %1160 = vrot.lane.b32.xlu0 %v1057, 1
  %v1161 = vpop.permute.xlu0 %1160
  %1178 = vrot.lane.b32.xlu0 %v1090, 2
  %v1179 = vpop.permute.xlu0 %1178
  %1180 = vrot.lane.b32.xlu0 %v1091, 2
  %v1181 = vpop.permute.xlu0 %1180
  %1182 = vrot.lane.b32.xlu0 %v1092, 2
  %v1183 = vpop.permute.xlu0 %1182
  %1184 = vrot.lane.b32.xlu0 %v1093, 2
  %v1185 = vpop.permute.xlu0 %1184
  %1186 = vrot.lane.b32.xlu0 %v1094, 2
  %v1187 = vpop.permute.xlu0 %1186
  %1188 = vrot.lane.b32.xlu0 %v1095, 2
  %v1189 = vpop.permute.xlu0 %1188
  %1190 = vrot.lane.b32.xlu0 %v1096, 2
  %v1191 = vpop.permute.xlu0 %1190
  %1192 = vrot.lane.b32.xlu0 %v1097, 2
  %v1193 = vpop.permute.xlu0 %1192
  %1210 = vrot.lane.b32.xlu0 %v1130, 3
  %v1211 = vpop.permute.xlu0 %1210
  %1212 = vrot.lane.b32.xlu0 %v1131, 3
  %v1213 = vpop.permute.xlu0 %1212
  %1214 = vrot.lane.b32.xlu0 %v1132, 3
  %v1215 = vpop.permute.xlu0 %1214
  %1216 = vrot.lane.b32.xlu0 %v1133, 3
  %v1217 = vpop.permute.xlu0 %1216
  %1218 = vrot.lane.b32.xlu0 %v1134, 3
  %v1219 = vpop.permute.xlu0 %1218
  %1220 = vrot.lane.b32.xlu0 %v1135, 3
  %v1221 = vpop.permute.xlu0 %1220
  %1222 = vrot.lane.b32.xlu0 %v1136, 3
  %v1223 = vpop.permute.xlu0 %1222
  %1224 = vrot.lane.b32.xlu0 %v1137, 3
  %v1225 = vpop.permute.xlu0 %1224
  %vm1234 = vcmask 7168
  %v1235 = vsel %vm1234, %v1010, %v1147
  %v1236 = vsel %vm1234, %v1011, %v1149
  %v1237 = vsel %vm1234, %v1012, %v1151
  %v1238 = vsel %vm1234, %v1013, %v1153
  %v1239 = vsel %vm1234, %v1014, %v1155
  %v1240 = vsel %vm1234, %v1015, %v1157
  %v1241 = vsel %vm1234, %v1016, %v1159
  %v1242 = vsel %vm1234, %v1017, %v1161
  %vm1243 = vcmask 15360
  %v1244 = vsel %vm1243, %v1235, %v1179
  %v1245 = vsel %vm1243, %v1236, %v1181
  %v1246 = vsel %vm1243, %v1237, %v1183
  %v1247 = vsel %vm1243, %v1238, %v1185
  %v1248 = vsel %vm1243, %v1239, %v1187
  %v1249 = vsel %vm1243, %v1240, %v1189
  %v1250 = vsel %vm1243, %v1241, %v1191
  %v1251 = vsel %vm1243, %v1242, %v1193
  %vm1252 = vcmask 23552
  %v1253 = vsel %vm1252, %v1244, %v1211
  %v1254 = vsel %vm1252, %v1245, %v1213
  %v1255 = vsel %vm1252, %v1246, %v1215
  %v1256 = vsel %vm1252, %v1247, %v1217
  %v1257 = vsel %vm1252, %v1248, %v1219
  %v1258 = vsel %vm1252, %v1249, %v1221
  %v1259 = vsel %vm1252, %v1250, %v1223
  %v1260 = vsel %vm1252, %v1251, %v1225
  %vm1261 = vcmask 31744
  %1262 = vst.msk [vmem:[%s7] sm:$0xff] %vm1261, %v1253
  %1263 = vst.msk [vmem:[%s7 + $0x8] sm:$0xff] %vm1261, %v1254
  %1264 = vst.msk [vmem:[%s7 + $0x10] sm:$0xff] %vm1261, %v1255
  %1265 = vst.msk [vmem:[%s7 + $0x18] sm:$0xff] %vm1261, %v1256
  %1266 = vst.msk [vmem:[%s7 + $0x20] sm:$0xff] %vm1261, %v1257
  %1267 = vst.msk [vmem:[%s7 + $0x28] sm:$0xff] %vm1261, %v1258
  %1268 = vst.msk [vmem:[%s7 + $0x30] sm:$0xff] %vm1261, %v1259
  %1269 = vst.msk [vmem:[%s7 + $0x38] sm:$0xff] %vm1261, %v1260
  // Predicated region
  $region30: #{forward.13} parent=0 // pred_check
    _
  $region31: #{forward.13} parent=0 // pred_check_branch
    %1271 = sbr.rel (0) target = $region33
  $region32: #{forward.13} parent=0 // pred_region
    _
  $region33: #{forward.13} parent=0 // pred_fallthru
    _
  // Predicated region
  $region34: #{forward.13} parent=0 // pred_check
    _
  $region35: #{forward.13} parent=0 // pred_check_branch
    %1273 = sbr.rel (0) target = $region37
  $region36: #{forward.13} parent=0 // pred_region
    _
  $region37: #{forward.13} parent=0 // pred_fallthru
    _

</llo_original>
